<compile_context>
chip_gen: v6e
topology: v6e:2x2x1
jax: 0.10.0
libtpu: 0.0.40
codegen_flags: <defaults>
</compile_context>

<pallas_src>
import jax
import jax.numpy as jnp
from jax.experimental import pallas as pl
from jax.experimental.pallas import tpu as pltpu

# Pin f32 matmul precision so the fused (hoisted) precompute matches the
# unfused reference to ~ulp level on TPU.
jax.config.update("jax_default_matmul_precision", "highest")


def tgcn_kernel(p_zr_ref, p_h_ref, wh_zr_ref, wh_h_ref, h0_ref, hout_ref):
    """Whole GRU recurrence over T steps in a single kernel invocation.

    p_zr_ref : [T, N, 2*Fout]  H-independent pre-activations for z|r (lane-stacked)
    p_h_ref  : [T, N, Fout]    H-independent pre-activation for the candidate gate
    wh_zr_ref: [Fout, 2*Fout]  H-side Linear weights for z|r (lane-stacked)
    wh_h_ref : [Fout, Fout]    H-side Linear weight for the candidate gate
    h0_ref   : [N, Fout]       initial hidden state
    hout_ref : [T, N, Fout]    hidden state for every step (output)
    """
    t_steps = hout_ref.shape[0]
    f_out = hout_ref.shape[2]

    wh_zr = wh_zr_ref[...]
    wh_h = wh_h_ref[...]

    def step(t, h):
        # Update + reset gates: one batched MXU push, one wide sigmoid.
        zr = jax.nn.sigmoid(
            p_zr_ref[t] + jnp.dot(h, wh_zr, preferred_element_type=jnp.float32))
        z = zr[:, :f_out]
        r = zr[:, f_out:]
        # Candidate state (depends on r — stays on the serial path).
        h_tilde = jnp.tanh(
            p_h_ref[t] + jnp.dot(h * r, wh_h, preferred_element_type=jnp.float32))
        h_new = z * h + (1.0 - z) * h_tilde
        hout_ref[t] = h_new
        return h_new

    jax.lax.fori_loop(0, t_steps, step, h0_ref[...], unroll=True)


def gcn_norm_dense(edge_index, edge_weight, num_nodes, improved=False,
                   add_self_loops=True):
    """Dense Â = D^{-1/2}(A [+ fill*I])D^{-1/2} from COO edges (plain JAX, one-off)."""
    src, dst = edge_index[0], edge_index[1]
    if edge_weight is None:
        edge_weight = jnp.ones(src.shape[0], dtype=jnp.float32)
    a = jnp.zeros((num_nodes, num_nodes), jnp.float32).at[dst, src].add(edge_weight)
    if add_self_loops:
        fill = 2.0 if improved else 1.0
        a = a + fill * jnp.eye(num_nodes, dtype=jnp.float32)
    deg = a.sum(axis=1)
    dinv = jnp.where(deg > 0.0, jax.lax.rsqrt(deg), 0.0)
    return dinv[:, None] * a * dinv[None, :]


def tgcn_forward(x_seq, edge_index, edge_weight, params, h0=None,
                 improved=False, add_self_loops=True):
    """Run the TGCN cell over a [T, N, Fin] sequence with one pallas_call."""
    t_steps, n, f_in = x_seq.shape
    w_gcn, b_gcn, w_lin, b_lin = (params["w_gcn"], params["b_gcn"],
                                  params["w_lin"], params["b_lin"])
    f_out = w_gcn.shape[-1]
    if h0 is None:
        h0 = jnp.zeros((n, f_out), jnp.float32)

    a_hat = gcn_norm_dense(edge_index, edge_weight, n, improved, add_self_loops)

    # Split Linear(2*Fout -> Fout): cat([C, H]) @ W  ==  C @ Wc + H @ Wh.
    w_lin_c = w_lin[:, :f_out, :]                               # [3, Fout, Fout]
    w_lin_h = w_lin[:, f_out:, :]                               # [3, Fout, Fout]

    # Hoist everything H-independent:
    #   (Â X W_g + b_g) Wc_g + b_lin_g == Â X (W_g Wc_g) + (b_g Wc_g + b_lin_g)
    w_eff = jnp.einsum('gik,gko->gio', w_gcn, w_lin_c)          # [3, Fin, Fout]
    b_eff = jnp.einsum('gk,gko->go', b_gcn, w_lin_c) + b_lin    # [3, Fout]

    # One wide matmul over all T steps and all 3 gates (lane order [z | r | h~]),
    # then Â applied per step — all amortized outside the serial recurrence.
    w_eff_all = jnp.concatenate([w_eff[0], w_eff[1], w_eff[2]], axis=1)   # [Fin, 3*Fout]
    b_eff_all = jnp.concatenate([b_eff[0], b_eff[1], b_eff[2]], axis=0)   # [3*Fout]
    xw = x_seq.reshape(t_steps * n, f_in) @ w_eff_all                     # [T*N, 3*Fout]
    p = jnp.einsum('ij,tjk->tik', a_hat,
                   xw.reshape(t_steps, n, 3 * f_out)) + b_eff_all         # [T, N, 3*Fout]
    p_zr = p[:, :, :2 * f_out]                                            # [T, N, 2*Fout]
    p_h = p[:, :, 2 * f_out:]                                             # [T, N,   Fout]

    # H-side weights: z|r stacked along lanes, candidate kept separate.
    wh_zr = jnp.concatenate([w_lin_h[0], w_lin_h[1]], axis=1)             # [Fout, 2*Fout]
    wh_h = w_lin_h[2]                                                     # [Fout, Fout]

    def full(shape):
        return pl.BlockSpec(shape, lambda i: (0,) * len(shape))

    return pl.pallas_call(
        tgcn_kernel,
        out_shape=jax.ShapeDtypeStruct((t_steps, n, f_out), jnp.float32),
        grid=(1,),                     # single invocation; recurrence is in-kernel
        in_specs=[
            full((t_steps, n, 2 * f_out)),   # P_zr  (resident)
            full((t_steps, n, f_out)),       # P_h   (resident)
            full((f_out, 2 * f_out)),        # Wh_zr (resident)
            full((f_out, f_out)),            # Wh_h  (resident)
            full((n, f_out)),                # H0
        ],
        out_specs=full((t_steps, n, f_out)),
        compiler_params=pltpu.CompilerParams(
            dimension_semantics=("arbitrary",)),
    )(p_zr, p_h, wh_zr, wh_h, h0)


def reference(x_seq, edge_index, edge_weight, params, h0, improved=False,
              add_self_loops=True):
    """Pure-JAX reference of the PyTorch TGCN forward (scanned over time)."""
    n = x_seq.shape[1]
    a_hat = gcn_norm_dense(edge_index, edge_weight, n, improved, add_self_loops)
    w_gcn, b_gcn, w_lin, b_lin = (params["w_gcn"], params["b_gcn"],
                                  params["w_lin"], params["b_lin"])

    def cell(h, x):
        def conv(g):
            return a_hat @ (x @ w_gcn[g]) + b_gcn[g]
        z = jax.nn.sigmoid(jnp.concatenate([conv(0), h], axis=1) @ w_lin[0] + b_lin[0])
        r = jax.nn.sigmoid(jnp.concatenate([conv(1), h], axis=1) @ w_lin[1] + b_lin[1])
        h_t = jnp.tanh(jnp.concatenate([conv(2), h * r], axis=1) @ w_lin[2] + b_lin[2])
        h_new = z * h + (1.0 - z) * h_t
        return h_new, h_new

    _, hs = jax.lax.scan(cell, h0, x_seq)
    return hs


if __name__ == "__main__":
    key = jax.random.PRNGKey(0)
    k_x, k_e, k_w, k_wg, k_bg, k_wl, k_bl = jax.random.split(key, 7)

    T, N, F_IN, F_OUT, E = 8, 16, 8, 32, 48   # time-steps, nodes, in/out channels, edges

    x_seq = jax.random.normal(k_x, (T, N, F_IN), dtype=jnp.float32)
    edge_index = jax.random.randint(k_e, (2, E), 0, N, dtype=jnp.int32)
    edge_weight = jax.random.uniform(k_w, (E,), minval=0.5, maxval=1.5,
                                     dtype=jnp.float32)

    bound_g = 1.0 / (F_IN ** 0.5)
    bound_l = 1.0 / ((2 * F_OUT) ** 0.5)
    params = {
        # GCNConv weights (pre-transposed [Fin, Fout]) + biases, one per gate z/r/h.
        "w_gcn": jax.random.uniform(k_wg, (3, F_IN, F_OUT),
                                    minval=-bound_g, maxval=bound_g,
                                    dtype=jnp.float32),
        "b_gcn": jax.random.uniform(k_bg, (3, F_OUT),
                                    minval=-bound_g, maxval=bound_g,
                                    dtype=jnp.float32),
        # Linear(2*Fout -> Fout) weights (pre-transposed [2*Fout, Fout]) + biases.
        "w_lin": jax.random.uniform(k_wl, (3, 2 * F_OUT, F_OUT),
                                    minval=-bound_l, maxval=bound_l,
                                    dtype=jnp.float32),
        "b_lin": jax.random.uniform(k_bl, (3, F_OUT),
                                    minval=-bound_l, maxval=bound_l,
                                    dtype=jnp.float32),
    }

    h0 = jnp.zeros((N, F_OUT), jnp.float32)   # module default: zero hidden state

    h_seq = jax.jit(tgcn_forward)(x_seq, edge_index, edge_weight, params, h0)
    h_seq = jax.block_until_ready(h_seq)

    ref = jax.jit(reference)(x_seq, edge_index, edge_weight, params, h0)
    ref = jax.block_until_ready(ref)

    assert h_seq.shape == (T, N, F_OUT)
    assert jnp.allclose(h_seq, ref, atol=1e-5, rtol=1e-5), "mismatch vs JAX reference"

    print("KERNEL_OK")
</pallas_src>

<mosaic_0001>
module attributes {stable_mosaic.version = 11 : i64} {
  func.func private @main(%arg0: i32) attributes {dimension_semantics = [#tpu.dimension_semantics<core_parallel>], iteration_bounds = array<i64: 2>, tpu.core_type = #tpu.core_type<sc_scalar_subcore>, window_params = []} {
    return
  }
}

module attributes {stable_mosaic.version = 11 : i64} {
  func.func private @main(%arg0: i32) attributes {dimension_semantics = [#tpu.dimension_semantics<core_parallel>], iteration_bounds = array<i64: 2>, tpu.core_type = #tpu.core_type<sc_scalar_subcore>, window_params = []} {
    return
  }
}

module attributes {stable_mosaic.version = 11 : i64} {
  func.func @tgcn_kernel(%arg0: i32, %arg1: memref<8x16x64xf32, #tpu.memory_space<vmem>>, %arg2: memref<8x16x32xf32, #tpu.memory_space<vmem>>, %arg3: memref<32x64xf32, #tpu.memory_space<vmem>>, %arg4: memref<32x32xf32, #tpu.memory_space<vmem>>, %arg5: memref<16x32xf32, #tpu.memory_space<vmem>>, %arg6: memref<8x16x32xf32, #tpu.memory_space<vmem>>) attributes {dimension_semantics = [#tpu.dimension_semantics<arbitrary>], iteration_bounds = array<i64: 1>, scalar_prefetch = 0 : i64, scratch_operands = 0 : i64, tpu.core_type = #tpu.core_type<tc>, window_params = [{pipeline_mode = #tpu.pipeline_mode<synchronous>, transform_indices = @transform_0, window_bounds = array<i64: 8, 16, 64>}, {pipeline_mode = #tpu.pipeline_mode<synchronous>, transform_indices = @transform_1, window_bounds = array<i64: 8, 16, 32>}, {pipeline_mode = #tpu.pipeline_mode<synchronous>, transform_indices = @transform_2, window_bounds = array<i64: 32, 64>}, {pipeline_mode = #tpu.pipeline_mode<synchronous>, transform_indices = @transform_3, window_bounds = array<i64: 32, 32>}, {pipeline_mode = #tpu.pipeline_mode<synchronous>, transform_indices = @transform_4, window_bounds = array<i64: 16, 32>}, {pipeline_mode = #tpu.pipeline_mode<synchronous>, transform_indices = @transform_5, window_bounds = array<i64: 8, 16, 32>}]} {
    %c0 = arith.constant 0 : index
    %c0_0 = arith.constant 0 : index
    %0 = vector.load %arg3[%c0, %c0_0] : memref<32x64xf32, #tpu.memory_space<vmem>>, vector<32x64xf32>
    %c0_1 = arith.constant 0 : index
    %c0_2 = arith.constant 0 : index
    %1 = vector.load %arg4[%c0_1, %c0_2] : memref<32x32xf32, #tpu.memory_space<vmem>>, vector<32x32xf32>
    %c0_3 = arith.constant 0 : index
    %c0_4 = arith.constant 0 : index
    %2 = vector.load %arg5[%c0_3, %c0_4] : memref<16x32xf32, #tpu.memory_space<vmem>>, vector<16x32xf32>
    %c0_i32 = arith.constant 0 : i32
    %3 = arith.index_cast %c0_i32 : i32 to index
    %c0_5 = arith.constant 0 : index
    %c0_6 = arith.constant 0 : index
    %4 = vector.load %arg1[%3, %c0_5, %c0_6] : memref<8x16x64xf32, #tpu.memory_space<vmem>>, vector<1x16x64xf32>
    %5 = vector.shape_cast %4 : vector<1x16x64xf32> to vector<16x64xf32>
    %cst = arith.constant dense<0.000000e+00> : vector<16x64xf32>
    %6 = tpu.matmul %2, %0, %cst {dimension_numbers = #tpu.dot_dimension_numbers<[1], [0], [0], [1], [0, 0, 1, 1], [], []>, precision = #tpu.contract_precision<fp32>} : vector<16x32xf32>, vector<32x64xf32>, vector<16x64xf32> -> vector<16x64xf32>
    %7 = arith.addf %5, %6 : vector<16x64xf32>
    %8 = arith.negf %7 : vector<16x64xf32>
    %9 = math.exp %8 : vector<16x64xf32>
    %cst_7 = arith.constant 1.000000e+00 : f32
    %10 = vector.broadcast %cst_7 : f32 to vector<16x64xf32>
    %11 = arith.addf %10, %9 : vector<16x64xf32>
    %12 = arith.divf %10, %11 : vector<16x64xf32>
    %13 = vector.extract_strided_slice %12 {offsets = [0, 0], sizes = [16, 32], strides = [1, 1]} : vector<16x64xf32> to vector<16x32xf32>
    %14 = vector.extract_strided_slice %12 {offsets = [0, 32], sizes = [16, 32], strides = [1, 1]} : vector<16x64xf32> to vector<16x32xf32>
    %15 = arith.index_cast %c0_i32 : i32 to index
    %c0_8 = arith.constant 0 : index
    %c0_9 = arith.constant 0 : index
    %16 = vector.load %arg2[%15, %c0_8, %c0_9] : memref<8x16x32xf32, #tpu.memory_space<vmem>>, vector<1x16x32xf32>
    %17 = vector.shape_cast %16 : vector<1x16x32xf32> to vector<16x32xf32>
    %18 = arith.mulf %2, %14 : vector<16x32xf32>
    %cst_10 = arith.constant dense<0.000000e+00> : vector<16x32xf32>
    %19 = tpu.matmul %18, %1, %cst_10 {dimension_numbers = #tpu.dot_dimension_numbers<[1], [0], [0], [1], [0, 0, 1, 1], [], []>, precision = #tpu.contract_precision<fp32>} : vector<16x32xf32>, vector<32x32xf32>, vector<16x32xf32> -> vector<16x32xf32>
    %20 = arith.addf %17, %19 : vector<16x32xf32>
    %21 = math.tanh %20 : vector<16x32xf32>
    %22 = arith.mulf %13, %2 : vector<16x32xf32>
    %cst_11 = arith.constant 1.000000e+00 : f32
    %23 = vector.broadcast %cst_11 : f32 to vector<16x32xf32>
    %24 = arith.subf %23, %13 : vector<16x32xf32>
    %25 = arith.mulf %24, %21 : vector<16x32xf32>
    %26 = arith.addf %22, %25 : vector<16x32xf32>
    %27 = arith.index_cast %c0_i32 : i32 to index
    %c0_12 = arith.constant 0 : index
    %c0_13 = arith.constant 0 : index
    %28 = vector.load %arg6[%27, %c0_12, %c0_13] : memref<8x16x32xf32, #tpu.memory_space<vmem>>, vector<1x16x32xf32>
    %29 = vector.shape_cast %28 : vector<1x16x32xf32> to vector<16x32xf32>
    %30 = vector.shape_cast %26 : vector<16x32xf32> to vector<1x16x32xf32>
    tpu.vector_store %arg6[%27, %c0_12, %c0_13], %30 {strides = array<i32>} : memref<8x16x32xf32, #tpu.memory_space<vmem>>, vector<1x16x32xf32>,
    %c1_i32 = arith.constant 1 : i32
    %31 = arith.index_cast %c1_i32 : i32 to index
    %c0_14 = arith.constant 0 : index
    %c0_15 = arith.constant 0 : index
    %32 = vector.load %arg1[%31, %c0_14, %c0_15] : memref<8x16x64xf32, #tpu.memory_space<vmem>>, vector<1x16x64xf32>
    %33 = vector.shape_cast %32 : vector<1x16x64xf32> to vector<16x64xf32>
    %cst_16 = arith.constant dense<0.000000e+00> : vector<16x64xf32>
    %34 = tpu.matmul %26, %0, %cst_16 {dimension_numbers = #tpu.dot_dimension_numbers<[1], [0], [0], [1], [0, 0, 1, 1], [], []>, precision = #tpu.contract_precision<fp32>} : vector<16x32xf32>, vector<32x64xf32>, vector<16x64xf32> -> vector<16x64xf32>
    %35 = arith.addf %33, %34 : vector<16x64xf32>
    %36 = arith.negf %35 : vector<16x64xf32>
    %37 = math.exp %36 : vector<16x64xf32>
    %cst_17 = arith.constant 1.000000e+00 : f32
    %38 = vector.broadcast %cst_17 : f32 to vector<16x64xf32>
    %39 = arith.addf %38, %37 : vector<16x64xf32>
    %40 = arith.divf %38, %39 : vector<16x64xf32>
    %41 = vector.extract_strided_slice %40 {offsets = [0, 0], sizes = [16, 32], strides = [1, 1]} : vector<16x64xf32> to vector<16x32xf32>
    %42 = vector.extract_strided_slice %40 {offsets = [0, 32], sizes = [16, 32], strides = [1, 1]} : vector<16x64xf32> to vector<16x32xf32>
    %43 = arith.index_cast %c1_i32 : i32 to index
    %c0_18 = arith.constant 0 : index
    %c0_19 = arith.constant 0 : index
    %44 = vector.load %arg2[%43, %c0_18, %c0_19] : memref<8x16x32xf32, #tpu.memory_space<vmem>>, vector<1x16x32xf32>
    %45 = vector.shape_cast %44 : vector<1x16x32xf32> to vector<16x32xf32>
    %46 = arith.mulf %26, %42 : vector<16x32xf32>
    %cst_20 = arith.constant dense<0.000000e+00> : vector<16x32xf32>
    %47 = tpu.matmul %46, %1, %cst_20 {dimension_numbers = #tpu.dot_dimension_numbers<[1], [0], [0], [1], [0, 0, 1, 1], [], []>, precision = #tpu.contract_precision<fp32>} : vector<16x32xf32>, vector<32x32xf32>, vector<16x32xf32> -> vector<16x32xf32>
    %48 = arith.addf %45, %47 : vector<16x32xf32>
    %49 = math.tanh %48 : vector<16x32xf32>
    %50 = arith.mulf %41, %26 : vector<16x32xf32>
    %cst_21 = arith.constant 1.000000e+00 : f32
    %51 = vector.broadcast %cst_21 : f32 to vector<16x32xf32>
    %52 = arith.subf %51, %41 : vector<16x32xf32>
    %53 = arith.mulf %52, %49 : vector<16x32xf32>
    %54 = arith.addf %50, %53 : vector<16x32xf32>
    %55 = arith.index_cast %c1_i32 : i32 to index
    %c0_22 = arith.constant 0 : index
    %c0_23 = arith.constant 0 : index
    %56 = vector.load %arg6[%55, %c0_22, %c0_23] : memref<8x16x32xf32, #tpu.memory_space<vmem>>, vector<1x16x32xf32>
    %57 = vector.shape_cast %56 : vector<1x16x32xf32> to vector<16x32xf32>
    %58 = vector.shape_cast %54 : vector<16x32xf32> to vector<1x16x32xf32>
    tpu.vector_store %arg6[%55, %c0_22, %c0_23], %58 {strides = array<i32>} : memref<8x16x32xf32, #tpu.memory_space<vmem>>, vector<1x16x32xf32>,
    %c2_i32 = arith.constant 2 : i32
    %59 = arith.index_cast %c2_i32 : i32 to index
    %c0_24 = arith.constant 0 : index
    %c0_25 = arith.constant 0 : index
    %60 = vector.load %arg1[%59, %c0_24, %c0_25] : memref<8x16x64xf32, #tpu.memory_space<vmem>>, vector<1x16x64xf32>
    %61 = vector.shape_cast %60 : vector<1x16x64xf32> to vector<16x64xf32>
    %cst_26 = arith.constant dense<0.000000e+00> : vector<16x64xf32>
    %62 = tpu.matmul %54, %0, %cst_26 {dimension_numbers = #tpu.dot_dimension_numbers<[1], [0], [0], [1], [0, 0, 1, 1], [], []>, precision = #tpu.contract_precision<fp32>} : vector<16x32xf32>, vector<32x64xf32>, vector<16x64xf32> -> vector<16x64xf32>
    %63 = arith.addf %61, %62 : vector<16x64xf32>
    %64 = arith.negf %63 : vector<16x64xf32>
    %65 = math.exp %64 : vector<16x64xf32>
    %cst_27 = arith.constant 1.000000e+00 : f32
    %66 = vector.broadcast %cst_27 : f32 to vector<16x64xf32>
    %67 = arith.addf %66, %65 : vector<16x64xf32>
    %68 = arith.divf %66, %67 : vector<16x64xf32>
    %69 = vector.extract_strided_slice %68 {offsets = [0, 0], sizes = [16, 32], strides = [1, 1]} : vector<16x64xf32> to vector<16x32xf32>
    %70 = vector.extract_strided_slice %68 {offsets = [0, 32], sizes = [16, 32], strides = [1, 1]} : vector<16x64xf32> to vector<16x32xf32>
    %71 = arith.index_cast %c2_i32 : i32 to index
    %c0_28 = arith.constant 0 : index
    %c0_29 = arith.constant 0 : index
    %72 = vector.load %arg2[%71, %c0_28, %c0_29] : memref<8x16x32xf32, #tpu.memory_space<vmem>>, vector<1x16x32xf32>
    %73 = vector.shape_cast %72 : vector<1x16x32xf32> to vector<16x32xf32>
    %74 = arith.mulf %54, %70 : vector<16x32xf32>
    %cst_30 = arith.constant dense<0.000000e+00> : vector<16x32xf32>
    %75 = tpu.matmul %74, %1, %cst_30 {dimension_numbers = #tpu.dot_dimension_numbers<[1], [0], [0], [1], [0, 0, 1, 1], [], []>, precision = #tpu.contract_precision<fp32>} : vector<16x32xf32>, vector<32x32xf32>, vector<16x32xf32> -> vector<16x32xf32>
    %76 = arith.addf %73, %75 : vector<16x32xf32>
    %77 = math.tanh %76 : vector<16x32xf32>
    %78 = arith.mulf %69, %54 : vector<16x32xf32>
    %cst_31 = arith.constant 1.000000e+00 : f32
    %79 = vector.broadcast %cst_31 : f32 to vector<16x32xf32>
    %80 = arith.subf %79, %69 : vector<16x32xf32>
    %81 = arith.mulf %80, %77 : vector<16x32xf32>
    %82 = arith.addf %78, %81 : vector<16x32xf32>
    %83 = arith.index_cast %c2_i32 : i32 to index
    %c0_32 = arith.constant 0 : index
    %c0_33 = arith.constant 0 : index
    %84 = vector.load %arg6[%83, %c0_32, %c0_33] : memref<8x16x32xf32, #tpu.memory_space<vmem>>, vector<1x16x32xf32>
    %85 = vector.shape_cast %84 : vector<1x16x32xf32> to vector<16x32xf32>
    %86 = vector.shape_cast %82 : vector<16x32xf32> to vector<1x16x32xf32>
    tpu.vector_store %arg6[%83, %c0_32, %c0_33], %86 {strides = array<i32>} : memref<8x16x32xf32, #tpu.memory_space<vmem>>, vector<1x16x32xf32>,
    %c3_i32 = arith.constant 3 : i32
    %87 = arith.index_cast %c3_i32 : i32 to index
    %c0_34 = arith.constant 0 : index
    %c0_35 = arith.constant 0 : index
    %88 = vector.load %arg1[%87, %c0_34, %c0_35] : memref<8x16x64xf32, #tpu.memory_space<vmem>>, vector<1x16x64xf32>
    %89 = vector.shape_cast %88 : vector<1x16x64xf32> to vector<16x64xf32>
    %cst_36 = arith.constant dense<0.000000e+00> : vector<16x64xf32>
    %90 = tpu.matmul %82, %0, %cst_36 {dimension_numbers = #tpu.dot_dimension_numbers<[1], [0], [0], [1], [0, 0, 1, 1], [], []>, precision = #tpu.contract_precision<fp32>} : vector<16x32xf32>, vector<32x64xf32>, vector<16x64xf32> -> vector<16x64xf32>
    %91 = arith.addf %89, %90 : vector<16x64xf32>
    %92 = arith.negf %91 : vector<16x64xf32>
    %93 = math.exp %92 : vector<16x64xf32>
    %cst_37 = arith.constant 1.000000e+00 : f32
    %94 = vector.broadcast %cst_37 : f32 to vector<16x64xf32>
    %95 = arith.addf %94, %93 : vector<16x64xf32>
    %96 = arith.divf %94, %95 : vector<16x64xf32>
    %97 = vector.extract_strided_slice %96 {offsets = [0, 0], sizes = [16, 32], strides = [1, 1]} : vector<16x64xf32> to vector<16x32xf32>
    %98 = vector.extract_strided_slice %96 {offsets = [0, 32], sizes = [16, 32], strides = [1, 1]} : vector<16x64xf32> to vector<16x32xf32>
    %99 = arith.index_cast %c3_i32 : i32 to index
    %c0_38 = arith.constant 0 : index
    %c0_39 = arith.constant 0 : index
    %100 = vector.load %arg2[%99, %c0_38, %c0_39] : memref<8x16x32xf32, #tpu.memory_space<vmem>>, vector<1x16x32xf32>
    %101 = vector.shape_cast %100 : vector<1x16x32xf32> to vector<16x32xf32>
    %102 = arith.mulf %82, %98 : vector<16x32xf32>
    %cst_40 = arith.constant dense<0.000000e+00> : vector<16x32xf32>
    %103 = tpu.matmul %102, %1, %cst_40 {dimension_numbers = #tpu.dot_dimension_numbers<[1], [0], [0], [1], [0, 0, 1, 1], [], []>, precision = #tpu.contract_precision<fp32>} : vector<16x32xf32>, vector<32x32xf32>, vector<16x32xf32> -> vector<16x32xf32>
    %104 = arith.addf %101, %103 : vector<16x32xf32>
    %105 = math.tanh %104 : vector<16x32xf32>
    %106 = arith.mulf %97, %82 : vector<16x32xf32>
    %cst_41 = arith.constant 1.000000e+00 : f32
    %107 = vector.broadcast %cst_41 : f32 to vector<16x32xf32>
    %108 = arith.subf %107, %97 : vector<16x32xf32>
    %109 = arith.mulf %108, %105 : vector<16x32xf32>
    %110 = arith.addf %106, %109 : vector<16x32xf32>
    %111 = arith.index_cast %c3_i32 : i32 to index
    %c0_42 = arith.constant 0 : index
    %c0_43 = arith.constant 0 : index
    %112 = vector.load %arg6[%111, %c0_42, %c0_43] : memref<8x16x32xf32, #tpu.memory_space<vmem>>, vector<1x16x32xf32>
    %113 = vector.shape_cast %112 : vector<1x16x32xf32> to vector<16x32xf32>
    %114 = vector.shape_cast %110 : vector<16x32xf32> to vector<1x16x32xf32>
    tpu.vector_store %arg6[%111, %c0_42, %c0_43], %114 {strides = array<i32>} : memref<8x16x32xf32, #tpu.memory_space<vmem>>, vector<1x16x32xf32>,
    %c4_i32 = arith.constant 4 : i32
    %115 = arith.index_cast %c4_i32 : i32 to index
    %c0_44 = arith.constant 0 : index
    %c0_45 = arith.constant 0 : index
    %116 = vector.load %arg1[%115, %c0_44, %c0_45] : memref<8x16x64xf32, #tpu.memory_space<vmem>>, vector<1x16x64xf32>
    %117 = vector.shape_cast %116 : vector<1x16x64xf32> to vector<16x64xf32>
    %cst_46 = arith.constant dense<0.000000e+00> : vector<16x64xf32>
    %118 = tpu.matmul %110, %0, %cst_46 {dimension_numbers = #tpu.dot_dimension_numbers<[1], [0], [0], [1], [0, 0, 1, 1], [], []>, precision = #tpu.contract_precision<fp32>} : vector<16x32xf32>, vector<32x64xf32>, vector<16x64xf32> -> vector<16x64xf32>
    %119 = arith.addf %117, %118 : vector<16x64xf32>
    %120 = arith.negf %119 : vector<16x64xf32>
    %121 = math.exp %120 : vector<16x64xf32>
    %cst_47 = arith.constant 1.000000e+00 : f32
    %122 = vector.broadcast %cst_47 : f32 to vector<16x64xf32>
    %123 = arith.addf %122, %121 : vector<16x64xf32>
    %124 = arith.divf %122, %123 : vector<16x64xf32>
    %125 = vector.extract_strided_slice %124 {offsets = [0, 0], sizes = [16, 32], strides = [1, 1]} : vector<16x64xf32> to vector<16x32xf32>
    %126 = vector.extract_strided_slice %124 {offsets = [0, 32], sizes = [16, 32], strides = [1, 1]} : vector<16x64xf32> to vector<16x32xf32>
    %127 = arith.index_cast %c4_i32 : i32 to index
    %c0_48 = arith.constant 0 : index
    %c0_49 = arith.constant 0 : index
    %128 = vector.load %arg2[%127, %c0_48, %c0_49] : memref<8x16x32xf32, #tpu.memory_space<vmem>>, vector<1x16x32xf32>
    %129 = vector.shape_cast %128 : vector<1x16x32xf32> to vector<16x32xf32>
    %130 = arith.mulf %110, %126 : vector<16x32xf32>
    %cst_50 = arith.constant dense<0.000000e+00> : vector<16x32xf32>
    %131 = tpu.matmul %130, %1, %cst_50 {dimension_numbers = #tpu.dot_dimension_numbers<[1], [0], [0], [1], [0, 0, 1, 1], [], []>, precision = #tpu.contract_precision<fp32>} : vector<16x32xf32>, vector<32x32xf32>, vector<16x32xf32> -> vector<16x32xf32>
    %132 = arith.addf %129, %131 : vector<16x32xf32>
    %133 = math.tanh %132 : vector<16x32xf32>
    %134 = arith.mulf %125, %110 : vector<16x32xf32>
    %cst_51 = arith.constant 1.000000e+00 : f32
    %135 = vector.broadcast %cst_51 : f32 to vector<16x32xf32>
    %136 = arith.subf %135, %125 : vector<16x32xf32>
    %137 = arith.mulf %136, %133 : vector<16x32xf32>
    %138 = arith.addf %134, %137 : vector<16x32xf32>
    %139 = arith.index_cast %c4_i32 : i32 to index
    %c0_52 = arith.constant 0 : index
    %c0_53 = arith.constant 0 : index
    %140 = vector.load %arg6[%139, %c0_52, %c0_53] : memref<8x16x32xf32, #tpu.memory_space<vmem>>, vector<1x16x32xf32>
    %141 = vector.shape_cast %140 : vector<1x16x32xf32> to vector<16x32xf32>
    %142 = vector.shape_cast %138 : vector<16x32xf32> to vector<1x16x32xf32>
    tpu.vector_store %arg6[%139, %c0_52, %c0_53], %142 {strides = array<i32>} : memref<8x16x32xf32, #tpu.memory_space<vmem>>, vector<1x16x32xf32>,
    %c5_i32 = arith.constant 5 : i32
    %143 = arith.index_cast %c5_i32 : i32 to index
    %c0_54 = arith.constant 0 : index
    %c0_55 = arith.constant 0 : index
    %144 = vector.load %arg1[%143, %c0_54, %c0_55] : memref<8x16x64xf32, #tpu.memory_space<vmem>>, vector<1x16x64xf32>
    %145 = vector.shape_cast %144 : vector<1x16x64xf32> to vector<16x64xf32>
    %cst_56 = arith.constant dense<0.000000e+00> : vector<16x64xf32>
    %146 = tpu.matmul %138, %0, %cst_56 {dimension_numbers = #tpu.dot_dimension_numbers<[1], [0], [0], [1], [0, 0, 1, 1], [], []>, precision = #tpu.contract_precision<fp32>} : vector<16x32xf32>, vector<32x64xf32>, vector<16x64xf32> -> vector<16x64xf32>
    %147 = arith.addf %145, %146 : vector<16x64xf32>
    %148 = arith.negf %147 : vector<16x64xf32>
    %149 = math.exp %148 : vector<16x64xf32>
    %cst_57 = arith.constant 1.000000e+00 : f32
    %150 = vector.broadcast %cst_57 : f32 to vector<16x64xf32>
    %151 = arith.addf %150, %149 : vector<16x64xf32>
    %152 = arith.divf %150, %151 : vector<16x64xf32>
    %153 = vector.extract_strided_slice %152 {offsets = [0, 0], sizes = [16, 32], strides = [1, 1]} : vector<16x64xf32> to vector<16x32xf32>
    %154 = vector.extract_strided_slice %152 {offsets = [0, 32], sizes = [16, 32], strides = [1, 1]} : vector<16x64xf32> to vector<16x32xf32>
    %155 = arith.index_cast %c5_i32 : i32 to index
    %c0_58 = arith.constant 0 : index
    %c0_59 = arith.constant 0 : index
    %156 = vector.load %arg2[%155, %c0_58, %c0_59] : memref<8x16x32xf32, #tpu.memory_space<vmem>>, vector<1x16x32xf32>
    %157 = vector.shape_cast %156 : vector<1x16x32xf32> to vector<16x32xf32>
    %158 = arith.mulf %138, %154 : vector<16x32xf32>
    %cst_60 = arith.constant dense<0.000000e+00> : vector<16x32xf32>
    %159 = tpu.matmul %158, %1, %cst_60 {dimension_numbers = #tpu.dot_dimension_numbers<[1], [0], [0], [1], [0, 0, 1, 1], [], []>, precision = #tpu.contract_precision<fp32>} : vector<16x32xf32>, vector<32x32xf32>, vector<16x32xf32> -> vector<16x32xf32>
    %160 = arith.addf %157, %159 : vector<16x32xf32>
    %161 = math.tanh %160 : vector<16x32xf32>
    %162 = arith.mulf %153, %138 : vector<16x32xf32>
    %cst_61 = arith.constant 1.000000e+00 : f32
    %163 = vector.broadcast %cst_61 : f32 to vector<16x32xf32>
    %164 = arith.subf %163, %153 : vector<16x32xf32>
    %165 = arith.mulf %164, %161 : vector<16x32xf32>
    %166 = arith.addf %162, %165 : vector<16x32xf32>
    %167 = arith.index_cast %c5_i32 : i32 to index
    %c0_62 = arith.constant 0 : index
    %c0_63 = arith.constant 0 : index
    %168 = vector.load %arg6[%167, %c0_62, %c0_63] : memref<8x16x32xf32, #tpu.memory_space<vmem>>, vector<1x16x32xf32>
    %169 = vector.shape_cast %168 : vector<1x16x32xf32> to vector<16x32xf32>
    %170 = vector.shape_cast %166 : vector<16x32xf32> to vector<1x16x32xf32>
    tpu.vector_store %arg6[%167, %c0_62, %c0_63], %170 {strides = array<i32>} : memref<8x16x32xf32, #tpu.memory_space<vmem>>, vector<1x16x32xf32>,
    %c6_i32 = arith.constant 6 : i32
    %171 = arith.index_cast %c6_i32 : i32 to index
    %c0_64 = arith.constant 0 : index
    %c0_65 = arith.constant 0 : index
    %172 = vector.load %arg1[%171, %c0_64, %c0_65] : memref<8x16x64xf32, #tpu.memory_space<vmem>>, vector<1x16x64xf32>
    %173 = vector.shape_cast %172 : vector<1x16x64xf32> to vector<16x64xf32>
    %cst_66 = arith.constant dense<0.000000e+00> : vector<16x64xf32>
    %174 = tpu.matmul %166, %0, %cst_66 {dimension_numbers = #tpu.dot_dimension_numbers<[1], [0], [0], [1], [0, 0, 1, 1], [], []>, precision = #tpu.contract_precision<fp32>} : vector<16x32xf32>, vector<32x64xf32>, vector<16x64xf32> -> vector<16x64xf32>
    %175 = arith.addf %173, %174 : vector<16x64xf32>
    %176 = arith.negf %175 : vector<16x64xf32>
    %177 = math.exp %176 : vector<16x64xf32>
    %cst_67 = arith.constant 1.000000e+00 : f32
    %178 = vector.broadcast %cst_67 : f32 to vector<16x64xf32>
    %179 = arith.addf %178, %177 : vector<16x64xf32>
    %180 = arith.divf %178, %179 : vector<16x64xf32>
    %181 = vector.extract_strided_slice %180 {offsets = [0, 0], sizes = [16, 32], strides = [1, 1]} : vector<16x64xf32> to vector<16x32xf32>
    %182 = vector.extract_strided_slice %180 {offsets = [0, 32], sizes = [16, 32], strides = [1, 1]} : vector<16x64xf32> to vector<16x32xf32>
    %183 = arith.index_cast %c6_i32 : i32 to index
    %c0_68 = arith.constant 0 : index
    %c0_69 = arith.constant 0 : index
    %184 = vector.load %arg2[%183, %c0_68, %c0_69] : memref<8x16x32xf32, #tpu.memory_space<vmem>>, vector<1x16x32xf32>
    %185 = vector.shape_cast %184 : vector<1x16x32xf32> to vector<16x32xf32>
    %186 = arith.mulf %166, %182 : vector<16x32xf32>
    %cst_70 = arith.constant dense<0.000000e+00> : vector<16x32xf32>
    %187 = tpu.matmul %186, %1, %cst_70 {dimension_numbers = #tpu.dot_dimension_numbers<[1], [0], [0], [1], [0, 0, 1, 1], [], []>, precision = #tpu.contract_precision<fp32>} : vector<16x32xf32>, vector<32x32xf32>, vector<16x32xf32> -> vector<16x32xf32>
    %188 = arith.addf %185, %187 : vector<16x32xf32>
    %189 = math.tanh %188 : vector<16x32xf32>
    %190 = arith.mulf %181, %166 : vector<16x32xf32>
    %cst_71 = arith.constant 1.000000e+00 : f32
    %191 = vector.broadcast %cst_71 : f32 to vector<16x32xf32>
    %192 = arith.subf %191, %181 : vector<16x32xf32>
    %193 = arith.mulf %192, %189 : vector<16x32xf32>
    %194 = arith.addf %190, %193 : vector<16x32xf32>
    %195 = arith.index_cast %c6_i32 : i32 to index
    %c0_72 = arith.constant 0 : index
    %c0_73 = arith.constant 0 : index
    %196 = vector.load %arg6[%195, %c0_72, %c0_73] : memref<8x16x32xf32, #tpu.memory_space<vmem>>, vector<1x16x32xf32>
    %197 = vector.shape_cast %196 : vector<1x16x32xf32> to vector<16x32xf32>
    %198 = vector.shape_cast %194 : vector<16x32xf32> to vector<1x16x32xf32>
    tpu.vector_store %arg6[%195, %c0_72, %c0_73], %198 {strides = array<i32>} : memref<8x16x32xf32, #tpu.memory_space<vmem>>, vector<1x16x32xf32>,
    %c7_i32 = arith.constant 7 : i32
    %199 = arith.index_cast %c7_i32 : i32 to index
    %c0_74 = arith.constant 0 : index
    %c0_75 = arith.constant 0 : index
    %200 = vector.load %arg1[%199, %c0_74, %c0_75] : memref<8x16x64xf32, #tpu.memory_space<vmem>>, vector<1x16x64xf32>
    %201 = vector.shape_cast %200 : vector<1x16x64xf32> to vector<16x64xf32>
    %cst_76 = arith.constant dense<0.000000e+00> : vector<16x64xf32>
    %202 = tpu.matmul %194, %0, %cst_76 {dimension_numbers = #tpu.dot_dimension_numbers<[1], [0], [0], [1], [0, 0, 1, 1], [], []>, precision = #tpu.contract_precision<fp32>} : vector<16x32xf32>, vector<32x64xf32>, vector<16x64xf32> -> vector<16x64xf32>
    %203 = arith.addf %201, %202 : vector<16x64xf32>
    %204 = arith.negf %203 : vector<16x64xf32>
    %205 = math.exp %204 : vector<16x64xf32>
    %cst_77 = arith.constant 1.000000e+00 : f32
    %206 = vector.broadcast %cst_77 : f32 to vector<16x64xf32>
    %207 = arith.addf %206, %205 : vector<16x64xf32>
    %208 = arith.divf %206, %207 : vector<16x64xf32>
    %209 = vector.extract_strided_slice %208 {offsets = [0, 0], sizes = [16, 32], strides = [1, 1]} : vector<16x64xf32> to vector<16x32xf32>
    %210 = vector.extract_strided_slice %208 {offsets = [0, 32], sizes = [16, 32], strides = [1, 1]} : vector<16x64xf32> to vector<16x32xf32>
    %211 = arith.index_cast %c7_i32 : i32 to index
    %c0_78 = arith.constant 0 : index
    %c0_79 = arith.constant 0 : index
    %212 = vector.load %arg2[%211, %c0_78, %c0_79] : memref<8x16x32xf32, #tpu.memory_space<vmem>>, vector<1x16x32xf32>
    %213 = vector.shape_cast %212 : vector<1x16x32xf32> to vector<16x32xf32>
    %214 = arith.mulf %194, %210 : vector<16x32xf32>
    %cst_80 = arith.constant dense<0.000000e+00> : vector<16x32xf32>
    %215 = tpu.matmul %214, %1, %cst_80 {dimension_numbers = #tpu.dot_dimension_numbers<[1], [0], [0], [1], [0, 0, 1, 1], [], []>, precision = #tpu.contract_precision<fp32>} : vector<16x32xf32>, vector<32x32xf32>, vector<16x32xf32> -> vector<16x32xf32>
    %216 = arith.addf %213, %215 : vector<16x32xf32>
    %217 = math.tanh %216 : vector<16x32xf32>
    %218 = arith.mulf %209, %194 : vector<16x32xf32>
    %cst_81 = arith.constant 1.000000e+00 : f32
    %219 = vector.broadcast %cst_81 : f32 to vector<16x32xf32>
    %220 = arith.subf %219, %209 : vector<16x32xf32>
    %221 = arith.mulf %220, %217 : vector<16x32xf32>
    %222 = arith.addf %218, %221 : vector<16x32xf32>
    %223 = arith.index_cast %c7_i32 : i32 to index
    %c0_82 = arith.constant 0 : index
    %c0_83 = arith.constant 0 : index
    %224 = vector.load %arg6[%223, %c0_82, %c0_83] : memref<8x16x32xf32, #tpu.memory_space<vmem>>, vector<1x16x32xf32>
    %225 = vector.shape_cast %224 : vector<1x16x32xf32> to vector<16x32xf32>
    %226 = vector.shape_cast %222 : vector<16x32xf32> to vector<1x16x32xf32>
    tpu.vector_store %arg6[%223, %c0_82, %c0_83], %226 {strides = array<i32>} : memref<8x16x32xf32, #tpu.memory_space<vmem>>, vector<1x16x32xf32>,
    %c8_i32 = arith.constant 8 : i32
    return
  }
  func.func @transform_0(%arg0: i32) -> (i32, i32, i32) {
    %c0_i32 = arith.constant 0 : i32
    %c0_i32_0 = arith.constant 0 : i32
    %c0_i32_1 = arith.constant 0 : i32
    %c0_i32_2 = arith.constant 0 : i32
    return %c0_i32, %c0_i32_0, %c0_i32_1 : i32, i32, i32
  }
  func.func @transform_1(%arg0: i32) -> (i32, i32, i32) {
    %c0_i32 = arith.constant 0 : i32
    %c0_i32_0 = arith.constant 0 : i32
    %c0_i32_1 = arith.constant 0 : i32
    %c0_i32_2 = arith.constant 0 : i32
    return %c0_i32, %c0_i32_0, %c0_i32_1 : i32, i32, i32
  }
  func.func @transform_2(%arg0: i32) -> (i32, i32) {
    %c0_i32 = arith.constant 0 : i32
    %c0_i32_0 = arith.constant 0 : i32
    %c0_i32_1 = arith.constant 0 : i32
    return %c0_i32, %c0_i32_0 : i32, i32
  }
  func.func @transform_3(%arg0: i32) -> (i32, i32) {
    %c0_i32 = arith.constant 0 : i32
    %c0_i32_0 = arith.constant 0 : i32
    %c0_i32_1 = arith.constant 0 : i32
    return %c0_i32, %c0_i32_0 : i32, i32
  }
  func.func @transform_4(%arg0: i32) -> (i32, i32) {
    %c0_i32 = arith.constant 0 : i32
    %c0_i32_0 = arith.constant 0 : i32
    %c0_i32_1 = arith.constant 0 : i32
    return %c0_i32, %c0_i32_0 : i32, i32
  }
  func.func @transform_5(%arg0: i32) -> (i32, i32, i32) {
    %c0_i32 = arith.constant 0 : i32
    %c0_i32_0 = arith.constant 0 : i32
    %c0_i32_1 = arith.constant 0 : i32
    %c0_i32_2 = arith.constant 0 : i32
    return %c0_i32, %c0_i32_0, %c0_i32_1 : i32, i32, i32
  }
}

</mosaic_0001>

<llo_original>
// kernel: tgcn_forward.1
$region0: #{tgcn_forward.1}
  #allocation0 [shape = 'u32[]', space=smem, size = 0x4, offset = 0x4, fixed_abs, tag = 'smem constant byte address 0x4 - core index']
  #allocation1 [shape = 'u32[144,128]{1,0:T(1,128)}', space=vmem, size = 0x12000, scoped, tag = 'internal scratch']
  %s0 = inlined_call_operand.vmem [shape: f32[8,16,64], index: 0, kind: input, shape index: {}]
  %s1 = inlined_call_operand.vmem [shape: f32[8,16,32], index: 1, kind: input, shape index: {}]
  %s2 = inlined_call_operand.vmem [shape: f32[32,64], index: 2, kind: input, shape index: {}]
  %s3 = inlined_call_operand.vmem [shape: f32[32,32], index: 3, kind: input, shape index: {}]
  %s4 = inlined_call_operand.vmem [shape: f32[16,32], index: 4, kind: input, shape index: {}]
  %s5 = inlined_call_operand.hbm [shape: f32[8,16,32], index: 5, kind: output, shape index: {}]
  %s6 = sld [smem:[#allocation0]]
  $region30: #{tgcn_forward.1} parent=0
    _
  %s8 = ssub.s32 1, %s6
  %s9 = scalar_select 0, %s8, %s6
  $region1: #{tgcn_forward.1} parent=0
    #allocation2 [shape = 'u8[65536]{0}', space=vmem, size = 0x10000, scoped, tag = 'output window, operand 0, single buffered']
    #allocation3 [shape = 's32[1]{0}', space=sflag, size = 0x4, scoped, tag = 'scoped memory for tgcn_forward.1']
    %10 = vsyncpa [#allocation3], 0
    // Predicated region
    $region2: #{tgcn_forward.1} parent=1 // pred_check
      _
    $region3: #{tgcn_forward.1} parent=1 // pred_check_branch
      %12 = sbr.rel (0) target = $region5
    $region4: #{tgcn_forward.1} parent=1 // pred_region
      _
    $region5: #{tgcn_forward.1} parent=1 // pred_fallthru
      _
    // Predicated region
    $region6: #{tgcn_forward.1} parent=1 // pred_check
      _
    $region7: #{tgcn_forward.1} parent=1 // pred_check_branch
      %14 = sbr.rel (0) target = $region9
    $region8: #{tgcn_forward.1} parent=1 // pred_region
      _
    $region9: #{tgcn_forward.1} parent=1 // pred_fallthru
      _
    // Predicated region
    $region10: #{tgcn_forward.1} parent=1 // pred_check
      _
    $region11: #{tgcn_forward.1} parent=1 // pred_check_branch
      %16 = sbr.rel (0) target = $region13
    $region12: #{tgcn_forward.1} parent=1 // pred_region
      _
    $region13: #{tgcn_forward.1} parent=1 // pred_fallthru
      _
    // Predicated region
    $region14: #{tgcn_forward.1} parent=1 // pred_check
      _
    $region15: #{tgcn_forward.1} parent=1 // pred_check_branch
      %18 = sbr.rel (0) target = $region17
    $region16: #{tgcn_forward.1} parent=1 // pred_region
      _
    $region17: #{tgcn_forward.1} parent=1 // pred_fallthru
      _
    // Predicated region
    $region18: #{tgcn_forward.1} parent=1 // pred_check
      _
    $region19: #{tgcn_forward.1} parent=1 // pred_check_branch
      %20 = sbr.rel (0) target = $region21
    $region20: #{tgcn_forward.1} parent=1 // pred_region
      _
    $region21: #{tgcn_forward.1} parent=1 // pred_fallthru
      _
    %v21 = vld [vmem:[%s2] sm:$0xff]
    %v22 = vld [vmem:[%s2 + $0x8] sm:$0xff]
    %v23 = vld [vmem:[%s2 + $0x10] sm:$0xff]
    %v24 = vld [vmem:[%s2 + $0x18] sm:$0xff]
    %v25 = vld [vmem:[%s3] sm:$0xff]
    %v26 = vld [vmem:[%s3 + $0x8] sm:$0xff]
    %v27 = vld [vmem:[%s3 + $0x10] sm:$0xff]
    %v28 = vld [vmem:[%s3 + $0x18] sm:$0xff]
    %v29 = vld [vmem:[%s4] sm:$0xff]
    %v30 = vld [vmem:[%s4 + $0x8] sm:$0xff]
    %v31 = vld [vmem:[%s0] sm:$0xff]
    %v32 = vld [vmem:[%s0 + $0x8] sm:$0xff]
    %vm33 = vcmask 261120
    %v35 = vsel %vm33, %v29, 0
    %v38 = vsel %vm33, %v30, 0
    %40 = vmatprep.subr.mxu0 0.0
    %41 = vmatpush1.msra.mxu0 0.0
    %42 = vmatprep.subr.mxu0 0.0
    %43 = vmatpush1.msra.mxu0 0.0
    %44 = vmatprep.subr.mxu0 0.0
    %45 = vmatpush1.msra.mxu0 0.0
    %46 = vmatprep.subr.mxu0 0.0
    %47 = vmatpush1.msra.mxu0 0.0
    %48 = vmatprep.subr.mxu0 0.0
    %49 = vmatpush1.msra.mxu0 0.0
    %50 = vmatprep.subr.mxu0 0.0
    %51 = vmatpush1.msra.mxu0 0.0
    %52 = vmatprep.subr.mxu0 0.0
    %53 = vmatpush1.msra.mxu0 0.0
    %54 = vmatprep.subr.mxu0 0.0
    %55 = vmatpush1.msra.mxu0 0.0
    %56 = vmatprep.subr.mxu0 0.0
    %57 = vmatpush1.msra.mxu0 0.0
    %58 = vmatprep.subr.mxu0 0.0
    %59 = vmatpush1.msra.mxu0 0.0
    %60 = vmatprep.subr.mxu0 0.0
    %61 = vmatpush1.msra.mxu0 0.0
    %62 = vmatprep.subr.mxu0 0.0
    %63 = vmatpush1.msra.mxu0 0.0
    %64 = vmatprep.subr.mxu0 0.0
    %v65 = vand.u32 %v24, 4294901760
    %66 = vmatpush1.msra.mxu0 %v65
    %67 = vmatprep.subr.mxu0 0.0
    %v68 = vand.u32 %v23, 4294901760
    %69 = vmatpush1.msra.mxu0 %v68
    %70 = vmatprep.subr.mxu0 0.0
    %v71 = vand.u32 %v22, 4294901760
    %72 = vmatpush1.msra.mxu0 %v71
    %73 = vmatprep.subr.mxu0 0.0
    %v74 = vand.u32 %v21, 4294901760
    %75 = vmatpush1.msra.mxu0 %v74
    %76 = vmatprep.subr.mxu0 0.0
    %77 = vmatpush2.msra.mxu0 0.0
    %78 = vmatprep.subr.mxu0 0.0
    %79 = vmatpush2.msra.mxu0 0.0
    %80 = vmatprep.subr.mxu0 0.0
    %81 = vmatpush2.msra.mxu0 0.0
    %82 = vmatprep.subr.mxu0 0.0
    %83 = vmatpush2.msra.mxu0 0.0
    %84 = vmatprep.subr.mxu0 0.0
    %85 = vmatpush2.msra.mxu0 0.0
    %86 = vmatprep.subr.mxu0 0.0
    %87 = vmatpush2.msra.mxu0 0.0
    %88 = vmatprep.subr.mxu0 0.0
    %89 = vmatpush2.msra.mxu0 0.0
    %90 = vmatprep.subr.mxu0 0.0
    %91 = vmatpush2.msra.mxu0 0.0
    %92 = vmatprep.subr.mxu0 0.0
    %93 = vmatpush2.msra.mxu0 0.0
    %94 = vmatprep.subr.mxu0 0.0
    %95 = vmatpush2.msra.mxu0 0.0
    %96 = vmatprep.subr.mxu0 0.0
    %97 = vmatpush2.msra.mxu0 0.0
    %98 = vmatprep.subr.mxu0 0.0
    %99 = vmatpush2.msra.mxu0 0.0
    %100 = vmatprep.subr.mxu0 0.0
    %101 = vmatpush2.msra.mxu0 0.0
    %102 = vmatprep.subr.mxu0 0.0
    %103 = vmatpush2.msra.mxu0 0.0
    %104 = vmatprep.subr.mxu0 0.0
    %105 = vmatpush2.msra.mxu0 0.0
    %106 = vmatprep.subr.mxu0 0.0
    %107 = vmatpush2.msra.mxu0 0.0
    %108 = vmatprep.mubr.f32.mxu0 0.0
    %v109 = vand.u32 %v35, 4294901760
    %v110 = vsub.f32 %v35, %v109
    %v111 = vand.u32 %v110, 4294901760
    %v112 = vsub.f32 %v110, %v111
    %v113 = vand.u32 %v112, 4294901760
    %114 = vmatmul.mubr.f32.gmra.mxu0 %v113
    %v115 = vpop.f32.mrf.mxu0
    %v116 = vadd.f32 0.0, %v115
    %v117 = vpop.f32.mrf.mxu0
    %118 = vmatprep.mubr.f32.mxu0 0.0
    %v119 = vand.u32 %v38, 4294901760
    %v120 = vsub.f32 %v38, %v119
    %v121 = vand.u32 %v120, 4294901760
    %v122 = vsub.f32 %v120, %v121
    %v123 = vand.u32 %v122, 4294901760
    %124 = vmatmul.mubr.f32.gmra.mxu0 %v123
    %v125 = vpop.f32.mrf.mxu0
    %v126 = vadd.f32 0.0, %v125
    %v127 = vpop.f32.mrf.mxu0
    %128 = vdwg.mxu0
    %129 = vmatprep.subr.mxu0 0.0
    %130 = vmatpush1.msra.mxu0 0.0
    %131 = vmatprep.subr.mxu0 0.0
    %132 = vmatpush1.msra.mxu0 0.0
    %133 = vmatprep.subr.mxu0 0.0
    %134 = vmatpush1.msra.mxu0 0.0
    %135 = vmatprep.subr.mxu0 0.0
    %136 = vmatpush1.msra.mxu0 0.0
    %137 = vmatprep.subr.mxu0 0.0
    %138 = vmatpush1.msra.mxu0 0.0
    %139 = vmatprep.subr.mxu0 0.0
    %140 = vmatpush1.msra.mxu0 0.0
    %141 = vmatprep.subr.mxu0 0.0
    %142 = vmatpush1.msra.mxu0 0.0
    %143 = vmatprep.subr.mxu0 0.0
    %144 = vmatpush1.msra.mxu0 0.0
    %145 = vmatprep.subr.mxu0 0.0
    %146 = vmatpush1.msra.mxu0 0.0
    %147 = vmatprep.subr.mxu0 0.0
    %148 = vmatpush1.msra.mxu0 0.0
    %149 = vmatprep.subr.mxu0 0.0
    %150 = vmatpush1.msra.mxu0 0.0
    %151 = vmatprep.subr.mxu0 0.0
    %152 = vmatpush1.msra.mxu0 0.0
    %153 = vmatprep.subr.mxu0 0.0
    %v154 = vand.u32 %v24, 4294901760
    %v155 = vsub.f32 %v24, %v154
    %v156 = vand.u32 %v155, 4294901760
    %v157 = vsub.f32 %v155, %v156
    %v158 = vand.u32 %v157, 4294901760
    %159 = vmatpush1.msra.mxu0 %v158
    %160 = vmatprep.subr.mxu0 0.0
    %v161 = vand.u32 %v23, 4294901760
    %v162 = vsub.f32 %v23, %v161
    %v163 = vand.u32 %v162, 4294901760
    %v164 = vsub.f32 %v162, %v163
    %v165 = vand.u32 %v164, 4294901760
    %166 = vmatpush1.msra.mxu0 %v165
    %167 = vmatprep.subr.mxu0 0.0
    %v168 = vand.u32 %v22, 4294901760
    %v169 = vsub.f32 %v22, %v168
    %v170 = vand.u32 %v169, 4294901760
    %v171 = vsub.f32 %v169, %v170
    %v172 = vand.u32 %v171, 4294901760
    %173 = vmatpush1.msra.mxu0 %v172
    %174 = vmatprep.subr.mxu0 0.0
    %v175 = vand.u32 %v21, 4294901760
    %v176 = vsub.f32 %v21, %v175
    %v177 = vand.u32 %v176, 4294901760
    %v178 = vsub.f32 %v176, %v177
    %v179 = vand.u32 %v178, 4294901760
    %180 = vmatpush1.msra.mxu0 %v179
    %181 = vmatprep.subr.mxu0 0.0
    %182 = vmatpush2.msra.mxu0 0.0
    %183 = vmatprep.subr.mxu0 0.0
    %184 = vmatpush2.msra.mxu0 0.0
    %185 = vmatprep.subr.mxu0 0.0
    %186 = vmatpush2.msra.mxu0 0.0
    %187 = vmatprep.subr.mxu0 0.0
    %188 = vmatpush2.msra.mxu0 0.0
    %189 = vmatprep.subr.mxu0 0.0
    %190 = vmatpush2.msra.mxu0 0.0
    %191 = vmatprep.subr.mxu0 0.0
    %192 = vmatpush2.msra.mxu0 0.0
    %193 = vmatprep.subr.mxu0 0.0
    %194 = vmatpush2.msra.mxu0 0.0
    %195 = vmatprep.subr.mxu0 0.0
    %196 = vmatpush2.msra.mxu0 0.0
    %197 = vmatprep.subr.mxu0 0.0
    %198 = vmatpush2.msra.mxu0 0.0
    %199 = vmatprep.subr.mxu0 0.0
    %200 = vmatpush2.msra.mxu0 0.0
    %201 = vmatprep.subr.mxu0 0.0
    %202 = vmatpush2.msra.mxu0 0.0
    %203 = vmatprep.subr.mxu0 0.0
    %204 = vmatpush2.msra.mxu0 0.0
    %205 = vmatprep.subr.mxu0 0.0
    %206 = vmatpush2.msra.mxu0 0.0
    %207 = vmatprep.subr.mxu0 0.0
    %208 = vmatpush2.msra.mxu0 0.0
    %209 = vmatprep.subr.mxu0 0.0
    %210 = vmatpush2.msra.mxu0 0.0
    %211 = vmatprep.subr.mxu0 0.0
    %212 = vmatpush2.msra.mxu0 0.0
    %213 = vmatprep.mubr.f32.mxu0 0.0
    %v214 = vand.u32 %v35, 4294901760
    %215 = vmatmul.mubr.f32.gmra.mxu0 %v214
    %v216 = vpop.f32.mrf.mxu0
    %v217 = vadd.f32 %v116, %v216
    %v218 = vpop.f32.mrf.mxu0
    %219 = vmatprep.mubr.f32.mxu0 0.0
    %v220 = vand.u32 %v38, 4294901760
    %221 = vmatmul.mubr.f32.gmra.mxu0 %v220
    %v222 = vpop.f32.mrf.mxu0
    %v223 = vadd.f32 %v126, %v222
    %v224 = vpop.f32.mrf.mxu0
    %225 = vdwg.mxu0
    %226 = vmatprep.subr.mxu0 0.0
    %227 = vmatpush1.msra.mxu0 0.0
    %228 = vmatprep.subr.mxu0 0.0
    %229 = vmatpush1.msra.mxu0 0.0
    %230 = vmatprep.subr.mxu0 0.0
    %231 = vmatpush1.msra.mxu0 0.0
    %232 = vmatprep.subr.mxu0 0.0
    %233 = vmatpush1.msra.mxu0 0.0
    %234 = vmatprep.subr.mxu0 0.0
    %235 = vmatpush1.msra.mxu0 0.0
    %236 = vmatprep.subr.mxu0 0.0
    %237 = vmatpush1.msra.mxu0 0.0
    %238 = vmatprep.subr.mxu0 0.0
    %239 = vmatpush1.msra.mxu0 0.0
    %240 = vmatprep.subr.mxu0 0.0
    %241 = vmatpush1.msra.mxu0 0.0
    %242 = vmatprep.subr.mxu0 0.0
    %243 = vmatpush1.msra.mxu0 0.0
    %244 = vmatprep.subr.mxu0 0.0
    %245 = vmatpush1.msra.mxu0 0.0
    %246 = vmatprep.subr.mxu0 0.0
    %247 = vmatpush1.msra.mxu0 0.0
    %248 = vmatprep.subr.mxu0 0.0
    %249 = vmatpush1.msra.mxu0 0.0
    %250 = vmatprep.subr.mxu0 0.0
    %v251 = vand.u32 %v24, 4294901760
    %v252 = vsub.f32 %v24, %v251
    %253 = vmatpush1.msra.mxu0 %v252
    %254 = vmatprep.subr.mxu0 0.0
    %v255 = vand.u32 %v23, 4294901760
    %v256 = vsub.f32 %v23, %v255
    %257 = vmatpush1.msra.mxu0 %v256
    %258 = vmatprep.subr.mxu0 0.0
    %v259 = vand.u32 %v22, 4294901760
    %v260 = vsub.f32 %v22, %v259
    %261 = vmatpush1.msra.mxu0 %v260
    %262 = vmatprep.subr.mxu0 0.0
    %v263 = vand.u32 %v21, 4294901760
    %v264 = vsub.f32 %v21, %v263
    %265 = vmatpush1.msra.mxu0 %v264
    %266 = vmatprep.subr.mxu0 0.0
    %267 = vmatpush2.msra.mxu0 0.0
    %268 = vmatprep.subr.mxu0 0.0
    %269 = vmatpush2.msra.mxu0 0.0
    %270 = vmatprep.subr.mxu0 0.0
    %271 = vmatpush2.msra.mxu0 0.0
    %272 = vmatprep.subr.mxu0 0.0
    %273 = vmatpush2.msra.mxu0 0.0
    %274 = vmatprep.subr.mxu0 0.0
    %275 = vmatpush2.msra.mxu0 0.0
    %276 = vmatprep.subr.mxu0 0.0
    %277 = vmatpush2.msra.mxu0 0.0
    %278 = vmatprep.subr.mxu0 0.0
    %279 = vmatpush2.msra.mxu0 0.0
    %280 = vmatprep.subr.mxu0 0.0
    %281 = vmatpush2.msra.mxu0 0.0
    %282 = vmatprep.subr.mxu0 0.0
    %283 = vmatpush2.msra.mxu0 0.0
    %284 = vmatprep.subr.mxu0 0.0
    %285 = vmatpush2.msra.mxu0 0.0
    %286 = vmatprep.subr.mxu0 0.0
    %287 = vmatpush2.msra.mxu0 0.0
    %288 = vmatprep.subr.mxu0 0.0
    %289 = vmatpush2.msra.mxu0 0.0
    %290 = vmatprep.subr.mxu0 0.0
    %291 = vmatpush2.msra.mxu0 0.0
    %292 = vmatprep.subr.mxu0 0.0
    %293 = vmatpush2.msra.mxu0 0.0
    %294 = vmatprep.subr.mxu0 0.0
    %295 = vmatpush2.msra.mxu0 0.0
    %296 = vmatprep.subr.mxu0 0.0
    %297 = vmatpush2.msra.mxu0 0.0
    %298 = vmatprep.mubr.f32.mxu0 0.0
    %v299 = vand.u32 %v35, 4294901760
    %v300 = vsub.f32 %v35, %v299
    %301 = vmatmul.mubr.f32.gmra.mxu0 %v300
    %v302 = vpop.f32.mrf.mxu0
    %v303 = vadd.f32 %v217, %v302
    %v304 = vpop.f32.mrf.mxu0
    %305 = vmatprep.mubr.f32.mxu0 0.0
    %v306 = vand.u32 %v38, 4294901760
    %v307 = vsub.f32 %v38, %v306
    %308 = vmatmul.mubr.f32.gmra.mxu0 %v307
    %v309 = vpop.f32.mrf.mxu0
    %v310 = vadd.f32 %v223, %v309
    %v311 = vpop.f32.mrf.mxu0
    %312 = vdwg.mxu0
    %313 = vmatprep.subr.mxu0 0.0
    %314 = vmatpush1.msra.mxu0 0.0
    %315 = vmatprep.subr.mxu0 0.0
    %316 = vmatpush1.msra.mxu0 0.0
    %317 = vmatprep.subr.mxu0 0.0
    %318 = vmatpush1.msra.mxu0 0.0
    %319 = vmatprep.subr.mxu0 0.0
    %320 = vmatpush1.msra.mxu0 0.0
    %321 = vmatprep.subr.mxu0 0.0
    %322 = vmatpush1.msra.mxu0 0.0
    %323 = vmatprep.subr.mxu0 0.0
    %324 = vmatpush1.msra.mxu0 0.0
    %325 = vmatprep.subr.mxu0 0.0
    %326 = vmatpush1.msra.mxu0 0.0
    %327 = vmatprep.subr.mxu0 0.0
    %328 = vmatpush1.msra.mxu0 0.0
    %329 = vmatprep.subr.mxu0 0.0
    %330 = vmatpush1.msra.mxu0 0.0
    %331 = vmatprep.subr.mxu0 0.0
    %332 = vmatpush1.msra.mxu0 0.0
    %333 = vmatprep.subr.mxu0 0.0
    %334 = vmatpush1.msra.mxu0 0.0
    %335 = vmatprep.subr.mxu0 0.0
    %336 = vmatpush1.msra.mxu0 0.0
    %337 = vmatprep.subr.mxu0 0.0
    %v338 = vand.u32 %v24, 4294901760
    %339 = vmatpush1.msra.mxu0 %v338
    %340 = vmatprep.subr.mxu0 0.0
    %v341 = vand.u32 %v23, 4294901760
    %342 = vmatpush1.msra.mxu0 %v341
    %343 = vmatprep.subr.mxu0 0.0
    %v344 = vand.u32 %v22, 4294901760
    %345 = vmatpush1.msra.mxu0 %v344
    %346 = vmatprep.subr.mxu0 0.0
    %v347 = vand.u32 %v21, 4294901760
    %348 = vmatpush1.msra.mxu0 %v347
    %349 = vmatprep.subr.mxu0 0.0
    %350 = vmatpush2.msra.mxu0 0.0
    %351 = vmatprep.subr.mxu0 0.0
    %352 = vmatpush2.msra.mxu0 0.0
    %353 = vmatprep.subr.mxu0 0.0
    %354 = vmatpush2.msra.mxu0 0.0
    %355 = vmatprep.subr.mxu0 0.0
    %356 = vmatpush2.msra.mxu0 0.0
    %357 = vmatprep.subr.mxu0 0.0
    %358 = vmatpush2.msra.mxu0 0.0
    %359 = vmatprep.subr.mxu0 0.0
    %360 = vmatpush2.msra.mxu0 0.0
    %361 = vmatprep.subr.mxu0 0.0
    %362 = vmatpush2.msra.mxu0 0.0
    %363 = vmatprep.subr.mxu0 0.0
    %364 = vmatpush2.msra.mxu0 0.0
    %365 = vmatprep.subr.mxu0 0.0
    %366 = vmatpush2.msra.mxu0 0.0
    %367 = vmatprep.subr.mxu0 0.0
    %368 = vmatpush2.msra.mxu0 0.0
    %369 = vmatprep.subr.mxu0 0.0
    %370 = vmatpush2.msra.mxu0 0.0
    %371 = vmatprep.subr.mxu0 0.0
    %372 = vmatpush2.msra.mxu0 0.0
    %373 = vmatprep.subr.mxu0 0.0
    %374 = vmatpush2.msra.mxu0 0.0
    %375 = vmatprep.subr.mxu0 0.0
    %376 = vmatpush2.msra.mxu0 0.0
    %377 = vmatprep.subr.mxu0 0.0
    %378 = vmatpush2.msra.mxu0 0.0
    %379 = vmatprep.subr.mxu0 0.0
    %380 = vmatpush2.msra.mxu0 0.0
    %381 = vmatprep.mubr.f32.mxu0 0.0
    %v382 = vand.u32 %v35, 4294901760
    %v383 = vsub.f32 %v35, %v382
    %v384 = vand.u32 %v383, 4294901760
    %385 = vmatmul.mubr.f32.gmra.mxu0 %v384
    %v386 = vpop.f32.mrf.mxu0
    %v387 = vadd.f32 %v303, %v386
    %v388 = vpop.f32.mrf.mxu0
    %389 = vmatprep.mubr.f32.mxu0 0.0
    %v390 = vand.u32 %v38, 4294901760
    %v391 = vsub.f32 %v38, %v390
    %v392 = vand.u32 %v391, 4294901760
    %393 = vmatmul.mubr.f32.gmra.mxu0 %v392
    %v394 = vpop.f32.mrf.mxu0
    %v395 = vadd.f32 %v310, %v394
    %v396 = vpop.f32.mrf.mxu0
    %397 = vdwg.mxu0
    %398 = vmatprep.subr.mxu0 0.0
    %399 = vmatpush1.msra.mxu0 0.0
    %400 = vmatprep.subr.mxu0 0.0
    %401 = vmatpush1.msra.mxu0 0.0
    %402 = vmatprep.subr.mxu0 0.0
    %403 = vmatpush1.msra.mxu0 0.0
    %404 = vmatprep.subr.mxu0 0.0
    %405 = vmatpush1.msra.mxu0 0.0
    %406 = vmatprep.subr.mxu0 0.0
    %407 = vmatpush1.msra.mxu0 0.0
    %408 = vmatprep.subr.mxu0 0.0
    %409 = vmatpush1.msra.mxu0 0.0
    %410 = vmatprep.subr.mxu0 0.0
    %411 = vmatpush1.msra.mxu0 0.0
    %412 = vmatprep.subr.mxu0 0.0
    %413 = vmatpush1.msra.mxu0 0.0
    %414 = vmatprep.subr.mxu0 0.0
    %415 = vmatpush1.msra.mxu0 0.0
    %416 = vmatprep.subr.mxu0 0.0
    %417 = vmatpush1.msra.mxu0 0.0
    %418 = vmatprep.subr.mxu0 0.0
    %419 = vmatpush1.msra.mxu0 0.0
    %420 = vmatprep.subr.mxu0 0.0
    %421 = vmatpush1.msra.mxu0 0.0
    %422 = vmatprep.subr.mxu0 0.0
    %v423 = vand.u32 %v24, 4294901760
    %v424 = vsub.f32 %v24, %v423
    %v425 = vand.u32 %v424, 4294901760
    %426 = vmatpush1.msra.mxu0 %v425
    %427 = vmatprep.subr.mxu0 0.0
    %v428 = vand.u32 %v23, 4294901760
    %v429 = vsub.f32 %v23, %v428
    %v430 = vand.u32 %v429, 4294901760
    %431 = vmatpush1.msra.mxu0 %v430
    %432 = vmatprep.subr.mxu0 0.0
    %v433 = vand.u32 %v22, 4294901760
    %v434 = vsub.f32 %v22, %v433
    %v435 = vand.u32 %v434, 4294901760
    %436 = vmatpush1.msra.mxu0 %v435
    %437 = vmatprep.subr.mxu0 0.0
    %v438 = vand.u32 %v21, 4294901760
    %v439 = vsub.f32 %v21, %v438
    %v440 = vand.u32 %v439, 4294901760
    %441 = vmatpush1.msra.mxu0 %v440
    %442 = vmatprep.subr.mxu0 0.0
    %443 = vmatpush2.msra.mxu0 0.0
    %444 = vmatprep.subr.mxu0 0.0
    %445 = vmatpush2.msra.mxu0 0.0
    %446 = vmatprep.subr.mxu0 0.0
    %447 = vmatpush2.msra.mxu0 0.0
    %448 = vmatprep.subr.mxu0 0.0
    %449 = vmatpush2.msra.mxu0 0.0
    %450 = vmatprep.subr.mxu0 0.0
    %451 = vmatpush2.msra.mxu0 0.0
    %452 = vmatprep.subr.mxu0 0.0
    %453 = vmatpush2.msra.mxu0 0.0
    %454 = vmatprep.subr.mxu0 0.0
    %455 = vmatpush2.msra.mxu0 0.0
    %456 = vmatprep.subr.mxu0 0.0
    %457 = vmatpush2.msra.mxu0 0.0
    %458 = vmatprep.subr.mxu0 0.0
    %459 = vmatpush2.msra.mxu0 0.0
    %460 = vmatprep.subr.mxu0 0.0
    %461 = vmatpush2.msra.mxu0 0.0
    %462 = vmatprep.subr.mxu0 0.0
    %463 = vmatpush2.msra.mxu0 0.0
    %464 = vmatprep.subr.mxu0 0.0
    %465 = vmatpush2.msra.mxu0 0.0
    %466 = vmatprep.subr.mxu0 0.0
    %467 = vmatpush2.msra.mxu0 0.0
    %468 = vmatprep.subr.mxu0 0.0
    %469 = vmatpush2.msra.mxu0 0.0
    %470 = vmatprep.subr.mxu0 0.0
    %471 = vmatpush2.msra.mxu0 0.0
    %472 = vmatprep.subr.mxu0 0.0
    %473 = vmatpush2.msra.mxu0 0.0
    %474 = vmatprep.mubr.f32.mxu0 0.0
    %v475 = vand.u32 %v35, 4294901760
    %476 = vmatmul.mubr.f32.gmra.mxu0 %v475
    %v477 = vpop.f32.mrf.mxu0
    %v478 = vadd.f32 %v387, %v477
    %v479 = vpop.f32.mrf.mxu0
    %480 = vmatprep.mubr.f32.mxu0 0.0
    %v481 = vand.u32 %v38, 4294901760
    %482 = vmatmul.mubr.f32.gmra.mxu0 %v481
    %v483 = vpop.f32.mrf.mxu0
    %v484 = vadd.f32 %v395, %v483
    %v485 = vpop.f32.mrf.mxu0
    %486 = vdwg.mxu0
    %487 = vmatprep.subr.mxu0 0.0
    %488 = vmatpush1.msra.mxu0 0.0
    %489 = vmatprep.subr.mxu0 0.0
    %490 = vmatpush1.msra.mxu0 0.0
    %491 = vmatprep.subr.mxu0 0.0
    %492 = vmatpush1.msra.mxu0 0.0
    %493 = vmatprep.subr.mxu0 0.0
    %494 = vmatpush1.msra.mxu0 0.0
    %495 = vmatprep.subr.mxu0 0.0
    %496 = vmatpush1.msra.mxu0 0.0
    %497 = vmatprep.subr.mxu0 0.0
    %498 = vmatpush1.msra.mxu0 0.0
    %499 = vmatprep.subr.mxu0 0.0
    %500 = vmatpush1.msra.mxu0 0.0
    %501 = vmatprep.subr.mxu0 0.0
    %502 = vmatpush1.msra.mxu0 0.0
    %503 = vmatprep.subr.mxu0 0.0
    %504 = vmatpush1.msra.mxu0 0.0
    %505 = vmatprep.subr.mxu0 0.0
    %506 = vmatpush1.msra.mxu0 0.0
    %507 = vmatprep.subr.mxu0 0.0
    %508 = vmatpush1.msra.mxu0 0.0
    %509 = vmatprep.subr.mxu0 0.0
    %510 = vmatpush1.msra.mxu0 0.0
    %511 = vmatprep.subr.mxu0 0.0
    %v512 = vand.u32 %v24, 4294901760
    %513 = vmatpush1.msra.mxu0 %v512
    %514 = vmatprep.subr.mxu0 0.0
    %v515 = vand.u32 %v23, 4294901760
    %516 = vmatpush1.msra.mxu0 %v515
    %517 = vmatprep.subr.mxu0 0.0
    %v518 = vand.u32 %v22, 4294901760
    %519 = vmatpush1.msra.mxu0 %v518
    %520 = vmatprep.subr.mxu0 0.0
    %v521 = vand.u32 %v21, 4294901760
    %522 = vmatpush1.msra.mxu0 %v521
    %523 = vmatprep.subr.mxu0 0.0
    %524 = vmatpush2.msra.mxu0 0.0
    %525 = vmatprep.subr.mxu0 0.0
    %526 = vmatpush2.msra.mxu0 0.0
    %527 = vmatprep.subr.mxu0 0.0
    %528 = vmatpush2.msra.mxu0 0.0
    %529 = vmatprep.subr.mxu0 0.0
    %530 = vmatpush2.msra.mxu0 0.0
    %531 = vmatprep.subr.mxu0 0.0
    %532 = vmatpush2.msra.mxu0 0.0
    %533 = vmatprep.subr.mxu0 0.0
    %534 = vmatpush2.msra.mxu0 0.0
    %535 = vmatprep.subr.mxu0 0.0
    %536 = vmatpush2.msra.mxu0 0.0
    %537 = vmatprep.subr.mxu0 0.0
    %538 = vmatpush2.msra.mxu0 0.0
    %539 = vmatprep.subr.mxu0 0.0
    %540 = vmatpush2.msra.mxu0 0.0
    %541 = vmatprep.subr.mxu0 0.0
    %542 = vmatpush2.msra.mxu0 0.0
    %543 = vmatprep.subr.mxu0 0.0
    %544 = vmatpush2.msra.mxu0 0.0
    %545 = vmatprep.subr.mxu0 0.0
    %546 = vmatpush2.msra.mxu0 0.0
    %547 = vmatprep.subr.mxu0 0.0
    %548 = vmatpush2.msra.mxu0 0.0
    %549 = vmatprep.subr.mxu0 0.0
    %550 = vmatpush2.msra.mxu0 0.0
    %551 = vmatprep.subr.mxu0 0.0
    %552 = vmatpush2.msra.mxu0 0.0
    %553 = vmatprep.subr.mxu0 0.0
    %554 = vmatpush2.msra.mxu0 0.0
    %555 = vmatprep.mubr.f32.mxu0 0.0
    %v556 = vand.u32 %v35, 4294901760
    %557 = vmatmul.mubr.f32.gmra.mxu0 %v556
    %v558 = vpop.f32.mrf.mxu0
    %v559 = vadd.f32 %v478, %v558
    %v560 = vpop.f32.mrf.mxu0
    %561 = vmatprep.mubr.f32.mxu0 0.0
    %v562 = vand.u32 %v38, 4294901760
    %563 = vmatmul.mubr.f32.gmra.mxu0 %v562
    %v564 = vpop.f32.mrf.mxu0
    %v565 = vadd.f32 %v484, %v564
    %v566 = vpop.f32.mrf.mxu0
    %567 = vdwg.mxu0
    %v568 = vadd.f32 %v31, %v559
    %v569 = vadd.f32 %v32, %v565
    %v570 = vxor.u32 %v568, 2147483648
    %v571 = vxor.u32 %v569, 2147483648
    %v572 = vmul.f32 %v570, 1.442695
    %v573 = vpow.pop %v572
    %v574 = vmul.f32 %v571, 1.442695
    %v575 = vpow.pop %v574
    %v576 = vadd.f32 %v573, 1.0
    %v577 = vadd.f32 %v575, 1.0
    %v578 = vrcp.pop %v576
    %v579 = vmul.f32 1.0, %v578
    %v580 = vrcp.pop %v577
    %v581 = vmul.f32 1.0, %v580
    %v582 = vld [vmem:[%s1] sm:$0xff]
    %v583 = vld [vmem:[%s1 + $0x8] sm:$0xff]
    %586 = vrot.lane.b32.xlu0 %v579, 96
    %v587 = vpop.permute.xlu0 %586
    %588 = vrot.lane.b32.xlu0 %v581, 96
    %v589 = vpop.permute.xlu0 %588
    %v592 = vmul.f32 %v29, %v587
    %v593 = vmul.f32 %v30, %v589
    %v595 = vsel %vm33, %v592, 0
    %v598 = vsel %vm33, %v593, 0
    %600 = vmatprep.subr.mxu0 0.0
    %601 = vmatpush1.msra.mxu0 0.0
    %602 = vmatprep.subr.mxu0 0.0
    %603 = vmatpush1.msra.mxu0 0.0
    %604 = vmatprep.subr.mxu0 0.0
    %605 = vmatpush1.msra.mxu0 0.0
    %606 = vmatprep.subr.mxu0 0.0
    %607 = vmatpush1.msra.mxu0 0.0
    %608 = vmatprep.subr.mxu0 0.0
    %609 = vmatpush1.msra.mxu0 0.0
    %610 = vmatprep.subr.mxu0 0.0
    %611 = vmatpush1.msra.mxu0 0.0
    %612 = vmatprep.subr.mxu0 0.0
    %613 = vmatpush1.msra.mxu0 0.0
    %614 = vmatprep.subr.mxu0 0.0
    %615 = vmatpush1.msra.mxu0 0.0
    %616 = vmatprep.subr.mxu0 0.0
    %617 = vmatpush1.msra.mxu0 0.0
    %618 = vmatprep.subr.mxu0 0.0
    %619 = vmatpush1.msra.mxu0 0.0
    %620 = vmatprep.subr.mxu0 0.0
    %621 = vmatpush1.msra.mxu0 0.0
    %622 = vmatprep.subr.mxu0 0.0
    %623 = vmatpush1.msra.mxu0 0.0
    %624 = vmatprep.subr.mxu0 0.0
    %v625 = vand.u32 %v28, 4294901760
    %626 = vmatpush1.msra.mxu0 %v625
    %627 = vmatprep.subr.mxu0 0.0
    %v628 = vand.u32 %v27, 4294901760
    %629 = vmatpush1.msra.mxu0 %v628
    %630 = vmatprep.subr.mxu0 0.0
    %v631 = vand.u32 %v26, 4294901760
    %632 = vmatpush1.msra.mxu0 %v631
    %633 = vmatprep.subr.mxu0 0.0
    %v634 = vand.u32 %v25, 4294901760
    %635 = vmatpush1.msra.mxu0 %v634
    %636 = vmatprep.subr.mxu0 0.0
    %637 = vmatpush2.msra.mxu0 0.0
    %638 = vmatprep.subr.mxu0 0.0
    %639 = vmatpush2.msra.mxu0 0.0
    %640 = vmatprep.subr.mxu0 0.0
    %641 = vmatpush2.msra.mxu0 0.0
    %642 = vmatprep.subr.mxu0 0.0
    %643 = vmatpush2.msra.mxu0 0.0
    %644 = vmatprep.subr.mxu0 0.0
    %645 = vmatpush2.msra.mxu0 0.0
    %646 = vmatprep.subr.mxu0 0.0
    %647 = vmatpush2.msra.mxu0 0.0
    %648 = vmatprep.subr.mxu0 0.0
    %649 = vmatpush2.msra.mxu0 0.0
    %650 = vmatprep.subr.mxu0 0.0
    %651 = vmatpush2.msra.mxu0 0.0
    %652 = vmatprep.subr.mxu0 0.0
    %653 = vmatpush2.msra.mxu0 0.0
    %654 = vmatprep.subr.mxu0 0.0
    %655 = vmatpush2.msra.mxu0 0.0
    %656 = vmatprep.subr.mxu0 0.0
    %657 = vmatpush2.msra.mxu0 0.0
    %658 = vmatprep.subr.mxu0 0.0
    %659 = vmatpush2.msra.mxu0 0.0
    %660 = vmatprep.subr.mxu0 0.0
    %661 = vmatpush2.msra.mxu0 0.0
    %662 = vmatprep.subr.mxu0 0.0
    %663 = vmatpush2.msra.mxu0 0.0
    %664 = vmatprep.subr.mxu0 0.0
    %665 = vmatpush2.msra.mxu0 0.0
    %666 = vmatprep.subr.mxu0 0.0
    %667 = vmatpush2.msra.mxu0 0.0
    %668 = vmatprep.mubr.f32.mxu0 0.0
    %v669 = vand.u32 %v595, 4294901760
    %v670 = vsub.f32 %v595, %v669
    %v671 = vand.u32 %v670, 4294901760
    %v672 = vsub.f32 %v670, %v671
    %v673 = vand.u32 %v672, 4294901760
    %674 = vmatmul.mubr.f32.gmra.mxu0 %v673
    %v675 = vpop.f32.mrf.mxu0
    %v676 = vadd.f32 0.0, %v675
    %v677 = vpop.f32.mrf.mxu0
    %678 = vmatprep.mubr.f32.mxu0 0.0
    %v679 = vand.u32 %v598, 4294901760
    %v680 = vsub.f32 %v598, %v679
    %v681 = vand.u32 %v680, 4294901760
    %v682 = vsub.f32 %v680, %v681
    %v683 = vand.u32 %v682, 4294901760
    %684 = vmatmul.mubr.f32.gmra.mxu0 %v683
    %v685 = vpop.f32.mrf.mxu0
    %v686 = vadd.f32 0.0, %v685
    %v687 = vpop.f32.mrf.mxu0
    %688 = vdwg.mxu0
    %689 = vmatprep.subr.mxu0 0.0
    %690 = vmatpush1.msra.mxu0 0.0
    %691 = vmatprep.subr.mxu0 0.0
    %692 = vmatpush1.msra.mxu0 0.0
    %693 = vmatprep.subr.mxu0 0.0
    %694 = vmatpush1.msra.mxu0 0.0
    %695 = vmatprep.subr.mxu0 0.0
    %696 = vmatpush1.msra.mxu0 0.0
    %697 = vmatprep.subr.mxu0 0.0
    %698 = vmatpush1.msra.mxu0 0.0
    %699 = vmatprep.subr.mxu0 0.0
    %700 = vmatpush1.msra.mxu0 0.0
    %701 = vmatprep.subr.mxu0 0.0
    %702 = vmatpush1.msra.mxu0 0.0
    %703 = vmatprep.subr.mxu0 0.0
    %704 = vmatpush1.msra.mxu0 0.0
    %705 = vmatprep.subr.mxu0 0.0
    %706 = vmatpush1.msra.mxu0 0.0
    %707 = vmatprep.subr.mxu0 0.0
    %708 = vmatpush1.msra.mxu0 0.0
    %709 = vmatprep.subr.mxu0 0.0
    %710 = vmatpush1.msra.mxu0 0.0
    %711 = vmatprep.subr.mxu0 0.0
    %712 = vmatpush1.msra.mxu0 0.0
    %713 = vmatprep.subr.mxu0 0.0
    %v714 = vand.u32 %v28, 4294901760
    %v715 = vsub.f32 %v28, %v714
    %v716 = vand.u32 %v715, 4294901760
    %v717 = vsub.f32 %v715, %v716
    %v718 = vand.u32 %v717, 4294901760
    %719 = vmatpush1.msra.mxu0 %v718
    %720 = vmatprep.subr.mxu0 0.0
    %v721 = vand.u32 %v27, 4294901760
    %v722 = vsub.f32 %v27, %v721
    %v723 = vand.u32 %v722, 4294901760
    %v724 = vsub.f32 %v722, %v723
    %v725 = vand.u32 %v724, 4294901760
    %726 = vmatpush1.msra.mxu0 %v725
    %727 = vmatprep.subr.mxu0 0.0
    %v728 = vand.u32 %v26, 4294901760
    %v729 = vsub.f32 %v26, %v728
    %v730 = vand.u32 %v729, 4294901760
    %v731 = vsub.f32 %v729, %v730
    %v732 = vand.u32 %v731, 4294901760
    %733 = vmatpush1.msra.mxu0 %v732
    %734 = vmatprep.subr.mxu0 0.0
    %v735 = vand.u32 %v25, 4294901760
    %v736 = vsub.f32 %v25, %v735
    %v737 = vand.u32 %v736, 4294901760
    %v738 = vsub.f32 %v736, %v737
    %v739 = vand.u32 %v738, 4294901760
    %740 = vmatpush1.msra.mxu0 %v739
    %741 = vmatprep.subr.mxu0 0.0
    %742 = vmatpush2.msra.mxu0 0.0
    %743 = vmatprep.subr.mxu0 0.0
    %744 = vmatpush2.msra.mxu0 0.0
    %745 = vmatprep.subr.mxu0 0.0
    %746 = vmatpush2.msra.mxu0 0.0
    %747 = vmatprep.subr.mxu0 0.0
    %748 = vmatpush2.msra.mxu0 0.0
    %749 = vmatprep.subr.mxu0 0.0
    %750 = vmatpush2.msra.mxu0 0.0
    %751 = vmatprep.subr.mxu0 0.0
    %752 = vmatpush2.msra.mxu0 0.0
    %753 = vmatprep.subr.mxu0 0.0
    %754 = vmatpush2.msra.mxu0 0.0
    %755 = vmatprep.subr.mxu0 0.0
    %756 = vmatpush2.msra.mxu0 0.0
    %757 = vmatprep.subr.mxu0 0.0
    %758 = vmatpush2.msra.mxu0 0.0
    %759 = vmatprep.subr.mxu0 0.0
    %760 = vmatpush2.msra.mxu0 0.0
    %761 = vmatprep.subr.mxu0 0.0
    %762 = vmatpush2.msra.mxu0 0.0
    %763 = vmatprep.subr.mxu0 0.0
    %764 = vmatpush2.msra.mxu0 0.0
    %765 = vmatprep.subr.mxu0 0.0
    %766 = vmatpush2.msra.mxu0 0.0
    %767 = vmatprep.subr.mxu0 0.0
    %768 = vmatpush2.msra.mxu0 0.0
    %769 = vmatprep.subr.mxu0 0.0
    %770 = vmatpush2.msra.mxu0 0.0
    %771 = vmatprep.subr.mxu0 0.0
    %772 = vmatpush2.msra.mxu0 0.0
    %773 = vmatprep.mubr.f32.mxu0 0.0
    %v774 = vand.u32 %v595, 4294901760
    %775 = vmatmul.mubr.f32.gmra.mxu0 %v774
    %v776 = vpop.f32.mrf.mxu0
    %v777 = vadd.f32 %v676, %v776
    %v778 = vpop.f32.mrf.mxu0
    %779 = vmatprep.mubr.f32.mxu0 0.0
    %v780 = vand.u32 %v598, 4294901760
    %781 = vmatmul.mubr.f32.gmra.mxu0 %v780
    %v782 = vpop.f32.mrf.mxu0
    %v783 = vadd.f32 %v686, %v782
    %v784 = vpop.f32.mrf.mxu0
    %785 = vdwg.mxu0
    %786 = vmatprep.subr.mxu0 0.0
    %787 = vmatpush1.msra.mxu0 0.0
    %788 = vmatprep.subr.mxu0 0.0
    %789 = vmatpush1.msra.mxu0 0.0
    %790 = vmatprep.subr.mxu0 0.0
    %791 = vmatpush1.msra.mxu0 0.0
    %792 = vmatprep.subr.mxu0 0.0
    %793 = vmatpush1.msra.mxu0 0.0
    %794 = vmatprep.subr.mxu0 0.0
    %795 = vmatpush1.msra.mxu0 0.0
    %796 = vmatprep.subr.mxu0 0.0
    %797 = vmatpush1.msra.mxu0 0.0
    %798 = vmatprep.subr.mxu0 0.0
    %799 = vmatpush1.msra.mxu0 0.0
    %800 = vmatprep.subr.mxu0 0.0
    %801 = vmatpush1.msra.mxu0 0.0
    %802 = vmatprep.subr.mxu0 0.0
    %803 = vmatpush1.msra.mxu0 0.0
    %804 = vmatprep.subr.mxu0 0.0
    %805 = vmatpush1.msra.mxu0 0.0
    %806 = vmatprep.subr.mxu0 0.0
    %807 = vmatpush1.msra.mxu0 0.0
    %808 = vmatprep.subr.mxu0 0.0
    %809 = vmatpush1.msra.mxu0 0.0
    %810 = vmatprep.subr.mxu0 0.0
    %v811 = vand.u32 %v28, 4294901760
    %v812 = vsub.f32 %v28, %v811
    %813 = vmatpush1.msra.mxu0 %v812
    %814 = vmatprep.subr.mxu0 0.0
    %v815 = vand.u32 %v27, 4294901760
    %v816 = vsub.f32 %v27, %v815
    %817 = vmatpush1.msra.mxu0 %v816
    %818 = vmatprep.subr.mxu0 0.0
    %v819 = vand.u32 %v26, 4294901760
    %v820 = vsub.f32 %v26, %v819
    %821 = vmatpush1.msra.mxu0 %v820
    %822 = vmatprep.subr.mxu0 0.0
    %v823 = vand.u32 %v25, 4294901760
    %v824 = vsub.f32 %v25, %v823
    %825 = vmatpush1.msra.mxu0 %v824
    %826 = vmatprep.subr.mxu0 0.0
    %827 = vmatpush2.msra.mxu0 0.0
    %828 = vmatprep.subr.mxu0 0.0
    %829 = vmatpush2.msra.mxu0 0.0
    %830 = vmatprep.subr.mxu0 0.0
    %831 = vmatpush2.msra.mxu0 0.0
    %832 = vmatprep.subr.mxu0 0.0
    %833 = vmatpush2.msra.mxu0 0.0
    %834 = vmatprep.subr.mxu0 0.0
    %835 = vmatpush2.msra.mxu0 0.0
    %836 = vmatprep.subr.mxu0 0.0
    %837 = vmatpush2.msra.mxu0 0.0
    %838 = vmatprep.subr.mxu0 0.0
    %839 = vmatpush2.msra.mxu0 0.0
    %840 = vmatprep.subr.mxu0 0.0
    %841 = vmatpush2.msra.mxu0 0.0
    %842 = vmatprep.subr.mxu0 0.0
    %843 = vmatpush2.msra.mxu0 0.0
    %844 = vmatprep.subr.mxu0 0.0
    %845 = vmatpush2.msra.mxu0 0.0
    %846 = vmatprep.subr.mxu0 0.0
    %847 = vmatpush2.msra.mxu0 0.0
    %848 = vmatprep.subr.mxu0 0.0
    %849 = vmatpush2.msra.mxu0 0.0
    %850 = vmatprep.subr.mxu0 0.0
    %851 = vmatpush2.msra.mxu0 0.0
    %852 = vmatprep.subr.mxu0 0.0
    %853 = vmatpush2.msra.mxu0 0.0
    %854 = vmatprep.subr.mxu0 0.0
    %855 = vmatpush2.msra.mxu0 0.0
    %856 = vmatprep.subr.mxu0 0.0
    %857 = vmatpush2.msra.mxu0 0.0
    %858 = vmatprep.mubr.f32.mxu0 0.0
    %v859 = vand.u32 %v595, 4294901760
    %v860 = vsub.f32 %v595, %v859
    %861 = vmatmul.mubr.f32.gmra.mxu0 %v860
    %v862 = vpop.f32.mrf.mxu0
    %v863 = vadd.f32 %v777, %v862
    %v864 = vpop.f32.mrf.mxu0
    %865 = vmatprep.mubr.f32.mxu0 0.0
    %v866 = vand.u32 %v598, 4294901760
    %v867 = vsub.f32 %v598, %v866
    %868 = vmatmul.mubr.f32.gmra.mxu0 %v867
    %v869 = vpop.f32.mrf.mxu0
    %v870 = vadd.f32 %v783, %v869
    %v871 = vpop.f32.mrf.mxu0
    %872 = vdwg.mxu0
    %873 = vmatprep.subr.mxu0 0.0
    %874 = vmatpush1.msra.mxu0 0.0
    %875 = vmatprep.subr.mxu0 0.0
    %876 = vmatpush1.msra.mxu0 0.0
    %877 = vmatprep.subr.mxu0 0.0
    %878 = vmatpush1.msra.mxu0 0.0
    %879 = vmatprep.subr.mxu0 0.0
    %880 = vmatpush1.msra.mxu0 0.0
    %881 = vmatprep.subr.mxu0 0.0
    %882 = vmatpush1.msra.mxu0 0.0
    %883 = vmatprep.subr.mxu0 0.0
    %884 = vmatpush1.msra.mxu0 0.0
    %885 = vmatprep.subr.mxu0 0.0
    %886 = vmatpush1.msra.mxu0 0.0
    %887 = vmatprep.subr.mxu0 0.0
    %888 = vmatpush1.msra.mxu0 0.0
    %889 = vmatprep.subr.mxu0 0.0
    %890 = vmatpush1.msra.mxu0 0.0
    %891 = vmatprep.subr.mxu0 0.0
    %892 = vmatpush1.msra.mxu0 0.0
    %893 = vmatprep.subr.mxu0 0.0
    %894 = vmatpush1.msra.mxu0 0.0
    %895 = vmatprep.subr.mxu0 0.0
    %896 = vmatpush1.msra.mxu0 0.0
    %897 = vmatprep.subr.mxu0 0.0
    %v898 = vand.u32 %v28, 4294901760
    %899 = vmatpush1.msra.mxu0 %v898
    %900 = vmatprep.subr.mxu0 0.0
    %v901 = vand.u32 %v27, 4294901760
    %902 = vmatpush1.msra.mxu0 %v901
    %903 = vmatprep.subr.mxu0 0.0
    %v904 = vand.u32 %v26, 4294901760
    %905 = vmatpush1.msra.mxu0 %v904
    %906 = vmatprep.subr.mxu0 0.0
    %v907 = vand.u32 %v25, 4294901760
    %908 = vmatpush1.msra.mxu0 %v907
    %909 = vmatprep.subr.mxu0 0.0
    %910 = vmatpush2.msra.mxu0 0.0
    %911 = vmatprep.subr.mxu0 0.0
    %912 = vmatpush2.msra.mxu0 0.0
    %913 = vmatprep.subr.mxu0 0.0
    %914 = vmatpush2.msra.mxu0 0.0
    %915 = vmatprep.subr.mxu0 0.0
    %916 = vmatpush2.msra.mxu0 0.0
    %917 = vmatprep.subr.mxu0 0.0
    %918 = vmatpush2.msra.mxu0 0.0
    %919 = vmatprep.subr.mxu0 0.0
    %920 = vmatpush2.msra.mxu0 0.0
    %921 = vmatprep.subr.mxu0 0.0
    %922 = vmatpush2.msra.mxu0 0.0
    %923 = vmatprep.subr.mxu0 0.0
    %924 = vmatpush2.msra.mxu0 0.0
    %925 = vmatprep.subr.mxu0 0.0
    %926 = vmatpush2.msra.mxu0 0.0
    %927 = vmatprep.subr.mxu0 0.0
    %928 = vmatpush2.msra.mxu0 0.0
    %929 = vmatprep.subr.mxu0 0.0
    %930 = vmatpush2.msra.mxu0 0.0
    %931 = vmatprep.subr.mxu0 0.0
    %932 = vmatpush2.msra.mxu0 0.0
    %933 = vmatprep.subr.mxu0 0.0
    %934 = vmatpush2.msra.mxu0 0.0
    %935 = vmatprep.subr.mxu0 0.0
    %936 = vmatpush2.msra.mxu0 0.0
    %937 = vmatprep.subr.mxu0 0.0
    %938 = vmatpush2.msra.mxu0 0.0
    %939 = vmatprep.subr.mxu0 0.0
    %940 = vmatpush2.msra.mxu0 0.0
    %941 = vmatprep.mubr.f32.mxu0 0.0
    %v942 = vand.u32 %v595, 4294901760
    %v943 = vsub.f32 %v595, %v942
    %v944 = vand.u32 %v943, 4294901760
    %945 = vmatmul.mubr.f32.gmra.mxu0 %v944
    %v946 = vpop.f32.mrf.mxu0
    %v947 = vadd.f32 %v863, %v946
    %v948 = vpop.f32.mrf.mxu0
    %949 = vmatprep.mubr.f32.mxu0 0.0
    %v950 = vand.u32 %v598, 4294901760
    %v951 = vsub.f32 %v598, %v950
    %v952 = vand.u32 %v951, 4294901760
    %953 = vmatmul.mubr.f32.gmra.mxu0 %v952
    %v954 = vpop.f32.mrf.mxu0
    %v955 = vadd.f32 %v870, %v954
    %v956 = vpop.f32.mrf.mxu0
    %957 = vdwg.mxu0
    %958 = vmatprep.subr.mxu0 0.0
    %959 = vmatpush1.msra.mxu0 0.0
    %960 = vmatprep.subr.mxu0 0.0
    %961 = vmatpush1.msra.mxu0 0.0
    %962 = vmatprep.subr.mxu0 0.0
    %963 = vmatpush1.msra.mxu0 0.0
    %964 = vmatprep.subr.mxu0 0.0
    %965 = vmatpush1.msra.mxu0 0.0
    %966 = vmatprep.subr.mxu0 0.0
    %967 = vmatpush1.msra.mxu0 0.0
    %968 = vmatprep.subr.mxu0 0.0
    %969 = vmatpush1.msra.mxu0 0.0
    %970 = vmatprep.subr.mxu0 0.0
    %971 = vmatpush1.msra.mxu0 0.0
    %972 = vmatprep.subr.mxu0 0.0
    %973 = vmatpush1.msra.mxu0 0.0
    %974 = vmatprep.subr.mxu0 0.0
    %975 = vmatpush1.msra.mxu0 0.0
    %976 = vmatprep.subr.mxu0 0.0
    %977 = vmatpush1.msra.mxu0 0.0
    %978 = vmatprep.subr.mxu0 0.0
    %979 = vmatpush1.msra.mxu0 0.0
    %980 = vmatprep.subr.mxu0 0.0
    %981 = vmatpush1.msra.mxu0 0.0
    %982 = vmatprep.subr.mxu0 0.0
    %v983 = vand.u32 %v28, 4294901760
    %v984 = vsub.f32 %v28, %v983
    %v985 = vand.u32 %v984, 4294901760
    %986 = vmatpush1.msra.mxu0 %v985
    %987 = vmatprep.subr.mxu0 0.0
    %v988 = vand.u32 %v27, 4294901760
    %v989 = vsub.f32 %v27, %v988
    %v990 = vand.u32 %v989, 4294901760
    %991 = vmatpush1.msra.mxu0 %v990
    %992 = vmatprep.subr.mxu0 0.0
    %v993 = vand.u32 %v26, 4294901760
    %v994 = vsub.f32 %v26, %v993
    %v995 = vand.u32 %v994, 4294901760
    %996 = vmatpush1.msra.mxu0 %v995
    %997 = vmatprep.subr.mxu0 0.0
    %v998 = vand.u32 %v25, 4294901760
    %v999 = vsub.f32 %v25, %v998
    %v1000 = vand.u32 %v999, 4294901760
    %1001 = vmatpush1.msra.mxu0 %v1000
    %1002 = vmatprep.subr.mxu0 0.0
    %1003 = vmatpush2.msra.mxu0 0.0
    %1004 = vmatprep.subr.mxu0 0.0
    %1005 = vmatpush2.msra.mxu0 0.0
    %1006 = vmatprep.subr.mxu0 0.0
    %1007 = vmatpush2.msra.mxu0 0.0
    %1008 = vmatprep.subr.mxu0 0.0
    %1009 = vmatpush2.msra.mxu0 0.0
    %1010 = vmatprep.subr.mxu0 0.0
    %1011 = vmatpush2.msra.mxu0 0.0
    %1012 = vmatprep.subr.mxu0 0.0
    %1013 = vmatpush2.msra.mxu0 0.0
    %1014 = vmatprep.subr.mxu0 0.0
    %1015 = vmatpush2.msra.mxu0 0.0
    %1016 = vmatprep.subr.mxu0 0.0
    %1017 = vmatpush2.msra.mxu0 0.0
    %1018 = vmatprep.subr.mxu0 0.0
    %1019 = vmatpush2.msra.mxu0 0.0
    %1020 = vmatprep.subr.mxu0 0.0
    %1021 = vmatpush2.msra.mxu0 0.0
    %1022 = vmatprep.subr.mxu0 0.0
    %1023 = vmatpush2.msra.mxu0 0.0
    %1024 = vmatprep.subr.mxu0 0.0
    %1025 = vmatpush2.msra.mxu0 0.0
    %1026 = vmatprep.subr.mxu0 0.0
    %1027 = vmatpush2.msra.mxu0 0.0
    %1028 = vmatprep.subr.mxu0 0.0
    %1029 = vmatpush2.msra.mxu0 0.0
    %1030 = vmatprep.subr.mxu0 0.0
    %1031 = vmatpush2.msra.mxu0 0.0
    %1032 = vmatprep.subr.mxu0 0.0
    %1033 = vmatpush2.msra.mxu0 0.0
    %1034 = vmatprep.mubr.f32.mxu0 0.0
    %v1035 = vand.u32 %v595, 4294901760
    %1036 = vmatmul.mubr.f32.gmra.mxu0 %v1035
    %v1037 = vpop.f32.mrf.mxu0
    %v1038 = vadd.f32 %v947, %v1037
    %v1039 = vpop.f32.mrf.mxu0
    %1040 = vmatprep.mubr.f32.mxu0 0.0
    %v1041 = vand.u32 %v598, 4294901760
    %1042 = vmatmul.mubr.f32.gmra.mxu0 %v1041
    %v1043 = vpop.f32.mrf.mxu0
    %v1044 = vadd.f32 %v955, %v1043
    %v1045 = vpop.f32.mrf.mxu0
    %1046 = vdwg.mxu0
    %1047 = vmatprep.subr.mxu0 0.0
    %1048 = vmatpush1.msra.mxu0 0.0
    %1049 = vmatprep.subr.mxu0 0.0
    %1050 = vmatpush1.msra.mxu0 0.0
    %1051 = vmatprep.subr.mxu0 0.0
    %1052 = vmatpush1.msra.mxu0 0.0
    %1053 = vmatprep.subr.mxu0 0.0
    %1054 = vmatpush1.msra.mxu0 0.0
    %1055 = vmatprep.subr.mxu0 0.0
    %1056 = vmatpush1.msra.mxu0 0.0
    %1057 = vmatprep.subr.mxu0 0.0
    %1058 = vmatpush1.msra.mxu0 0.0
    %1059 = vmatprep.subr.mxu0 0.0
    %1060 = vmatpush1.msra.mxu0 0.0
    %1061 = vmatprep.subr.mxu0 0.0
    %1062 = vmatpush1.msra.mxu0 0.0
    %1063 = vmatprep.subr.mxu0 0.0
    %1064 = vmatpush1.msra.mxu0 0.0
    %1065 = vmatprep.subr.mxu0 0.0
    %1066 = vmatpush1.msra.mxu0 0.0
    %1067 = vmatprep.subr.mxu0 0.0
    %1068 = vmatpush1.msra.mxu0 0.0
    %1069 = vmatprep.subr.mxu0 0.0
    %1070 = vmatpush1.msra.mxu0 0.0
    %1071 = vmatprep.subr.mxu0 0.0
    %v1072 = vand.u32 %v28, 4294901760
    %1073 = vmatpush1.msra.mxu0 %v1072
    %1074 = vmatprep.subr.mxu0 0.0
    %v1075 = vand.u32 %v27, 4294901760
    %1076 = vmatpush1.msra.mxu0 %v1075
    %1077 = vmatprep.subr.mxu0 0.0
    %v1078 = vand.u32 %v26, 4294901760
    %1079 = vmatpush1.msra.mxu0 %v1078
    %1080 = vmatprep.subr.mxu0 0.0
    %v1081 = vand.u32 %v25, 4294901760
    %1082 = vmatpush1.msra.mxu0 %v1081
    %1083 = vmatprep.subr.mxu0 0.0
    %1084 = vmatpush2.msra.mxu0 0.0
    %1085 = vmatprep.subr.mxu0 0.0
    %1086 = vmatpush2.msra.mxu0 0.0
    %1087 = vmatprep.subr.mxu0 0.0
    %1088 = vmatpush2.msra.mxu0 0.0
    %1089 = vmatprep.subr.mxu0 0.0
    %1090 = vmatpush2.msra.mxu0 0.0
    %1091 = vmatprep.subr.mxu0 0.0
    %1092 = vmatpush2.msra.mxu0 0.0
    %1093 = vmatprep.subr.mxu0 0.0
    %1094 = vmatpush2.msra.mxu0 0.0
    %1095 = vmatprep.subr.mxu0 0.0
    %1096 = vmatpush2.msra.mxu0 0.0
    %1097 = vmatprep.subr.mxu0 0.0
    %1098 = vmatpush2.msra.mxu0 0.0
    %1099 = vmatprep.subr.mxu0 0.0
    %1100 = vmatpush2.msra.mxu0 0.0
    %1101 = vmatprep.subr.mxu0 0.0
    %1102 = vmatpush2.msra.mxu0 0.0
    %1103 = vmatprep.subr.mxu0 0.0
    %1104 = vmatpush2.msra.mxu0 0.0
    %1105 = vmatprep.subr.mxu0 0.0
    %1106 = vmatpush2.msra.mxu0 0.0
    %1107 = vmatprep.subr.mxu0 0.0
    %1108 = vmatpush2.msra.mxu0 0.0
    %1109 = vmatprep.subr.mxu0 0.0
    %1110 = vmatpush2.msra.mxu0 0.0
    %1111 = vmatprep.subr.mxu0 0.0
    %1112 = vmatpush2.msra.mxu0 0.0
    %1113 = vmatprep.subr.mxu0 0.0
    %1114 = vmatpush2.msra.mxu0 0.0
    %1115 = vmatprep.mubr.f32.mxu0 0.0
    %v1116 = vand.u32 %v595, 4294901760
    %1117 = vmatmul.mubr.f32.gmra.mxu0 %v1116
    %v1118 = vpop.f32.mrf.mxu0
    %v1119 = vadd.f32 %v1038, %v1118
    %v1120 = vpop.f32.mrf.mxu0
    %1121 = vmatprep.mubr.f32.mxu0 0.0
    %v1122 = vand.u32 %v598, 4294901760
    %1123 = vmatmul.mubr.f32.gmra.mxu0 %v1122
    %v1124 = vpop.f32.mrf.mxu0
    %v1125 = vadd.f32 %v1044, %v1124
    %v1126 = vpop.f32.mrf.mxu0
    %1127 = vdwg.mxu0
    %v1128 = vadd.f32 %v582, %v1119
    %v1129 = vadd.f32 %v583, %v1125
    %v1130 = vtanh.pop %v1128
    %v1131 = vtanh.pop %v1129
    %v1132 = vmul.f32 %v579, %v29
    %v1133 = vmul.f32 %v581, %v30
    %v1134 = vsub.f32 1.0, %v579
    %v1135 = vsub.f32 1.0, %v581
    %v1136 = vmul.f32 %v1134, %v1130
    %v1137 = vmul.f32 %v1135, %v1131
    %v1138 = vadd.f32 %v1132, %v1136
    %v1139 = vadd.f32 %v1133, %v1137
    %1140 = vst.msk [vmem:[#allocation2] sm:$0xff] %vm33, %v1138
    %1141 = vst.msk [vmem:[#allocation2 + $0x8] sm:$0xff] %vm33, %v1139
    %s1142 = scalar_lea.vmem %s0, 16
    %v1143 = vld [vmem:[%s1142] sm:$0xff]
    %v1144 = vld [vmem:[%s1142 + $0x8] sm:$0xff]
    %v1146 = vsel %vm33, %v1138, 0
    %v1149 = vsel %vm33, %v1139, 0
    %1151 = vmatprep.subr.mxu0 0.0
    %1152 = vmatpush1.msra.mxu0 0.0
    %1153 = vmatprep.subr.mxu0 0.0
    %1154 = vmatpush1.msra.mxu0 0.0
    %1155 = vmatprep.subr.mxu0 0.0
    %1156 = vmatpush1.msra.mxu0 0.0
    %1157 = vmatprep.subr.mxu0 0.0
    %1158 = vmatpush1.msra.mxu0 0.0
    %1159 = vmatprep.subr.mxu0 0.0
    %1160 = vmatpush1.msra.mxu0 0.0
    %1161 = vmatprep.subr.mxu0 0.0
    %1162 = vmatpush1.msra.mxu0 0.0
    %1163 = vmatprep.subr.mxu0 0.0
    %1164 = vmatpush1.msra.mxu0 0.0
    %1165 = vmatprep.subr.mxu0 0.0
    %1166 = vmatpush1.msra.mxu0 0.0
    %1167 = vmatprep.subr.mxu0 0.0
    %1168 = vmatpush1.msra.mxu0 0.0
    %1169 = vmatprep.subr.mxu0 0.0
    %1170 = vmatpush1.msra.mxu0 0.0
    %1171 = vmatprep.subr.mxu0 0.0
    %1172 = vmatpush1.msra.mxu0 0.0
    %1173 = vmatprep.subr.mxu0 0.0
    %1174 = vmatpush1.msra.mxu0 0.0
    %1175 = vmatprep.subr.mxu0 0.0
    %v1176 = vand.u32 %v24, 4294901760
    %1177 = vmatpush1.msra.mxu0 %v1176
    %1178 = vmatprep.subr.mxu0 0.0
    %v1179 = vand.u32 %v23, 4294901760
    %1180 = vmatpush1.msra.mxu0 %v1179
    %1181 = vmatprep.subr.mxu0 0.0
    %v1182 = vand.u32 %v22, 4294901760
    %1183 = vmatpush1.msra.mxu0 %v1182
    %1184 = vmatprep.subr.mxu0 0.0
    %v1185 = vand.u32 %v21, 4294901760
    %1186 = vmatpush1.msra.mxu0 %v1185
    %1187 = vmatprep.subr.mxu0 0.0
    %1188 = vmatpush2.msra.mxu0 0.0
    %1189 = vmatprep.subr.mxu0 0.0
    %1190 = vmatpush2.msra.mxu0 0.0
    %1191 = vmatprep.subr.mxu0 0.0
    %1192 = vmatpush2.msra.mxu0 0.0
    %1193 = vmatprep.subr.mxu0 0.0
    %1194 = vmatpush2.msra.mxu0 0.0
    %1195 = vmatprep.subr.mxu0 0.0
    %1196 = vmatpush2.msra.mxu0 0.0
    %1197 = vmatprep.subr.mxu0 0.0
    %1198 = vmatpush2.msra.mxu0 0.0
    %1199 = vmatprep.subr.mxu0 0.0
    %1200 = vmatpush2.msra.mxu0 0.0
    %1201 = vmatprep.subr.mxu0 0.0
    %1202 = vmatpush2.msra.mxu0 0.0
    %1203 = vmatprep.subr.mxu0 0.0
    %1204 = vmatpush2.msra.mxu0 0.0
    %1205 = vmatprep.subr.mxu0 0.0
    %1206 = vmatpush2.msra.mxu0 0.0
    %1207 = vmatprep.subr.mxu0 0.0
    %1208 = vmatpush2.msra.mxu0 0.0
    %1209 = vmatprep.subr.mxu0 0.0
    %1210 = vmatpush2.msra.mxu0 0.0
    %1211 = vmatprep.subr.mxu0 0.0
    %1212 = vmatpush2.msra.mxu0 0.0
    %1213 = vmatprep.subr.mxu0 0.0
    %1214 = vmatpush2.msra.mxu0 0.0
    %1215 = vmatprep.subr.mxu0 0.0
    %1216 = vmatpush2.msra.mxu0 0.0
    %1217 = vmatprep.subr.mxu0 0.0
    %1218 = vmatpush2.msra.mxu0 0.0
    %1219 = vmatprep.mubr.f32.mxu0 0.0
    %v1220 = vand.u32 %v1146, 4294901760
    %v1221 = vsub.f32 %v1146, %v1220
    %v1222 = vand.u32 %v1221, 4294901760
    %v1223 = vsub.f32 %v1221, %v1222
    %v1224 = vand.u32 %v1223, 4294901760
    %1225 = vmatmul.mubr.f32.gmra.mxu0 %v1224
    %v1226 = vpop.f32.mrf.mxu0
    %v1227 = vadd.f32 0.0, %v1226
    %v1228 = vpop.f32.mrf.mxu0
    %1229 = vmatprep.mubr.f32.mxu0 0.0
    %v1230 = vand.u32 %v1149, 4294901760
    %v1231 = vsub.f32 %v1149, %v1230
    %v1232 = vand.u32 %v1231, 4294901760
    %v1233 = vsub.f32 %v1231, %v1232
    %v1234 = vand.u32 %v1233, 4294901760
    %1235 = vmatmul.mubr.f32.gmra.mxu0 %v1234
    %v1236 = vpop.f32.mrf.mxu0
    %v1237 = vadd.f32 0.0, %v1236
    %v1238 = vpop.f32.mrf.mxu0
    %1239 = vdwg.mxu0
    %1240 = vmatprep.subr.mxu0 0.0
    %1241 = vmatpush1.msra.mxu0 0.0
    %1242 = vmatprep.subr.mxu0 0.0
    %1243 = vmatpush1.msra.mxu0 0.0
    %1244 = vmatprep.subr.mxu0 0.0
    %1245 = vmatpush1.msra.mxu0 0.0
    %1246 = vmatprep.subr.mxu0 0.0
    %1247 = vmatpush1.msra.mxu0 0.0
    %1248 = vmatprep.subr.mxu0 0.0
    %1249 = vmatpush1.msra.mxu0 0.0
    %1250 = vmatprep.subr.mxu0 0.0
    %1251 = vmatpush1.msra.mxu0 0.0
    %1252 = vmatprep.subr.mxu0 0.0
    %1253 = vmatpush1.msra.mxu0 0.0
    %1254 = vmatprep.subr.mxu0 0.0
    %1255 = vmatpush1.msra.mxu0 0.0
    %1256 = vmatprep.subr.mxu0 0.0
    %1257 = vmatpush1.msra.mxu0 0.0
    %1258 = vmatprep.subr.mxu0 0.0
    %1259 = vmatpush1.msra.mxu0 0.0
    %1260 = vmatprep.subr.mxu0 0.0
    %1261 = vmatpush1.msra.mxu0 0.0
    %1262 = vmatprep.subr.mxu0 0.0
    %1263 = vmatpush1.msra.mxu0 0.0
    %1264 = vmatprep.subr.mxu0 0.0
    %v1265 = vand.u32 %v24, 4294901760
    %v1266 = vsub.f32 %v24, %v1265
    %v1267 = vand.u32 %v1266, 4294901760
    %v1268 = vsub.f32 %v1266, %v1267
    %v1269 = vand.u32 %v1268, 4294901760
    %1270 = vmatpush1.msra.mxu0 %v1269
    %1271 = vmatprep.subr.mxu0 0.0
    %v1272 = vand.u32 %v23, 4294901760
    %v1273 = vsub.f32 %v23, %v1272
    %v1274 = vand.u32 %v1273, 4294901760
    %v1275 = vsub.f32 %v1273, %v1274
    %v1276 = vand.u32 %v1275, 4294901760
    %1277 = vmatpush1.msra.mxu0 %v1276
    %1278 = vmatprep.subr.mxu0 0.0
    %v1279 = vand.u32 %v22, 4294901760
    %v1280 = vsub.f32 %v22, %v1279
    %v1281 = vand.u32 %v1280, 4294901760
    %v1282 = vsub.f32 %v1280, %v1281
    %v1283 = vand.u32 %v1282, 4294901760
    %1284 = vmatpush1.msra.mxu0 %v1283
    %1285 = vmatprep.subr.mxu0 0.0
    %v1286 = vand.u32 %v21, 4294901760
    %v1287 = vsub.f32 %v21, %v1286
    %v1288 = vand.u32 %v1287, 4294901760
    %v1289 = vsub.f32 %v1287, %v1288
    %v1290 = vand.u32 %v1289, 4294901760
    %1291 = vmatpush1.msra.mxu0 %v1290
    %1292 = vmatprep.subr.mxu0 0.0
    %1293 = vmatpush2.msra.mxu0 0.0
    %1294 = vmatprep.subr.mxu0 0.0
    %1295 = vmatpush2.msra.mxu0 0.0
    %1296 = vmatprep.subr.mxu0 0.0
    %1297 = vmatpush2.msra.mxu0 0.0
    %1298 = vmatprep.subr.mxu0 0.0
    %1299 = vmatpush2.msra.mxu0 0.0
    %1300 = vmatprep.subr.mxu0 0.0
    %1301 = vmatpush2.msra.mxu0 0.0
    %1302 = vmatprep.subr.mxu0 0.0
    %1303 = vmatpush2.msra.mxu0 0.0
    %1304 = vmatprep.subr.mxu0 0.0
    %1305 = vmatpush2.msra.mxu0 0.0
    %1306 = vmatprep.subr.mxu0 0.0
    %1307 = vmatpush2.msra.mxu0 0.0
    %1308 = vmatprep.subr.mxu0 0.0
    %1309 = vmatpush2.msra.mxu0 0.0
    %1310 = vmatprep.subr.mxu0 0.0
    %1311 = vmatpush2.msra.mxu0 0.0
    %1312 = vmatprep.subr.mxu0 0.0
    %1313 = vmatpush2.msra.mxu0 0.0
    %1314 = vmatprep.subr.mxu0 0.0
    %1315 = vmatpush2.msra.mxu0 0.0
    %1316 = vmatprep.subr.mxu0 0.0
    %1317 = vmatpush2.msra.mxu0 0.0
    %1318 = vmatprep.subr.mxu0 0.0
    %1319 = vmatpush2.msra.mxu0 0.0
    %1320 = vmatprep.subr.mxu0 0.0
    %1321 = vmatpush2.msra.mxu0 0.0
    %1322 = vmatprep.subr.mxu0 0.0
    %1323 = vmatpush2.msra.mxu0 0.0
    %1324 = vmatprep.mubr.f32.mxu0 0.0
    %v1325 = vand.u32 %v1146, 4294901760
    %1326 = vmatmul.mubr.f32.gmra.mxu0 %v1325
    %v1327 = vpop.f32.mrf.mxu0
    %v1328 = vadd.f32 %v1227, %v1327
    %v1329 = vpop.f32.mrf.mxu0
    %1330 = vmatprep.mubr.f32.mxu0 0.0
    %v1331 = vand.u32 %v1149, 4294901760
    %1332 = vmatmul.mubr.f32.gmra.mxu0 %v1331
    %v1333 = vpop.f32.mrf.mxu0
    %v1334 = vadd.f32 %v1237, %v1333
    %v1335 = vpop.f32.mrf.mxu0
    %1336 = vdwg.mxu0
    %1337 = vmatprep.subr.mxu0 0.0
    %1338 = vmatpush1.msra.mxu0 0.0
    %1339 = vmatprep.subr.mxu0 0.0
    %1340 = vmatpush1.msra.mxu0 0.0
    %1341 = vmatprep.subr.mxu0 0.0
    %1342 = vmatpush1.msra.mxu0 0.0
    %1343 = vmatprep.subr.mxu0 0.0
    %1344 = vmatpush1.msra.mxu0 0.0
    %1345 = vmatprep.subr.mxu0 0.0
    %1346 = vmatpush1.msra.mxu0 0.0
    %1347 = vmatprep.subr.mxu0 0.0
    %1348 = vmatpush1.msra.mxu0 0.0
    %1349 = vmatprep.subr.mxu0 0.0
    %1350 = vmatpush1.msra.mxu0 0.0
    %1351 = vmatprep.subr.mxu0 0.0
    %1352 = vmatpush1.msra.mxu0 0.0
    %1353 = vmatprep.subr.mxu0 0.0
    %1354 = vmatpush1.msra.mxu0 0.0
    %1355 = vmatprep.subr.mxu0 0.0
    %1356 = vmatpush1.msra.mxu0 0.0
    %1357 = vmatprep.subr.mxu0 0.0
    %1358 = vmatpush1.msra.mxu0 0.0
    %1359 = vmatprep.subr.mxu0 0.0
    %1360 = vmatpush1.msra.mxu0 0.0
    %1361 = vmatprep.subr.mxu0 0.0
    %v1362 = vand.u32 %v24, 4294901760
    %v1363 = vsub.f32 %v24, %v1362
    %1364 = vmatpush1.msra.mxu0 %v1363
    %1365 = vmatprep.subr.mxu0 0.0
    %v1366 = vand.u32 %v23, 4294901760
    %v1367 = vsub.f32 %v23, %v1366
    %1368 = vmatpush1.msra.mxu0 %v1367
    %1369 = vmatprep.subr.mxu0 0.0
    %v1370 = vand.u32 %v22, 4294901760
    %v1371 = vsub.f32 %v22, %v1370
    %1372 = vmatpush1.msra.mxu0 %v1371
    %1373 = vmatprep.subr.mxu0 0.0
    %v1374 = vand.u32 %v21, 4294901760
    %v1375 = vsub.f32 %v21, %v1374
    %1376 = vmatpush1.msra.mxu0 %v1375
    %1377 = vmatprep.subr.mxu0 0.0
    %1378 = vmatpush2.msra.mxu0 0.0
    %1379 = vmatprep.subr.mxu0 0.0
    %1380 = vmatpush2.msra.mxu0 0.0
    %1381 = vmatprep.subr.mxu0 0.0
    %1382 = vmatpush2.msra.mxu0 0.0
    %1383 = vmatprep.subr.mxu0 0.0
    %1384 = vmatpush2.msra.mxu0 0.0
    %1385 = vmatprep.subr.mxu0 0.0
    %1386 = vmatpush2.msra.mxu0 0.0
    %1387 = vmatprep.subr.mxu0 0.0
    %1388 = vmatpush2.msra.mxu0 0.0
    %1389 = vmatprep.subr.mxu0 0.0
    %1390 = vmatpush2.msra.mxu0 0.0
    %1391 = vmatprep.subr.mxu0 0.0
    %1392 = vmatpush2.msra.mxu0 0.0
    %1393 = vmatprep.subr.mxu0 0.0
    %1394 = vmatpush2.msra.mxu0 0.0
    %1395 = vmatprep.subr.mxu0 0.0
    %1396 = vmatpush2.msra.mxu0 0.0
    %1397 = vmatprep.subr.mxu0 0.0
    %1398 = vmatpush2.msra.mxu0 0.0
    %1399 = vmatprep.subr.mxu0 0.0
    %1400 = vmatpush2.msra.mxu0 0.0
    %1401 = vmatprep.subr.mxu0 0.0
    %1402 = vmatpush2.msra.mxu0 0.0
    %1403 = vmatprep.subr.mxu0 0.0
    %1404 = vmatpush2.msra.mxu0 0.0
    %1405 = vmatprep.subr.mxu0 0.0
    %1406 = vmatpush2.msra.mxu0 0.0
    %1407 = vmatprep.subr.mxu0 0.0
    %1408 = vmatpush2.msra.mxu0 0.0
    %1409 = vmatprep.mubr.f32.mxu0 0.0
    %v1410 = vand.u32 %v1146, 4294901760
    %v1411 = vsub.f32 %v1146, %v1410
    %1412 = vmatmul.mubr.f32.gmra.mxu0 %v1411
    %v1413 = vpop.f32.mrf.mxu0
    %v1414 = vadd.f32 %v1328, %v1413
    %v1415 = vpop.f32.mrf.mxu0
    %1416 = vmatprep.mubr.f32.mxu0 0.0
    %v1417 = vand.u32 %v1149, 4294901760
    %v1418 = vsub.f32 %v1149, %v1417
    %1419 = vmatmul.mubr.f32.gmra.mxu0 %v1418
    %v1420 = vpop.f32.mrf.mxu0
    %v1421 = vadd.f32 %v1334, %v1420
    %v1422 = vpop.f32.mrf.mxu0
    %1423 = vdwg.mxu0
    %1424 = vmatprep.subr.mxu0 0.0
    %1425 = vmatpush1.msra.mxu0 0.0
    %1426 = vmatprep.subr.mxu0 0.0
    %1427 = vmatpush1.msra.mxu0 0.0
    %1428 = vmatprep.subr.mxu0 0.0
    %1429 = vmatpush1.msra.mxu0 0.0
    %1430 = vmatprep.subr.mxu0 0.0
    %1431 = vmatpush1.msra.mxu0 0.0
    %1432 = vmatprep.subr.mxu0 0.0
    %1433 = vmatpush1.msra.mxu0 0.0
    %1434 = vmatprep.subr.mxu0 0.0
    %1435 = vmatpush1.msra.mxu0 0.0
    %1436 = vmatprep.subr.mxu0 0.0
    %1437 = vmatpush1.msra.mxu0 0.0
    %1438 = vmatprep.subr.mxu0 0.0
    %1439 = vmatpush1.msra.mxu0 0.0
    %1440 = vmatprep.subr.mxu0 0.0
    %1441 = vmatpush1.msra.mxu0 0.0
    %1442 = vmatprep.subr.mxu0 0.0
    %1443 = vmatpush1.msra.mxu0 0.0
    %1444 = vmatprep.subr.mxu0 0.0
    %1445 = vmatpush1.msra.mxu0 0.0
    %1446 = vmatprep.subr.mxu0 0.0
    %1447 = vmatpush1.msra.mxu0 0.0
    %1448 = vmatprep.subr.mxu0 0.0
    %v1449 = vand.u32 %v24, 4294901760
    %1450 = vmatpush1.msra.mxu0 %v1449
    %1451 = vmatprep.subr.mxu0 0.0
    %v1452 = vand.u32 %v23, 4294901760
    %1453 = vmatpush1.msra.mxu0 %v1452
    %1454 = vmatprep.subr.mxu0 0.0
    %v1455 = vand.u32 %v22, 4294901760
    %1456 = vmatpush1.msra.mxu0 %v1455
    %1457 = vmatprep.subr.mxu0 0.0
    %v1458 = vand.u32 %v21, 4294901760
    %1459 = vmatpush1.msra.mxu0 %v1458
    %1460 = vmatprep.subr.mxu0 0.0
    %1461 = vmatpush2.msra.mxu0 0.0
    %1462 = vmatprep.subr.mxu0 0.0
    %1463 = vmatpush2.msra.mxu0 0.0
    %1464 = vmatprep.subr.mxu0 0.0
    %1465 = vmatpush2.msra.mxu0 0.0
    %1466 = vmatprep.subr.mxu0 0.0
    %1467 = vmatpush2.msra.mxu0 0.0
    %1468 = vmatprep.subr.mxu0 0.0
    %1469 = vmatpush2.msra.mxu0 0.0
    %1470 = vmatprep.subr.mxu0 0.0
    %1471 = vmatpush2.msra.mxu0 0.0
    %1472 = vmatprep.subr.mxu0 0.0
    %1473 = vmatpush2.msra.mxu0 0.0
    %1474 = vmatprep.subr.mxu0 0.0
    %1475 = vmatpush2.msra.mxu0 0.0
    %1476 = vmatprep.subr.mxu0 0.0
    %1477 = vmatpush2.msra.mxu0 0.0
    %1478 = vmatprep.subr.mxu0 0.0
    %1479 = vmatpush2.msra.mxu0 0.0
    %1480 = vmatprep.subr.mxu0 0.0
    %1481 = vmatpush2.msra.mxu0 0.0
    %1482 = vmatprep.subr.mxu0 0.0
    %1483 = vmatpush2.msra.mxu0 0.0
    %1484 = vmatprep.subr.mxu0 0.0
    %1485 = vmatpush2.msra.mxu0 0.0
    %1486 = vmatprep.subr.mxu0 0.0
    %1487 = vmatpush2.msra.mxu0 0.0
    %1488 = vmatprep.subr.mxu0 0.0
    %1489 = vmatpush2.msra.mxu0 0.0
    %1490 = vmatprep.subr.mxu0 0.0
    %1491 = vmatpush2.msra.mxu0 0.0
    %1492 = vmatprep.mubr.f32.mxu0 0.0
    %v1493 = vand.u32 %v1146, 4294901760
    %v1494 = vsub.f32 %v1146, %v1493
    %v1495 = vand.u32 %v1494, 4294901760
    %1496 = vmatmul.mubr.f32.gmra.mxu0 %v1495
    %v1497 = vpop.f32.mrf.mxu0
    %v1498 = vadd.f32 %v1414, %v1497
    %v1499 = vpop.f32.mrf.mxu0
    %1500 = vmatprep.mubr.f32.mxu0 0.0
    %v1501 = vand.u32 %v1149, 4294901760
    %v1502 = vsub.f32 %v1149, %v1501
    %v1503 = vand.u32 %v1502, 4294901760
    %1504 = vmatmul.mubr.f32.gmra.mxu0 %v1503
    %v1505 = vpop.f32.mrf.mxu0
    %v1506 = vadd.f32 %v1421, %v1505
    %v1507 = vpop.f32.mrf.mxu0
    %1508 = vdwg.mxu0
    %1509 = vmatprep.subr.mxu0 0.0
    %1510 = vmatpush1.msra.mxu0 0.0
    %1511 = vmatprep.subr.mxu0 0.0
    %1512 = vmatpush1.msra.mxu0 0.0
    %1513 = vmatprep.subr.mxu0 0.0
    %1514 = vmatpush1.msra.mxu0 0.0
    %1515 = vmatprep.subr.mxu0 0.0
    %1516 = vmatpush1.msra.mxu0 0.0
    %1517 = vmatprep.subr.mxu0 0.0
    %1518 = vmatpush1.msra.mxu0 0.0
    %1519 = vmatprep.subr.mxu0 0.0
    %1520 = vmatpush1.msra.mxu0 0.0
    %1521 = vmatprep.subr.mxu0 0.0
    %1522 = vmatpush1.msra.mxu0 0.0
    %1523 = vmatprep.subr.mxu0 0.0
    %1524 = vmatpush1.msra.mxu0 0.0
    %1525 = vmatprep.subr.mxu0 0.0
    %1526 = vmatpush1.msra.mxu0 0.0
    %1527 = vmatprep.subr.mxu0 0.0
    %1528 = vmatpush1.msra.mxu0 0.0
    %1529 = vmatprep.subr.mxu0 0.0
    %1530 = vmatpush1.msra.mxu0 0.0
    %1531 = vmatprep.subr.mxu0 0.0
    %1532 = vmatpush1.msra.mxu0 0.0
    %1533 = vmatprep.subr.mxu0 0.0
    %v1534 = vand.u32 %v24, 4294901760
    %v1535 = vsub.f32 %v24, %v1534
    %v1536 = vand.u32 %v1535, 4294901760
    %1537 = vmatpush1.msra.mxu0 %v1536
    %1538 = vmatprep.subr.mxu0 0.0
    %v1539 = vand.u32 %v23, 4294901760
    %v1540 = vsub.f32 %v23, %v1539
    %v1541 = vand.u32 %v1540, 4294901760
    %1542 = vmatpush1.msra.mxu0 %v1541
    %1543 = vmatprep.subr.mxu0 0.0
    %v1544 = vand.u32 %v22, 4294901760
    %v1545 = vsub.f32 %v22, %v1544
    %v1546 = vand.u32 %v1545, 4294901760
    %1547 = vmatpush1.msra.mxu0 %v1546
    %1548 = vmatprep.subr.mxu0 0.0
    %v1549 = vand.u32 %v21, 4294901760
    %v1550 = vsub.f32 %v21, %v1549
    %v1551 = vand.u32 %v1550, 4294901760
    %1552 = vmatpush1.msra.mxu0 %v1551
    %1553 = vmatprep.subr.mxu0 0.0
    %1554 = vmatpush2.msra.mxu0 0.0
    %1555 = vmatprep.subr.mxu0 0.0
    %1556 = vmatpush2.msra.mxu0 0.0
    %1557 = vmatprep.subr.mxu0 0.0
    %1558 = vmatpush2.msra.mxu0 0.0
    %1559 = vmatprep.subr.mxu0 0.0
    %1560 = vmatpush2.msra.mxu0 0.0
    %1561 = vmatprep.subr.mxu0 0.0
    %1562 = vmatpush2.msra.mxu0 0.0
    %1563 = vmatprep.subr.mxu0 0.0
    %1564 = vmatpush2.msra.mxu0 0.0
    %1565 = vmatprep.subr.mxu0 0.0
    %1566 = vmatpush2.msra.mxu0 0.0
    %1567 = vmatprep.subr.mxu0 0.0
    %1568 = vmatpush2.msra.mxu0 0.0
    %1569 = vmatprep.subr.mxu0 0.0
    %1570 = vmatpush2.msra.mxu0 0.0
    %1571 = vmatprep.subr.mxu0 0.0
    %1572 = vmatpush2.msra.mxu0 0.0
    %1573 = vmatprep.subr.mxu0 0.0
    %1574 = vmatpush2.msra.mxu0 0.0
    %1575 = vmatprep.subr.mxu0 0.0
    %1576 = vmatpush2.msra.mxu0 0.0
    %1577 = vmatprep.subr.mxu0 0.0
    %1578 = vmatpush2.msra.mxu0 0.0
    %1579 = vmatprep.subr.mxu0 0.0
    %1580 = vmatpush2.msra.mxu0 0.0
    %1581 = vmatprep.subr.mxu0 0.0
    %1582 = vmatpush2.msra.mxu0 0.0
    %1583 = vmatprep.subr.mxu0 0.0
    %1584 = vmatpush2.msra.mxu0 0.0
    %1585 = vmatprep.mubr.f32.mxu0 0.0
    %v1586 = vand.u32 %v1146, 4294901760
    %1587 = vmatmul.mubr.f32.gmra.mxu0 %v1586
    %v1588 = vpop.f32.mrf.mxu0
    %v1589 = vadd.f32 %v1498, %v1588
    %v1590 = vpop.f32.mrf.mxu0
    %1591 = vmatprep.mubr.f32.mxu0 0.0
    %v1592 = vand.u32 %v1149, 4294901760
    %1593 = vmatmul.mubr.f32.gmra.mxu0 %v1592
    %v1594 = vpop.f32.mrf.mxu0
    %v1595 = vadd.f32 %v1506, %v1594
    %v1596 = vpop.f32.mrf.mxu0
    %1597 = vdwg.mxu0
    %1598 = vmatprep.subr.mxu0 0.0
    %1599 = vmatpush1.msra.mxu0 0.0
    %1600 = vmatprep.subr.mxu0 0.0
    %1601 = vmatpush1.msra.mxu0 0.0
    %1602 = vmatprep.subr.mxu0 0.0
    %1603 = vmatpush1.msra.mxu0 0.0
    %1604 = vmatprep.subr.mxu0 0.0
    %1605 = vmatpush1.msra.mxu0 0.0
    %1606 = vmatprep.subr.mxu0 0.0
    %1607 = vmatpush1.msra.mxu0 0.0
    %1608 = vmatprep.subr.mxu0 0.0
    %1609 = vmatpush1.msra.mxu0 0.0
    %1610 = vmatprep.subr.mxu0 0.0
    %1611 = vmatpush1.msra.mxu0 0.0
    %1612 = vmatprep.subr.mxu0 0.0
    %1613 = vmatpush1.msra.mxu0 0.0
    %1614 = vmatprep.subr.mxu0 0.0
    %1615 = vmatpush1.msra.mxu0 0.0
    %1616 = vmatprep.subr.mxu0 0.0
    %1617 = vmatpush1.msra.mxu0 0.0
    %1618 = vmatprep.subr.mxu0 0.0
    %1619 = vmatpush1.msra.mxu0 0.0
    %1620 = vmatprep.subr.mxu0 0.0
    %1621 = vmatpush1.msra.mxu0 0.0
    %1622 = vmatprep.subr.mxu0 0.0
    %v1623 = vand.u32 %v24, 4294901760
    %1624 = vmatpush1.msra.mxu0 %v1623
    %1625 = vmatprep.subr.mxu0 0.0
    %v1626 = vand.u32 %v23, 4294901760
    %1627 = vmatpush1.msra.mxu0 %v1626
    %1628 = vmatprep.subr.mxu0 0.0
    %v1629 = vand.u32 %v22, 4294901760
    %1630 = vmatpush1.msra.mxu0 %v1629
    %1631 = vmatprep.subr.mxu0 0.0
    %v1632 = vand.u32 %v21, 4294901760
    %1633 = vmatpush1.msra.mxu0 %v1632
    %1634 = vmatprep.subr.mxu0 0.0
    %1635 = vmatpush2.msra.mxu0 0.0
    %1636 = vmatprep.subr.mxu0 0.0
    %1637 = vmatpush2.msra.mxu0 0.0
    %1638 = vmatprep.subr.mxu0 0.0
    %1639 = vmatpush2.msra.mxu0 0.0
    %1640 = vmatprep.subr.mxu0 0.0
    %1641 = vmatpush2.msra.mxu0 0.0
    %1642 = vmatprep.subr.mxu0 0.0
    %1643 = vmatpush2.msra.mxu0 0.0
    %1644 = vmatprep.subr.mxu0 0.0
    %1645 = vmatpush2.msra.mxu0 0.0
    %1646 = vmatprep.subr.mxu0 0.0
    %1647 = vmatpush2.msra.mxu0 0.0
    %1648 = vmatprep.subr.mxu0 0.0
    %1649 = vmatpush2.msra.mxu0 0.0
    %1650 = vmatprep.subr.mxu0 0.0
    %1651 = vmatpush2.msra.mxu0 0.0
    %1652 = vmatprep.subr.mxu0 0.0
    %1653 = vmatpush2.msra.mxu0 0.0
    %1654 = vmatprep.subr.mxu0 0.0
    %1655 = vmatpush2.msra.mxu0 0.0
    %1656 = vmatprep.subr.mxu0 0.0
    %1657 = vmatpush2.msra.mxu0 0.0
    %1658 = vmatprep.subr.mxu0 0.0
    %1659 = vmatpush2.msra.mxu0 0.0
    %1660 = vmatprep.subr.mxu0 0.0
    %1661 = vmatpush2.msra.mxu0 0.0
    %1662 = vmatprep.subr.mxu0 0.0
    %1663 = vmatpush2.msra.mxu0 0.0
    %1664 = vmatprep.subr.mxu0 0.0
    %1665 = vmatpush2.msra.mxu0 0.0
    %1666 = vmatprep.mubr.f32.mxu0 0.0
    %v1667 = vand.u32 %v1146, 4294901760
    %1668 = vmatmul.mubr.f32.gmra.mxu0 %v1667
    %v1669 = vpop.f32.mrf.mxu0
    %v1670 = vadd.f32 %v1589, %v1669
    %v1671 = vpop.f32.mrf.mxu0
    %1672 = vmatprep.mubr.f32.mxu0 0.0
    %v1673 = vand.u32 %v1149, 4294901760
    %1674 = vmatmul.mubr.f32.gmra.mxu0 %v1673
    %v1675 = vpop.f32.mrf.mxu0
    %v1676 = vadd.f32 %v1595, %v1675
    %v1677 = vpop.f32.mrf.mxu0
    %1678 = vdwg.mxu0
    %v1679 = vadd.f32 %v1143, %v1670
    %v1680 = vadd.f32 %v1144, %v1676
    %v1681 = vxor.u32 %v1679, 2147483648
    %v1682 = vxor.u32 %v1680, 2147483648
    %v1683 = vmul.f32 %v1681, 1.442695
    %v1684 = vpow.pop %v1683
    %v1685 = vmul.f32 %v1682, 1.442695
    %v1686 = vpow.pop %v1685
    %v1687 = vadd.f32 %v1684, 1.0
    %v1688 = vadd.f32 %v1686, 1.0
    %v1689 = vrcp.pop %v1687
    %v1690 = vmul.f32 1.0, %v1689
    %v1691 = vrcp.pop %v1688
    %v1692 = vmul.f32 1.0, %v1691
    %s1693 = scalar_lea.vmem %s1, 16
    %v1694 = vld [vmem:[%s1693] sm:$0xff]
    %v1695 = vld [vmem:[%s1693 + $0x8] sm:$0xff]
    %1698 = vrot.lane.b32.xlu0 %v1690, 96
    %v1699 = vpop.permute.xlu0 %1698
    %1700 = vrot.lane.b32.xlu0 %v1692, 96
    %v1701 = vpop.permute.xlu0 %1700
    %v1704 = vmul.f32 %v1138, %v1699
    %v1705 = vmul.f32 %v1139, %v1701
    %v1707 = vsel %vm33, %v1704, 0
    %v1710 = vsel %vm33, %v1705, 0
    %1712 = vmatprep.subr.mxu0 0.0
    %1713 = vmatpush1.msra.mxu0 0.0
    %1714 = vmatprep.subr.mxu0 0.0
    %1715 = vmatpush1.msra.mxu0 0.0
    %1716 = vmatprep.subr.mxu0 0.0
    %1717 = vmatpush1.msra.mxu0 0.0
    %1718 = vmatprep.subr.mxu0 0.0
    %1719 = vmatpush1.msra.mxu0 0.0
    %1720 = vmatprep.subr.mxu0 0.0
    %1721 = vmatpush1.msra.mxu0 0.0
    %1722 = vmatprep.subr.mxu0 0.0
    %1723 = vmatpush1.msra.mxu0 0.0
    %1724 = vmatprep.subr.mxu0 0.0
    %1725 = vmatpush1.msra.mxu0 0.0
    %1726 = vmatprep.subr.mxu0 0.0
    %1727 = vmatpush1.msra.mxu0 0.0
    %1728 = vmatprep.subr.mxu0 0.0
    %1729 = vmatpush1.msra.mxu0 0.0
    %1730 = vmatprep.subr.mxu0 0.0
    %1731 = vmatpush1.msra.mxu0 0.0
    %1732 = vmatprep.subr.mxu0 0.0
    %1733 = vmatpush1.msra.mxu0 0.0
    %1734 = vmatprep.subr.mxu0 0.0
    %1735 = vmatpush1.msra.mxu0 0.0
    %1736 = vmatprep.subr.mxu0 0.0
    %v1737 = vand.u32 %v28, 4294901760
    %1738 = vmatpush1.msra.mxu0 %v1737
    %1739 = vmatprep.subr.mxu0 0.0
    %v1740 = vand.u32 %v27, 4294901760
    %1741 = vmatpush1.msra.mxu0 %v1740
    %1742 = vmatprep.subr.mxu0 0.0
    %v1743 = vand.u32 %v26, 4294901760
    %1744 = vmatpush1.msra.mxu0 %v1743
    %1745 = vmatprep.subr.mxu0 0.0
    %v1746 = vand.u32 %v25, 4294901760
    %1747 = vmatpush1.msra.mxu0 %v1746
    %1748 = vmatprep.subr.mxu0 0.0
    %1749 = vmatpush2.msra.mxu0 0.0
    %1750 = vmatprep.subr.mxu0 0.0
    %1751 = vmatpush2.msra.mxu0 0.0
    %1752 = vmatprep.subr.mxu0 0.0
    %1753 = vmatpush2.msra.mxu0 0.0
    %1754 = vmatprep.subr.mxu0 0.0
    %1755 = vmatpush2.msra.mxu0 0.0
    %1756 = vmatprep.subr.mxu0 0.0
    %1757 = vmatpush2.msra.mxu0 0.0
    %1758 = vmatprep.subr.mxu0 0.0
    %1759 = vmatpush2.msra.mxu0 0.0
    %1760 = vmatprep.subr.mxu0 0.0
    %1761 = vmatpush2.msra.mxu0 0.0
    %1762 = vmatprep.subr.mxu0 0.0
    %1763 = vmatpush2.msra.mxu0 0.0
    %1764 = vmatprep.subr.mxu0 0.0
    %1765 = vmatpush2.msra.mxu0 0.0
    %1766 = vmatprep.subr.mxu0 0.0
    %1767 = vmatpush2.msra.mxu0 0.0
    %1768 = vmatprep.subr.mxu0 0.0
    %1769 = vmatpush2.msra.mxu0 0.0
    %1770 = vmatprep.subr.mxu0 0.0
    %1771 = vmatpush2.msra.mxu0 0.0
    %1772 = vmatprep.subr.mxu0 0.0
    %1773 = vmatpush2.msra.mxu0 0.0
    %1774 = vmatprep.subr.mxu0 0.0
    %1775 = vmatpush2.msra.mxu0 0.0
    %1776 = vmatprep.subr.mxu0 0.0
    %1777 = vmatpush2.msra.mxu0 0.0
    %1778 = vmatprep.subr.mxu0 0.0
    %1779 = vmatpush2.msra.mxu0 0.0
    %1780 = vmatprep.mubr.f32.mxu0 0.0
    %v1781 = vand.u32 %v1707, 4294901760
    %v1782 = vsub.f32 %v1707, %v1781
    %v1783 = vand.u32 %v1782, 4294901760
    %v1784 = vsub.f32 %v1782, %v1783
    %v1785 = vand.u32 %v1784, 4294901760
    %1786 = vmatmul.mubr.f32.gmra.mxu0 %v1785
    %v1787 = vpop.f32.mrf.mxu0
    %v1788 = vadd.f32 0.0, %v1787
    %v1789 = vpop.f32.mrf.mxu0
    %1790 = vmatprep.mubr.f32.mxu0 0.0
    %v1791 = vand.u32 %v1710, 4294901760
    %v1792 = vsub.f32 %v1710, %v1791
    %v1793 = vand.u32 %v1792, 4294901760
    %v1794 = vsub.f32 %v1792, %v1793
    %v1795 = vand.u32 %v1794, 4294901760
    %1796 = vmatmul.mubr.f32.gmra.mxu0 %v1795
    %v1797 = vpop.f32.mrf.mxu0
    %v1798 = vadd.f32 0.0, %v1797
    %v1799 = vpop.f32.mrf.mxu0
    %1800 = vdwg.mxu0
    %1801 = vmatprep.subr.mxu0 0.0
    %1802 = vmatpush1.msra.mxu0 0.0
    %1803 = vmatprep.subr.mxu0 0.0
    %1804 = vmatpush1.msra.mxu0 0.0
    %1805 = vmatprep.subr.mxu0 0.0
    %1806 = vmatpush1.msra.mxu0 0.0
    %1807 = vmatprep.subr.mxu0 0.0
    %1808 = vmatpush1.msra.mxu0 0.0
    %1809 = vmatprep.subr.mxu0 0.0
    %1810 = vmatpush1.msra.mxu0 0.0
    %1811 = vmatprep.subr.mxu0 0.0
    %1812 = vmatpush1.msra.mxu0 0.0
    %1813 = vmatprep.subr.mxu0 0.0
    %1814 = vmatpush1.msra.mxu0 0.0
    %1815 = vmatprep.subr.mxu0 0.0
    %1816 = vmatpush1.msra.mxu0 0.0
    %1817 = vmatprep.subr.mxu0 0.0
    %1818 = vmatpush1.msra.mxu0 0.0
    %1819 = vmatprep.subr.mxu0 0.0
    %1820 = vmatpush1.msra.mxu0 0.0
    %1821 = vmatprep.subr.mxu0 0.0
    %1822 = vmatpush1.msra.mxu0 0.0
    %1823 = vmatprep.subr.mxu0 0.0
    %1824 = vmatpush1.msra.mxu0 0.0
    %1825 = vmatprep.subr.mxu0 0.0
    %v1826 = vand.u32 %v28, 4294901760
    %v1827 = vsub.f32 %v28, %v1826
    %v1828 = vand.u32 %v1827, 4294901760
    %v1829 = vsub.f32 %v1827, %v1828
    %v1830 = vand.u32 %v1829, 4294901760
    %1831 = vmatpush1.msra.mxu0 %v1830
    %1832 = vmatprep.subr.mxu0 0.0
    %v1833 = vand.u32 %v27, 4294901760
    %v1834 = vsub.f32 %v27, %v1833
    %v1835 = vand.u32 %v1834, 4294901760
    %v1836 = vsub.f32 %v1834, %v1835
    %v1837 = vand.u32 %v1836, 4294901760
    %1838 = vmatpush1.msra.mxu0 %v1837
    %1839 = vmatprep.subr.mxu0 0.0
    %v1840 = vand.u32 %v26, 4294901760
    %v1841 = vsub.f32 %v26, %v1840
    %v1842 = vand.u32 %v1841, 4294901760
    %v1843 = vsub.f32 %v1841, %v1842
    %v1844 = vand.u32 %v1843, 4294901760
    %1845 = vmatpush1.msra.mxu0 %v1844
    %1846 = vmatprep.subr.mxu0 0.0
    %v1847 = vand.u32 %v25, 4294901760
    %v1848 = vsub.f32 %v25, %v1847
    %v1849 = vand.u32 %v1848, 4294901760
    %v1850 = vsub.f32 %v1848, %v1849
    %v1851 = vand.u32 %v1850, 4294901760
    %1852 = vmatpush1.msra.mxu0 %v1851
    %1853 = vmatprep.subr.mxu0 0.0
    %1854 = vmatpush2.msra.mxu0 0.0
    %1855 = vmatprep.subr.mxu0 0.0
    %1856 = vmatpush2.msra.mxu0 0.0
    %1857 = vmatprep.subr.mxu0 0.0
    %1858 = vmatpush2.msra.mxu0 0.0
    %1859 = vmatprep.subr.mxu0 0.0
    %1860 = vmatpush2.msra.mxu0 0.0
    %1861 = vmatprep.subr.mxu0 0.0
    %1862 = vmatpush2.msra.mxu0 0.0
    %1863 = vmatprep.subr.mxu0 0.0
    %1864 = vmatpush2.msra.mxu0 0.0
    %1865 = vmatprep.subr.mxu0 0.0
    %1866 = vmatpush2.msra.mxu0 0.0
    %1867 = vmatprep.subr.mxu0 0.0
    %1868 = vmatpush2.msra.mxu0 0.0
    %1869 = vmatprep.subr.mxu0 0.0
    %1870 = vmatpush2.msra.mxu0 0.0
    %1871 = vmatprep.subr.mxu0 0.0
    %1872 = vmatpush2.msra.mxu0 0.0
    %1873 = vmatprep.subr.mxu0 0.0
    %1874 = vmatpush2.msra.mxu0 0.0
    %1875 = vmatprep.subr.mxu0 0.0
    %1876 = vmatpush2.msra.mxu0 0.0
    %1877 = vmatprep.subr.mxu0 0.0
    %1878 = vmatpush2.msra.mxu0 0.0
    %1879 = vmatprep.subr.mxu0 0.0
    %1880 = vmatpush2.msra.mxu0 0.0
    %1881 = vmatprep.subr.mxu0 0.0
    %1882 = vmatpush2.msra.mxu0 0.0
    %1883 = vmatprep.subr.mxu0 0.0
    %1884 = vmatpush2.msra.mxu0 0.0
    %1885 = vmatprep.mubr.f32.mxu0 0.0
    %v1886 = vand.u32 %v1707, 4294901760
    %1887 = vmatmul.mubr.f32.gmra.mxu0 %v1886
    %v1888 = vpop.f32.mrf.mxu0
    %v1889 = vadd.f32 %v1788, %v1888
    %v1890 = vpop.f32.mrf.mxu0
    %1891 = vmatprep.mubr.f32.mxu0 0.0
    %v1892 = vand.u32 %v1710, 4294901760
    %1893 = vmatmul.mubr.f32.gmra.mxu0 %v1892
    %v1894 = vpop.f32.mrf.mxu0
    %v1895 = vadd.f32 %v1798, %v1894
    %v1896 = vpop.f32.mrf.mxu0
    %1897 = vdwg.mxu0
    %1898 = vmatprep.subr.mxu0 0.0
    %1899 = vmatpush1.msra.mxu0 0.0
    %1900 = vmatprep.subr.mxu0 0.0
    %1901 = vmatpush1.msra.mxu0 0.0
    %1902 = vmatprep.subr.mxu0 0.0
    %1903 = vmatpush1.msra.mxu0 0.0
    %1904 = vmatprep.subr.mxu0 0.0
    %1905 = vmatpush1.msra.mxu0 0.0
    %1906 = vmatprep.subr.mxu0 0.0
    %1907 = vmatpush1.msra.mxu0 0.0
    %1908 = vmatprep.subr.mxu0 0.0
    %1909 = vmatpush1.msra.mxu0 0.0
    %1910 = vmatprep.subr.mxu0 0.0
    %1911 = vmatpush1.msra.mxu0 0.0
    %1912 = vmatprep.subr.mxu0 0.0
    %1913 = vmatpush1.msra.mxu0 0.0
    %1914 = vmatprep.subr.mxu0 0.0
    %1915 = vmatpush1.msra.mxu0 0.0
    %1916 = vmatprep.subr.mxu0 0.0
    %1917 = vmatpush1.msra.mxu0 0.0
    %1918 = vmatprep.subr.mxu0 0.0
    %1919 = vmatpush1.msra.mxu0 0.0
    %1920 = vmatprep.subr.mxu0 0.0
    %1921 = vmatpush1.msra.mxu0 0.0
    %1922 = vmatprep.subr.mxu0 0.0
    %v1923 = vand.u32 %v28, 4294901760
    %v1924 = vsub.f32 %v28, %v1923
    %1925 = vmatpush1.msra.mxu0 %v1924
    %1926 = vmatprep.subr.mxu0 0.0
    %v1927 = vand.u32 %v27, 4294901760
    %v1928 = vsub.f32 %v27, %v1927
    %1929 = vmatpush1.msra.mxu0 %v1928
    %1930 = vmatprep.subr.mxu0 0.0
    %v1931 = vand.u32 %v26, 4294901760
    %v1932 = vsub.f32 %v26, %v1931
    %1933 = vmatpush1.msra.mxu0 %v1932
    %1934 = vmatprep.subr.mxu0 0.0
    %v1935 = vand.u32 %v25, 4294901760
    %v1936 = vsub.f32 %v25, %v1935
    %1937 = vmatpush1.msra.mxu0 %v1936
    %1938 = vmatprep.subr.mxu0 0.0
    %1939 = vmatpush2.msra.mxu0 0.0
    %1940 = vmatprep.subr.mxu0 0.0
    %1941 = vmatpush2.msra.mxu0 0.0
    %1942 = vmatprep.subr.mxu0 0.0
    %1943 = vmatpush2.msra.mxu0 0.0
    %1944 = vmatprep.subr.mxu0 0.0
    %1945 = vmatpush2.msra.mxu0 0.0
    %1946 = vmatprep.subr.mxu0 0.0
    %1947 = vmatpush2.msra.mxu0 0.0
    %1948 = vmatprep.subr.mxu0 0.0
    %1949 = vmatpush2.msra.mxu0 0.0
    %1950 = vmatprep.subr.mxu0 0.0
    %1951 = vmatpush2.msra.mxu0 0.0
    %1952 = vmatprep.subr.mxu0 0.0
    %1953 = vmatpush2.msra.mxu0 0.0
    %1954 = vmatprep.subr.mxu0 0.0
    %1955 = vmatpush2.msra.mxu0 0.0
    %1956 = vmatprep.subr.mxu0 0.0
    %1957 = vmatpush2.msra.mxu0 0.0
    %1958 = vmatprep.subr.mxu0 0.0
    %1959 = vmatpush2.msra.mxu0 0.0
    %1960 = vmatprep.subr.mxu0 0.0
    %1961 = vmatpush2.msra.mxu0 0.0
    %1962 = vmatprep.subr.mxu0 0.0
    %1963 = vmatpush2.msra.mxu0 0.0
    %1964 = vmatprep.subr.mxu0 0.0
    %1965 = vmatpush2.msra.mxu0 0.0
    %1966 = vmatprep.subr.mxu0 0.0
    %1967 = vmatpush2.msra.mxu0 0.0
    %1968 = vmatprep.subr.mxu0 0.0
    %1969 = vmatpush2.msra.mxu0 0.0
    %1970 = vmatprep.mubr.f32.mxu0 0.0
    %v1971 = vand.u32 %v1707, 4294901760
    %v1972 = vsub.f32 %v1707, %v1971
    %1973 = vmatmul.mubr.f32.gmra.mxu0 %v1972
    %v1974 = vpop.f32.mrf.mxu0
    %v1975 = vadd.f32 %v1889, %v1974
    %v1976 = vpop.f32.mrf.mxu0
    %1977 = vmatprep.mubr.f32.mxu0 0.0
    %v1978 = vand.u32 %v1710, 4294901760
    %v1979 = vsub.f32 %v1710, %v1978
    %1980 = vmatmul.mubr.f32.gmra.mxu0 %v1979
    %v1981 = vpop.f32.mrf.mxu0
    %v1982 = vadd.f32 %v1895, %v1981
    %v1983 = vpop.f32.mrf.mxu0
    %1984 = vdwg.mxu0
    %1985 = vmatprep.subr.mxu0 0.0
    %1986 = vmatpush1.msra.mxu0 0.0
    %1987 = vmatprep.subr.mxu0 0.0
    %1988 = vmatpush1.msra.mxu0 0.0
    %1989 = vmatprep.subr.mxu0 0.0
    %1990 = vmatpush1.msra.mxu0 0.0
    %1991 = vmatprep.subr.mxu0 0.0
    %1992 = vmatpush1.msra.mxu0 0.0
    %1993 = vmatprep.subr.mxu0 0.0
    %1994 = vmatpush1.msra.mxu0 0.0
    %1995 = vmatprep.subr.mxu0 0.0
    %1996 = vmatpush1.msra.mxu0 0.0
    %1997 = vmatprep.subr.mxu0 0.0
    %1998 = vmatpush1.msra.mxu0 0.0
    %1999 = vmatprep.subr.mxu0 0.0
    %2000 = vmatpush1.msra.mxu0 0.0
    %2001 = vmatprep.subr.mxu0 0.0
    %2002 = vmatpush1.msra.mxu0 0.0
    %2003 = vmatprep.subr.mxu0 0.0
    %2004 = vmatpush1.msra.mxu0 0.0
    %2005 = vmatprep.subr.mxu0 0.0
    %2006 = vmatpush1.msra.mxu0 0.0
    %2007 = vmatprep.subr.mxu0 0.0
    %2008 = vmatpush1.msra.mxu0 0.0
    %2009 = vmatprep.subr.mxu0 0.0
    %v2010 = vand.u32 %v28, 4294901760
    %2011 = vmatpush1.msra.mxu0 %v2010
    %2012 = vmatprep.subr.mxu0 0.0
    %v2013 = vand.u32 %v27, 4294901760
    %2014 = vmatpush1.msra.mxu0 %v2013
    %2015 = vmatprep.subr.mxu0 0.0
    %v2016 = vand.u32 %v26, 4294901760
    %2017 = vmatpush1.msra.mxu0 %v2016
    %2018 = vmatprep.subr.mxu0 0.0
    %v2019 = vand.u32 %v25, 4294901760
    %2020 = vmatpush1.msra.mxu0 %v2019
    %2021 = vmatprep.subr.mxu0 0.0
    %2022 = vmatpush2.msra.mxu0 0.0
    %2023 = vmatprep.subr.mxu0 0.0
    %2024 = vmatpush2.msra.mxu0 0.0
    %2025 = vmatprep.subr.mxu0 0.0
    %2026 = vmatpush2.msra.mxu0 0.0
    %2027 = vmatprep.subr.mxu0 0.0
    %2028 = vmatpush2.msra.mxu0 0.0
    %2029 = vmatprep.subr.mxu0 0.0
    %2030 = vmatpush2.msra.mxu0 0.0
    %2031 = vmatprep.subr.mxu0 0.0
    %2032 = vmatpush2.msra.mxu0 0.0
    %2033 = vmatprep.subr.mxu0 0.0
    %2034 = vmatpush2.msra.mxu0 0.0
    %2035 = vmatprep.subr.mxu0 0.0
    %2036 = vmatpush2.msra.mxu0 0.0
    %2037 = vmatprep.subr.mxu0 0.0
    %2038 = vmatpush2.msra.mxu0 0.0
    %2039 = vmatprep.subr.mxu0 0.0
    %2040 = vmatpush2.msra.mxu0 0.0
    %2041 = vmatprep.subr.mxu0 0.0
    %2042 = vmatpush2.msra.mxu0 0.0
    %2043 = vmatprep.subr.mxu0 0.0
    %2044 = vmatpush2.msra.mxu0 0.0
    %2045 = vmatprep.subr.mxu0 0.0
    %2046 = vmatpush2.msra.mxu0 0.0
    %2047 = vmatprep.subr.mxu0 0.0
    %2048 = vmatpush2.msra.mxu0 0.0
    %2049 = vmatprep.subr.mxu0 0.0
    %2050 = vmatpush2.msra.mxu0 0.0
    %2051 = vmatprep.subr.mxu0 0.0
    %2052 = vmatpush2.msra.mxu0 0.0
    %2053 = vmatprep.mubr.f32.mxu0 0.0
    %v2054 = vand.u32 %v1707, 4294901760
    %v2055 = vsub.f32 %v1707, %v2054
    %v2056 = vand.u32 %v2055, 4294901760
    %2057 = vmatmul.mubr.f32.gmra.mxu0 %v2056
    %v2058 = vpop.f32.mrf.mxu0
    %v2059 = vadd.f32 %v1975, %v2058
    %v2060 = vpop.f32.mrf.mxu0
    %2061 = vmatprep.mubr.f32.mxu0 0.0
    %v2062 = vand.u32 %v1710, 4294901760
    %v2063 = vsub.f32 %v1710, %v2062
    %v2064 = vand.u32 %v2063, 4294901760
    %2065 = vmatmul.mubr.f32.gmra.mxu0 %v2064
    %v2066 = vpop.f32.mrf.mxu0
    %v2067 = vadd.f32 %v1982, %v2066
    %v2068 = vpop.f32.mrf.mxu0
    %2069 = vdwg.mxu0
    %2070 = vmatprep.subr.mxu0 0.0
    %2071 = vmatpush1.msra.mxu0 0.0
    %2072 = vmatprep.subr.mxu0 0.0
    %2073 = vmatpush1.msra.mxu0 0.0
    %2074 = vmatprep.subr.mxu0 0.0
    %2075 = vmatpush1.msra.mxu0 0.0
    %2076 = vmatprep.subr.mxu0 0.0
    %2077 = vmatpush1.msra.mxu0 0.0
    %2078 = vmatprep.subr.mxu0 0.0
    %2079 = vmatpush1.msra.mxu0 0.0
    %2080 = vmatprep.subr.mxu0 0.0
    %2081 = vmatpush1.msra.mxu0 0.0
    %2082 = vmatprep.subr.mxu0 0.0
    %2083 = vmatpush1.msra.mxu0 0.0
    %2084 = vmatprep.subr.mxu0 0.0
    %2085 = vmatpush1.msra.mxu0 0.0
    %2086 = vmatprep.subr.mxu0 0.0
    %2087 = vmatpush1.msra.mxu0 0.0
    %2088 = vmatprep.subr.mxu0 0.0
    %2089 = vmatpush1.msra.mxu0 0.0
    %2090 = vmatprep.subr.mxu0 0.0
    %2091 = vmatpush1.msra.mxu0 0.0
    %2092 = vmatprep.subr.mxu0 0.0
    %2093 = vmatpush1.msra.mxu0 0.0
    %2094 = vmatprep.subr.mxu0 0.0
    %v2095 = vand.u32 %v28, 4294901760
    %v2096 = vsub.f32 %v28, %v2095
    %v2097 = vand.u32 %v2096, 4294901760
    %2098 = vmatpush1.msra.mxu0 %v2097
    %2099 = vmatprep.subr.mxu0 0.0
    %v2100 = vand.u32 %v27, 4294901760
    %v2101 = vsub.f32 %v27, %v2100
    %v2102 = vand.u32 %v2101, 4294901760
    %2103 = vmatpush1.msra.mxu0 %v2102
    %2104 = vmatprep.subr.mxu0 0.0
    %v2105 = vand.u32 %v26, 4294901760
    %v2106 = vsub.f32 %v26, %v2105
    %v2107 = vand.u32 %v2106, 4294901760
    %2108 = vmatpush1.msra.mxu0 %v2107
    %2109 = vmatprep.subr.mxu0 0.0
    %v2110 = vand.u32 %v25, 4294901760
    %v2111 = vsub.f32 %v25, %v2110
    %v2112 = vand.u32 %v2111, 4294901760
    %2113 = vmatpush1.msra.mxu0 %v2112
    %2114 = vmatprep.subr.mxu0 0.0
    %2115 = vmatpush2.msra.mxu0 0.0
    %2116 = vmatprep.subr.mxu0 0.0
    %2117 = vmatpush2.msra.mxu0 0.0
    %2118 = vmatprep.subr.mxu0 0.0
    %2119 = vmatpush2.msra.mxu0 0.0
    %2120 = vmatprep.subr.mxu0 0.0
    %2121 = vmatpush2.msra.mxu0 0.0
    %2122 = vmatprep.subr.mxu0 0.0
    %2123 = vmatpush2.msra.mxu0 0.0
    %2124 = vmatprep.subr.mxu0 0.0
    %2125 = vmatpush2.msra.mxu0 0.0
    %2126 = vmatprep.subr.mxu0 0.0
    %2127 = vmatpush2.msra.mxu0 0.0
    %2128 = vmatprep.subr.mxu0 0.0
    %2129 = vmatpush2.msra.mxu0 0.0
    %2130 = vmatprep.subr.mxu0 0.0
    %2131 = vmatpush2.msra.mxu0 0.0
    %2132 = vmatprep.subr.mxu0 0.0
    %2133 = vmatpush2.msra.mxu0 0.0
    %2134 = vmatprep.subr.mxu0 0.0
    %2135 = vmatpush2.msra.mxu0 0.0
    %2136 = vmatprep.subr.mxu0 0.0
    %2137 = vmatpush2.msra.mxu0 0.0
    %2138 = vmatprep.subr.mxu0 0.0
    %2139 = vmatpush2.msra.mxu0 0.0
    %2140 = vmatprep.subr.mxu0 0.0
    %2141 = vmatpush2.msra.mxu0 0.0
    %2142 = vmatprep.subr.mxu0 0.0
    %2143 = vmatpush2.msra.mxu0 0.0
    %2144 = vmatprep.subr.mxu0 0.0
    %2145 = vmatpush2.msra.mxu0 0.0
    %2146 = vmatprep.mubr.f32.mxu0 0.0
    %v2147 = vand.u32 %v1707, 4294901760
    %2148 = vmatmul.mubr.f32.gmra.mxu0 %v2147
    %v2149 = vpop.f32.mrf.mxu0
    %v2150 = vadd.f32 %v2059, %v2149
    %v2151 = vpop.f32.mrf.mxu0
    %2152 = vmatprep.mubr.f32.mxu0 0.0
    %v2153 = vand.u32 %v1710, 4294901760
    %2154 = vmatmul.mubr.f32.gmra.mxu0 %v2153
    %v2155 = vpop.f32.mrf.mxu0
    %v2156 = vadd.f32 %v2067, %v2155
    %v2157 = vpop.f32.mrf.mxu0
    %2158 = vdwg.mxu0
    %2159 = vmatprep.subr.mxu0 0.0
    %2160 = vmatpush1.msra.mxu0 0.0
    %2161 = vmatprep.subr.mxu0 0.0
    %2162 = vmatpush1.msra.mxu0 0.0
    %2163 = vmatprep.subr.mxu0 0.0
    %2164 = vmatpush1.msra.mxu0 0.0
    %2165 = vmatprep.subr.mxu0 0.0
    %2166 = vmatpush1.msra.mxu0 0.0
    %2167 = vmatprep.subr.mxu0 0.0
    %2168 = vmatpush1.msra.mxu0 0.0
    %2169 = vmatprep.subr.mxu0 0.0
    %2170 = vmatpush1.msra.mxu0 0.0
    %2171 = vmatprep.subr.mxu0 0.0
    %2172 = vmatpush1.msra.mxu0 0.0
    %2173 = vmatprep.subr.mxu0 0.0
    %2174 = vmatpush1.msra.mxu0 0.0
    %2175 = vmatprep.subr.mxu0 0.0
    %2176 = vmatpush1.msra.mxu0 0.0
    %2177 = vmatprep.subr.mxu0 0.0
    %2178 = vmatpush1.msra.mxu0 0.0
    %2179 = vmatprep.subr.mxu0 0.0
    %2180 = vmatpush1.msra.mxu0 0.0
    %2181 = vmatprep.subr.mxu0 0.0
    %2182 = vmatpush1.msra.mxu0 0.0
    %2183 = vmatprep.subr.mxu0 0.0
    %v2184 = vand.u32 %v28, 4294901760
    %2185 = vmatpush1.msra.mxu0 %v2184
    %2186 = vmatprep.subr.mxu0 0.0
    %v2187 = vand.u32 %v27, 4294901760
    %2188 = vmatpush1.msra.mxu0 %v2187
    %2189 = vmatprep.subr.mxu0 0.0
    %v2190 = vand.u32 %v26, 4294901760
    %2191 = vmatpush1.msra.mxu0 %v2190
    %2192 = vmatprep.subr.mxu0 0.0
    %v2193 = vand.u32 %v25, 4294901760
    %2194 = vmatpush1.msra.mxu0 %v2193
    %2195 = vmatprep.subr.mxu0 0.0
    %2196 = vmatpush2.msra.mxu0 0.0
    %2197 = vmatprep.subr.mxu0 0.0
    %2198 = vmatpush2.msra.mxu0 0.0
    %2199 = vmatprep.subr.mxu0 0.0
    %2200 = vmatpush2.msra.mxu0 0.0
    %2201 = vmatprep.subr.mxu0 0.0
    %2202 = vmatpush2.msra.mxu0 0.0
    %2203 = vmatprep.subr.mxu0 0.0
    %2204 = vmatpush2.msra.mxu0 0.0
    %2205 = vmatprep.subr.mxu0 0.0
    %2206 = vmatpush2.msra.mxu0 0.0
    %2207 = vmatprep.subr.mxu0 0.0
    %2208 = vmatpush2.msra.mxu0 0.0
    %2209 = vmatprep.subr.mxu0 0.0
    %2210 = vmatpush2.msra.mxu0 0.0
    %2211 = vmatprep.subr.mxu0 0.0
    %2212 = vmatpush2.msra.mxu0 0.0
    %2213 = vmatprep.subr.mxu0 0.0
    %2214 = vmatpush2.msra.mxu0 0.0
    %2215 = vmatprep.subr.mxu0 0.0
    %2216 = vmatpush2.msra.mxu0 0.0
    %2217 = vmatprep.subr.mxu0 0.0
    %2218 = vmatpush2.msra.mxu0 0.0
    %2219 = vmatprep.subr.mxu0 0.0
    %2220 = vmatpush2.msra.mxu0 0.0
    %2221 = vmatprep.subr.mxu0 0.0
    %2222 = vmatpush2.msra.mxu0 0.0
    %2223 = vmatprep.subr.mxu0 0.0
    %2224 = vmatpush2.msra.mxu0 0.0
    %2225 = vmatprep.subr.mxu0 0.0
    %2226 = vmatpush2.msra.mxu0 0.0
    %2227 = vmatprep.mubr.f32.mxu0 0.0
    %v2228 = vand.u32 %v1707, 4294901760
    %2229 = vmatmul.mubr.f32.gmra.mxu0 %v2228
    %v2230 = vpop.f32.mrf.mxu0
    %v2231 = vadd.f32 %v2150, %v2230
    %v2232 = vpop.f32.mrf.mxu0
    %2233 = vmatprep.mubr.f32.mxu0 0.0
    %v2234 = vand.u32 %v1710, 4294901760
    %2235 = vmatmul.mubr.f32.gmra.mxu0 %v2234
    %v2236 = vpop.f32.mrf.mxu0
    %v2237 = vadd.f32 %v2156, %v2236
    %v2238 = vpop.f32.mrf.mxu0
    %2239 = vdwg.mxu0
    %v2240 = vadd.f32 %v1694, %v2231
    %v2241 = vadd.f32 %v1695, %v2237
    %v2242 = vtanh.pop %v2240
    %v2243 = vtanh.pop %v2241
    %v2244 = vmul.f32 %v1690, %v1138
    %v2245 = vmul.f32 %v1692, %v1139
    %v2246 = vsub.f32 1.0, %v1690
    %v2247 = vsub.f32 1.0, %v1692
    %v2248 = vmul.f32 %v2246, %v2242
    %v2249 = vmul.f32 %v2247, %v2243
    %v2250 = vadd.f32 %v2244, %v2248
    %v2251 = vadd.f32 %v2245, %v2249
    %s2252 = scalar_lea.vmem [#allocation2], 16
    %2253 = vst.msk [vmem:[%s2252] sm:$0xff] %vm33, %v2250
    %2254 = vst.msk [vmem:[%s2252 + $0x8] sm:$0xff] %vm33, %v2251
    %s2255 = scalar_lea.vmem %s0, 32
    %v2256 = vld [vmem:[%s2255] sm:$0xff]
    %v2257 = vld [vmem:[%s2255 + $0x8] sm:$0xff]
    %v2259 = vsel %vm33, %v2250, 0
    %v2262 = vsel %vm33, %v2251, 0
    %2264 = vmatprep.subr.mxu0 0.0
    %2265 = vmatpush1.msra.mxu0 0.0
    %2266 = vmatprep.subr.mxu0 0.0
    %2267 = vmatpush1.msra.mxu0 0.0
    %2268 = vmatprep.subr.mxu0 0.0
    %2269 = vmatpush1.msra.mxu0 0.0
    %2270 = vmatprep.subr.mxu0 0.0
    %2271 = vmatpush1.msra.mxu0 0.0
    %2272 = vmatprep.subr.mxu0 0.0
    %2273 = vmatpush1.msra.mxu0 0.0
    %2274 = vmatprep.subr.mxu0 0.0
    %2275 = vmatpush1.msra.mxu0 0.0
    %2276 = vmatprep.subr.mxu0 0.0
    %2277 = vmatpush1.msra.mxu0 0.0
    %2278 = vmatprep.subr.mxu0 0.0
    %2279 = vmatpush1.msra.mxu0 0.0
    %2280 = vmatprep.subr.mxu0 0.0
    %2281 = vmatpush1.msra.mxu0 0.0
    %2282 = vmatprep.subr.mxu0 0.0
    %2283 = vmatpush1.msra.mxu0 0.0
    %2284 = vmatprep.subr.mxu0 0.0
    %2285 = vmatpush1.msra.mxu0 0.0
    %2286 = vmatprep.subr.mxu0 0.0
    %2287 = vmatpush1.msra.mxu0 0.0
    %2288 = vmatprep.subr.mxu0 0.0
    %v2289 = vand.u32 %v24, 4294901760
    %2290 = vmatpush1.msra.mxu0 %v2289
    %2291 = vmatprep.subr.mxu0 0.0
    %v2292 = vand.u32 %v23, 4294901760
    %2293 = vmatpush1.msra.mxu0 %v2292
    %2294 = vmatprep.subr.mxu0 0.0
    %v2295 = vand.u32 %v22, 4294901760
    %2296 = vmatpush1.msra.mxu0 %v2295
    %2297 = vmatprep.subr.mxu0 0.0
    %v2298 = vand.u32 %v21, 4294901760
    %2299 = vmatpush1.msra.mxu0 %v2298
    %2300 = vmatprep.subr.mxu0 0.0
    %2301 = vmatpush2.msra.mxu0 0.0
    %2302 = vmatprep.subr.mxu0 0.0
    %2303 = vmatpush2.msra.mxu0 0.0
    %2304 = vmatprep.subr.mxu0 0.0
    %2305 = vmatpush2.msra.mxu0 0.0
    %2306 = vmatprep.subr.mxu0 0.0
    %2307 = vmatpush2.msra.mxu0 0.0
    %2308 = vmatprep.subr.mxu0 0.0
    %2309 = vmatpush2.msra.mxu0 0.0
    %2310 = vmatprep.subr.mxu0 0.0
    %2311 = vmatpush2.msra.mxu0 0.0
    %2312 = vmatprep.subr.mxu0 0.0
    %2313 = vmatpush2.msra.mxu0 0.0
    %2314 = vmatprep.subr.mxu0 0.0
    %2315 = vmatpush2.msra.mxu0 0.0
    %2316 = vmatprep.subr.mxu0 0.0
    %2317 = vmatpush2.msra.mxu0 0.0
    %2318 = vmatprep.subr.mxu0 0.0
    %2319 = vmatpush2.msra.mxu0 0.0
    %2320 = vmatprep.subr.mxu0 0.0
    %2321 = vmatpush2.msra.mxu0 0.0
    %2322 = vmatprep.subr.mxu0 0.0
    %2323 = vmatpush2.msra.mxu0 0.0
    %2324 = vmatprep.subr.mxu0 0.0
    %2325 = vmatpush2.msra.mxu0 0.0
    %2326 = vmatprep.subr.mxu0 0.0
    %2327 = vmatpush2.msra.mxu0 0.0
    %2328 = vmatprep.subr.mxu0 0.0
    %2329 = vmatpush2.msra.mxu0 0.0
    %2330 = vmatprep.subr.mxu0 0.0
    %2331 = vmatpush2.msra.mxu0 0.0
    %2332 = vmatprep.mubr.f32.mxu0 0.0
    %v2333 = vand.u32 %v2259, 4294901760
    %v2334 = vsub.f32 %v2259, %v2333
    %v2335 = vand.u32 %v2334, 4294901760
    %v2336 = vsub.f32 %v2334, %v2335
    %v2337 = vand.u32 %v2336, 4294901760
    %2338 = vmatmul.mubr.f32.gmra.mxu0 %v2337
    %v2339 = vpop.f32.mrf.mxu0
    %v2340 = vadd.f32 0.0, %v2339
    %v2341 = vpop.f32.mrf.mxu0
    %2342 = vmatprep.mubr.f32.mxu0 0.0
    %v2343 = vand.u32 %v2262, 4294901760
    %v2344 = vsub.f32 %v2262, %v2343
    %v2345 = vand.u32 %v2344, 4294901760
    %v2346 = vsub.f32 %v2344, %v2345
    %v2347 = vand.u32 %v2346, 4294901760
    %2348 = vmatmul.mubr.f32.gmra.mxu0 %v2347
    %v2349 = vpop.f32.mrf.mxu0
    %v2350 = vadd.f32 0.0, %v2349
    %v2351 = vpop.f32.mrf.mxu0
    %2352 = vdwg.mxu0
    %2353 = vmatprep.subr.mxu0 0.0
    %2354 = vmatpush1.msra.mxu0 0.0
    %2355 = vmatprep.subr.mxu0 0.0
    %2356 = vmatpush1.msra.mxu0 0.0
    %2357 = vmatprep.subr.mxu0 0.0
    %2358 = vmatpush1.msra.mxu0 0.0
    %2359 = vmatprep.subr.mxu0 0.0
    %2360 = vmatpush1.msra.mxu0 0.0
    %2361 = vmatprep.subr.mxu0 0.0
    %2362 = vmatpush1.msra.mxu0 0.0
    %2363 = vmatprep.subr.mxu0 0.0
    %2364 = vmatpush1.msra.mxu0 0.0
    %2365 = vmatprep.subr.mxu0 0.0
    %2366 = vmatpush1.msra.mxu0 0.0
    %2367 = vmatprep.subr.mxu0 0.0
    %2368 = vmatpush1.msra.mxu0 0.0
    %2369 = vmatprep.subr.mxu0 0.0
    %2370 = vmatpush1.msra.mxu0 0.0
    %2371 = vmatprep.subr.mxu0 0.0
    %2372 = vmatpush1.msra.mxu0 0.0
    %2373 = vmatprep.subr.mxu0 0.0
    %2374 = vmatpush1.msra.mxu0 0.0
    %2375 = vmatprep.subr.mxu0 0.0
    %2376 = vmatpush1.msra.mxu0 0.0
    %2377 = vmatprep.subr.mxu0 0.0
    %v2378 = vand.u32 %v24, 4294901760
    %v2379 = vsub.f32 %v24, %v2378
    %v2380 = vand.u32 %v2379, 4294901760
    %v2381 = vsub.f32 %v2379, %v2380
    %v2382 = vand.u32 %v2381, 4294901760
    %2383 = vmatpush1.msra.mxu0 %v2382
    %2384 = vmatprep.subr.mxu0 0.0
    %v2385 = vand.u32 %v23, 4294901760
    %v2386 = vsub.f32 %v23, %v2385
    %v2387 = vand.u32 %v2386, 4294901760
    %v2388 = vsub.f32 %v2386, %v2387
    %v2389 = vand.u32 %v2388, 4294901760
    %2390 = vmatpush1.msra.mxu0 %v2389
    %2391 = vmatprep.subr.mxu0 0.0
    %v2392 = vand.u32 %v22, 4294901760
    %v2393 = vsub.f32 %v22, %v2392
    %v2394 = vand.u32 %v2393, 4294901760
    %v2395 = vsub.f32 %v2393, %v2394
    %v2396 = vand.u32 %v2395, 4294901760
    %2397 = vmatpush1.msra.mxu0 %v2396
    %2398 = vmatprep.subr.mxu0 0.0
    %v2399 = vand.u32 %v21, 4294901760
    %v2400 = vsub.f32 %v21, %v2399
    %v2401 = vand.u32 %v2400, 4294901760
    %v2402 = vsub.f32 %v2400, %v2401
    %v2403 = vand.u32 %v2402, 4294901760
    %2404 = vmatpush1.msra.mxu0 %v2403
    %2405 = vmatprep.subr.mxu0 0.0
    %2406 = vmatpush2.msra.mxu0 0.0
    %2407 = vmatprep.subr.mxu0 0.0
    %2408 = vmatpush2.msra.mxu0 0.0
    %2409 = vmatprep.subr.mxu0 0.0
    %2410 = vmatpush2.msra.mxu0 0.0
    %2411 = vmatprep.subr.mxu0 0.0
    %2412 = vmatpush2.msra.mxu0 0.0
    %2413 = vmatprep.subr.mxu0 0.0
    %2414 = vmatpush2.msra.mxu0 0.0
    %2415 = vmatprep.subr.mxu0 0.0
    %2416 = vmatpush2.msra.mxu0 0.0
    %2417 = vmatprep.subr.mxu0 0.0
    %2418 = vmatpush2.msra.mxu0 0.0
    %2419 = vmatprep.subr.mxu0 0.0
    %2420 = vmatpush2.msra.mxu0 0.0
    %2421 = vmatprep.subr.mxu0 0.0
    %2422 = vmatpush2.msra.mxu0 0.0
    %2423 = vmatprep.subr.mxu0 0.0
    %2424 = vmatpush2.msra.mxu0 0.0
    %2425 = vmatprep.subr.mxu0 0.0
    %2426 = vmatpush2.msra.mxu0 0.0
    %2427 = vmatprep.subr.mxu0 0.0
    %2428 = vmatpush2.msra.mxu0 0.0
    %2429 = vmatprep.subr.mxu0 0.0
    %2430 = vmatpush2.msra.mxu0 0.0
    %2431 = vmatprep.subr.mxu0 0.0
    %2432 = vmatpush2.msra.mxu0 0.0
    %2433 = vmatprep.subr.mxu0 0.0
    %2434 = vmatpush2.msra.mxu0 0.0
    %2435 = vmatprep.subr.mxu0 0.0
    %2436 = vmatpush2.msra.mxu0 0.0
    %2437 = vmatprep.mubr.f32.mxu0 0.0
    %v2438 = vand.u32 %v2259, 4294901760
    %2439 = vmatmul.mubr.f32.gmra.mxu0 %v2438
    %v2440 = vpop.f32.mrf.mxu0
    %v2441 = vadd.f32 %v2340, %v2440
    %v2442 = vpop.f32.mrf.mxu0
    %2443 = vmatprep.mubr.f32.mxu0 0.0
    %v2444 = vand.u32 %v2262, 4294901760
    %2445 = vmatmul.mubr.f32.gmra.mxu0 %v2444
    %v2446 = vpop.f32.mrf.mxu0
    %v2447 = vadd.f32 %v2350, %v2446
    %v2448 = vpop.f32.mrf.mxu0
    %2449 = vdwg.mxu0
    %2450 = vmatprep.subr.mxu0 0.0
    %2451 = vmatpush1.msra.mxu0 0.0
    %2452 = vmatprep.subr.mxu0 0.0
    %2453 = vmatpush1.msra.mxu0 0.0
    %2454 = vmatprep.subr.mxu0 0.0
    %2455 = vmatpush1.msra.mxu0 0.0
    %2456 = vmatprep.subr.mxu0 0.0
    %2457 = vmatpush1.msra.mxu0 0.0
    %2458 = vmatprep.subr.mxu0 0.0
    %2459 = vmatpush1.msra.mxu0 0.0
    %2460 = vmatprep.subr.mxu0 0.0
    %2461 = vmatpush1.msra.mxu0 0.0
    %2462 = vmatprep.subr.mxu0 0.0
    %2463 = vmatpush1.msra.mxu0 0.0
    %2464 = vmatprep.subr.mxu0 0.0
    %2465 = vmatpush1.msra.mxu0 0.0
    %2466 = vmatprep.subr.mxu0 0.0
    %2467 = vmatpush1.msra.mxu0 0.0
    %2468 = vmatprep.subr.mxu0 0.0
    %2469 = vmatpush1.msra.mxu0 0.0
    %2470 = vmatprep.subr.mxu0 0.0
    %2471 = vmatpush1.msra.mxu0 0.0
    %2472 = vmatprep.subr.mxu0 0.0
    %2473 = vmatpush1.msra.mxu0 0.0
    %2474 = vmatprep.subr.mxu0 0.0
    %v2475 = vand.u32 %v24, 4294901760
    %v2476 = vsub.f32 %v24, %v2475
    %2477 = vmatpush1.msra.mxu0 %v2476
    %2478 = vmatprep.subr.mxu0 0.0
    %v2479 = vand.u32 %v23, 4294901760
    %v2480 = vsub.f32 %v23, %v2479
    %2481 = vmatpush1.msra.mxu0 %v2480
    %2482 = vmatprep.subr.mxu0 0.0
    %v2483 = vand.u32 %v22, 4294901760
    %v2484 = vsub.f32 %v22, %v2483
    %2485 = vmatpush1.msra.mxu0 %v2484
    %2486 = vmatprep.subr.mxu0 0.0
    %v2487 = vand.u32 %v21, 4294901760
    %v2488 = vsub.f32 %v21, %v2487
    %2489 = vmatpush1.msra.mxu0 %v2488
    %2490 = vmatprep.subr.mxu0 0.0
    %2491 = vmatpush2.msra.mxu0 0.0
    %2492 = vmatprep.subr.mxu0 0.0
    %2493 = vmatpush2.msra.mxu0 0.0
    %2494 = vmatprep.subr.mxu0 0.0
    %2495 = vmatpush2.msra.mxu0 0.0
    %2496 = vmatprep.subr.mxu0 0.0
    %2497 = vmatpush2.msra.mxu0 0.0
    %2498 = vmatprep.subr.mxu0 0.0
    %2499 = vmatpush2.msra.mxu0 0.0
    %2500 = vmatprep.subr.mxu0 0.0
    %2501 = vmatpush2.msra.mxu0 0.0
    %2502 = vmatprep.subr.mxu0 0.0
    %2503 = vmatpush2.msra.mxu0 0.0
    %2504 = vmatprep.subr.mxu0 0.0
    %2505 = vmatpush2.msra.mxu0 0.0
    %2506 = vmatprep.subr.mxu0 0.0
    %2507 = vmatpush2.msra.mxu0 0.0
    %2508 = vmatprep.subr.mxu0 0.0
    %2509 = vmatpush2.msra.mxu0 0.0
    %2510 = vmatprep.subr.mxu0 0.0
    %2511 = vmatpush2.msra.mxu0 0.0
    %2512 = vmatprep.subr.mxu0 0.0
    %2513 = vmatpush2.msra.mxu0 0.0
    %2514 = vmatprep.subr.mxu0 0.0
    %2515 = vmatpush2.msra.mxu0 0.0
    %2516 = vmatprep.subr.mxu0 0.0
    %2517 = vmatpush2.msra.mxu0 0.0
    %2518 = vmatprep.subr.mxu0 0.0
    %2519 = vmatpush2.msra.mxu0 0.0
    %2520 = vmatprep.subr.mxu0 0.0
    %2521 = vmatpush2.msra.mxu0 0.0
    %2522 = vmatprep.mubr.f32.mxu0 0.0
    %v2523 = vand.u32 %v2259, 4294901760
    %v2524 = vsub.f32 %v2259, %v2523
    %2525 = vmatmul.mubr.f32.gmra.mxu0 %v2524
    %v2526 = vpop.f32.mrf.mxu0
    %v2527 = vadd.f32 %v2441, %v2526
    %v2528 = vpop.f32.mrf.mxu0
    %2529 = vmatprep.mubr.f32.mxu0 0.0
    %v2530 = vand.u32 %v2262, 4294901760
    %v2531 = vsub.f32 %v2262, %v2530
    %2532 = vmatmul.mubr.f32.gmra.mxu0 %v2531
    %v2533 = vpop.f32.mrf.mxu0
    %v2534 = vadd.f32 %v2447, %v2533
    %v2535 = vpop.f32.mrf.mxu0
    %2536 = vdwg.mxu0
    %2537 = vmatprep.subr.mxu0 0.0
    %2538 = vmatpush1.msra.mxu0 0.0
    %2539 = vmatprep.subr.mxu0 0.0
    %2540 = vmatpush1.msra.mxu0 0.0
    %2541 = vmatprep.subr.mxu0 0.0
    %2542 = vmatpush1.msra.mxu0 0.0
    %2543 = vmatprep.subr.mxu0 0.0
    %2544 = vmatpush1.msra.mxu0 0.0
    %2545 = vmatprep.subr.mxu0 0.0
    %2546 = vmatpush1.msra.mxu0 0.0
    %2547 = vmatprep.subr.mxu0 0.0
    %2548 = vmatpush1.msra.mxu0 0.0
    %2549 = vmatprep.subr.mxu0 0.0
    %2550 = vmatpush1.msra.mxu0 0.0
    %2551 = vmatprep.subr.mxu0 0.0
    %2552 = vmatpush1.msra.mxu0 0.0
    %2553 = vmatprep.subr.mxu0 0.0
    %2554 = vmatpush1.msra.mxu0 0.0
    %2555 = vmatprep.subr.mxu0 0.0
    %2556 = vmatpush1.msra.mxu0 0.0
    %2557 = vmatprep.subr.mxu0 0.0
    %2558 = vmatpush1.msra.mxu0 0.0
    %2559 = vmatprep.subr.mxu0 0.0
    %2560 = vmatpush1.msra.mxu0 0.0
    %2561 = vmatprep.subr.mxu0 0.0
    %v2562 = vand.u32 %v24, 4294901760
    %2563 = vmatpush1.msra.mxu0 %v2562
    %2564 = vmatprep.subr.mxu0 0.0
    %v2565 = vand.u32 %v23, 4294901760
    %2566 = vmatpush1.msra.mxu0 %v2565
    %2567 = vmatprep.subr.mxu0 0.0
    %v2568 = vand.u32 %v22, 4294901760
    %2569 = vmatpush1.msra.mxu0 %v2568
    %2570 = vmatprep.subr.mxu0 0.0
    %v2571 = vand.u32 %v21, 4294901760
    %2572 = vmatpush1.msra.mxu0 %v2571
    %2573 = vmatprep.subr.mxu0 0.0
    %2574 = vmatpush2.msra.mxu0 0.0
    %2575 = vmatprep.subr.mxu0 0.0
    %2576 = vmatpush2.msra.mxu0 0.0
    %2577 = vmatprep.subr.mxu0 0.0
    %2578 = vmatpush2.msra.mxu0 0.0
    %2579 = vmatprep.subr.mxu0 0.0
    %2580 = vmatpush2.msra.mxu0 0.0
    %2581 = vmatprep.subr.mxu0 0.0
    %2582 = vmatpush2.msra.mxu0 0.0
    %2583 = vmatprep.subr.mxu0 0.0
    %2584 = vmatpush2.msra.mxu0 0.0
    %2585 = vmatprep.subr.mxu0 0.0
    %2586 = vmatpush2.msra.mxu0 0.0
    %2587 = vmatprep.subr.mxu0 0.0
    %2588 = vmatpush2.msra.mxu0 0.0
    %2589 = vmatprep.subr.mxu0 0.0
    %2590 = vmatpush2.msra.mxu0 0.0
    %2591 = vmatprep.subr.mxu0 0.0
    %2592 = vmatpush2.msra.mxu0 0.0
    %2593 = vmatprep.subr.mxu0 0.0
    %2594 = vmatpush2.msra.mxu0 0.0
    %2595 = vmatprep.subr.mxu0 0.0
    %2596 = vmatpush2.msra.mxu0 0.0
    %2597 = vmatprep.subr.mxu0 0.0
    %2598 = vmatpush2.msra.mxu0 0.0
    %2599 = vmatprep.subr.mxu0 0.0
    %2600 = vmatpush2.msra.mxu0 0.0
    %2601 = vmatprep.subr.mxu0 0.0
    %2602 = vmatpush2.msra.mxu0 0.0
    %2603 = vmatprep.subr.mxu0 0.0
    %2604 = vmatpush2.msra.mxu0 0.0
    %2605 = vmatprep.mubr.f32.mxu0 0.0
    %v2606 = vand.u32 %v2259, 4294901760
    %v2607 = vsub.f32 %v2259, %v2606
    %v2608 = vand.u32 %v2607, 4294901760
    %2609 = vmatmul.mubr.f32.gmra.mxu0 %v2608
    %v2610 = vpop.f32.mrf.mxu0
    %v2611 = vadd.f32 %v2527, %v2610
    %v2612 = vpop.f32.mrf.mxu0
    %2613 = vmatprep.mubr.f32.mxu0 0.0
    %v2614 = vand.u32 %v2262, 4294901760
    %v2615 = vsub.f32 %v2262, %v2614
    %v2616 = vand.u32 %v2615, 4294901760
    %2617 = vmatmul.mubr.f32.gmra.mxu0 %v2616
    %v2618 = vpop.f32.mrf.mxu0
    %v2619 = vadd.f32 %v2534, %v2618
    %v2620 = vpop.f32.mrf.mxu0
    %2621 = vdwg.mxu0
    %2622 = vmatprep.subr.mxu0 0.0
    %2623 = vmatpush1.msra.mxu0 0.0
    %2624 = vmatprep.subr.mxu0 0.0
    %2625 = vmatpush1.msra.mxu0 0.0
    %2626 = vmatprep.subr.mxu0 0.0
    %2627 = vmatpush1.msra.mxu0 0.0
    %2628 = vmatprep.subr.mxu0 0.0
    %2629 = vmatpush1.msra.mxu0 0.0
    %2630 = vmatprep.subr.mxu0 0.0
    %2631 = vmatpush1.msra.mxu0 0.0
    %2632 = vmatprep.subr.mxu0 0.0
    %2633 = vmatpush1.msra.mxu0 0.0
    %2634 = vmatprep.subr.mxu0 0.0
    %2635 = vmatpush1.msra.mxu0 0.0
    %2636 = vmatprep.subr.mxu0 0.0
    %2637 = vmatpush1.msra.mxu0 0.0
    %2638 = vmatprep.subr.mxu0 0.0
    %2639 = vmatpush1.msra.mxu0 0.0
    %2640 = vmatprep.subr.mxu0 0.0
    %2641 = vmatpush1.msra.mxu0 0.0
    %2642 = vmatprep.subr.mxu0 0.0
    %2643 = vmatpush1.msra.mxu0 0.0
    %2644 = vmatprep.subr.mxu0 0.0
    %2645 = vmatpush1.msra.mxu0 0.0
    %2646 = vmatprep.subr.mxu0 0.0
    %v2647 = vand.u32 %v24, 4294901760
    %v2648 = vsub.f32 %v24, %v2647
    %v2649 = vand.u32 %v2648, 4294901760
    %2650 = vmatpush1.msra.mxu0 %v2649
    %2651 = vmatprep.subr.mxu0 0.0
    %v2652 = vand.u32 %v23, 4294901760
    %v2653 = vsub.f32 %v23, %v2652
    %v2654 = vand.u32 %v2653, 4294901760
    %2655 = vmatpush1.msra.mxu0 %v2654
    %2656 = vmatprep.subr.mxu0 0.0
    %v2657 = vand.u32 %v22, 4294901760
    %v2658 = vsub.f32 %v22, %v2657
    %v2659 = vand.u32 %v2658, 4294901760
    %2660 = vmatpush1.msra.mxu0 %v2659
    %2661 = vmatprep.subr.mxu0 0.0
    %v2662 = vand.u32 %v21, 4294901760
    %v2663 = vsub.f32 %v21, %v2662
    %v2664 = vand.u32 %v2663, 4294901760
    %2665 = vmatpush1.msra.mxu0 %v2664
    %2666 = vmatprep.subr.mxu0 0.0
    %2667 = vmatpush2.msra.mxu0 0.0
    %2668 = vmatprep.subr.mxu0 0.0
    %2669 = vmatpush2.msra.mxu0 0.0
    %2670 = vmatprep.subr.mxu0 0.0
    %2671 = vmatpush2.msra.mxu0 0.0
    %2672 = vmatprep.subr.mxu0 0.0
    %2673 = vmatpush2.msra.mxu0 0.0
    %2674 = vmatprep.subr.mxu0 0.0
    %2675 = vmatpush2.msra.mxu0 0.0
    %2676 = vmatprep.subr.mxu0 0.0
    %2677 = vmatpush2.msra.mxu0 0.0
    %2678 = vmatprep.subr.mxu0 0.0
    %2679 = vmatpush2.msra.mxu0 0.0
    %2680 = vmatprep.subr.mxu0 0.0
    %2681 = vmatpush2.msra.mxu0 0.0
    %2682 = vmatprep.subr.mxu0 0.0
    %2683 = vmatpush2.msra.mxu0 0.0
    %2684 = vmatprep.subr.mxu0 0.0
    %2685 = vmatpush2.msra.mxu0 0.0
    %2686 = vmatprep.subr.mxu0 0.0
    %2687 = vmatpush2.msra.mxu0 0.0
    %2688 = vmatprep.subr.mxu0 0.0
    %2689 = vmatpush2.msra.mxu0 0.0
    %2690 = vmatprep.subr.mxu0 0.0
    %2691 = vmatpush2.msra.mxu0 0.0
    %2692 = vmatprep.subr.mxu0 0.0
    %2693 = vmatpush2.msra.mxu0 0.0
    %2694 = vmatprep.subr.mxu0 0.0
    %2695 = vmatpush2.msra.mxu0 0.0
    %2696 = vmatprep.subr.mxu0 0.0
    %2697 = vmatpush2.msra.mxu0 0.0
    %2698 = vmatprep.mubr.f32.mxu0 0.0
    %v2699 = vand.u32 %v2259, 4294901760
    %2700 = vmatmul.mubr.f32.gmra.mxu0 %v2699
    %v2701 = vpop.f32.mrf.mxu0
    %v2702 = vadd.f32 %v2611, %v2701
    %v2703 = vpop.f32.mrf.mxu0
    %2704 = vmatprep.mubr.f32.mxu0 0.0
    %v2705 = vand.u32 %v2262, 4294901760
    %2706 = vmatmul.mubr.f32.gmra.mxu0 %v2705
    %v2707 = vpop.f32.mrf.mxu0
    %v2708 = vadd.f32 %v2619, %v2707
    %v2709 = vpop.f32.mrf.mxu0
    %2710 = vdwg.mxu0
    %2711 = vmatprep.subr.mxu0 0.0
    %2712 = vmatpush1.msra.mxu0 0.0
    %2713 = vmatprep.subr.mxu0 0.0
    %2714 = vmatpush1.msra.mxu0 0.0
    %2715 = vmatprep.subr.mxu0 0.0
    %2716 = vmatpush1.msra.mxu0 0.0
    %2717 = vmatprep.subr.mxu0 0.0
    %2718 = vmatpush1.msra.mxu0 0.0
    %2719 = vmatprep.subr.mxu0 0.0
    %2720 = vmatpush1.msra.mxu0 0.0
    %2721 = vmatprep.subr.mxu0 0.0
    %2722 = vmatpush1.msra.mxu0 0.0
    %2723 = vmatprep.subr.mxu0 0.0
    %2724 = vmatpush1.msra.mxu0 0.0
    %2725 = vmatprep.subr.mxu0 0.0
    %2726 = vmatpush1.msra.mxu0 0.0
    %2727 = vmatprep.subr.mxu0 0.0
    %2728 = vmatpush1.msra.mxu0 0.0
    %2729 = vmatprep.subr.mxu0 0.0
    %2730 = vmatpush1.msra.mxu0 0.0
    %2731 = vmatprep.subr.mxu0 0.0
    %2732 = vmatpush1.msra.mxu0 0.0
    %2733 = vmatprep.subr.mxu0 0.0
    %2734 = vmatpush1.msra.mxu0 0.0
    %2735 = vmatprep.subr.mxu0 0.0
    %v2736 = vand.u32 %v24, 4294901760
    %2737 = vmatpush1.msra.mxu0 %v2736
    %2738 = vmatprep.subr.mxu0 0.0
    %v2739 = vand.u32 %v23, 4294901760
    %2740 = vmatpush1.msra.mxu0 %v2739
    %2741 = vmatprep.subr.mxu0 0.0
    %v2742 = vand.u32 %v22, 4294901760
    %2743 = vmatpush1.msra.mxu0 %v2742
    %2744 = vmatprep.subr.mxu0 0.0
    %v2745 = vand.u32 %v21, 4294901760
    %2746 = vmatpush1.msra.mxu0 %v2745
    %2747 = vmatprep.subr.mxu0 0.0
    %2748 = vmatpush2.msra.mxu0 0.0
    %2749 = vmatprep.subr.mxu0 0.0
    %2750 = vmatpush2.msra.mxu0 0.0
    %2751 = vmatprep.subr.mxu0 0.0
    %2752 = vmatpush2.msra.mxu0 0.0
    %2753 = vmatprep.subr.mxu0 0.0
    %2754 = vmatpush2.msra.mxu0 0.0
    %2755 = vmatprep.subr.mxu0 0.0
    %2756 = vmatpush2.msra.mxu0 0.0
    %2757 = vmatprep.subr.mxu0 0.0
    %2758 = vmatpush2.msra.mxu0 0.0
    %2759 = vmatprep.subr.mxu0 0.0
    %2760 = vmatpush2.msra.mxu0 0.0
    %2761 = vmatprep.subr.mxu0 0.0
    %2762 = vmatpush2.msra.mxu0 0.0
    %2763 = vmatprep.subr.mxu0 0.0
    %2764 = vmatpush2.msra.mxu0 0.0
    %2765 = vmatprep.subr.mxu0 0.0
    %2766 = vmatpush2.msra.mxu0 0.0
    %2767 = vmatprep.subr.mxu0 0.0
    %2768 = vmatpush2.msra.mxu0 0.0
    %2769 = vmatprep.subr.mxu0 0.0
    %2770 = vmatpush2.msra.mxu0 0.0
    %2771 = vmatprep.subr.mxu0 0.0
    %2772 = vmatpush2.msra.mxu0 0.0
    %2773 = vmatprep.subr.mxu0 0.0
    %2774 = vmatpush2.msra.mxu0 0.0
    %2775 = vmatprep.subr.mxu0 0.0
    %2776 = vmatpush2.msra.mxu0 0.0
    %2777 = vmatprep.subr.mxu0 0.0
    %2778 = vmatpush2.msra.mxu0 0.0
    %2779 = vmatprep.mubr.f32.mxu0 0.0
    %v2780 = vand.u32 %v2259, 4294901760
    %2781 = vmatmul.mubr.f32.gmra.mxu0 %v2780
    %v2782 = vpop.f32.mrf.mxu0
    %v2783 = vadd.f32 %v2702, %v2782
    %v2784 = vpop.f32.mrf.mxu0
    %2785 = vmatprep.mubr.f32.mxu0 0.0
    %v2786 = vand.u32 %v2262, 4294901760
    %2787 = vmatmul.mubr.f32.gmra.mxu0 %v2786
    %v2788 = vpop.f32.mrf.mxu0
    %v2789 = vadd.f32 %v2708, %v2788
    %v2790 = vpop.f32.mrf.mxu0
    %2791 = vdwg.mxu0
    %v2792 = vadd.f32 %v2256, %v2783
    %v2793 = vadd.f32 %v2257, %v2789
    %v2794 = vxor.u32 %v2792, 2147483648
    %v2795 = vxor.u32 %v2793, 2147483648
    %v2796 = vmul.f32 %v2794, 1.442695
    %v2797 = vpow.pop %v2796
    %v2798 = vmul.f32 %v2795, 1.442695
    %v2799 = vpow.pop %v2798
    %v2800 = vadd.f32 %v2797, 1.0
    %v2801 = vadd.f32 %v2799, 1.0
    %v2802 = vrcp.pop %v2800
    %v2803 = vmul.f32 1.0, %v2802
    %v2804 = vrcp.pop %v2801
    %v2805 = vmul.f32 1.0, %v2804
    %s2806 = scalar_lea.vmem %s1, 32
    %v2807 = vld [vmem:[%s2806] sm:$0xff]
    %v2808 = vld [vmem:[%s2806 + $0x8] sm:$0xff]
    %2811 = vrot.lane.b32.xlu0 %v2803, 96
    %v2812 = vpop.permute.xlu0 %2811
    %2813 = vrot.lane.b32.xlu0 %v2805, 96
    %v2814 = vpop.permute.xlu0 %2813
    %v2817 = vmul.f32 %v2250, %v2812
    %v2818 = vmul.f32 %v2251, %v2814
    %v2820 = vsel %vm33, %v2817, 0
    %v2823 = vsel %vm33, %v2818, 0
    %2825 = vmatprep.subr.mxu0 0.0
    %2826 = vmatpush1.msra.mxu0 0.0
    %2827 = vmatprep.subr.mxu0 0.0
    %2828 = vmatpush1.msra.mxu0 0.0
    %2829 = vmatprep.subr.mxu0 0.0
    %2830 = vmatpush1.msra.mxu0 0.0
    %2831 = vmatprep.subr.mxu0 0.0
    %2832 = vmatpush1.msra.mxu0 0.0
    %2833 = vmatprep.subr.mxu0 0.0
    %2834 = vmatpush1.msra.mxu0 0.0
    %2835 = vmatprep.subr.mxu0 0.0
    %2836 = vmatpush1.msra.mxu0 0.0
    %2837 = vmatprep.subr.mxu0 0.0
    %2838 = vmatpush1.msra.mxu0 0.0
    %2839 = vmatprep.subr.mxu0 0.0
    %2840 = vmatpush1.msra.mxu0 0.0
    %2841 = vmatprep.subr.mxu0 0.0
    %2842 = vmatpush1.msra.mxu0 0.0
    %2843 = vmatprep.subr.mxu0 0.0
    %2844 = vmatpush1.msra.mxu0 0.0
    %2845 = vmatprep.subr.mxu0 0.0
    %2846 = vmatpush1.msra.mxu0 0.0
    %2847 = vmatprep.subr.mxu0 0.0
    %2848 = vmatpush1.msra.mxu0 0.0
    %2849 = vmatprep.subr.mxu0 0.0
    %v2850 = vand.u32 %v28, 4294901760
    %2851 = vmatpush1.msra.mxu0 %v2850
    %2852 = vmatprep.subr.mxu0 0.0
    %v2853 = vand.u32 %v27, 4294901760
    %2854 = vmatpush1.msra.mxu0 %v2853
    %2855 = vmatprep.subr.mxu0 0.0
    %v2856 = vand.u32 %v26, 4294901760
    %2857 = vmatpush1.msra.mxu0 %v2856
    %2858 = vmatprep.subr.mxu0 0.0
    %v2859 = vand.u32 %v25, 4294901760
    %2860 = vmatpush1.msra.mxu0 %v2859
    %2861 = vmatprep.subr.mxu0 0.0
    %2862 = vmatpush2.msra.mxu0 0.0
    %2863 = vmatprep.subr.mxu0 0.0
    %2864 = vmatpush2.msra.mxu0 0.0
    %2865 = vmatprep.subr.mxu0 0.0
    %2866 = vmatpush2.msra.mxu0 0.0
    %2867 = vmatprep.subr.mxu0 0.0
    %2868 = vmatpush2.msra.mxu0 0.0
    %2869 = vmatprep.subr.mxu0 0.0
    %2870 = vmatpush2.msra.mxu0 0.0
    %2871 = vmatprep.subr.mxu0 0.0
    %2872 = vmatpush2.msra.mxu0 0.0
    %2873 = vmatprep.subr.mxu0 0.0
    %2874 = vmatpush2.msra.mxu0 0.0
    %2875 = vmatprep.subr.mxu0 0.0
    %2876 = vmatpush2.msra.mxu0 0.0
    %2877 = vmatprep.subr.mxu0 0.0
    %2878 = vmatpush2.msra.mxu0 0.0
    %2879 = vmatprep.subr.mxu0 0.0
    %2880 = vmatpush2.msra.mxu0 0.0
    %2881 = vmatprep.subr.mxu0 0.0
    %2882 = vmatpush2.msra.mxu0 0.0
    %2883 = vmatprep.subr.mxu0 0.0
    %2884 = vmatpush2.msra.mxu0 0.0
    %2885 = vmatprep.subr.mxu0 0.0
    %2886 = vmatpush2.msra.mxu0 0.0
    %2887 = vmatprep.subr.mxu0 0.0
    %2888 = vmatpush2.msra.mxu0 0.0
    %2889 = vmatprep.subr.mxu0 0.0
    %2890 = vmatpush2.msra.mxu0 0.0
    %2891 = vmatprep.subr.mxu0 0.0
    %2892 = vmatpush2.msra.mxu0 0.0
    %2893 = vmatprep.mubr.f32.mxu0 0.0
    %v2894 = vand.u32 %v2820, 4294901760
    %v2895 = vsub.f32 %v2820, %v2894
    %v2896 = vand.u32 %v2895, 4294901760
    %v2897 = vsub.f32 %v2895, %v2896
    %v2898 = vand.u32 %v2897, 4294901760
    %2899 = vmatmul.mubr.f32.gmra.mxu0 %v2898
    %v2900 = vpop.f32.mrf.mxu0
    %v2901 = vadd.f32 0.0, %v2900
    %v2902 = vpop.f32.mrf.mxu0
    %2903 = vmatprep.mubr.f32.mxu0 0.0
    %v2904 = vand.u32 %v2823, 4294901760
    %v2905 = vsub.f32 %v2823, %v2904
    %v2906 = vand.u32 %v2905, 4294901760
    %v2907 = vsub.f32 %v2905, %v2906
    %v2908 = vand.u32 %v2907, 4294901760
    %2909 = vmatmul.mubr.f32.gmra.mxu0 %v2908
    %v2910 = vpop.f32.mrf.mxu0
    %v2911 = vadd.f32 0.0, %v2910
    %v2912 = vpop.f32.mrf.mxu0
    %2913 = vdwg.mxu0
    %2914 = vmatprep.subr.mxu0 0.0
    %2915 = vmatpush1.msra.mxu0 0.0
    %2916 = vmatprep.subr.mxu0 0.0
    %2917 = vmatpush1.msra.mxu0 0.0
    %2918 = vmatprep.subr.mxu0 0.0
    %2919 = vmatpush1.msra.mxu0 0.0
    %2920 = vmatprep.subr.mxu0 0.0
    %2921 = vmatpush1.msra.mxu0 0.0
    %2922 = vmatprep.subr.mxu0 0.0
    %2923 = vmatpush1.msra.mxu0 0.0
    %2924 = vmatprep.subr.mxu0 0.0
    %2925 = vmatpush1.msra.mxu0 0.0
    %2926 = vmatprep.subr.mxu0 0.0
    %2927 = vmatpush1.msra.mxu0 0.0
    %2928 = vmatprep.subr.mxu0 0.0
    %2929 = vmatpush1.msra.mxu0 0.0
    %2930 = vmatprep.subr.mxu0 0.0
    %2931 = vmatpush1.msra.mxu0 0.0
    %2932 = vmatprep.subr.mxu0 0.0
    %2933 = vmatpush1.msra.mxu0 0.0
    %2934 = vmatprep.subr.mxu0 0.0
    %2935 = vmatpush1.msra.mxu0 0.0
    %2936 = vmatprep.subr.mxu0 0.0
    %2937 = vmatpush1.msra.mxu0 0.0
    %2938 = vmatprep.subr.mxu0 0.0
    %v2939 = vand.u32 %v28, 4294901760
    %v2940 = vsub.f32 %v28, %v2939
    %v2941 = vand.u32 %v2940, 4294901760
    %v2942 = vsub.f32 %v2940, %v2941
    %v2943 = vand.u32 %v2942, 4294901760
    %2944 = vmatpush1.msra.mxu0 %v2943
    %2945 = vmatprep.subr.mxu0 0.0
    %v2946 = vand.u32 %v27, 4294901760
    %v2947 = vsub.f32 %v27, %v2946
    %v2948 = vand.u32 %v2947, 4294901760
    %v2949 = vsub.f32 %v2947, %v2948
    %v2950 = vand.u32 %v2949, 4294901760
    %2951 = vmatpush1.msra.mxu0 %v2950
    %2952 = vmatprep.subr.mxu0 0.0
    %v2953 = vand.u32 %v26, 4294901760
    %v2954 = vsub.f32 %v26, %v2953
    %v2955 = vand.u32 %v2954, 4294901760
    %v2956 = vsub.f32 %v2954, %v2955
    %v2957 = vand.u32 %v2956, 4294901760
    %2958 = vmatpush1.msra.mxu0 %v2957
    %2959 = vmatprep.subr.mxu0 0.0
    %v2960 = vand.u32 %v25, 4294901760
    %v2961 = vsub.f32 %v25, %v2960
    %v2962 = vand.u32 %v2961, 4294901760
    %v2963 = vsub.f32 %v2961, %v2962
    %v2964 = vand.u32 %v2963, 4294901760
    %2965 = vmatpush1.msra.mxu0 %v2964
    %2966 = vmatprep.subr.mxu0 0.0
    %2967 = vmatpush2.msra.mxu0 0.0
    %2968 = vmatprep.subr.mxu0 0.0
    %2969 = vmatpush2.msra.mxu0 0.0
    %2970 = vmatprep.subr.mxu0 0.0
    %2971 = vmatpush2.msra.mxu0 0.0
    %2972 = vmatprep.subr.mxu0 0.0
    %2973 = vmatpush2.msra.mxu0 0.0
    %2974 = vmatprep.subr.mxu0 0.0
    %2975 = vmatpush2.msra.mxu0 0.0
    %2976 = vmatprep.subr.mxu0 0.0
    %2977 = vmatpush2.msra.mxu0 0.0
    %2978 = vmatprep.subr.mxu0 0.0
    %2979 = vmatpush2.msra.mxu0 0.0
    %2980 = vmatprep.subr.mxu0 0.0
    %2981 = vmatpush2.msra.mxu0 0.0
    %2982 = vmatprep.subr.mxu0 0.0
    %2983 = vmatpush2.msra.mxu0 0.0
    %2984 = vmatprep.subr.mxu0 0.0
    %2985 = vmatpush2.msra.mxu0 0.0
    %2986 = vmatprep.subr.mxu0 0.0
    %2987 = vmatpush2.msra.mxu0 0.0
    %2988 = vmatprep.subr.mxu0 0.0
    %2989 = vmatpush2.msra.mxu0 0.0
    %2990 = vmatprep.subr.mxu0 0.0
    %2991 = vmatpush2.msra.mxu0 0.0
    %2992 = vmatprep.subr.mxu0 0.0
    %2993 = vmatpush2.msra.mxu0 0.0
    %2994 = vmatprep.subr.mxu0 0.0
    %2995 = vmatpush2.msra.mxu0 0.0
    %2996 = vmatprep.subr.mxu0 0.0
    %2997 = vmatpush2.msra.mxu0 0.0
    %2998 = vmatprep.mubr.f32.mxu0 0.0
    %v2999 = vand.u32 %v2820, 4294901760
    %3000 = vmatmul.mubr.f32.gmra.mxu0 %v2999
    %v3001 = vpop.f32.mrf.mxu0
    %v3002 = vadd.f32 %v2901, %v3001
    %v3003 = vpop.f32.mrf.mxu0
    %3004 = vmatprep.mubr.f32.mxu0 0.0
    %v3005 = vand.u32 %v2823, 4294901760
    %3006 = vmatmul.mubr.f32.gmra.mxu0 %v3005
    %v3007 = vpop.f32.mrf.mxu0
    %v3008 = vadd.f32 %v2911, %v3007
    %v3009 = vpop.f32.mrf.mxu0
    %3010 = vdwg.mxu0
    %3011 = vmatprep.subr.mxu0 0.0
    %3012 = vmatpush1.msra.mxu0 0.0
    %3013 = vmatprep.subr.mxu0 0.0
    %3014 = vmatpush1.msra.mxu0 0.0
    %3015 = vmatprep.subr.mxu0 0.0
    %3016 = vmatpush1.msra.mxu0 0.0
    %3017 = vmatprep.subr.mxu0 0.0
    %3018 = vmatpush1.msra.mxu0 0.0
    %3019 = vmatprep.subr.mxu0 0.0
    %3020 = vmatpush1.msra.mxu0 0.0
    %3021 = vmatprep.subr.mxu0 0.0
    %3022 = vmatpush1.msra.mxu0 0.0
    %3023 = vmatprep.subr.mxu0 0.0
    %3024 = vmatpush1.msra.mxu0 0.0
    %3025 = vmatprep.subr.mxu0 0.0
    %3026 = vmatpush1.msra.mxu0 0.0
    %3027 = vmatprep.subr.mxu0 0.0
    %3028 = vmatpush1.msra.mxu0 0.0
    %3029 = vmatprep.subr.mxu0 0.0
    %3030 = vmatpush1.msra.mxu0 0.0
    %3031 = vmatprep.subr.mxu0 0.0
    %3032 = vmatpush1.msra.mxu0 0.0
    %3033 = vmatprep.subr.mxu0 0.0
    %3034 = vmatpush1.msra.mxu0 0.0
    %3035 = vmatprep.subr.mxu0 0.0
    %v3036 = vand.u32 %v28, 4294901760
    %v3037 = vsub.f32 %v28, %v3036
    %3038 = vmatpush1.msra.mxu0 %v3037
    %3039 = vmatprep.subr.mxu0 0.0
    %v3040 = vand.u32 %v27, 4294901760
    %v3041 = vsub.f32 %v27, %v3040
    %3042 = vmatpush1.msra.mxu0 %v3041
    %3043 = vmatprep.subr.mxu0 0.0
    %v3044 = vand.u32 %v26, 4294901760
    %v3045 = vsub.f32 %v26, %v3044
    %3046 = vmatpush1.msra.mxu0 %v3045
    %3047 = vmatprep.subr.mxu0 0.0
    %v3048 = vand.u32 %v25, 4294901760
    %v3049 = vsub.f32 %v25, %v3048
    %3050 = vmatpush1.msra.mxu0 %v3049
    %3051 = vmatprep.subr.mxu0 0.0
    %3052 = vmatpush2.msra.mxu0 0.0
    %3053 = vmatprep.subr.mxu0 0.0
    %3054 = vmatpush2.msra.mxu0 0.0
    %3055 = vmatprep.subr.mxu0 0.0
    %3056 = vmatpush2.msra.mxu0 0.0
    %3057 = vmatprep.subr.mxu0 0.0
    %3058 = vmatpush2.msra.mxu0 0.0
    %3059 = vmatprep.subr.mxu0 0.0
    %3060 = vmatpush2.msra.mxu0 0.0
    %3061 = vmatprep.subr.mxu0 0.0
    %3062 = vmatpush2.msra.mxu0 0.0
    %3063 = vmatprep.subr.mxu0 0.0
    %3064 = vmatpush2.msra.mxu0 0.0
    %3065 = vmatprep.subr.mxu0 0.0
    %3066 = vmatpush2.msra.mxu0 0.0
    %3067 = vmatprep.subr.mxu0 0.0
    %3068 = vmatpush2.msra.mxu0 0.0
    %3069 = vmatprep.subr.mxu0 0.0
    %3070 = vmatpush2.msra.mxu0 0.0
    %3071 = vmatprep.subr.mxu0 0.0
    %3072 = vmatpush2.msra.mxu0 0.0
    %3073 = vmatprep.subr.mxu0 0.0
    %3074 = vmatpush2.msra.mxu0 0.0
    %3075 = vmatprep.subr.mxu0 0.0
    %3076 = vmatpush2.msra.mxu0 0.0
    %3077 = vmatprep.subr.mxu0 0.0
    %3078 = vmatpush2.msra.mxu0 0.0
    %3079 = vmatprep.subr.mxu0 0.0
    %3080 = vmatpush2.msra.mxu0 0.0
    %3081 = vmatprep.subr.mxu0 0.0
    %3082 = vmatpush2.msra.mxu0 0.0
    %3083 = vmatprep.mubr.f32.mxu0 0.0
    %v3084 = vand.u32 %v2820, 4294901760
    %v3085 = vsub.f32 %v2820, %v3084
    %3086 = vmatmul.mubr.f32.gmra.mxu0 %v3085
    %v3087 = vpop.f32.mrf.mxu0
    %v3088 = vadd.f32 %v3002, %v3087
    %v3089 = vpop.f32.mrf.mxu0
    %3090 = vmatprep.mubr.f32.mxu0 0.0
    %v3091 = vand.u32 %v2823, 4294901760
    %v3092 = vsub.f32 %v2823, %v3091
    %3093 = vmatmul.mubr.f32.gmra.mxu0 %v3092
    %v3094 = vpop.f32.mrf.mxu0
    %v3095 = vadd.f32 %v3008, %v3094
    %v3096 = vpop.f32.mrf.mxu0
    %3097 = vdwg.mxu0
    %3098 = vmatprep.subr.mxu0 0.0
    %3099 = vmatpush1.msra.mxu0 0.0
    %3100 = vmatprep.subr.mxu0 0.0
    %3101 = vmatpush1.msra.mxu0 0.0
    %3102 = vmatprep.subr.mxu0 0.0
    %3103 = vmatpush1.msra.mxu0 0.0
    %3104 = vmatprep.subr.mxu0 0.0
    %3105 = vmatpush1.msra.mxu0 0.0
    %3106 = vmatprep.subr.mxu0 0.0
    %3107 = vmatpush1.msra.mxu0 0.0
    %3108 = vmatprep.subr.mxu0 0.0
    %3109 = vmatpush1.msra.mxu0 0.0
    %3110 = vmatprep.subr.mxu0 0.0
    %3111 = vmatpush1.msra.mxu0 0.0
    %3112 = vmatprep.subr.mxu0 0.0
    %3113 = vmatpush1.msra.mxu0 0.0
    %3114 = vmatprep.subr.mxu0 0.0
    %3115 = vmatpush1.msra.mxu0 0.0
    %3116 = vmatprep.subr.mxu0 0.0
    %3117 = vmatpush1.msra.mxu0 0.0
    %3118 = vmatprep.subr.mxu0 0.0
    %3119 = vmatpush1.msra.mxu0 0.0
    %3120 = vmatprep.subr.mxu0 0.0
    %3121 = vmatpush1.msra.mxu0 0.0
    %3122 = vmatprep.subr.mxu0 0.0
    %v3123 = vand.u32 %v28, 4294901760
    %3124 = vmatpush1.msra.mxu0 %v3123
    %3125 = vmatprep.subr.mxu0 0.0
    %v3126 = vand.u32 %v27, 4294901760
    %3127 = vmatpush1.msra.mxu0 %v3126
    %3128 = vmatprep.subr.mxu0 0.0
    %v3129 = vand.u32 %v26, 4294901760
    %3130 = vmatpush1.msra.mxu0 %v3129
    %3131 = vmatprep.subr.mxu0 0.0
    %v3132 = vand.u32 %v25, 4294901760
    %3133 = vmatpush1.msra.mxu0 %v3132
    %3134 = vmatprep.subr.mxu0 0.0
    %3135 = vmatpush2.msra.mxu0 0.0
    %3136 = vmatprep.subr.mxu0 0.0
    %3137 = vmatpush2.msra.mxu0 0.0
    %3138 = vmatprep.subr.mxu0 0.0
    %3139 = vmatpush2.msra.mxu0 0.0
    %3140 = vmatprep.subr.mxu0 0.0
    %3141 = vmatpush2.msra.mxu0 0.0
    %3142 = vmatprep.subr.mxu0 0.0
    %3143 = vmatpush2.msra.mxu0 0.0
    %3144 = vmatprep.subr.mxu0 0.0
    %3145 = vmatpush2.msra.mxu0 0.0
    %3146 = vmatprep.subr.mxu0 0.0
    %3147 = vmatpush2.msra.mxu0 0.0
    %3148 = vmatprep.subr.mxu0 0.0
    %3149 = vmatpush2.msra.mxu0 0.0
    %3150 = vmatprep.subr.mxu0 0.0
    %3151 = vmatpush2.msra.mxu0 0.0
    %3152 = vmatprep.subr.mxu0 0.0
    %3153 = vmatpush2.msra.mxu0 0.0
    %3154 = vmatprep.subr.mxu0 0.0
    %3155 = vmatpush2.msra.mxu0 0.0
    %3156 = vmatprep.subr.mxu0 0.0
    %3157 = vmatpush2.msra.mxu0 0.0
    %3158 = vmatprep.subr.mxu0 0.0
    %3159 = vmatpush2.msra.mxu0 0.0
    %3160 = vmatprep.subr.mxu0 0.0
    %3161 = vmatpush2.msra.mxu0 0.0
    %3162 = vmatprep.subr.mxu0 0.0
    %3163 = vmatpush2.msra.mxu0 0.0
    %3164 = vmatprep.subr.mxu0 0.0
    %3165 = vmatpush2.msra.mxu0 0.0
    %3166 = vmatprep.mubr.f32.mxu0 0.0
    %v3167 = vand.u32 %v2820, 4294901760
    %v3168 = vsub.f32 %v2820, %v3167
    %v3169 = vand.u32 %v3168, 4294901760
    %3170 = vmatmul.mubr.f32.gmra.mxu0 %v3169
    %v3171 = vpop.f32.mrf.mxu0
    %v3172 = vadd.f32 %v3088, %v3171
    %v3173 = vpop.f32.mrf.mxu0
    %3174 = vmatprep.mubr.f32.mxu0 0.0
    %v3175 = vand.u32 %v2823, 4294901760
    %v3176 = vsub.f32 %v2823, %v3175
    %v3177 = vand.u32 %v3176, 4294901760
    %3178 = vmatmul.mubr.f32.gmra.mxu0 %v3177
    %v3179 = vpop.f32.mrf.mxu0
    %v3180 = vadd.f32 %v3095, %v3179
    %v3181 = vpop.f32.mrf.mxu0
    %3182 = vdwg.mxu0
    %3183 = vmatprep.subr.mxu0 0.0
    %3184 = vmatpush1.msra.mxu0 0.0
    %3185 = vmatprep.subr.mxu0 0.0
    %3186 = vmatpush1.msra.mxu0 0.0
    %3187 = vmatprep.subr.mxu0 0.0
    %3188 = vmatpush1.msra.mxu0 0.0
    %3189 = vmatprep.subr.mxu0 0.0
    %3190 = vmatpush1.msra.mxu0 0.0
    %3191 = vmatprep.subr.mxu0 0.0
    %3192 = vmatpush1.msra.mxu0 0.0
    %3193 = vmatprep.subr.mxu0 0.0
    %3194 = vmatpush1.msra.mxu0 0.0
    %3195 = vmatprep.subr.mxu0 0.0
    %3196 = vmatpush1.msra.mxu0 0.0
    %3197 = vmatprep.subr.mxu0 0.0
    %3198 = vmatpush1.msra.mxu0 0.0
    %3199 = vmatprep.subr.mxu0 0.0
    %3200 = vmatpush1.msra.mxu0 0.0
    %3201 = vmatprep.subr.mxu0 0.0
    %3202 = vmatpush1.msra.mxu0 0.0
    %3203 = vmatprep.subr.mxu0 0.0
    %3204 = vmatpush1.msra.mxu0 0.0
    %3205 = vmatprep.subr.mxu0 0.0
    %3206 = vmatpush1.msra.mxu0 0.0
    %3207 = vmatprep.subr.mxu0 0.0
    %v3208 = vand.u32 %v28, 4294901760
    %v3209 = vsub.f32 %v28, %v3208
    %v3210 = vand.u32 %v3209, 4294901760
    %3211 = vmatpush1.msra.mxu0 %v3210
    %3212 = vmatprep.subr.mxu0 0.0
    %v3213 = vand.u32 %v27, 4294901760
    %v3214 = vsub.f32 %v27, %v3213
    %v3215 = vand.u32 %v3214, 4294901760
    %3216 = vmatpush1.msra.mxu0 %v3215
    %3217 = vmatprep.subr.mxu0 0.0
    %v3218 = vand.u32 %v26, 4294901760
    %v3219 = vsub.f32 %v26, %v3218
    %v3220 = vand.u32 %v3219, 4294901760
    %3221 = vmatpush1.msra.mxu0 %v3220
    %3222 = vmatprep.subr.mxu0 0.0
    %v3223 = vand.u32 %v25, 4294901760
    %v3224 = vsub.f32 %v25, %v3223
    %v3225 = vand.u32 %v3224, 4294901760
    %3226 = vmatpush1.msra.mxu0 %v3225
    %3227 = vmatprep.subr.mxu0 0.0
    %3228 = vmatpush2.msra.mxu0 0.0
    %3229 = vmatprep.subr.mxu0 0.0
    %3230 = vmatpush2.msra.mxu0 0.0
    %3231 = vmatprep.subr.mxu0 0.0
    %3232 = vmatpush2.msra.mxu0 0.0
    %3233 = vmatprep.subr.mxu0 0.0
    %3234 = vmatpush2.msra.mxu0 0.0
    %3235 = vmatprep.subr.mxu0 0.0
    %3236 = vmatpush2.msra.mxu0 0.0
    %3237 = vmatprep.subr.mxu0 0.0
    %3238 = vmatpush2.msra.mxu0 0.0
    %3239 = vmatprep.subr.mxu0 0.0
    %3240 = vmatpush2.msra.mxu0 0.0
    %3241 = vmatprep.subr.mxu0 0.0
    %3242 = vmatpush2.msra.mxu0 0.0
    %3243 = vmatprep.subr.mxu0 0.0
    %3244 = vmatpush2.msra.mxu0 0.0
    %3245 = vmatprep.subr.mxu0 0.0
    %3246 = vmatpush2.msra.mxu0 0.0
    %3247 = vmatprep.subr.mxu0 0.0
    %3248 = vmatpush2.msra.mxu0 0.0
    %3249 = vmatprep.subr.mxu0 0.0
    %3250 = vmatpush2.msra.mxu0 0.0
    %3251 = vmatprep.subr.mxu0 0.0
    %3252 = vmatpush2.msra.mxu0 0.0
    %3253 = vmatprep.subr.mxu0 0.0
    %3254 = vmatpush2.msra.mxu0 0.0
    %3255 = vmatprep.subr.mxu0 0.0
    %3256 = vmatpush2.msra.mxu0 0.0
    %3257 = vmatprep.subr.mxu0 0.0
    %3258 = vmatpush2.msra.mxu0 0.0
    %3259 = vmatprep.mubr.f32.mxu0 0.0
    %v3260 = vand.u32 %v2820, 4294901760
    %3261 = vmatmul.mubr.f32.gmra.mxu0 %v3260
    %v3262 = vpop.f32.mrf.mxu0
    %v3263 = vadd.f32 %v3172, %v3262
    %v3264 = vpop.f32.mrf.mxu0
    %3265 = vmatprep.mubr.f32.mxu0 0.0
    %v3266 = vand.u32 %v2823, 4294901760
    %3267 = vmatmul.mubr.f32.gmra.mxu0 %v3266
    %v3268 = vpop.f32.mrf.mxu0
    %v3269 = vadd.f32 %v3180, %v3268
    %v3270 = vpop.f32.mrf.mxu0
    %3271 = vdwg.mxu0
    %3272 = vmatprep.subr.mxu0 0.0
    %3273 = vmatpush1.msra.mxu0 0.0
    %3274 = vmatprep.subr.mxu0 0.0
    %3275 = vmatpush1.msra.mxu0 0.0
    %3276 = vmatprep.subr.mxu0 0.0
    %3277 = vmatpush1.msra.mxu0 0.0
    %3278 = vmatprep.subr.mxu0 0.0
    %3279 = vmatpush1.msra.mxu0 0.0
    %3280 = vmatprep.subr.mxu0 0.0
    %3281 = vmatpush1.msra.mxu0 0.0
    %3282 = vmatprep.subr.mxu0 0.0
    %3283 = vmatpush1.msra.mxu0 0.0
    %3284 = vmatprep.subr.mxu0 0.0
    %3285 = vmatpush1.msra.mxu0 0.0
    %3286 = vmatprep.subr.mxu0 0.0
    %3287 = vmatpush1.msra.mxu0 0.0
    %3288 = vmatprep.subr.mxu0 0.0
    %3289 = vmatpush1.msra.mxu0 0.0
    %3290 = vmatprep.subr.mxu0 0.0
    %3291 = vmatpush1.msra.mxu0 0.0
    %3292 = vmatprep.subr.mxu0 0.0
    %3293 = vmatpush1.msra.mxu0 0.0
    %3294 = vmatprep.subr.mxu0 0.0
    %3295 = vmatpush1.msra.mxu0 0.0
    %3296 = vmatprep.subr.mxu0 0.0
    %v3297 = vand.u32 %v28, 4294901760
    %3298 = vmatpush1.msra.mxu0 %v3297
    %3299 = vmatprep.subr.mxu0 0.0
    %v3300 = vand.u32 %v27, 4294901760
    %3301 = vmatpush1.msra.mxu0 %v3300
    %3302 = vmatprep.subr.mxu0 0.0
    %v3303 = vand.u32 %v26, 4294901760
    %3304 = vmatpush1.msra.mxu0 %v3303
    %3305 = vmatprep.subr.mxu0 0.0
    %v3306 = vand.u32 %v25, 4294901760
    %3307 = vmatpush1.msra.mxu0 %v3306
    %3308 = vmatprep.subr.mxu0 0.0
    %3309 = vmatpush2.msra.mxu0 0.0
    %3310 = vmatprep.subr.mxu0 0.0
    %3311 = vmatpush2.msra.mxu0 0.0
    %3312 = vmatprep.subr.mxu0 0.0
    %3313 = vmatpush2.msra.mxu0 0.0
    %3314 = vmatprep.subr.mxu0 0.0
    %3315 = vmatpush2.msra.mxu0 0.0
    %3316 = vmatprep.subr.mxu0 0.0
    %3317 = vmatpush2.msra.mxu0 0.0
    %3318 = vmatprep.subr.mxu0 0.0
    %3319 = vmatpush2.msra.mxu0 0.0
    %3320 = vmatprep.subr.mxu0 0.0
    %3321 = vmatpush2.msra.mxu0 0.0
    %3322 = vmatprep.subr.mxu0 0.0
    %3323 = vmatpush2.msra.mxu0 0.0
    %3324 = vmatprep.subr.mxu0 0.0
    %3325 = vmatpush2.msra.mxu0 0.0
    %3326 = vmatprep.subr.mxu0 0.0
    %3327 = vmatpush2.msra.mxu0 0.0
    %3328 = vmatprep.subr.mxu0 0.0
    %3329 = vmatpush2.msra.mxu0 0.0
    %3330 = vmatprep.subr.mxu0 0.0
    %3331 = vmatpush2.msra.mxu0 0.0
    %3332 = vmatprep.subr.mxu0 0.0
    %3333 = vmatpush2.msra.mxu0 0.0
    %3334 = vmatprep.subr.mxu0 0.0
    %3335 = vmatpush2.msra.mxu0 0.0
    %3336 = vmatprep.subr.mxu0 0.0
    %3337 = vmatpush2.msra.mxu0 0.0
    %3338 = vmatprep.subr.mxu0 0.0
    %3339 = vmatpush2.msra.mxu0 0.0
    %3340 = vmatprep.mubr.f32.mxu0 0.0
    %v3341 = vand.u32 %v2820, 4294901760
    %3342 = vmatmul.mubr.f32.gmra.mxu0 %v3341
    %v3343 = vpop.f32.mrf.mxu0
    %v3344 = vadd.f32 %v3263, %v3343
    %v3345 = vpop.f32.mrf.mxu0
    %3346 = vmatprep.mubr.f32.mxu0 0.0
    %v3347 = vand.u32 %v2823, 4294901760
    %3348 = vmatmul.mubr.f32.gmra.mxu0 %v3347
    %v3349 = vpop.f32.mrf.mxu0
    %v3350 = vadd.f32 %v3269, %v3349
    %v3351 = vpop.f32.mrf.mxu0
    %3352 = vdwg.mxu0
    %v3353 = vadd.f32 %v2807, %v3344
    %v3354 = vadd.f32 %v2808, %v3350
    %v3355 = vtanh.pop %v3353
    %v3356 = vtanh.pop %v3354
    %v3357 = vmul.f32 %v2803, %v2250
    %v3358 = vmul.f32 %v2805, %v2251
    %v3359 = vsub.f32 1.0, %v2803
    %v3360 = vsub.f32 1.0, %v2805
    %v3361 = vmul.f32 %v3359, %v3355
    %v3362 = vmul.f32 %v3360, %v3356
    %v3363 = vadd.f32 %v3357, %v3361
    %v3364 = vadd.f32 %v3358, %v3362
    %s3365 = scalar_lea.vmem [#allocation2], 32
    %3366 = vst.msk [vmem:[%s3365] sm:$0xff] %vm33, %v3363
    %3367 = vst.msk [vmem:[%s3365 + $0x8] sm:$0xff] %vm33, %v3364
    %s3368 = scalar_lea.vmem %s0, 48
    %v3369 = vld [vmem:[%s3368] sm:$0xff]
    %v3370 = vld [vmem:[%s3368 + $0x8] sm:$0xff]
    %v3372 = vsel %vm33, %v3363, 0
    %v3375 = vsel %vm33, %v3364, 0
    %3377 = vmatprep.subr.mxu0 0.0
    %3378 = vmatpush1.msra.mxu0 0.0
    %3379 = vmatprep.subr.mxu0 0.0
    %3380 = vmatpush1.msra.mxu0 0.0
    %3381 = vmatprep.subr.mxu0 0.0
    %3382 = vmatpush1.msra.mxu0 0.0
    %3383 = vmatprep.subr.mxu0 0.0
    %3384 = vmatpush1.msra.mxu0 0.0
    %3385 = vmatprep.subr.mxu0 0.0
    %3386 = vmatpush1.msra.mxu0 0.0
    %3387 = vmatprep.subr.mxu0 0.0
    %3388 = vmatpush1.msra.mxu0 0.0
    %3389 = vmatprep.subr.mxu0 0.0
    %3390 = vmatpush1.msra.mxu0 0.0
    %3391 = vmatprep.subr.mxu0 0.0
    %3392 = vmatpush1.msra.mxu0 0.0
    %3393 = vmatprep.subr.mxu0 0.0
    %3394 = vmatpush1.msra.mxu0 0.0
    %3395 = vmatprep.subr.mxu0 0.0
    %3396 = vmatpush1.msra.mxu0 0.0
    %3397 = vmatprep.subr.mxu0 0.0
    %3398 = vmatpush1.msra.mxu0 0.0
    %3399 = vmatprep.subr.mxu0 0.0
    %3400 = vmatpush1.msra.mxu0 0.0
    %3401 = vmatprep.subr.mxu0 0.0
    %v3402 = vand.u32 %v24, 4294901760
    %3403 = vmatpush1.msra.mxu0 %v3402
    %3404 = vmatprep.subr.mxu0 0.0
    %v3405 = vand.u32 %v23, 4294901760
    %3406 = vmatpush1.msra.mxu0 %v3405
    %3407 = vmatprep.subr.mxu0 0.0
    %v3408 = vand.u32 %v22, 4294901760
    %3409 = vmatpush1.msra.mxu0 %v3408
    %3410 = vmatprep.subr.mxu0 0.0
    %v3411 = vand.u32 %v21, 4294901760
    %3412 = vmatpush1.msra.mxu0 %v3411
    %3413 = vmatprep.subr.mxu0 0.0
    %3414 = vmatpush2.msra.mxu0 0.0
    %3415 = vmatprep.subr.mxu0 0.0
    %3416 = vmatpush2.msra.mxu0 0.0
    %3417 = vmatprep.subr.mxu0 0.0
    %3418 = vmatpush2.msra.mxu0 0.0
    %3419 = vmatprep.subr.mxu0 0.0
    %3420 = vmatpush2.msra.mxu0 0.0
    %3421 = vmatprep.subr.mxu0 0.0
    %3422 = vmatpush2.msra.mxu0 0.0
    %3423 = vmatprep.subr.mxu0 0.0
    %3424 = vmatpush2.msra.mxu0 0.0
    %3425 = vmatprep.subr.mxu0 0.0
    %3426 = vmatpush2.msra.mxu0 0.0
    %3427 = vmatprep.subr.mxu0 0.0
    %3428 = vmatpush2.msra.mxu0 0.0
    %3429 = vmatprep.subr.mxu0 0.0
    %3430 = vmatpush2.msra.mxu0 0.0
    %3431 = vmatprep.subr.mxu0 0.0
    %3432 = vmatpush2.msra.mxu0 0.0
    %3433 = vmatprep.subr.mxu0 0.0
    %3434 = vmatpush2.msra.mxu0 0.0
    %3435 = vmatprep.subr.mxu0 0.0
    %3436 = vmatpush2.msra.mxu0 0.0
    %3437 = vmatprep.subr.mxu0 0.0
    %3438 = vmatpush2.msra.mxu0 0.0
    %3439 = vmatprep.subr.mxu0 0.0
    %3440 = vmatpush2.msra.mxu0 0.0
    %3441 = vmatprep.subr.mxu0 0.0
    %3442 = vmatpush2.msra.mxu0 0.0
    %3443 = vmatprep.subr.mxu0 0.0
    %3444 = vmatpush2.msra.mxu0 0.0
    %3445 = vmatprep.mubr.f32.mxu0 0.0
    %v3446 = vand.u32 %v3372, 4294901760
    %v3447 = vsub.f32 %v3372, %v3446
    %v3448 = vand.u32 %v3447, 4294901760
    %v3449 = vsub.f32 %v3447, %v3448
    %v3450 = vand.u32 %v3449, 4294901760
    %3451 = vmatmul.mubr.f32.gmra.mxu0 %v3450
    %v3452 = vpop.f32.mrf.mxu0
    %v3453 = vadd.f32 0.0, %v3452
    %v3454 = vpop.f32.mrf.mxu0
    %3455 = vmatprep.mubr.f32.mxu0 0.0
    %v3456 = vand.u32 %v3375, 4294901760
    %v3457 = vsub.f32 %v3375, %v3456
    %v3458 = vand.u32 %v3457, 4294901760
    %v3459 = vsub.f32 %v3457, %v3458
    %v3460 = vand.u32 %v3459, 4294901760
    %3461 = vmatmul.mubr.f32.gmra.mxu0 %v3460
    %v3462 = vpop.f32.mrf.mxu0
    %v3463 = vadd.f32 0.0, %v3462
    %v3464 = vpop.f32.mrf.mxu0
    %3465 = vdwg.mxu0
    %3466 = vmatprep.subr.mxu0 0.0
    %3467 = vmatpush1.msra.mxu0 0.0
    %3468 = vmatprep.subr.mxu0 0.0
    %3469 = vmatpush1.msra.mxu0 0.0
    %3470 = vmatprep.subr.mxu0 0.0
    %3471 = vmatpush1.msra.mxu0 0.0
    %3472 = vmatprep.subr.mxu0 0.0
    %3473 = vmatpush1.msra.mxu0 0.0
    %3474 = vmatprep.subr.mxu0 0.0
    %3475 = vmatpush1.msra.mxu0 0.0
    %3476 = vmatprep.subr.mxu0 0.0
    %3477 = vmatpush1.msra.mxu0 0.0
    %3478 = vmatprep.subr.mxu0 0.0
    %3479 = vmatpush1.msra.mxu0 0.0
    %3480 = vmatprep.subr.mxu0 0.0
    %3481 = vmatpush1.msra.mxu0 0.0
    %3482 = vmatprep.subr.mxu0 0.0
    %3483 = vmatpush1.msra.mxu0 0.0
    %3484 = vmatprep.subr.mxu0 0.0
    %3485 = vmatpush1.msra.mxu0 0.0
    %3486 = vmatprep.subr.mxu0 0.0
    %3487 = vmatpush1.msra.mxu0 0.0
    %3488 = vmatprep.subr.mxu0 0.0
    %3489 = vmatpush1.msra.mxu0 0.0
    %3490 = vmatprep.subr.mxu0 0.0
    %v3491 = vand.u32 %v24, 4294901760
    %v3492 = vsub.f32 %v24, %v3491
    %v3493 = vand.u32 %v3492, 4294901760
    %v3494 = vsub.f32 %v3492, %v3493
    %v3495 = vand.u32 %v3494, 4294901760
    %3496 = vmatpush1.msra.mxu0 %v3495
    %3497 = vmatprep.subr.mxu0 0.0
    %v3498 = vand.u32 %v23, 4294901760
    %v3499 = vsub.f32 %v23, %v3498
    %v3500 = vand.u32 %v3499, 4294901760
    %v3501 = vsub.f32 %v3499, %v3500
    %v3502 = vand.u32 %v3501, 4294901760
    %3503 = vmatpush1.msra.mxu0 %v3502
    %3504 = vmatprep.subr.mxu0 0.0
    %v3505 = vand.u32 %v22, 4294901760
    %v3506 = vsub.f32 %v22, %v3505
    %v3507 = vand.u32 %v3506, 4294901760
    %v3508 = vsub.f32 %v3506, %v3507
    %v3509 = vand.u32 %v3508, 4294901760
    %3510 = vmatpush1.msra.mxu0 %v3509
    %3511 = vmatprep.subr.mxu0 0.0
    %v3512 = vand.u32 %v21, 4294901760
    %v3513 = vsub.f32 %v21, %v3512
    %v3514 = vand.u32 %v3513, 4294901760
    %v3515 = vsub.f32 %v3513, %v3514
    %v3516 = vand.u32 %v3515, 4294901760
    %3517 = vmatpush1.msra.mxu0 %v3516
    %3518 = vmatprep.subr.mxu0 0.0
    %3519 = vmatpush2.msra.mxu0 0.0
    %3520 = vmatprep.subr.mxu0 0.0
    %3521 = vmatpush2.msra.mxu0 0.0
    %3522 = vmatprep.subr.mxu0 0.0
    %3523 = vmatpush2.msra.mxu0 0.0
    %3524 = vmatprep.subr.mxu0 0.0
    %3525 = vmatpush2.msra.mxu0 0.0
    %3526 = vmatprep.subr.mxu0 0.0
    %3527 = vmatpush2.msra.mxu0 0.0
    %3528 = vmatprep.subr.mxu0 0.0
    %3529 = vmatpush2.msra.mxu0 0.0
    %3530 = vmatprep.subr.mxu0 0.0
    %3531 = vmatpush2.msra.mxu0 0.0
    %3532 = vmatprep.subr.mxu0 0.0
    %3533 = vmatpush2.msra.mxu0 0.0
    %3534 = vmatprep.subr.mxu0 0.0
    %3535 = vmatpush2.msra.mxu0 0.0
    %3536 = vmatprep.subr.mxu0 0.0
    %3537 = vmatpush2.msra.mxu0 0.0
    %3538 = vmatprep.subr.mxu0 0.0
    %3539 = vmatpush2.msra.mxu0 0.0
    %3540 = vmatprep.subr.mxu0 0.0
    %3541 = vmatpush2.msra.mxu0 0.0
    %3542 = vmatprep.subr.mxu0 0.0
    %3543 = vmatpush2.msra.mxu0 0.0
    %3544 = vmatprep.subr.mxu0 0.0
    %3545 = vmatpush2.msra.mxu0 0.0
    %3546 = vmatprep.subr.mxu0 0.0
    %3547 = vmatpush2.msra.mxu0 0.0
    %3548 = vmatprep.subr.mxu0 0.0
    %3549 = vmatpush2.msra.mxu0 0.0
    %3550 = vmatprep.mubr.f32.mxu0 0.0
    %v3551 = vand.u32 %v3372, 4294901760
    %3552 = vmatmul.mubr.f32.gmra.mxu0 %v3551
    %v3553 = vpop.f32.mrf.mxu0
    %v3554 = vadd.f32 %v3453, %v3553
    %v3555 = vpop.f32.mrf.mxu0
    %3556 = vmatprep.mubr.f32.mxu0 0.0
    %v3557 = vand.u32 %v3375, 4294901760
    %3558 = vmatmul.mubr.f32.gmra.mxu0 %v3557
    %v3559 = vpop.f32.mrf.mxu0
    %v3560 = vadd.f32 %v3463, %v3559
    %v3561 = vpop.f32.mrf.mxu0
    %3562 = vdwg.mxu0
    %3563 = vmatprep.subr.mxu0 0.0
    %3564 = vmatpush1.msra.mxu0 0.0
    %3565 = vmatprep.subr.mxu0 0.0
    %3566 = vmatpush1.msra.mxu0 0.0
    %3567 = vmatprep.subr.mxu0 0.0
    %3568 = vmatpush1.msra.mxu0 0.0
    %3569 = vmatprep.subr.mxu0 0.0
    %3570 = vmatpush1.msra.mxu0 0.0
    %3571 = vmatprep.subr.mxu0 0.0
    %3572 = vmatpush1.msra.mxu0 0.0
    %3573 = vmatprep.subr.mxu0 0.0
    %3574 = vmatpush1.msra.mxu0 0.0
    %3575 = vmatprep.subr.mxu0 0.0
    %3576 = vmatpush1.msra.mxu0 0.0
    %3577 = vmatprep.subr.mxu0 0.0
    %3578 = vmatpush1.msra.mxu0 0.0
    %3579 = vmatprep.subr.mxu0 0.0
    %3580 = vmatpush1.msra.mxu0 0.0
    %3581 = vmatprep.subr.mxu0 0.0
    %3582 = vmatpush1.msra.mxu0 0.0
    %3583 = vmatprep.subr.mxu0 0.0
    %3584 = vmatpush1.msra.mxu0 0.0
    %3585 = vmatprep.subr.mxu0 0.0
    %3586 = vmatpush1.msra.mxu0 0.0
    %3587 = vmatprep.subr.mxu0 0.0
    %v3588 = vand.u32 %v24, 4294901760
    %v3589 = vsub.f32 %v24, %v3588
    %3590 = vmatpush1.msra.mxu0 %v3589
    %3591 = vmatprep.subr.mxu0 0.0
    %v3592 = vand.u32 %v23, 4294901760
    %v3593 = vsub.f32 %v23, %v3592
    %3594 = vmatpush1.msra.mxu0 %v3593
    %3595 = vmatprep.subr.mxu0 0.0
    %v3596 = vand.u32 %v22, 4294901760
    %v3597 = vsub.f32 %v22, %v3596
    %3598 = vmatpush1.msra.mxu0 %v3597
    %3599 = vmatprep.subr.mxu0 0.0
    %v3600 = vand.u32 %v21, 4294901760
    %v3601 = vsub.f32 %v21, %v3600
    %3602 = vmatpush1.msra.mxu0 %v3601
    %3603 = vmatprep.subr.mxu0 0.0
    %3604 = vmatpush2.msra.mxu0 0.0
    %3605 = vmatprep.subr.mxu0 0.0
    %3606 = vmatpush2.msra.mxu0 0.0
    %3607 = vmatprep.subr.mxu0 0.0
    %3608 = vmatpush2.msra.mxu0 0.0
    %3609 = vmatprep.subr.mxu0 0.0
    %3610 = vmatpush2.msra.mxu0 0.0
    %3611 = vmatprep.subr.mxu0 0.0
    %3612 = vmatpush2.msra.mxu0 0.0
    %3613 = vmatprep.subr.mxu0 0.0
    %3614 = vmatpush2.msra.mxu0 0.0
    %3615 = vmatprep.subr.mxu0 0.0
    %3616 = vmatpush2.msra.mxu0 0.0
    %3617 = vmatprep.subr.mxu0 0.0
    %3618 = vmatpush2.msra.mxu0 0.0
    %3619 = vmatprep.subr.mxu0 0.0
    %3620 = vmatpush2.msra.mxu0 0.0
    %3621 = vmatprep.subr.mxu0 0.0
    %3622 = vmatpush2.msra.mxu0 0.0
    %3623 = vmatprep.subr.mxu0 0.0
    %3624 = vmatpush2.msra.mxu0 0.0
    %3625 = vmatprep.subr.mxu0 0.0
    %3626 = vmatpush2.msra.mxu0 0.0
    %3627 = vmatprep.subr.mxu0 0.0
    %3628 = vmatpush2.msra.mxu0 0.0
    %3629 = vmatprep.subr.mxu0 0.0
    %3630 = vmatpush2.msra.mxu0 0.0
    %3631 = vmatprep.subr.mxu0 0.0
    %3632 = vmatpush2.msra.mxu0 0.0
    %3633 = vmatprep.subr.mxu0 0.0
    %3634 = vmatpush2.msra.mxu0 0.0
    %3635 = vmatprep.mubr.f32.mxu0 0.0
    %v3636 = vand.u32 %v3372, 4294901760
    %v3637 = vsub.f32 %v3372, %v3636
    %3638 = vmatmul.mubr.f32.gmra.mxu0 %v3637
    %v3639 = vpop.f32.mrf.mxu0
    %v3640 = vadd.f32 %v3554, %v3639
    %v3641 = vpop.f32.mrf.mxu0
    %3642 = vmatprep.mubr.f32.mxu0 0.0
    %v3643 = vand.u32 %v3375, 4294901760
    %v3644 = vsub.f32 %v3375, %v3643
    %3645 = vmatmul.mubr.f32.gmra.mxu0 %v3644
    %v3646 = vpop.f32.mrf.mxu0
    %v3647 = vadd.f32 %v3560, %v3646
    %v3648 = vpop.f32.mrf.mxu0
    %3649 = vdwg.mxu0
    %3650 = vmatprep.subr.mxu0 0.0
    %3651 = vmatpush1.msra.mxu0 0.0
    %3652 = vmatprep.subr.mxu0 0.0
    %3653 = vmatpush1.msra.mxu0 0.0
    %3654 = vmatprep.subr.mxu0 0.0
    %3655 = vmatpush1.msra.mxu0 0.0
    %3656 = vmatprep.subr.mxu0 0.0
    %3657 = vmatpush1.msra.mxu0 0.0
    %3658 = vmatprep.subr.mxu0 0.0
    %3659 = vmatpush1.msra.mxu0 0.0
    %3660 = vmatprep.subr.mxu0 0.0
    %3661 = vmatpush1.msra.mxu0 0.0
    %3662 = vmatprep.subr.mxu0 0.0
    %3663 = vmatpush1.msra.mxu0 0.0
    %3664 = vmatprep.subr.mxu0 0.0
    %3665 = vmatpush1.msra.mxu0 0.0
    %3666 = vmatprep.subr.mxu0 0.0
    %3667 = vmatpush1.msra.mxu0 0.0
    %3668 = vmatprep.subr.mxu0 0.0
    %3669 = vmatpush1.msra.mxu0 0.0
    %3670 = vmatprep.subr.mxu0 0.0
    %3671 = vmatpush1.msra.mxu0 0.0
    %3672 = vmatprep.subr.mxu0 0.0
    %3673 = vmatpush1.msra.mxu0 0.0
    %3674 = vmatprep.subr.mxu0 0.0
    %v3675 = vand.u32 %v24, 4294901760
    %3676 = vmatpush1.msra.mxu0 %v3675
    %3677 = vmatprep.subr.mxu0 0.0
    %v3678 = vand.u32 %v23, 4294901760
    %3679 = vmatpush1.msra.mxu0 %v3678
    %3680 = vmatprep.subr.mxu0 0.0
    %v3681 = vand.u32 %v22, 4294901760
    %3682 = vmatpush1.msra.mxu0 %v3681
    %3683 = vmatprep.subr.mxu0 0.0
    %v3684 = vand.u32 %v21, 4294901760
    %3685 = vmatpush1.msra.mxu0 %v3684
    %3686 = vmatprep.subr.mxu0 0.0
    %3687 = vmatpush2.msra.mxu0 0.0
    %3688 = vmatprep.subr.mxu0 0.0
    %3689 = vmatpush2.msra.mxu0 0.0
    %3690 = vmatprep.subr.mxu0 0.0
    %3691 = vmatpush2.msra.mxu0 0.0
    %3692 = vmatprep.subr.mxu0 0.0
    %3693 = vmatpush2.msra.mxu0 0.0
    %3694 = vmatprep.subr.mxu0 0.0
    %3695 = vmatpush2.msra.mxu0 0.0
    %3696 = vmatprep.subr.mxu0 0.0
    %3697 = vmatpush2.msra.mxu0 0.0
    %3698 = vmatprep.subr.mxu0 0.0
    %3699 = vmatpush2.msra.mxu0 0.0
    %3700 = vmatprep.subr.mxu0 0.0
    %3701 = vmatpush2.msra.mxu0 0.0
    %3702 = vmatprep.subr.mxu0 0.0
    %3703 = vmatpush2.msra.mxu0 0.0
    %3704 = vmatprep.subr.mxu0 0.0
    %3705 = vmatpush2.msra.mxu0 0.0
    %3706 = vmatprep.subr.mxu0 0.0
    %3707 = vmatpush2.msra.mxu0 0.0
    %3708 = vmatprep.subr.mxu0 0.0
    %3709 = vmatpush2.msra.mxu0 0.0
    %3710 = vmatprep.subr.mxu0 0.0
    %3711 = vmatpush2.msra.mxu0 0.0
    %3712 = vmatprep.subr.mxu0 0.0
    %3713 = vmatpush2.msra.mxu0 0.0
    %3714 = vmatprep.subr.mxu0 0.0
    %3715 = vmatpush2.msra.mxu0 0.0
    %3716 = vmatprep.subr.mxu0 0.0
    %3717 = vmatpush2.msra.mxu0 0.0
    %3718 = vmatprep.mubr.f32.mxu0 0.0
    %v3719 = vand.u32 %v3372, 4294901760
    %v3720 = vsub.f32 %v3372, %v3719
    %v3721 = vand.u32 %v3720, 4294901760
    %3722 = vmatmul.mubr.f32.gmra.mxu0 %v3721
    %v3723 = vpop.f32.mrf.mxu0
    %v3724 = vadd.f32 %v3640, %v3723
    %v3725 = vpop.f32.mrf.mxu0
    %3726 = vmatprep.mubr.f32.mxu0 0.0
    %v3727 = vand.u32 %v3375, 4294901760
    %v3728 = vsub.f32 %v3375, %v3727
    %v3729 = vand.u32 %v3728, 4294901760
    %3730 = vmatmul.mubr.f32.gmra.mxu0 %v3729
    %v3731 = vpop.f32.mrf.mxu0
    %v3732 = vadd.f32 %v3647, %v3731
    %v3733 = vpop.f32.mrf.mxu0
    %3734 = vdwg.mxu0
    %3735 = vmatprep.subr.mxu0 0.0
    %3736 = vmatpush1.msra.mxu0 0.0
    %3737 = vmatprep.subr.mxu0 0.0
    %3738 = vmatpush1.msra.mxu0 0.0
    %3739 = vmatprep.subr.mxu0 0.0
    %3740 = vmatpush1.msra.mxu0 0.0
    %3741 = vmatprep.subr.mxu0 0.0
    %3742 = vmatpush1.msra.mxu0 0.0
    %3743 = vmatprep.subr.mxu0 0.0
    %3744 = vmatpush1.msra.mxu0 0.0
    %3745 = vmatprep.subr.mxu0 0.0
    %3746 = vmatpush1.msra.mxu0 0.0
    %3747 = vmatprep.subr.mxu0 0.0
    %3748 = vmatpush1.msra.mxu0 0.0
    %3749 = vmatprep.subr.mxu0 0.0
    %3750 = vmatpush1.msra.mxu0 0.0
    %3751 = vmatprep.subr.mxu0 0.0
    %3752 = vmatpush1.msra.mxu0 0.0
    %3753 = vmatprep.subr.mxu0 0.0
    %3754 = vmatpush1.msra.mxu0 0.0
    %3755 = vmatprep.subr.mxu0 0.0
    %3756 = vmatpush1.msra.mxu0 0.0
    %3757 = vmatprep.subr.mxu0 0.0
    %3758 = vmatpush1.msra.mxu0 0.0
    %3759 = vmatprep.subr.mxu0 0.0
    %v3760 = vand.u32 %v24, 4294901760
    %v3761 = vsub.f32 %v24, %v3760
    %v3762 = vand.u32 %v3761, 4294901760
    %3763 = vmatpush1.msra.mxu0 %v3762
    %3764 = vmatprep.subr.mxu0 0.0
    %v3765 = vand.u32 %v23, 4294901760
    %v3766 = vsub.f32 %v23, %v3765
    %v3767 = vand.u32 %v3766, 4294901760
    %3768 = vmatpush1.msra.mxu0 %v3767
    %3769 = vmatprep.subr.mxu0 0.0
    %v3770 = vand.u32 %v22, 4294901760
    %v3771 = vsub.f32 %v22, %v3770
    %v3772 = vand.u32 %v3771, 4294901760
    %3773 = vmatpush1.msra.mxu0 %v3772
    %3774 = vmatprep.subr.mxu0 0.0
    %v3775 = vand.u32 %v21, 4294901760
    %v3776 = vsub.f32 %v21, %v3775
    %v3777 = vand.u32 %v3776, 4294901760
    %3778 = vmatpush1.msra.mxu0 %v3777
    %3779 = vmatprep.subr.mxu0 0.0
    %3780 = vmatpush2.msra.mxu0 0.0
    %3781 = vmatprep.subr.mxu0 0.0
    %3782 = vmatpush2.msra.mxu0 0.0
    %3783 = vmatprep.subr.mxu0 0.0
    %3784 = vmatpush2.msra.mxu0 0.0
    %3785 = vmatprep.subr.mxu0 0.0
    %3786 = vmatpush2.msra.mxu0 0.0
    %3787 = vmatprep.subr.mxu0 0.0
    %3788 = vmatpush2.msra.mxu0 0.0
    %3789 = vmatprep.subr.mxu0 0.0
    %3790 = vmatpush2.msra.mxu0 0.0
    %3791 = vmatprep.subr.mxu0 0.0
    %3792 = vmatpush2.msra.mxu0 0.0
    %3793 = vmatprep.subr.mxu0 0.0
    %3794 = vmatpush2.msra.mxu0 0.0
    %3795 = vmatprep.subr.mxu0 0.0
    %3796 = vmatpush2.msra.mxu0 0.0
    %3797 = vmatprep.subr.mxu0 0.0
    %3798 = vmatpush2.msra.mxu0 0.0
    %3799 = vmatprep.subr.mxu0 0.0
    %3800 = vmatpush2.msra.mxu0 0.0
    %3801 = vmatprep.subr.mxu0 0.0
    %3802 = vmatpush2.msra.mxu0 0.0
    %3803 = vmatprep.subr.mxu0 0.0
    %3804 = vmatpush2.msra.mxu0 0.0
    %3805 = vmatprep.subr.mxu0 0.0
    %3806 = vmatpush2.msra.mxu0 0.0
    %3807 = vmatprep.subr.mxu0 0.0
    %3808 = vmatpush2.msra.mxu0 0.0
    %3809 = vmatprep.subr.mxu0 0.0
    %3810 = vmatpush2.msra.mxu0 0.0
    %3811 = vmatprep.mubr.f32.mxu0 0.0
    %v3812 = vand.u32 %v3372, 4294901760
    %3813 = vmatmul.mubr.f32.gmra.mxu0 %v3812
    %v3814 = vpop.f32.mrf.mxu0
    %v3815 = vadd.f32 %v3724, %v3814
    %v3816 = vpop.f32.mrf.mxu0
    %3817 = vmatprep.mubr.f32.mxu0 0.0
    %v3818 = vand.u32 %v3375, 4294901760
    %3819 = vmatmul.mubr.f32.gmra.mxu0 %v3818
    %v3820 = vpop.f32.mrf.mxu0
    %v3821 = vadd.f32 %v3732, %v3820
    %v3822 = vpop.f32.mrf.mxu0
    %3823 = vdwg.mxu0
    %3824 = vmatprep.subr.mxu0 0.0
    %3825 = vmatpush1.msra.mxu0 0.0
    %3826 = vmatprep.subr.mxu0 0.0
    %3827 = vmatpush1.msra.mxu0 0.0
    %3828 = vmatprep.subr.mxu0 0.0
    %3829 = vmatpush1.msra.mxu0 0.0
    %3830 = vmatprep.subr.mxu0 0.0
    %3831 = vmatpush1.msra.mxu0 0.0
    %3832 = vmatprep.subr.mxu0 0.0
    %3833 = vmatpush1.msra.mxu0 0.0
    %3834 = vmatprep.subr.mxu0 0.0
    %3835 = vmatpush1.msra.mxu0 0.0
    %3836 = vmatprep.subr.mxu0 0.0
    %3837 = vmatpush1.msra.mxu0 0.0
    %3838 = vmatprep.subr.mxu0 0.0
    %3839 = vmatpush1.msra.mxu0 0.0
    %3840 = vmatprep.subr.mxu0 0.0
    %3841 = vmatpush1.msra.mxu0 0.0
    %3842 = vmatprep.subr.mxu0 0.0
    %3843 = vmatpush1.msra.mxu0 0.0
    %3844 = vmatprep.subr.mxu0 0.0
    %3845 = vmatpush1.msra.mxu0 0.0
    %3846 = vmatprep.subr.mxu0 0.0
    %3847 = vmatpush1.msra.mxu0 0.0
    %3848 = vmatprep.subr.mxu0 0.0
    %v3849 = vand.u32 %v24, 4294901760
    %3850 = vmatpush1.msra.mxu0 %v3849
    %3851 = vmatprep.subr.mxu0 0.0
    %v3852 = vand.u32 %v23, 4294901760
    %3853 = vmatpush1.msra.mxu0 %v3852
    %3854 = vmatprep.subr.mxu0 0.0
    %v3855 = vand.u32 %v22, 4294901760
    %3856 = vmatpush1.msra.mxu0 %v3855
    %3857 = vmatprep.subr.mxu0 0.0
    %v3858 = vand.u32 %v21, 4294901760
    %3859 = vmatpush1.msra.mxu0 %v3858
    %3860 = vmatprep.subr.mxu0 0.0
    %3861 = vmatpush2.msra.mxu0 0.0
    %3862 = vmatprep.subr.mxu0 0.0
    %3863 = vmatpush2.msra.mxu0 0.0
    %3864 = vmatprep.subr.mxu0 0.0
    %3865 = vmatpush2.msra.mxu0 0.0
    %3866 = vmatprep.subr.mxu0 0.0
    %3867 = vmatpush2.msra.mxu0 0.0
    %3868 = vmatprep.subr.mxu0 0.0
    %3869 = vmatpush2.msra.mxu0 0.0
    %3870 = vmatprep.subr.mxu0 0.0
    %3871 = vmatpush2.msra.mxu0 0.0
    %3872 = vmatprep.subr.mxu0 0.0
    %3873 = vmatpush2.msra.mxu0 0.0
    %3874 = vmatprep.subr.mxu0 0.0
    %3875 = vmatpush2.msra.mxu0 0.0
    %3876 = vmatprep.subr.mxu0 0.0
    %3877 = vmatpush2.msra.mxu0 0.0
    %3878 = vmatprep.subr.mxu0 0.0
    %3879 = vmatpush2.msra.mxu0 0.0
    %3880 = vmatprep.subr.mxu0 0.0
    %3881 = vmatpush2.msra.mxu0 0.0
    %3882 = vmatprep.subr.mxu0 0.0
    %3883 = vmatpush2.msra.mxu0 0.0
    %3884 = vmatprep.subr.mxu0 0.0
    %3885 = vmatpush2.msra.mxu0 0.0
    %3886 = vmatprep.subr.mxu0 0.0
    %3887 = vmatpush2.msra.mxu0 0.0
    %3888 = vmatprep.subr.mxu0 0.0
    %3889 = vmatpush2.msra.mxu0 0.0
    %3890 = vmatprep.subr.mxu0 0.0
    %3891 = vmatpush2.msra.mxu0 0.0
    %3892 = vmatprep.mubr.f32.mxu0 0.0
    %v3893 = vand.u32 %v3372, 4294901760
    %3894 = vmatmul.mubr.f32.gmra.mxu0 %v3893
    %v3895 = vpop.f32.mrf.mxu0
    %v3896 = vadd.f32 %v3815, %v3895
    %v3897 = vpop.f32.mrf.mxu0
    %3898 = vmatprep.mubr.f32.mxu0 0.0
    %v3899 = vand.u32 %v3375, 4294901760
    %3900 = vmatmul.mubr.f32.gmra.mxu0 %v3899
    %v3901 = vpop.f32.mrf.mxu0
    %v3902 = vadd.f32 %v3821, %v3901
    %v3903 = vpop.f32.mrf.mxu0
    %3904 = vdwg.mxu0
    %v3905 = vadd.f32 %v3369, %v3896
    %v3906 = vadd.f32 %v3370, %v3902
    %v3907 = vxor.u32 %v3905, 2147483648
    %v3908 = vxor.u32 %v3906, 2147483648
    %v3909 = vmul.f32 %v3907, 1.442695
    %v3910 = vpow.pop %v3909
    %v3911 = vmul.f32 %v3908, 1.442695
    %v3912 = vpow.pop %v3911
    %v3913 = vadd.f32 %v3910, 1.0
    %v3914 = vadd.f32 %v3912, 1.0
    %v3915 = vrcp.pop %v3913
    %v3916 = vmul.f32 1.0, %v3915
    %v3917 = vrcp.pop %v3914
    %v3918 = vmul.f32 1.0, %v3917
    %s3919 = scalar_lea.vmem %s1, 48
    %v3920 = vld [vmem:[%s3919] sm:$0xff]
    %v3921 = vld [vmem:[%s3919 + $0x8] sm:$0xff]
    %3924 = vrot.lane.b32.xlu0 %v3916, 96
    %v3925 = vpop.permute.xlu0 %3924
    %3926 = vrot.lane.b32.xlu0 %v3918, 96
    %v3927 = vpop.permute.xlu0 %3926
    %v3930 = vmul.f32 %v3363, %v3925
    %v3931 = vmul.f32 %v3364, %v3927
    %v3933 = vsel %vm33, %v3930, 0
    %v3936 = vsel %vm33, %v3931, 0
    %3938 = vmatprep.subr.mxu0 0.0
    %3939 = vmatpush1.msra.mxu0 0.0
    %3940 = vmatprep.subr.mxu0 0.0
    %3941 = vmatpush1.msra.mxu0 0.0
    %3942 = vmatprep.subr.mxu0 0.0
    %3943 = vmatpush1.msra.mxu0 0.0
    %3944 = vmatprep.subr.mxu0 0.0
    %3945 = vmatpush1.msra.mxu0 0.0
    %3946 = vmatprep.subr.mxu0 0.0
    %3947 = vmatpush1.msra.mxu0 0.0
    %3948 = vmatprep.subr.mxu0 0.0
    %3949 = vmatpush1.msra.mxu0 0.0
    %3950 = vmatprep.subr.mxu0 0.0
    %3951 = vmatpush1.msra.mxu0 0.0
    %3952 = vmatprep.subr.mxu0 0.0
    %3953 = vmatpush1.msra.mxu0 0.0
    %3954 = vmatprep.subr.mxu0 0.0
    %3955 = vmatpush1.msra.mxu0 0.0
    %3956 = vmatprep.subr.mxu0 0.0
    %3957 = vmatpush1.msra.mxu0 0.0
    %3958 = vmatprep.subr.mxu0 0.0
    %3959 = vmatpush1.msra.mxu0 0.0
    %3960 = vmatprep.subr.mxu0 0.0
    %3961 = vmatpush1.msra.mxu0 0.0
    %3962 = vmatprep.subr.mxu0 0.0
    %v3963 = vand.u32 %v28, 4294901760
    %3964 = vmatpush1.msra.mxu0 %v3963
    %3965 = vmatprep.subr.mxu0 0.0
    %v3966 = vand.u32 %v27, 4294901760
    %3967 = vmatpush1.msra.mxu0 %v3966
    %3968 = vmatprep.subr.mxu0 0.0
    %v3969 = vand.u32 %v26, 4294901760
    %3970 = vmatpush1.msra.mxu0 %v3969
    %3971 = vmatprep.subr.mxu0 0.0
    %v3972 = vand.u32 %v25, 4294901760
    %3973 = vmatpush1.msra.mxu0 %v3972
    %3974 = vmatprep.subr.mxu0 0.0
    %3975 = vmatpush2.msra.mxu0 0.0
    %3976 = vmatprep.subr.mxu0 0.0
    %3977 = vmatpush2.msra.mxu0 0.0
    %3978 = vmatprep.subr.mxu0 0.0
    %3979 = vmatpush2.msra.mxu0 0.0
    %3980 = vmatprep.subr.mxu0 0.0
    %3981 = vmatpush2.msra.mxu0 0.0
    %3982 = vmatprep.subr.mxu0 0.0
    %3983 = vmatpush2.msra.mxu0 0.0
    %3984 = vmatprep.subr.mxu0 0.0
    %3985 = vmatpush2.msra.mxu0 0.0
    %3986 = vmatprep.subr.mxu0 0.0
    %3987 = vmatpush2.msra.mxu0 0.0
    %3988 = vmatprep.subr.mxu0 0.0
    %3989 = vmatpush2.msra.mxu0 0.0
    %3990 = vmatprep.subr.mxu0 0.0
    %3991 = vmatpush2.msra.mxu0 0.0
    %3992 = vmatprep.subr.mxu0 0.0
    %3993 = vmatpush2.msra.mxu0 0.0
    %3994 = vmatprep.subr.mxu0 0.0
    %3995 = vmatpush2.msra.mxu0 0.0
    %3996 = vmatprep.subr.mxu0 0.0
    %3997 = vmatpush2.msra.mxu0 0.0
    %3998 = vmatprep.subr.mxu0 0.0
    %3999 = vmatpush2.msra.mxu0 0.0
    %4000 = vmatprep.subr.mxu0 0.0
    %4001 = vmatpush2.msra.mxu0 0.0
    %4002 = vmatprep.subr.mxu0 0.0
    %4003 = vmatpush2.msra.mxu0 0.0
    %4004 = vmatprep.subr.mxu0 0.0
    %4005 = vmatpush2.msra.mxu0 0.0
    %4006 = vmatprep.mubr.f32.mxu0 0.0
    %v4007 = vand.u32 %v3933, 4294901760
    %v4008 = vsub.f32 %v3933, %v4007
    %v4009 = vand.u32 %v4008, 4294901760
    %v4010 = vsub.f32 %v4008, %v4009
    %v4011 = vand.u32 %v4010, 4294901760
    %4012 = vmatmul.mubr.f32.gmra.mxu0 %v4011
    %v4013 = vpop.f32.mrf.mxu0
    %v4014 = vadd.f32 0.0, %v4013
    %v4015 = vpop.f32.mrf.mxu0
    %4016 = vmatprep.mubr.f32.mxu0 0.0
    %v4017 = vand.u32 %v3936, 4294901760
    %v4018 = vsub.f32 %v3936, %v4017
    %v4019 = vand.u32 %v4018, 4294901760
    %v4020 = vsub.f32 %v4018, %v4019
    %v4021 = vand.u32 %v4020, 4294901760
    %4022 = vmatmul.mubr.f32.gmra.mxu0 %v4021
    %v4023 = vpop.f32.mrf.mxu0
    %v4024 = vadd.f32 0.0, %v4023
    %v4025 = vpop.f32.mrf.mxu0
    %4026 = vdwg.mxu0
    %4027 = vmatprep.subr.mxu0 0.0
    %4028 = vmatpush1.msra.mxu0 0.0
    %4029 = vmatprep.subr.mxu0 0.0
    %4030 = vmatpush1.msra.mxu0 0.0
    %4031 = vmatprep.subr.mxu0 0.0
    %4032 = vmatpush1.msra.mxu0 0.0
    %4033 = vmatprep.subr.mxu0 0.0
    %4034 = vmatpush1.msra.mxu0 0.0
    %4035 = vmatprep.subr.mxu0 0.0
    %4036 = vmatpush1.msra.mxu0 0.0
    %4037 = vmatprep.subr.mxu0 0.0
    %4038 = vmatpush1.msra.mxu0 0.0
    %4039 = vmatprep.subr.mxu0 0.0
    %4040 = vmatpush1.msra.mxu0 0.0
    %4041 = vmatprep.subr.mxu0 0.0
    %4042 = vmatpush1.msra.mxu0 0.0
    %4043 = vmatprep.subr.mxu0 0.0
    %4044 = vmatpush1.msra.mxu0 0.0
    %4045 = vmatprep.subr.mxu0 0.0
    %4046 = vmatpush1.msra.mxu0 0.0
    %4047 = vmatprep.subr.mxu0 0.0
    %4048 = vmatpush1.msra.mxu0 0.0
    %4049 = vmatprep.subr.mxu0 0.0
    %4050 = vmatpush1.msra.mxu0 0.0
    %4051 = vmatprep.subr.mxu0 0.0
    %v4052 = vand.u32 %v28, 4294901760
    %v4053 = vsub.f32 %v28, %v4052
    %v4054 = vand.u32 %v4053, 4294901760
    %v4055 = vsub.f32 %v4053, %v4054
    %v4056 = vand.u32 %v4055, 4294901760
    %4057 = vmatpush1.msra.mxu0 %v4056
    %4058 = vmatprep.subr.mxu0 0.0
    %v4059 = vand.u32 %v27, 4294901760
    %v4060 = vsub.f32 %v27, %v4059
    %v4061 = vand.u32 %v4060, 4294901760
    %v4062 = vsub.f32 %v4060, %v4061
    %v4063 = vand.u32 %v4062, 4294901760
    %4064 = vmatpush1.msra.mxu0 %v4063
    %4065 = vmatprep.subr.mxu0 0.0
    %v4066 = vand.u32 %v26, 4294901760
    %v4067 = vsub.f32 %v26, %v4066
    %v4068 = vand.u32 %v4067, 4294901760
    %v4069 = vsub.f32 %v4067, %v4068
    %v4070 = vand.u32 %v4069, 4294901760
    %4071 = vmatpush1.msra.mxu0 %v4070
    %4072 = vmatprep.subr.mxu0 0.0
    %v4073 = vand.u32 %v25, 4294901760
    %v4074 = vsub.f32 %v25, %v4073
    %v4075 = vand.u32 %v4074, 4294901760
    %v4076 = vsub.f32 %v4074, %v4075
    %v4077 = vand.u32 %v4076, 4294901760
    %4078 = vmatpush1.msra.mxu0 %v4077
    %4079 = vmatprep.subr.mxu0 0.0
    %4080 = vmatpush2.msra.mxu0 0.0
    %4081 = vmatprep.subr.mxu0 0.0
    %4082 = vmatpush2.msra.mxu0 0.0
    %4083 = vmatprep.subr.mxu0 0.0
    %4084 = vmatpush2.msra.mxu0 0.0
    %4085 = vmatprep.subr.mxu0 0.0
    %4086 = vmatpush2.msra.mxu0 0.0
    %4087 = vmatprep.subr.mxu0 0.0
    %4088 = vmatpush2.msra.mxu0 0.0
    %4089 = vmatprep.subr.mxu0 0.0
    %4090 = vmatpush2.msra.mxu0 0.0
    %4091 = vmatprep.subr.mxu0 0.0
    %4092 = vmatpush2.msra.mxu0 0.0
    %4093 = vmatprep.subr.mxu0 0.0
    %4094 = vmatpush2.msra.mxu0 0.0
    %4095 = vmatprep.subr.mxu0 0.0
    %4096 = vmatpush2.msra.mxu0 0.0
    %4097 = vmatprep.subr.mxu0 0.0
    %4098 = vmatpush2.msra.mxu0 0.0
    %4099 = vmatprep.subr.mxu0 0.0
    %4100 = vmatpush2.msra.mxu0 0.0
    %4101 = vmatprep.subr.mxu0 0.0
    %4102 = vmatpush2.msra.mxu0 0.0
    %4103 = vmatprep.subr.mxu0 0.0
    %4104 = vmatpush2.msra.mxu0 0.0
    %4105 = vmatprep.subr.mxu0 0.0
    %4106 = vmatpush2.msra.mxu0 0.0
    %4107 = vmatprep.subr.mxu0 0.0
    %4108 = vmatpush2.msra.mxu0 0.0
    %4109 = vmatprep.subr.mxu0 0.0
    %4110 = vmatpush2.msra.mxu0 0.0
    %4111 = vmatprep.mubr.f32.mxu0 0.0
    %v4112 = vand.u32 %v3933, 4294901760
    %4113 = vmatmul.mubr.f32.gmra.mxu0 %v4112
    %v4114 = vpop.f32.mrf.mxu0
    %v4115 = vadd.f32 %v4014, %v4114
    %v4116 = vpop.f32.mrf.mxu0
    %4117 = vmatprep.mubr.f32.mxu0 0.0
    %v4118 = vand.u32 %v3936, 4294901760
    %4119 = vmatmul.mubr.f32.gmra.mxu0 %v4118
    %v4120 = vpop.f32.mrf.mxu0
    %v4121 = vadd.f32 %v4024, %v4120
    %v4122 = vpop.f32.mrf.mxu0
    %4123 = vdwg.mxu0
    %4124 = vmatprep.subr.mxu0 0.0
    %4125 = vmatpush1.msra.mxu0 0.0
    %4126 = vmatprep.subr.mxu0 0.0
    %4127 = vmatpush1.msra.mxu0 0.0
    %4128 = vmatprep.subr.mxu0 0.0
    %4129 = vmatpush1.msra.mxu0 0.0
    %4130 = vmatprep.subr.mxu0 0.0
    %4131 = vmatpush1.msra.mxu0 0.0
    %4132 = vmatprep.subr.mxu0 0.0
    %4133 = vmatpush1.msra.mxu0 0.0
    %4134 = vmatprep.subr.mxu0 0.0
    %4135 = vmatpush1.msra.mxu0 0.0
    %4136 = vmatprep.subr.mxu0 0.0
    %4137 = vmatpush1.msra.mxu0 0.0
    %4138 = vmatprep.subr.mxu0 0.0
    %4139 = vmatpush1.msra.mxu0 0.0
    %4140 = vmatprep.subr.mxu0 0.0
    %4141 = vmatpush1.msra.mxu0 0.0
    %4142 = vmatprep.subr.mxu0 0.0
    %4143 = vmatpush1.msra.mxu0 0.0
    %4144 = vmatprep.subr.mxu0 0.0
    %4145 = vmatpush1.msra.mxu0 0.0
    %4146 = vmatprep.subr.mxu0 0.0
    %4147 = vmatpush1.msra.mxu0 0.0
    %4148 = vmatprep.subr.mxu0 0.0
    %v4149 = vand.u32 %v28, 4294901760
    %v4150 = vsub.f32 %v28, %v4149
    %4151 = vmatpush1.msra.mxu0 %v4150
    %4152 = vmatprep.subr.mxu0 0.0
    %v4153 = vand.u32 %v27, 4294901760
    %v4154 = vsub.f32 %v27, %v4153
    %4155 = vmatpush1.msra.mxu0 %v4154
    %4156 = vmatprep.subr.mxu0 0.0
    %v4157 = vand.u32 %v26, 4294901760
    %v4158 = vsub.f32 %v26, %v4157
    %4159 = vmatpush1.msra.mxu0 %v4158
    %4160 = vmatprep.subr.mxu0 0.0
    %v4161 = vand.u32 %v25, 4294901760
    %v4162 = vsub.f32 %v25, %v4161
    %4163 = vmatpush1.msra.mxu0 %v4162
    %4164 = vmatprep.subr.mxu0 0.0
    %4165 = vmatpush2.msra.mxu0 0.0
    %4166 = vmatprep.subr.mxu0 0.0
    %4167 = vmatpush2.msra.mxu0 0.0
    %4168 = vmatprep.subr.mxu0 0.0
    %4169 = vmatpush2.msra.mxu0 0.0
    %4170 = vmatprep.subr.mxu0 0.0
    %4171 = vmatpush2.msra.mxu0 0.0
    %4172 = vmatprep.subr.mxu0 0.0
    %4173 = vmatpush2.msra.mxu0 0.0
    %4174 = vmatprep.subr.mxu0 0.0
    %4175 = vmatpush2.msra.mxu0 0.0
    %4176 = vmatprep.subr.mxu0 0.0
    %4177 = vmatpush2.msra.mxu0 0.0
    %4178 = vmatprep.subr.mxu0 0.0
    %4179 = vmatpush2.msra.mxu0 0.0
    %4180 = vmatprep.subr.mxu0 0.0
    %4181 = vmatpush2.msra.mxu0 0.0
    %4182 = vmatprep.subr.mxu0 0.0
    %4183 = vmatpush2.msra.mxu0 0.0
    %4184 = vmatprep.subr.mxu0 0.0
    %4185 = vmatpush2.msra.mxu0 0.0
    %4186 = vmatprep.subr.mxu0 0.0
    %4187 = vmatpush2.msra.mxu0 0.0
    %4188 = vmatprep.subr.mxu0 0.0
    %4189 = vmatpush2.msra.mxu0 0.0
    %4190 = vmatprep.subr.mxu0 0.0
    %4191 = vmatpush2.msra.mxu0 0.0
    %4192 = vmatprep.subr.mxu0 0.0
    %4193 = vmatpush2.msra.mxu0 0.0
    %4194 = vmatprep.subr.mxu0 0.0
    %4195 = vmatpush2.msra.mxu0 0.0
    %4196 = vmatprep.mubr.f32.mxu0 0.0
    %v4197 = vand.u32 %v3933, 4294901760
    %v4198 = vsub.f32 %v3933, %v4197
    %4199 = vmatmul.mubr.f32.gmra.mxu0 %v4198
    %v4200 = vpop.f32.mrf.mxu0
    %v4201 = vadd.f32 %v4115, %v4200
    %v4202 = vpop.f32.mrf.mxu0
    %4203 = vmatprep.mubr.f32.mxu0 0.0
    %v4204 = vand.u32 %v3936, 4294901760
    %v4205 = vsub.f32 %v3936, %v4204
    %4206 = vmatmul.mubr.f32.gmra.mxu0 %v4205
    %v4207 = vpop.f32.mrf.mxu0
    %v4208 = vadd.f32 %v4121, %v4207
    %v4209 = vpop.f32.mrf.mxu0
    %4210 = vdwg.mxu0
    %4211 = vmatprep.subr.mxu0 0.0
    %4212 = vmatpush1.msra.mxu0 0.0
    %4213 = vmatprep.subr.mxu0 0.0
    %4214 = vmatpush1.msra.mxu0 0.0
    %4215 = vmatprep.subr.mxu0 0.0
    %4216 = vmatpush1.msra.mxu0 0.0
    %4217 = vmatprep.subr.mxu0 0.0
    %4218 = vmatpush1.msra.mxu0 0.0
    %4219 = vmatprep.subr.mxu0 0.0
    %4220 = vmatpush1.msra.mxu0 0.0
    %4221 = vmatprep.subr.mxu0 0.0
    %4222 = vmatpush1.msra.mxu0 0.0
    %4223 = vmatprep.subr.mxu0 0.0
    %4224 = vmatpush1.msra.mxu0 0.0
    %4225 = vmatprep.subr.mxu0 0.0
    %4226 = vmatpush1.msra.mxu0 0.0
    %4227 = vmatprep.subr.mxu0 0.0
    %4228 = vmatpush1.msra.mxu0 0.0
    %4229 = vmatprep.subr.mxu0 0.0
    %4230 = vmatpush1.msra.mxu0 0.0
    %4231 = vmatprep.subr.mxu0 0.0
    %4232 = vmatpush1.msra.mxu0 0.0
    %4233 = vmatprep.subr.mxu0 0.0
    %4234 = vmatpush1.msra.mxu0 0.0
    %4235 = vmatprep.subr.mxu0 0.0
    %v4236 = vand.u32 %v28, 4294901760
    %4237 = vmatpush1.msra.mxu0 %v4236
    %4238 = vmatprep.subr.mxu0 0.0
    %v4239 = vand.u32 %v27, 4294901760
    %4240 = vmatpush1.msra.mxu0 %v4239
    %4241 = vmatprep.subr.mxu0 0.0
    %v4242 = vand.u32 %v26, 4294901760
    %4243 = vmatpush1.msra.mxu0 %v4242
    %4244 = vmatprep.subr.mxu0 0.0
    %v4245 = vand.u32 %v25, 4294901760
    %4246 = vmatpush1.msra.mxu0 %v4245
    %4247 = vmatprep.subr.mxu0 0.0
    %4248 = vmatpush2.msra.mxu0 0.0
    %4249 = vmatprep.subr.mxu0 0.0
    %4250 = vmatpush2.msra.mxu0 0.0
    %4251 = vmatprep.subr.mxu0 0.0
    %4252 = vmatpush2.msra.mxu0 0.0
    %4253 = vmatprep.subr.mxu0 0.0
    %4254 = vmatpush2.msra.mxu0 0.0
    %4255 = vmatprep.subr.mxu0 0.0
    %4256 = vmatpush2.msra.mxu0 0.0
    %4257 = vmatprep.subr.mxu0 0.0
    %4258 = vmatpush2.msra.mxu0 0.0
    %4259 = vmatprep.subr.mxu0 0.0
    %4260 = vmatpush2.msra.mxu0 0.0
    %4261 = vmatprep.subr.mxu0 0.0
    %4262 = vmatpush2.msra.mxu0 0.0
    %4263 = vmatprep.subr.mxu0 0.0
    %4264 = vmatpush2.msra.mxu0 0.0
    %4265 = vmatprep.subr.mxu0 0.0
    %4266 = vmatpush2.msra.mxu0 0.0
    %4267 = vmatprep.subr.mxu0 0.0
    %4268 = vmatpush2.msra.mxu0 0.0
    %4269 = vmatprep.subr.mxu0 0.0
    %4270 = vmatpush2.msra.mxu0 0.0
    %4271 = vmatprep.subr.mxu0 0.0
    %4272 = vmatpush2.msra.mxu0 0.0
    %4273 = vmatprep.subr.mxu0 0.0
    %4274 = vmatpush2.msra.mxu0 0.0
    %4275 = vmatprep.subr.mxu0 0.0
    %4276 = vmatpush2.msra.mxu0 0.0
    %4277 = vmatprep.subr.mxu0 0.0
    %4278 = vmatpush2.msra.mxu0 0.0
    %4279 = vmatprep.mubr.f32.mxu0 0.0
    %v4280 = vand.u32 %v3933, 4294901760
    %v4281 = vsub.f32 %v3933, %v4280
    %v4282 = vand.u32 %v4281, 4294901760
    %4283 = vmatmul.mubr.f32.gmra.mxu0 %v4282
    %v4284 = vpop.f32.mrf.mxu0
    %v4285 = vadd.f32 %v4201, %v4284
    %v4286 = vpop.f32.mrf.mxu0
    %4287 = vmatprep.mubr.f32.mxu0 0.0
    %v4288 = vand.u32 %v3936, 4294901760
    %v4289 = vsub.f32 %v3936, %v4288
    %v4290 = vand.u32 %v4289, 4294901760
    %4291 = vmatmul.mubr.f32.gmra.mxu0 %v4290
    %v4292 = vpop.f32.mrf.mxu0
    %v4293 = vadd.f32 %v4208, %v4292
    %v4294 = vpop.f32.mrf.mxu0
    %4295 = vdwg.mxu0
    %4296 = vmatprep.subr.mxu0 0.0
    %4297 = vmatpush1.msra.mxu0 0.0
    %4298 = vmatprep.subr.mxu0 0.0
    %4299 = vmatpush1.msra.mxu0 0.0
    %4300 = vmatprep.subr.mxu0 0.0
    %4301 = vmatpush1.msra.mxu0 0.0
    %4302 = vmatprep.subr.mxu0 0.0
    %4303 = vmatpush1.msra.mxu0 0.0
    %4304 = vmatprep.subr.mxu0 0.0
    %4305 = vmatpush1.msra.mxu0 0.0
    %4306 = vmatprep.subr.mxu0 0.0
    %4307 = vmatpush1.msra.mxu0 0.0
    %4308 = vmatprep.subr.mxu0 0.0
    %4309 = vmatpush1.msra.mxu0 0.0
    %4310 = vmatprep.subr.mxu0 0.0
    %4311 = vmatpush1.msra.mxu0 0.0
    %4312 = vmatprep.subr.mxu0 0.0
    %4313 = vmatpush1.msra.mxu0 0.0
    %4314 = vmatprep.subr.mxu0 0.0
    %4315 = vmatpush1.msra.mxu0 0.0
    %4316 = vmatprep.subr.mxu0 0.0
    %4317 = vmatpush1.msra.mxu0 0.0
    %4318 = vmatprep.subr.mxu0 0.0
    %4319 = vmatpush1.msra.mxu0 0.0
    %4320 = vmatprep.subr.mxu0 0.0
    %v4321 = vand.u32 %v28, 4294901760
    %v4322 = vsub.f32 %v28, %v4321
    %v4323 = vand.u32 %v4322, 4294901760
    %4324 = vmatpush1.msra.mxu0 %v4323
    %4325 = vmatprep.subr.mxu0 0.0
    %v4326 = vand.u32 %v27, 4294901760
    %v4327 = vsub.f32 %v27, %v4326
    %v4328 = vand.u32 %v4327, 4294901760
    %4329 = vmatpush1.msra.mxu0 %v4328
    %4330 = vmatprep.subr.mxu0 0.0
    %v4331 = vand.u32 %v26, 4294901760
    %v4332 = vsub.f32 %v26, %v4331
    %v4333 = vand.u32 %v4332, 4294901760
    %4334 = vmatpush1.msra.mxu0 %v4333
    %4335 = vmatprep.subr.mxu0 0.0
    %v4336 = vand.u32 %v25, 4294901760
    %v4337 = vsub.f32 %v25, %v4336
    %v4338 = vand.u32 %v4337, 4294901760
    %4339 = vmatpush1.msra.mxu0 %v4338
    %4340 = vmatprep.subr.mxu0 0.0
    %4341 = vmatpush2.msra.mxu0 0.0
    %4342 = vmatprep.subr.mxu0 0.0
    %4343 = vmatpush2.msra.mxu0 0.0
    %4344 = vmatprep.subr.mxu0 0.0
    %4345 = vmatpush2.msra.mxu0 0.0
    %4346 = vmatprep.subr.mxu0 0.0
    %4347 = vmatpush2.msra.mxu0 0.0
    %4348 = vmatprep.subr.mxu0 0.0
    %4349 = vmatpush2.msra.mxu0 0.0
    %4350 = vmatprep.subr.mxu0 0.0
    %4351 = vmatpush2.msra.mxu0 0.0
    %4352 = vmatprep.subr.mxu0 0.0
    %4353 = vmatpush2.msra.mxu0 0.0
    %4354 = vmatprep.subr.mxu0 0.0
    %4355 = vmatpush2.msra.mxu0 0.0
    %4356 = vmatprep.subr.mxu0 0.0
    %4357 = vmatpush2.msra.mxu0 0.0
    %4358 = vmatprep.subr.mxu0 0.0
    %4359 = vmatpush2.msra.mxu0 0.0
    %4360 = vmatprep.subr.mxu0 0.0
    %4361 = vmatpush2.msra.mxu0 0.0
    %4362 = vmatprep.subr.mxu0 0.0
    %4363 = vmatpush2.msra.mxu0 0.0
    %4364 = vmatprep.subr.mxu0 0.0
    %4365 = vmatpush2.msra.mxu0 0.0
    %4366 = vmatprep.subr.mxu0 0.0
    %4367 = vmatpush2.msra.mxu0 0.0
    %4368 = vmatprep.subr.mxu0 0.0
    %4369 = vmatpush2.msra.mxu0 0.0
    %4370 = vmatprep.subr.mxu0 0.0
    %4371 = vmatpush2.msra.mxu0 0.0
    %4372 = vmatprep.mubr.f32.mxu0 0.0
    %v4373 = vand.u32 %v3933, 4294901760
    %4374 = vmatmul.mubr.f32.gmra.mxu0 %v4373
    %v4375 = vpop.f32.mrf.mxu0
    %v4376 = vadd.f32 %v4285, %v4375
    %v4377 = vpop.f32.mrf.mxu0
    %4378 = vmatprep.mubr.f32.mxu0 0.0
    %v4379 = vand.u32 %v3936, 4294901760
    %4380 = vmatmul.mubr.f32.gmra.mxu0 %v4379
    %v4381 = vpop.f32.mrf.mxu0
    %v4382 = vadd.f32 %v4293, %v4381
    %v4383 = vpop.f32.mrf.mxu0
    %4384 = vdwg.mxu0
    %4385 = vmatprep.subr.mxu0 0.0
    %4386 = vmatpush1.msra.mxu0 0.0
    %4387 = vmatprep.subr.mxu0 0.0
    %4388 = vmatpush1.msra.mxu0 0.0
    %4389 = vmatprep.subr.mxu0 0.0
    %4390 = vmatpush1.msra.mxu0 0.0
    %4391 = vmatprep.subr.mxu0 0.0
    %4392 = vmatpush1.msra.mxu0 0.0
    %4393 = vmatprep.subr.mxu0 0.0
    %4394 = vmatpush1.msra.mxu0 0.0
    %4395 = vmatprep.subr.mxu0 0.0
    %4396 = vmatpush1.msra.mxu0 0.0
    %4397 = vmatprep.subr.mxu0 0.0
    %4398 = vmatpush1.msra.mxu0 0.0
    %4399 = vmatprep.subr.mxu0 0.0
    %4400 = vmatpush1.msra.mxu0 0.0
    %4401 = vmatprep.subr.mxu0 0.0
    %4402 = vmatpush1.msra.mxu0 0.0
    %4403 = vmatprep.subr.mxu0 0.0
    %4404 = vmatpush1.msra.mxu0 0.0
    %4405 = vmatprep.subr.mxu0 0.0
    %4406 = vmatpush1.msra.mxu0 0.0
    %4407 = vmatprep.subr.mxu0 0.0
    %4408 = vmatpush1.msra.mxu0 0.0
    %4409 = vmatprep.subr.mxu0 0.0
    %v4410 = vand.u32 %v28, 4294901760
    %4411 = vmatpush1.msra.mxu0 %v4410
    %4412 = vmatprep.subr.mxu0 0.0
    %v4413 = vand.u32 %v27, 4294901760
    %4414 = vmatpush1.msra.mxu0 %v4413
    %4415 = vmatprep.subr.mxu0 0.0
    %v4416 = vand.u32 %v26, 4294901760
    %4417 = vmatpush1.msra.mxu0 %v4416
    %4418 = vmatprep.subr.mxu0 0.0
    %v4419 = vand.u32 %v25, 4294901760
    %4420 = vmatpush1.msra.mxu0 %v4419
    %4421 = vmatprep.subr.mxu0 0.0
    %4422 = vmatpush2.msra.mxu0 0.0
    %4423 = vmatprep.subr.mxu0 0.0
    %4424 = vmatpush2.msra.mxu0 0.0
    %4425 = vmatprep.subr.mxu0 0.0
    %4426 = vmatpush2.msra.mxu0 0.0
    %4427 = vmatprep.subr.mxu0 0.0
    %4428 = vmatpush2.msra.mxu0 0.0
    %4429 = vmatprep.subr.mxu0 0.0
    %4430 = vmatpush2.msra.mxu0 0.0
    %4431 = vmatprep.subr.mxu0 0.0
    %4432 = vmatpush2.msra.mxu0 0.0
    %4433 = vmatprep.subr.mxu0 0.0
    %4434 = vmatpush2.msra.mxu0 0.0
    %4435 = vmatprep.subr.mxu0 0.0
    %4436 = vmatpush2.msra.mxu0 0.0
    %4437 = vmatprep.subr.mxu0 0.0
    %4438 = vmatpush2.msra.mxu0 0.0
    %4439 = vmatprep.subr.mxu0 0.0
    %4440 = vmatpush2.msra.mxu0 0.0
    %4441 = vmatprep.subr.mxu0 0.0
    %4442 = vmatpush2.msra.mxu0 0.0
    %4443 = vmatprep.subr.mxu0 0.0
    %4444 = vmatpush2.msra.mxu0 0.0
    %4445 = vmatprep.subr.mxu0 0.0
    %4446 = vmatpush2.msra.mxu0 0.0
    %4447 = vmatprep.subr.mxu0 0.0
    %4448 = vmatpush2.msra.mxu0 0.0
    %4449 = vmatprep.subr.mxu0 0.0
    %4450 = vmatpush2.msra.mxu0 0.0
    %4451 = vmatprep.subr.mxu0 0.0
    %4452 = vmatpush2.msra.mxu0 0.0
    %4453 = vmatprep.mubr.f32.mxu0 0.0
    %v4454 = vand.u32 %v3933, 4294901760
    %4455 = vmatmul.mubr.f32.gmra.mxu0 %v4454
    %v4456 = vpop.f32.mrf.mxu0
    %v4457 = vadd.f32 %v4376, %v4456
    %v4458 = vpop.f32.mrf.mxu0
    %4459 = vmatprep.mubr.f32.mxu0 0.0
    %v4460 = vand.u32 %v3936, 4294901760
    %4461 = vmatmul.mubr.f32.gmra.mxu0 %v4460
    %v4462 = vpop.f32.mrf.mxu0
    %v4463 = vadd.f32 %v4382, %v4462
    %v4464 = vpop.f32.mrf.mxu0
    %4465 = vdwg.mxu0
    %v4466 = vadd.f32 %v3920, %v4457
    %v4467 = vadd.f32 %v3921, %v4463
    %v4468 = vtanh.pop %v4466
    %v4469 = vtanh.pop %v4467
    %v4470 = vmul.f32 %v3916, %v3363
    %v4471 = vmul.f32 %v3918, %v3364
    %v4472 = vsub.f32 1.0, %v3916
    %v4473 = vsub.f32 1.0, %v3918
    %v4474 = vmul.f32 %v4472, %v4468
    %v4475 = vmul.f32 %v4473, %v4469
    %v4476 = vadd.f32 %v4470, %v4474
    %v4477 = vadd.f32 %v4471, %v4475
    %s4478 = scalar_lea.vmem [#allocation2], 48
    %4479 = vst.msk [vmem:[%s4478] sm:$0xff] %vm33, %v4476
    %4480 = vst.msk [vmem:[%s4478 + $0x8] sm:$0xff] %vm33, %v4477
    %s4481 = scalar_lea.vmem %s0, 64
    %v4482 = vld [vmem:[%s4481] sm:$0xff]
    %v4483 = vld [vmem:[%s4481 + $0x8] sm:$0xff]
    %v4485 = vsel %vm33, %v4476, 0
    %v4488 = vsel %vm33, %v4477, 0
    %4490 = vmatprep.subr.mxu0 0.0
    %4491 = vmatpush1.msra.mxu0 0.0
    %4492 = vmatprep.subr.mxu0 0.0
    %4493 = vmatpush1.msra.mxu0 0.0
    %4494 = vmatprep.subr.mxu0 0.0
    %4495 = vmatpush1.msra.mxu0 0.0
    %4496 = vmatprep.subr.mxu0 0.0
    %4497 = vmatpush1.msra.mxu0 0.0
    %4498 = vmatprep.subr.mxu0 0.0
    %4499 = vmatpush1.msra.mxu0 0.0
    %4500 = vmatprep.subr.mxu0 0.0
    %4501 = vmatpush1.msra.mxu0 0.0
    %4502 = vmatprep.subr.mxu0 0.0
    %4503 = vmatpush1.msra.mxu0 0.0
    %4504 = vmatprep.subr.mxu0 0.0
    %4505 = vmatpush1.msra.mxu0 0.0
    %4506 = vmatprep.subr.mxu0 0.0
    %4507 = vmatpush1.msra.mxu0 0.0
    %4508 = vmatprep.subr.mxu0 0.0
    %4509 = vmatpush1.msra.mxu0 0.0
    %4510 = vmatprep.subr.mxu0 0.0
    %4511 = vmatpush1.msra.mxu0 0.0
    %4512 = vmatprep.subr.mxu0 0.0
    %4513 = vmatpush1.msra.mxu0 0.0
    %4514 = vmatprep.subr.mxu0 0.0
    %v4515 = vand.u32 %v24, 4294901760
    %4516 = vmatpush1.msra.mxu0 %v4515
    %4517 = vmatprep.subr.mxu0 0.0
    %v4518 = vand.u32 %v23, 4294901760
    %4519 = vmatpush1.msra.mxu0 %v4518
    %4520 = vmatprep.subr.mxu0 0.0
    %v4521 = vand.u32 %v22, 4294901760
    %4522 = vmatpush1.msra.mxu0 %v4521
    %4523 = vmatprep.subr.mxu0 0.0
    %v4524 = vand.u32 %v21, 4294901760
    %4525 = vmatpush1.msra.mxu0 %v4524
    %4526 = vmatprep.subr.mxu0 0.0
    %4527 = vmatpush2.msra.mxu0 0.0
    %4528 = vmatprep.subr.mxu0 0.0
    %4529 = vmatpush2.msra.mxu0 0.0
    %4530 = vmatprep.subr.mxu0 0.0
    %4531 = vmatpush2.msra.mxu0 0.0
    %4532 = vmatprep.subr.mxu0 0.0
    %4533 = vmatpush2.msra.mxu0 0.0
    %4534 = vmatprep.subr.mxu0 0.0
    %4535 = vmatpush2.msra.mxu0 0.0
    %4536 = vmatprep.subr.mxu0 0.0
    %4537 = vmatpush2.msra.mxu0 0.0
    %4538 = vmatprep.subr.mxu0 0.0
    %4539 = vmatpush2.msra.mxu0 0.0
    %4540 = vmatprep.subr.mxu0 0.0
    %4541 = vmatpush2.msra.mxu0 0.0
    %4542 = vmatprep.subr.mxu0 0.0
    %4543 = vmatpush2.msra.mxu0 0.0
    %4544 = vmatprep.subr.mxu0 0.0
    %4545 = vmatpush2.msra.mxu0 0.0
    %4546 = vmatprep.subr.mxu0 0.0
    %4547 = vmatpush2.msra.mxu0 0.0
    %4548 = vmatprep.subr.mxu0 0.0
    %4549 = vmatpush2.msra.mxu0 0.0
    %4550 = vmatprep.subr.mxu0 0.0
    %4551 = vmatpush2.msra.mxu0 0.0
    %4552 = vmatprep.subr.mxu0 0.0
    %4553 = vmatpush2.msra.mxu0 0.0
    %4554 = vmatprep.subr.mxu0 0.0
    %4555 = vmatpush2.msra.mxu0 0.0
    %4556 = vmatprep.subr.mxu0 0.0
    %4557 = vmatpush2.msra.mxu0 0.0
    %4558 = vmatprep.mubr.f32.mxu0 0.0
    %v4559 = vand.u32 %v4485, 4294901760
    %v4560 = vsub.f32 %v4485, %v4559
    %v4561 = vand.u32 %v4560, 4294901760
    %v4562 = vsub.f32 %v4560, %v4561
    %v4563 = vand.u32 %v4562, 4294901760
    %4564 = vmatmul.mubr.f32.gmra.mxu0 %v4563
    %v4565 = vpop.f32.mrf.mxu0
    %v4566 = vadd.f32 0.0, %v4565
    %v4567 = vpop.f32.mrf.mxu0
    %4568 = vmatprep.mubr.f32.mxu0 0.0
    %v4569 = vand.u32 %v4488, 4294901760
    %v4570 = vsub.f32 %v4488, %v4569
    %v4571 = vand.u32 %v4570, 4294901760
    %v4572 = vsub.f32 %v4570, %v4571
    %v4573 = vand.u32 %v4572, 4294901760
    %4574 = vmatmul.mubr.f32.gmra.mxu0 %v4573
    %v4575 = vpop.f32.mrf.mxu0
    %v4576 = vadd.f32 0.0, %v4575
    %v4577 = vpop.f32.mrf.mxu0
    %4578 = vdwg.mxu0
    %4579 = vmatprep.subr.mxu0 0.0
    %4580 = vmatpush1.msra.mxu0 0.0
    %4581 = vmatprep.subr.mxu0 0.0
    %4582 = vmatpush1.msra.mxu0 0.0
    %4583 = vmatprep.subr.mxu0 0.0
    %4584 = vmatpush1.msra.mxu0 0.0
    %4585 = vmatprep.subr.mxu0 0.0
    %4586 = vmatpush1.msra.mxu0 0.0
    %4587 = vmatprep.subr.mxu0 0.0
    %4588 = vmatpush1.msra.mxu0 0.0
    %4589 = vmatprep.subr.mxu0 0.0
    %4590 = vmatpush1.msra.mxu0 0.0
    %4591 = vmatprep.subr.mxu0 0.0
    %4592 = vmatpush1.msra.mxu0 0.0
    %4593 = vmatprep.subr.mxu0 0.0
    %4594 = vmatpush1.msra.mxu0 0.0
    %4595 = vmatprep.subr.mxu0 0.0
    %4596 = vmatpush1.msra.mxu0 0.0
    %4597 = vmatprep.subr.mxu0 0.0
    %4598 = vmatpush1.msra.mxu0 0.0
    %4599 = vmatprep.subr.mxu0 0.0
    %4600 = vmatpush1.msra.mxu0 0.0
    %4601 = vmatprep.subr.mxu0 0.0
    %4602 = vmatpush1.msra.mxu0 0.0
    %4603 = vmatprep.subr.mxu0 0.0
    %v4604 = vand.u32 %v24, 4294901760
    %v4605 = vsub.f32 %v24, %v4604
    %v4606 = vand.u32 %v4605, 4294901760
    %v4607 = vsub.f32 %v4605, %v4606
    %v4608 = vand.u32 %v4607, 4294901760
    %4609 = vmatpush1.msra.mxu0 %v4608
    %4610 = vmatprep.subr.mxu0 0.0
    %v4611 = vand.u32 %v23, 4294901760
    %v4612 = vsub.f32 %v23, %v4611
    %v4613 = vand.u32 %v4612, 4294901760
    %v4614 = vsub.f32 %v4612, %v4613
    %v4615 = vand.u32 %v4614, 4294901760
    %4616 = vmatpush1.msra.mxu0 %v4615
    %4617 = vmatprep.subr.mxu0 0.0
    %v4618 = vand.u32 %v22, 4294901760
    %v4619 = vsub.f32 %v22, %v4618
    %v4620 = vand.u32 %v4619, 4294901760
    %v4621 = vsub.f32 %v4619, %v4620
    %v4622 = vand.u32 %v4621, 4294901760
    %4623 = vmatpush1.msra.mxu0 %v4622
    %4624 = vmatprep.subr.mxu0 0.0
    %v4625 = vand.u32 %v21, 4294901760
    %v4626 = vsub.f32 %v21, %v4625
    %v4627 = vand.u32 %v4626, 4294901760
    %v4628 = vsub.f32 %v4626, %v4627
    %v4629 = vand.u32 %v4628, 4294901760
    %4630 = vmatpush1.msra.mxu0 %v4629
    %4631 = vmatprep.subr.mxu0 0.0
    %4632 = vmatpush2.msra.mxu0 0.0
    %4633 = vmatprep.subr.mxu0 0.0
    %4634 = vmatpush2.msra.mxu0 0.0
    %4635 = vmatprep.subr.mxu0 0.0
    %4636 = vmatpush2.msra.mxu0 0.0
    %4637 = vmatprep.subr.mxu0 0.0
    %4638 = vmatpush2.msra.mxu0 0.0
    %4639 = vmatprep.subr.mxu0 0.0
    %4640 = vmatpush2.msra.mxu0 0.0
    %4641 = vmatprep.subr.mxu0 0.0
    %4642 = vmatpush2.msra.mxu0 0.0
    %4643 = vmatprep.subr.mxu0 0.0
    %4644 = vmatpush2.msra.mxu0 0.0
    %4645 = vmatprep.subr.mxu0 0.0
    %4646 = vmatpush2.msra.mxu0 0.0
    %4647 = vmatprep.subr.mxu0 0.0
    %4648 = vmatpush2.msra.mxu0 0.0
    %4649 = vmatprep.subr.mxu0 0.0
    %4650 = vmatpush2.msra.mxu0 0.0
    %4651 = vmatprep.subr.mxu0 0.0
    %4652 = vmatpush2.msra.mxu0 0.0
    %4653 = vmatprep.subr.mxu0 0.0
    %4654 = vmatpush2.msra.mxu0 0.0
    %4655 = vmatprep.subr.mxu0 0.0
    %4656 = vmatpush2.msra.mxu0 0.0
    %4657 = vmatprep.subr.mxu0 0.0
    %4658 = vmatpush2.msra.mxu0 0.0
    %4659 = vmatprep.subr.mxu0 0.0
    %4660 = vmatpush2.msra.mxu0 0.0
    %4661 = vmatprep.subr.mxu0 0.0
    %4662 = vmatpush2.msra.mxu0 0.0
    %4663 = vmatprep.mubr.f32.mxu0 0.0
    %v4664 = vand.u32 %v4485, 4294901760
    %4665 = vmatmul.mubr.f32.gmra.mxu0 %v4664
    %v4666 = vpop.f32.mrf.mxu0
    %v4667 = vadd.f32 %v4566, %v4666
    %v4668 = vpop.f32.mrf.mxu0
    %4669 = vmatprep.mubr.f32.mxu0 0.0
    %v4670 = vand.u32 %v4488, 4294901760
    %4671 = vmatmul.mubr.f32.gmra.mxu0 %v4670
    %v4672 = vpop.f32.mrf.mxu0
    %v4673 = vadd.f32 %v4576, %v4672
    %v4674 = vpop.f32.mrf.mxu0
    %4675 = vdwg.mxu0
    %4676 = vmatprep.subr.mxu0 0.0
    %4677 = vmatpush1.msra.mxu0 0.0
    %4678 = vmatprep.subr.mxu0 0.0
    %4679 = vmatpush1.msra.mxu0 0.0
    %4680 = vmatprep.subr.mxu0 0.0
    %4681 = vmatpush1.msra.mxu0 0.0
    %4682 = vmatprep.subr.mxu0 0.0
    %4683 = vmatpush1.msra.mxu0 0.0
    %4684 = vmatprep.subr.mxu0 0.0
    %4685 = vmatpush1.msra.mxu0 0.0
    %4686 = vmatprep.subr.mxu0 0.0
    %4687 = vmatpush1.msra.mxu0 0.0
    %4688 = vmatprep.subr.mxu0 0.0
    %4689 = vmatpush1.msra.mxu0 0.0
    %4690 = vmatprep.subr.mxu0 0.0
    %4691 = vmatpush1.msra.mxu0 0.0
    %4692 = vmatprep.subr.mxu0 0.0
    %4693 = vmatpush1.msra.mxu0 0.0
    %4694 = vmatprep.subr.mxu0 0.0
    %4695 = vmatpush1.msra.mxu0 0.0
    %4696 = vmatprep.subr.mxu0 0.0
    %4697 = vmatpush1.msra.mxu0 0.0
    %4698 = vmatprep.subr.mxu0 0.0
    %4699 = vmatpush1.msra.mxu0 0.0
    %4700 = vmatprep.subr.mxu0 0.0
    %v4701 = vand.u32 %v24, 4294901760
    %v4702 = vsub.f32 %v24, %v4701
    %4703 = vmatpush1.msra.mxu0 %v4702
    %4704 = vmatprep.subr.mxu0 0.0
    %v4705 = vand.u32 %v23, 4294901760
    %v4706 = vsub.f32 %v23, %v4705
    %4707 = vmatpush1.msra.mxu0 %v4706
    %4708 = vmatprep.subr.mxu0 0.0
    %v4709 = vand.u32 %v22, 4294901760
    %v4710 = vsub.f32 %v22, %v4709
    %4711 = vmatpush1.msra.mxu0 %v4710
    %4712 = vmatprep.subr.mxu0 0.0
    %v4713 = vand.u32 %v21, 4294901760
    %v4714 = vsub.f32 %v21, %v4713
    %4715 = vmatpush1.msra.mxu0 %v4714
    %4716 = vmatprep.subr.mxu0 0.0
    %4717 = vmatpush2.msra.mxu0 0.0
    %4718 = vmatprep.subr.mxu0 0.0
    %4719 = vmatpush2.msra.mxu0 0.0
    %4720 = vmatprep.subr.mxu0 0.0
    %4721 = vmatpush2.msra.mxu0 0.0
    %4722 = vmatprep.subr.mxu0 0.0
    %4723 = vmatpush2.msra.mxu0 0.0
    %4724 = vmatprep.subr.mxu0 0.0
    %4725 = vmatpush2.msra.mxu0 0.0
    %4726 = vmatprep.subr.mxu0 0.0
    %4727 = vmatpush2.msra.mxu0 0.0
    %4728 = vmatprep.subr.mxu0 0.0
    %4729 = vmatpush2.msra.mxu0 0.0
    %4730 = vmatprep.subr.mxu0 0.0
    %4731 = vmatpush2.msra.mxu0 0.0
    %4732 = vmatprep.subr.mxu0 0.0
    %4733 = vmatpush2.msra.mxu0 0.0
    %4734 = vmatprep.subr.mxu0 0.0
    %4735 = vmatpush2.msra.mxu0 0.0
    %4736 = vmatprep.subr.mxu0 0.0
    %4737 = vmatpush2.msra.mxu0 0.0
    %4738 = vmatprep.subr.mxu0 0.0
    %4739 = vmatpush2.msra.mxu0 0.0
    %4740 = vmatprep.subr.mxu0 0.0
    %4741 = vmatpush2.msra.mxu0 0.0
    %4742 = vmatprep.subr.mxu0 0.0
    %4743 = vmatpush2.msra.mxu0 0.0
    %4744 = vmatprep.subr.mxu0 0.0
    %4745 = vmatpush2.msra.mxu0 0.0
    %4746 = vmatprep.subr.mxu0 0.0
    %4747 = vmatpush2.msra.mxu0 0.0
    %4748 = vmatprep.mubr.f32.mxu0 0.0
    %v4749 = vand.u32 %v4485, 4294901760
    %v4750 = vsub.f32 %v4485, %v4749
    %4751 = vmatmul.mubr.f32.gmra.mxu0 %v4750
    %v4752 = vpop.f32.mrf.mxu0
    %v4753 = vadd.f32 %v4667, %v4752
    %v4754 = vpop.f32.mrf.mxu0
    %4755 = vmatprep.mubr.f32.mxu0 0.0
    %v4756 = vand.u32 %v4488, 4294901760
    %v4757 = vsub.f32 %v4488, %v4756
    %4758 = vmatmul.mubr.f32.gmra.mxu0 %v4757
    %v4759 = vpop.f32.mrf.mxu0
    %v4760 = vadd.f32 %v4673, %v4759
    %v4761 = vpop.f32.mrf.mxu0
    %4762 = vdwg.mxu0
    %4763 = vmatprep.subr.mxu0 0.0
    %4764 = vmatpush1.msra.mxu0 0.0
    %4765 = vmatprep.subr.mxu0 0.0
    %4766 = vmatpush1.msra.mxu0 0.0
    %4767 = vmatprep.subr.mxu0 0.0
    %4768 = vmatpush1.msra.mxu0 0.0
    %4769 = vmatprep.subr.mxu0 0.0
    %4770 = vmatpush1.msra.mxu0 0.0
    %4771 = vmatprep.subr.mxu0 0.0
    %4772 = vmatpush1.msra.mxu0 0.0
    %4773 = vmatprep.subr.mxu0 0.0
    %4774 = vmatpush1.msra.mxu0 0.0
    %4775 = vmatprep.subr.mxu0 0.0
    %4776 = vmatpush1.msra.mxu0 0.0
    %4777 = vmatprep.subr.mxu0 0.0
    %4778 = vmatpush1.msra.mxu0 0.0
    %4779 = vmatprep.subr.mxu0 0.0
    %4780 = vmatpush1.msra.mxu0 0.0
    %4781 = vmatprep.subr.mxu0 0.0
    %4782 = vmatpush1.msra.mxu0 0.0
    %4783 = vmatprep.subr.mxu0 0.0
    %4784 = vmatpush1.msra.mxu0 0.0
    %4785 = vmatprep.subr.mxu0 0.0
    %4786 = vmatpush1.msra.mxu0 0.0
    %4787 = vmatprep.subr.mxu0 0.0
    %v4788 = vand.u32 %v24, 4294901760
    %4789 = vmatpush1.msra.mxu0 %v4788
    %4790 = vmatprep.subr.mxu0 0.0
    %v4791 = vand.u32 %v23, 4294901760
    %4792 = vmatpush1.msra.mxu0 %v4791
    %4793 = vmatprep.subr.mxu0 0.0
    %v4794 = vand.u32 %v22, 4294901760
    %4795 = vmatpush1.msra.mxu0 %v4794
    %4796 = vmatprep.subr.mxu0 0.0
    %v4797 = vand.u32 %v21, 4294901760
    %4798 = vmatpush1.msra.mxu0 %v4797
    %4799 = vmatprep.subr.mxu0 0.0
    %4800 = vmatpush2.msra.mxu0 0.0
    %4801 = vmatprep.subr.mxu0 0.0
    %4802 = vmatpush2.msra.mxu0 0.0
    %4803 = vmatprep.subr.mxu0 0.0
    %4804 = vmatpush2.msra.mxu0 0.0
    %4805 = vmatprep.subr.mxu0 0.0
    %4806 = vmatpush2.msra.mxu0 0.0
    %4807 = vmatprep.subr.mxu0 0.0
    %4808 = vmatpush2.msra.mxu0 0.0
    %4809 = vmatprep.subr.mxu0 0.0
    %4810 = vmatpush2.msra.mxu0 0.0
    %4811 = vmatprep.subr.mxu0 0.0
    %4812 = vmatpush2.msra.mxu0 0.0
    %4813 = vmatprep.subr.mxu0 0.0
    %4814 = vmatpush2.msra.mxu0 0.0
    %4815 = vmatprep.subr.mxu0 0.0
    %4816 = vmatpush2.msra.mxu0 0.0
    %4817 = vmatprep.subr.mxu0 0.0
    %4818 = vmatpush2.msra.mxu0 0.0
    %4819 = vmatprep.subr.mxu0 0.0
    %4820 = vmatpush2.msra.mxu0 0.0
    %4821 = vmatprep.subr.mxu0 0.0
    %4822 = vmatpush2.msra.mxu0 0.0
    %4823 = vmatprep.subr.mxu0 0.0
    %4824 = vmatpush2.msra.mxu0 0.0
    %4825 = vmatprep.subr.mxu0 0.0
    %4826 = vmatpush2.msra.mxu0 0.0
    %4827 = vmatprep.subr.mxu0 0.0
    %4828 = vmatpush2.msra.mxu0 0.0
    %4829 = vmatprep.subr.mxu0 0.0
    %4830 = vmatpush2.msra.mxu0 0.0
    %4831 = vmatprep.mubr.f32.mxu0 0.0
    %v4832 = vand.u32 %v4485, 4294901760
    %v4833 = vsub.f32 %v4485, %v4832
    %v4834 = vand.u32 %v4833, 4294901760
    %4835 = vmatmul.mubr.f32.gmra.mxu0 %v4834
    %v4836 = vpop.f32.mrf.mxu0
    %v4837 = vadd.f32 %v4753, %v4836
    %v4838 = vpop.f32.mrf.mxu0
    %4839 = vmatprep.mubr.f32.mxu0 0.0
    %v4840 = vand.u32 %v4488, 4294901760
    %v4841 = vsub.f32 %v4488, %v4840
    %v4842 = vand.u32 %v4841, 4294901760
    %4843 = vmatmul.mubr.f32.gmra.mxu0 %v4842
    %v4844 = vpop.f32.mrf.mxu0
    %v4845 = vadd.f32 %v4760, %v4844
    %v4846 = vpop.f32.mrf.mxu0
    %4847 = vdwg.mxu0
    %4848 = vmatprep.subr.mxu0 0.0
    %4849 = vmatpush1.msra.mxu0 0.0
    %4850 = vmatprep.subr.mxu0 0.0
    %4851 = vmatpush1.msra.mxu0 0.0
    %4852 = vmatprep.subr.mxu0 0.0
    %4853 = vmatpush1.msra.mxu0 0.0
    %4854 = vmatprep.subr.mxu0 0.0
    %4855 = vmatpush1.msra.mxu0 0.0
    %4856 = vmatprep.subr.mxu0 0.0
    %4857 = vmatpush1.msra.mxu0 0.0
    %4858 = vmatprep.subr.mxu0 0.0
    %4859 = vmatpush1.msra.mxu0 0.0
    %4860 = vmatprep.subr.mxu0 0.0
    %4861 = vmatpush1.msra.mxu0 0.0
    %4862 = vmatprep.subr.mxu0 0.0
    %4863 = vmatpush1.msra.mxu0 0.0
    %4864 = vmatprep.subr.mxu0 0.0
    %4865 = vmatpush1.msra.mxu0 0.0
    %4866 = vmatprep.subr.mxu0 0.0
    %4867 = vmatpush1.msra.mxu0 0.0
    %4868 = vmatprep.subr.mxu0 0.0
    %4869 = vmatpush1.msra.mxu0 0.0
    %4870 = vmatprep.subr.mxu0 0.0
    %4871 = vmatpush1.msra.mxu0 0.0
    %4872 = vmatprep.subr.mxu0 0.0
    %v4873 = vand.u32 %v24, 4294901760
    %v4874 = vsub.f32 %v24, %v4873
    %v4875 = vand.u32 %v4874, 4294901760
    %4876 = vmatpush1.msra.mxu0 %v4875
    %4877 = vmatprep.subr.mxu0 0.0
    %v4878 = vand.u32 %v23, 4294901760
    %v4879 = vsub.f32 %v23, %v4878
    %v4880 = vand.u32 %v4879, 4294901760
    %4881 = vmatpush1.msra.mxu0 %v4880
    %4882 = vmatprep.subr.mxu0 0.0
    %v4883 = vand.u32 %v22, 4294901760
    %v4884 = vsub.f32 %v22, %v4883
    %v4885 = vand.u32 %v4884, 4294901760
    %4886 = vmatpush1.msra.mxu0 %v4885
    %4887 = vmatprep.subr.mxu0 0.0
    %v4888 = vand.u32 %v21, 4294901760
    %v4889 = vsub.f32 %v21, %v4888
    %v4890 = vand.u32 %v4889, 4294901760
    %4891 = vmatpush1.msra.mxu0 %v4890
    %4892 = vmatprep.subr.mxu0 0.0
    %4893 = vmatpush2.msra.mxu0 0.0
    %4894 = vmatprep.subr.mxu0 0.0
    %4895 = vmatpush2.msra.mxu0 0.0
    %4896 = vmatprep.subr.mxu0 0.0
    %4897 = vmatpush2.msra.mxu0 0.0
    %4898 = vmatprep.subr.mxu0 0.0
    %4899 = vmatpush2.msra.mxu0 0.0
    %4900 = vmatprep.subr.mxu0 0.0
    %4901 = vmatpush2.msra.mxu0 0.0
    %4902 = vmatprep.subr.mxu0 0.0
    %4903 = vmatpush2.msra.mxu0 0.0
    %4904 = vmatprep.subr.mxu0 0.0
    %4905 = vmatpush2.msra.mxu0 0.0
    %4906 = vmatprep.subr.mxu0 0.0
    %4907 = vmatpush2.msra.mxu0 0.0
    %4908 = vmatprep.subr.mxu0 0.0
    %4909 = vmatpush2.msra.mxu0 0.0
    %4910 = vmatprep.subr.mxu0 0.0
    %4911 = vmatpush2.msra.mxu0 0.0
    %4912 = vmatprep.subr.mxu0 0.0
    %4913 = vmatpush2.msra.mxu0 0.0
    %4914 = vmatprep.subr.mxu0 0.0
    %4915 = vmatpush2.msra.mxu0 0.0
    %4916 = vmatprep.subr.mxu0 0.0
    %4917 = vmatpush2.msra.mxu0 0.0
    %4918 = vmatprep.subr.mxu0 0.0
    %4919 = vmatpush2.msra.mxu0 0.0
    %4920 = vmatprep.subr.mxu0 0.0
    %4921 = vmatpush2.msra.mxu0 0.0
    %4922 = vmatprep.subr.mxu0 0.0
    %4923 = vmatpush2.msra.mxu0 0.0
    %4924 = vmatprep.mubr.f32.mxu0 0.0
    %v4925 = vand.u32 %v4485, 4294901760
    %4926 = vmatmul.mubr.f32.gmra.mxu0 %v4925
    %v4927 = vpop.f32.mrf.mxu0
    %v4928 = vadd.f32 %v4837, %v4927
    %v4929 = vpop.f32.mrf.mxu0
    %4930 = vmatprep.mubr.f32.mxu0 0.0
    %v4931 = vand.u32 %v4488, 4294901760
    %4932 = vmatmul.mubr.f32.gmra.mxu0 %v4931
    %v4933 = vpop.f32.mrf.mxu0
    %v4934 = vadd.f32 %v4845, %v4933
    %v4935 = vpop.f32.mrf.mxu0
    %4936 = vdwg.mxu0
    %4937 = vmatprep.subr.mxu0 0.0
    %4938 = vmatpush1.msra.mxu0 0.0
    %4939 = vmatprep.subr.mxu0 0.0
    %4940 = vmatpush1.msra.mxu0 0.0
    %4941 = vmatprep.subr.mxu0 0.0
    %4942 = vmatpush1.msra.mxu0 0.0
    %4943 = vmatprep.subr.mxu0 0.0
    %4944 = vmatpush1.msra.mxu0 0.0
    %4945 = vmatprep.subr.mxu0 0.0
    %4946 = vmatpush1.msra.mxu0 0.0
    %4947 = vmatprep.subr.mxu0 0.0
    %4948 = vmatpush1.msra.mxu0 0.0
    %4949 = vmatprep.subr.mxu0 0.0
    %4950 = vmatpush1.msra.mxu0 0.0
    %4951 = vmatprep.subr.mxu0 0.0
    %4952 = vmatpush1.msra.mxu0 0.0
    %4953 = vmatprep.subr.mxu0 0.0
    %4954 = vmatpush1.msra.mxu0 0.0
    %4955 = vmatprep.subr.mxu0 0.0
    %4956 = vmatpush1.msra.mxu0 0.0
    %4957 = vmatprep.subr.mxu0 0.0
    %4958 = vmatpush1.msra.mxu0 0.0
    %4959 = vmatprep.subr.mxu0 0.0
    %4960 = vmatpush1.msra.mxu0 0.0
    %4961 = vmatprep.subr.mxu0 0.0
    %v4962 = vand.u32 %v24, 4294901760
    %4963 = vmatpush1.msra.mxu0 %v4962
    %4964 = vmatprep.subr.mxu0 0.0
    %v4965 = vand.u32 %v23, 4294901760
    %4966 = vmatpush1.msra.mxu0 %v4965
    %4967 = vmatprep.subr.mxu0 0.0
    %v4968 = vand.u32 %v22, 4294901760
    %4969 = vmatpush1.msra.mxu0 %v4968
    %4970 = vmatprep.subr.mxu0 0.0
    %v4971 = vand.u32 %v21, 4294901760
    %4972 = vmatpush1.msra.mxu0 %v4971
    %4973 = vmatprep.subr.mxu0 0.0
    %4974 = vmatpush2.msra.mxu0 0.0
    %4975 = vmatprep.subr.mxu0 0.0
    %4976 = vmatpush2.msra.mxu0 0.0
    %4977 = vmatprep.subr.mxu0 0.0
    %4978 = vmatpush2.msra.mxu0 0.0
    %4979 = vmatprep.subr.mxu0 0.0
    %4980 = vmatpush2.msra.mxu0 0.0
    %4981 = vmatprep.subr.mxu0 0.0
    %4982 = vmatpush2.msra.mxu0 0.0
    %4983 = vmatprep.subr.mxu0 0.0
    %4984 = vmatpush2.msra.mxu0 0.0
    %4985 = vmatprep.subr.mxu0 0.0
    %4986 = vmatpush2.msra.mxu0 0.0
    %4987 = vmatprep.subr.mxu0 0.0
    %4988 = vmatpush2.msra.mxu0 0.0
    %4989 = vmatprep.subr.mxu0 0.0
    %4990 = vmatpush2.msra.mxu0 0.0
    %4991 = vmatprep.subr.mxu0 0.0
    %4992 = vmatpush2.msra.mxu0 0.0
    %4993 = vmatprep.subr.mxu0 0.0
    %4994 = vmatpush2.msra.mxu0 0.0
    %4995 = vmatprep.subr.mxu0 0.0
    %4996 = vmatpush2.msra.mxu0 0.0
    %4997 = vmatprep.subr.mxu0 0.0
    %4998 = vmatpush2.msra.mxu0 0.0
    %4999 = vmatprep.subr.mxu0 0.0
    %5000 = vmatpush2.msra.mxu0 0.0
    %5001 = vmatprep.subr.mxu0 0.0
    %5002 = vmatpush2.msra.mxu0 0.0
    %5003 = vmatprep.subr.mxu0 0.0
    %5004 = vmatpush2.msra.mxu0 0.0
    %5005 = vmatprep.mubr.f32.mxu0 0.0
    %v5006 = vand.u32 %v4485, 4294901760
    %5007 = vmatmul.mubr.f32.gmra.mxu0 %v5006
    %v5008 = vpop.f32.mrf.mxu0
    %v5009 = vadd.f32 %v4928, %v5008
    %v5010 = vpop.f32.mrf.mxu0
    %5011 = vmatprep.mubr.f32.mxu0 0.0
    %v5012 = vand.u32 %v4488, 4294901760
    %5013 = vmatmul.mubr.f32.gmra.mxu0 %v5012
    %v5014 = vpop.f32.mrf.mxu0
    %v5015 = vadd.f32 %v4934, %v5014
    %v5016 = vpop.f32.mrf.mxu0
    %5017 = vdwg.mxu0
    %v5018 = vadd.f32 %v4482, %v5009
    %v5019 = vadd.f32 %v4483, %v5015
    %v5020 = vxor.u32 %v5018, 2147483648
    %v5021 = vxor.u32 %v5019, 2147483648
    %v5022 = vmul.f32 %v5020, 1.442695
    %v5023 = vpow.pop %v5022
    %v5024 = vmul.f32 %v5021, 1.442695
    %v5025 = vpow.pop %v5024
    %v5026 = vadd.f32 %v5023, 1.0
    %v5027 = vadd.f32 %v5025, 1.0
    %v5028 = vrcp.pop %v5026
    %v5029 = vmul.f32 1.0, %v5028
    %v5030 = vrcp.pop %v5027
    %v5031 = vmul.f32 1.0, %v5030
    %s5032 = scalar_lea.vmem %s1, 64
    %v5033 = vld [vmem:[%s5032] sm:$0xff]
    %v5034 = vld [vmem:[%s5032 + $0x8] sm:$0xff]
    %5037 = vrot.lane.b32.xlu0 %v5029, 96
    %v5038 = vpop.permute.xlu0 %5037
    %5039 = vrot.lane.b32.xlu0 %v5031, 96
    %v5040 = vpop.permute.xlu0 %5039
    %v5043 = vmul.f32 %v4476, %v5038
    %v5044 = vmul.f32 %v4477, %v5040
    %v5046 = vsel %vm33, %v5043, 0
    %v5049 = vsel %vm33, %v5044, 0
    %5051 = vmatprep.subr.mxu0 0.0
    %5052 = vmatpush1.msra.mxu0 0.0
    %5053 = vmatprep.subr.mxu0 0.0
    %5054 = vmatpush1.msra.mxu0 0.0
    %5055 = vmatprep.subr.mxu0 0.0
    %5056 = vmatpush1.msra.mxu0 0.0
    %5057 = vmatprep.subr.mxu0 0.0
    %5058 = vmatpush1.msra.mxu0 0.0
    %5059 = vmatprep.subr.mxu0 0.0
    %5060 = vmatpush1.msra.mxu0 0.0
    %5061 = vmatprep.subr.mxu0 0.0
    %5062 = vmatpush1.msra.mxu0 0.0
    %5063 = vmatprep.subr.mxu0 0.0
    %5064 = vmatpush1.msra.mxu0 0.0
    %5065 = vmatprep.subr.mxu0 0.0
    %5066 = vmatpush1.msra.mxu0 0.0
    %5067 = vmatprep.subr.mxu0 0.0
    %5068 = vmatpush1.msra.mxu0 0.0
    %5069 = vmatprep.subr.mxu0 0.0
    %5070 = vmatpush1.msra.mxu0 0.0
    %5071 = vmatprep.subr.mxu0 0.0
    %5072 = vmatpush1.msra.mxu0 0.0
    %5073 = vmatprep.subr.mxu0 0.0
    %5074 = vmatpush1.msra.mxu0 0.0
    %5075 = vmatprep.subr.mxu0 0.0
    %v5076 = vand.u32 %v28, 4294901760
    %5077 = vmatpush1.msra.mxu0 %v5076
    %5078 = vmatprep.subr.mxu0 0.0
    %v5079 = vand.u32 %v27, 4294901760
    %5080 = vmatpush1.msra.mxu0 %v5079
    %5081 = vmatprep.subr.mxu0 0.0
    %v5082 = vand.u32 %v26, 4294901760
    %5083 = vmatpush1.msra.mxu0 %v5082
    %5084 = vmatprep.subr.mxu0 0.0
    %v5085 = vand.u32 %v25, 4294901760
    %5086 = vmatpush1.msra.mxu0 %v5085
    %5087 = vmatprep.subr.mxu0 0.0
    %5088 = vmatpush2.msra.mxu0 0.0
    %5089 = vmatprep.subr.mxu0 0.0
    %5090 = vmatpush2.msra.mxu0 0.0
    %5091 = vmatprep.subr.mxu0 0.0
    %5092 = vmatpush2.msra.mxu0 0.0
    %5093 = vmatprep.subr.mxu0 0.0
    %5094 = vmatpush2.msra.mxu0 0.0
    %5095 = vmatprep.subr.mxu0 0.0
    %5096 = vmatpush2.msra.mxu0 0.0
    %5097 = vmatprep.subr.mxu0 0.0
    %5098 = vmatpush2.msra.mxu0 0.0
    %5099 = vmatprep.subr.mxu0 0.0
    %5100 = vmatpush2.msra.mxu0 0.0
    %5101 = vmatprep.subr.mxu0 0.0
    %5102 = vmatpush2.msra.mxu0 0.0
    %5103 = vmatprep.subr.mxu0 0.0
    %5104 = vmatpush2.msra.mxu0 0.0
    %5105 = vmatprep.subr.mxu0 0.0
    %5106 = vmatpush2.msra.mxu0 0.0
    %5107 = vmatprep.subr.mxu0 0.0
    %5108 = vmatpush2.msra.mxu0 0.0
    %5109 = vmatprep.subr.mxu0 0.0
    %5110 = vmatpush2.msra.mxu0 0.0
    %5111 = vmatprep.subr.mxu0 0.0
    %5112 = vmatpush2.msra.mxu0 0.0
    %5113 = vmatprep.subr.mxu0 0.0
    %5114 = vmatpush2.msra.mxu0 0.0
    %5115 = vmatprep.subr.mxu0 0.0
    %5116 = vmatpush2.msra.mxu0 0.0
    %5117 = vmatprep.subr.mxu0 0.0
    %5118 = vmatpush2.msra.mxu0 0.0
    %5119 = vmatprep.mubr.f32.mxu0 0.0
    %v5120 = vand.u32 %v5046, 4294901760
    %v5121 = vsub.f32 %v5046, %v5120
    %v5122 = vand.u32 %v5121, 4294901760
    %v5123 = vsub.f32 %v5121, %v5122
    %v5124 = vand.u32 %v5123, 4294901760
    %5125 = vmatmul.mubr.f32.gmra.mxu0 %v5124
    %v5126 = vpop.f32.mrf.mxu0
    %v5127 = vadd.f32 0.0, %v5126
    %v5128 = vpop.f32.mrf.mxu0
    %5129 = vmatprep.mubr.f32.mxu0 0.0
    %v5130 = vand.u32 %v5049, 4294901760
    %v5131 = vsub.f32 %v5049, %v5130
    %v5132 = vand.u32 %v5131, 4294901760
    %v5133 = vsub.f32 %v5131, %v5132
    %v5134 = vand.u32 %v5133, 4294901760
    %5135 = vmatmul.mubr.f32.gmra.mxu0 %v5134
    %v5136 = vpop.f32.mrf.mxu0
    %v5137 = vadd.f32 0.0, %v5136
    %v5138 = vpop.f32.mrf.mxu0
    %5139 = vdwg.mxu0
    %5140 = vmatprep.subr.mxu0 0.0
    %5141 = vmatpush1.msra.mxu0 0.0
    %5142 = vmatprep.subr.mxu0 0.0
    %5143 = vmatpush1.msra.mxu0 0.0
    %5144 = vmatprep.subr.mxu0 0.0
    %5145 = vmatpush1.msra.mxu0 0.0
    %5146 = vmatprep.subr.mxu0 0.0
    %5147 = vmatpush1.msra.mxu0 0.0
    %5148 = vmatprep.subr.mxu0 0.0
    %5149 = vmatpush1.msra.mxu0 0.0
    %5150 = vmatprep.subr.mxu0 0.0
    %5151 = vmatpush1.msra.mxu0 0.0
    %5152 = vmatprep.subr.mxu0 0.0
    %5153 = vmatpush1.msra.mxu0 0.0
    %5154 = vmatprep.subr.mxu0 0.0
    %5155 = vmatpush1.msra.mxu0 0.0
    %5156 = vmatprep.subr.mxu0 0.0
    %5157 = vmatpush1.msra.mxu0 0.0
    %5158 = vmatprep.subr.mxu0 0.0
    %5159 = vmatpush1.msra.mxu0 0.0
    %5160 = vmatprep.subr.mxu0 0.0
    %5161 = vmatpush1.msra.mxu0 0.0
    %5162 = vmatprep.subr.mxu0 0.0
    %5163 = vmatpush1.msra.mxu0 0.0
    %5164 = vmatprep.subr.mxu0 0.0
    %v5165 = vand.u32 %v28, 4294901760
    %v5166 = vsub.f32 %v28, %v5165
    %v5167 = vand.u32 %v5166, 4294901760
    %v5168 = vsub.f32 %v5166, %v5167
    %v5169 = vand.u32 %v5168, 4294901760
    %5170 = vmatpush1.msra.mxu0 %v5169
    %5171 = vmatprep.subr.mxu0 0.0
    %v5172 = vand.u32 %v27, 4294901760
    %v5173 = vsub.f32 %v27, %v5172
    %v5174 = vand.u32 %v5173, 4294901760
    %v5175 = vsub.f32 %v5173, %v5174
    %v5176 = vand.u32 %v5175, 4294901760
    %5177 = vmatpush1.msra.mxu0 %v5176
    %5178 = vmatprep.subr.mxu0 0.0
    %v5179 = vand.u32 %v26, 4294901760
    %v5180 = vsub.f32 %v26, %v5179
    %v5181 = vand.u32 %v5180, 4294901760
    %v5182 = vsub.f32 %v5180, %v5181
    %v5183 = vand.u32 %v5182, 4294901760
    %5184 = vmatpush1.msra.mxu0 %v5183
    %5185 = vmatprep.subr.mxu0 0.0
    %v5186 = vand.u32 %v25, 4294901760
    %v5187 = vsub.f32 %v25, %v5186
    %v5188 = vand.u32 %v5187, 4294901760
    %v5189 = vsub.f32 %v5187, %v5188
    %v5190 = vand.u32 %v5189, 4294901760
    %5191 = vmatpush1.msra.mxu0 %v5190
    %5192 = vmatprep.subr.mxu0 0.0
    %5193 = vmatpush2.msra.mxu0 0.0
    %5194 = vmatprep.subr.mxu0 0.0
    %5195 = vmatpush2.msra.mxu0 0.0
    %5196 = vmatprep.subr.mxu0 0.0
    %5197 = vmatpush2.msra.mxu0 0.0
    %5198 = vmatprep.subr.mxu0 0.0
    %5199 = vmatpush2.msra.mxu0 0.0
    %5200 = vmatprep.subr.mxu0 0.0
    %5201 = vmatpush2.msra.mxu0 0.0
    %5202 = vmatprep.subr.mxu0 0.0
    %5203 = vmatpush2.msra.mxu0 0.0
    %5204 = vmatprep.subr.mxu0 0.0
    %5205 = vmatpush2.msra.mxu0 0.0
    %5206 = vmatprep.subr.mxu0 0.0
    %5207 = vmatpush2.msra.mxu0 0.0
    %5208 = vmatprep.subr.mxu0 0.0
    %5209 = vmatpush2.msra.mxu0 0.0
    %5210 = vmatprep.subr.mxu0 0.0
    %5211 = vmatpush2.msra.mxu0 0.0
    %5212 = vmatprep.subr.mxu0 0.0
    %5213 = vmatpush2.msra.mxu0 0.0
    %5214 = vmatprep.subr.mxu0 0.0
    %5215 = vmatpush2.msra.mxu0 0.0
    %5216 = vmatprep.subr.mxu0 0.0
    %5217 = vmatpush2.msra.mxu0 0.0
    %5218 = vmatprep.subr.mxu0 0.0
    %5219 = vmatpush2.msra.mxu0 0.0
    %5220 = vmatprep.subr.mxu0 0.0
    %5221 = vmatpush2.msra.mxu0 0.0
    %5222 = vmatprep.subr.mxu0 0.0
    %5223 = vmatpush2.msra.mxu0 0.0
    %5224 = vmatprep.mubr.f32.mxu0 0.0
    %v5225 = vand.u32 %v5046, 4294901760
    %5226 = vmatmul.mubr.f32.gmra.mxu0 %v5225
    %v5227 = vpop.f32.mrf.mxu0
    %v5228 = vadd.f32 %v5127, %v5227
    %v5229 = vpop.f32.mrf.mxu0
    %5230 = vmatprep.mubr.f32.mxu0 0.0
    %v5231 = vand.u32 %v5049, 4294901760
    %5232 = vmatmul.mubr.f32.gmra.mxu0 %v5231
    %v5233 = vpop.f32.mrf.mxu0
    %v5234 = vadd.f32 %v5137, %v5233
    %v5235 = vpop.f32.mrf.mxu0
    %5236 = vdwg.mxu0
    %5237 = vmatprep.subr.mxu0 0.0
    %5238 = vmatpush1.msra.mxu0 0.0
    %5239 = vmatprep.subr.mxu0 0.0
    %5240 = vmatpush1.msra.mxu0 0.0
    %5241 = vmatprep.subr.mxu0 0.0
    %5242 = vmatpush1.msra.mxu0 0.0
    %5243 = vmatprep.subr.mxu0 0.0
    %5244 = vmatpush1.msra.mxu0 0.0
    %5245 = vmatprep.subr.mxu0 0.0
    %5246 = vmatpush1.msra.mxu0 0.0
    %5247 = vmatprep.subr.mxu0 0.0
    %5248 = vmatpush1.msra.mxu0 0.0
    %5249 = vmatprep.subr.mxu0 0.0
    %5250 = vmatpush1.msra.mxu0 0.0
    %5251 = vmatprep.subr.mxu0 0.0
    %5252 = vmatpush1.msra.mxu0 0.0
    %5253 = vmatprep.subr.mxu0 0.0
    %5254 = vmatpush1.msra.mxu0 0.0
    %5255 = vmatprep.subr.mxu0 0.0
    %5256 = vmatpush1.msra.mxu0 0.0
    %5257 = vmatprep.subr.mxu0 0.0
    %5258 = vmatpush1.msra.mxu0 0.0
    %5259 = vmatprep.subr.mxu0 0.0
    %5260 = vmatpush1.msra.mxu0 0.0
    %5261 = vmatprep.subr.mxu0 0.0
    %v5262 = vand.u32 %v28, 4294901760
    %v5263 = vsub.f32 %v28, %v5262
    %5264 = vmatpush1.msra.mxu0 %v5263
    %5265 = vmatprep.subr.mxu0 0.0
    %v5266 = vand.u32 %v27, 4294901760
    %v5267 = vsub.f32 %v27, %v5266
    %5268 = vmatpush1.msra.mxu0 %v5267
    %5269 = vmatprep.subr.mxu0 0.0
    %v5270 = vand.u32 %v26, 4294901760
    %v5271 = vsub.f32 %v26, %v5270
    %5272 = vmatpush1.msra.mxu0 %v5271
    %5273 = vmatprep.subr.mxu0 0.0
    %v5274 = vand.u32 %v25, 4294901760
    %v5275 = vsub.f32 %v25, %v5274
    %5276 = vmatpush1.msra.mxu0 %v5275
    %5277 = vmatprep.subr.mxu0 0.0
    %5278 = vmatpush2.msra.mxu0 0.0
    %5279 = vmatprep.subr.mxu0 0.0
    %5280 = vmatpush2.msra.mxu0 0.0
    %5281 = vmatprep.subr.mxu0 0.0
    %5282 = vmatpush2.msra.mxu0 0.0
    %5283 = vmatprep.subr.mxu0 0.0
    %5284 = vmatpush2.msra.mxu0 0.0
    %5285 = vmatprep.subr.mxu0 0.0
    %5286 = vmatpush2.msra.mxu0 0.0
    %5287 = vmatprep.subr.mxu0 0.0
    %5288 = vmatpush2.msra.mxu0 0.0
    %5289 = vmatprep.subr.mxu0 0.0
    %5290 = vmatpush2.msra.mxu0 0.0
    %5291 = vmatprep.subr.mxu0 0.0
    %5292 = vmatpush2.msra.mxu0 0.0
    %5293 = vmatprep.subr.mxu0 0.0
    %5294 = vmatpush2.msra.mxu0 0.0
    %5295 = vmatprep.subr.mxu0 0.0
    %5296 = vmatpush2.msra.mxu0 0.0
    %5297 = vmatprep.subr.mxu0 0.0
    %5298 = vmatpush2.msra.mxu0 0.0
    %5299 = vmatprep.subr.mxu0 0.0
    %5300 = vmatpush2.msra.mxu0 0.0
    %5301 = vmatprep.subr.mxu0 0.0
    %5302 = vmatpush2.msra.mxu0 0.0
    %5303 = vmatprep.subr.mxu0 0.0
    %5304 = vmatpush2.msra.mxu0 0.0
    %5305 = vmatprep.subr.mxu0 0.0
    %5306 = vmatpush2.msra.mxu0 0.0
    %5307 = vmatprep.subr.mxu0 0.0
    %5308 = vmatpush2.msra.mxu0 0.0
    %5309 = vmatprep.mubr.f32.mxu0 0.0
    %v5310 = vand.u32 %v5046, 4294901760
    %v5311 = vsub.f32 %v5046, %v5310
    %5312 = vmatmul.mubr.f32.gmra.mxu0 %v5311
    %v5313 = vpop.f32.mrf.mxu0
    %v5314 = vadd.f32 %v5228, %v5313
    %v5315 = vpop.f32.mrf.mxu0
    %5316 = vmatprep.mubr.f32.mxu0 0.0
    %v5317 = vand.u32 %v5049, 4294901760
    %v5318 = vsub.f32 %v5049, %v5317
    %5319 = vmatmul.mubr.f32.gmra.mxu0 %v5318
    %v5320 = vpop.f32.mrf.mxu0
    %v5321 = vadd.f32 %v5234, %v5320
    %v5322 = vpop.f32.mrf.mxu0
    %5323 = vdwg.mxu0
    %5324 = vmatprep.subr.mxu0 0.0
    %5325 = vmatpush1.msra.mxu0 0.0
    %5326 = vmatprep.subr.mxu0 0.0
    %5327 = vmatpush1.msra.mxu0 0.0
    %5328 = vmatprep.subr.mxu0 0.0
    %5329 = vmatpush1.msra.mxu0 0.0
    %5330 = vmatprep.subr.mxu0 0.0
    %5331 = vmatpush1.msra.mxu0 0.0
    %5332 = vmatprep.subr.mxu0 0.0
    %5333 = vmatpush1.msra.mxu0 0.0
    %5334 = vmatprep.subr.mxu0 0.0
    %5335 = vmatpush1.msra.mxu0 0.0
    %5336 = vmatprep.subr.mxu0 0.0
    %5337 = vmatpush1.msra.mxu0 0.0
    %5338 = vmatprep.subr.mxu0 0.0
    %5339 = vmatpush1.msra.mxu0 0.0
    %5340 = vmatprep.subr.mxu0 0.0
    %5341 = vmatpush1.msra.mxu0 0.0
    %5342 = vmatprep.subr.mxu0 0.0
    %5343 = vmatpush1.msra.mxu0 0.0
    %5344 = vmatprep.subr.mxu0 0.0
    %5345 = vmatpush1.msra.mxu0 0.0
    %5346 = vmatprep.subr.mxu0 0.0
    %5347 = vmatpush1.msra.mxu0 0.0
    %5348 = vmatprep.subr.mxu0 0.0
    %v5349 = vand.u32 %v28, 4294901760
    %5350 = vmatpush1.msra.mxu0 %v5349
    %5351 = vmatprep.subr.mxu0 0.0
    %v5352 = vand.u32 %v27, 4294901760
    %5353 = vmatpush1.msra.mxu0 %v5352
    %5354 = vmatprep.subr.mxu0 0.0
    %v5355 = vand.u32 %v26, 4294901760
    %5356 = vmatpush1.msra.mxu0 %v5355
    %5357 = vmatprep.subr.mxu0 0.0
    %v5358 = vand.u32 %v25, 4294901760
    %5359 = vmatpush1.msra.mxu0 %v5358
    %5360 = vmatprep.subr.mxu0 0.0
    %5361 = vmatpush2.msra.mxu0 0.0
    %5362 = vmatprep.subr.mxu0 0.0
    %5363 = vmatpush2.msra.mxu0 0.0
    %5364 = vmatprep.subr.mxu0 0.0
    %5365 = vmatpush2.msra.mxu0 0.0
    %5366 = vmatprep.subr.mxu0 0.0
    %5367 = vmatpush2.msra.mxu0 0.0
    %5368 = vmatprep.subr.mxu0 0.0
    %5369 = vmatpush2.msra.mxu0 0.0
    %5370 = vmatprep.subr.mxu0 0.0
    %5371 = vmatpush2.msra.mxu0 0.0
    %5372 = vmatprep.subr.mxu0 0.0
    %5373 = vmatpush2.msra.mxu0 0.0
    %5374 = vmatprep.subr.mxu0 0.0
    %5375 = vmatpush2.msra.mxu0 0.0
    %5376 = vmatprep.subr.mxu0 0.0
    %5377 = vmatpush2.msra.mxu0 0.0
    %5378 = vmatprep.subr.mxu0 0.0
    %5379 = vmatpush2.msra.mxu0 0.0
    %5380 = vmatprep.subr.mxu0 0.0
    %5381 = vmatpush2.msra.mxu0 0.0
    %5382 = vmatprep.subr.mxu0 0.0
    %5383 = vmatpush2.msra.mxu0 0.0
    %5384 = vmatprep.subr.mxu0 0.0
    %5385 = vmatpush2.msra.mxu0 0.0
    %5386 = vmatprep.subr.mxu0 0.0
    %5387 = vmatpush2.msra.mxu0 0.0
    %5388 = vmatprep.subr.mxu0 0.0
    %5389 = vmatpush2.msra.mxu0 0.0
    %5390 = vmatprep.subr.mxu0 0.0
    %5391 = vmatpush2.msra.mxu0 0.0
    %5392 = vmatprep.mubr.f32.mxu0 0.0
    %v5393 = vand.u32 %v5046, 4294901760
    %v5394 = vsub.f32 %v5046, %v5393
    %v5395 = vand.u32 %v5394, 4294901760
    %5396 = vmatmul.mubr.f32.gmra.mxu0 %v5395
    %v5397 = vpop.f32.mrf.mxu0
    %v5398 = vadd.f32 %v5314, %v5397
    %v5399 = vpop.f32.mrf.mxu0
    %5400 = vmatprep.mubr.f32.mxu0 0.0
    %v5401 = vand.u32 %v5049, 4294901760
    %v5402 = vsub.f32 %v5049, %v5401
    %v5403 = vand.u32 %v5402, 4294901760
    %5404 = vmatmul.mubr.f32.gmra.mxu0 %v5403
    %v5405 = vpop.f32.mrf.mxu0
    %v5406 = vadd.f32 %v5321, %v5405
    %v5407 = vpop.f32.mrf.mxu0
    %5408 = vdwg.mxu0
    %5409 = vmatprep.subr.mxu0 0.0
    %5410 = vmatpush1.msra.mxu0 0.0
    %5411 = vmatprep.subr.mxu0 0.0
    %5412 = vmatpush1.msra.mxu0 0.0
    %5413 = vmatprep.subr.mxu0 0.0
    %5414 = vmatpush1.msra.mxu0 0.0
    %5415 = vmatprep.subr.mxu0 0.0
    %5416 = vmatpush1.msra.mxu0 0.0
    %5417 = vmatprep.subr.mxu0 0.0
    %5418 = vmatpush1.msra.mxu0 0.0
    %5419 = vmatprep.subr.mxu0 0.0
    %5420 = vmatpush1.msra.mxu0 0.0
    %5421 = vmatprep.subr.mxu0 0.0
    %5422 = vmatpush1.msra.mxu0 0.0
    %5423 = vmatprep.subr.mxu0 0.0
    %5424 = vmatpush1.msra.mxu0 0.0
    %5425 = vmatprep.subr.mxu0 0.0
    %5426 = vmatpush1.msra.mxu0 0.0
    %5427 = vmatprep.subr.mxu0 0.0
    %5428 = vmatpush1.msra.mxu0 0.0
    %5429 = vmatprep.subr.mxu0 0.0
    %5430 = vmatpush1.msra.mxu0 0.0
    %5431 = vmatprep.subr.mxu0 0.0
    %5432 = vmatpush1.msra.mxu0 0.0
    %5433 = vmatprep.subr.mxu0 0.0
    %v5434 = vand.u32 %v28, 4294901760
    %v5435 = vsub.f32 %v28, %v5434
    %v5436 = vand.u32 %v5435, 4294901760
    %5437 = vmatpush1.msra.mxu0 %v5436
    %5438 = vmatprep.subr.mxu0 0.0
    %v5439 = vand.u32 %v27, 4294901760
    %v5440 = vsub.f32 %v27, %v5439
    %v5441 = vand.u32 %v5440, 4294901760
    %5442 = vmatpush1.msra.mxu0 %v5441
    %5443 = vmatprep.subr.mxu0 0.0
    %v5444 = vand.u32 %v26, 4294901760
    %v5445 = vsub.f32 %v26, %v5444
    %v5446 = vand.u32 %v5445, 4294901760
    %5447 = vmatpush1.msra.mxu0 %v5446
    %5448 = vmatprep.subr.mxu0 0.0
    %v5449 = vand.u32 %v25, 4294901760
    %v5450 = vsub.f32 %v25, %v5449
    %v5451 = vand.u32 %v5450, 4294901760
    %5452 = vmatpush1.msra.mxu0 %v5451
    %5453 = vmatprep.subr.mxu0 0.0
    %5454 = vmatpush2.msra.mxu0 0.0
    %5455 = vmatprep.subr.mxu0 0.0
    %5456 = vmatpush2.msra.mxu0 0.0
    %5457 = vmatprep.subr.mxu0 0.0
    %5458 = vmatpush2.msra.mxu0 0.0
    %5459 = vmatprep.subr.mxu0 0.0
    %5460 = vmatpush2.msra.mxu0 0.0
    %5461 = vmatprep.subr.mxu0 0.0
    %5462 = vmatpush2.msra.mxu0 0.0
    %5463 = vmatprep.subr.mxu0 0.0
    %5464 = vmatpush2.msra.mxu0 0.0
    %5465 = vmatprep.subr.mxu0 0.0
    %5466 = vmatpush2.msra.mxu0 0.0
    %5467 = vmatprep.subr.mxu0 0.0
    %5468 = vmatpush2.msra.mxu0 0.0
    %5469 = vmatprep.subr.mxu0 0.0
    %5470 = vmatpush2.msra.mxu0 0.0
    %5471 = vmatprep.subr.mxu0 0.0
    %5472 = vmatpush2.msra.mxu0 0.0
    %5473 = vmatprep.subr.mxu0 0.0
    %5474 = vmatpush2.msra.mxu0 0.0
    %5475 = vmatprep.subr.mxu0 0.0
    %5476 = vmatpush2.msra.mxu0 0.0
    %5477 = vmatprep.subr.mxu0 0.0
    %5478 = vmatpush2.msra.mxu0 0.0
    %5479 = vmatprep.subr.mxu0 0.0
    %5480 = vmatpush2.msra.mxu0 0.0
    %5481 = vmatprep.subr.mxu0 0.0
    %5482 = vmatpush2.msra.mxu0 0.0
    %5483 = vmatprep.subr.mxu0 0.0
    %5484 = vmatpush2.msra.mxu0 0.0
    %5485 = vmatprep.mubr.f32.mxu0 0.0
    %v5486 = vand.u32 %v5046, 4294901760
    %5487 = vmatmul.mubr.f32.gmra.mxu0 %v5486
    %v5488 = vpop.f32.mrf.mxu0
    %v5489 = vadd.f32 %v5398, %v5488
    %v5490 = vpop.f32.mrf.mxu0
    %5491 = vmatprep.mubr.f32.mxu0 0.0
    %v5492 = vand.u32 %v5049, 4294901760
    %5493 = vmatmul.mubr.f32.gmra.mxu0 %v5492
    %v5494 = vpop.f32.mrf.mxu0
    %v5495 = vadd.f32 %v5406, %v5494
    %v5496 = vpop.f32.mrf.mxu0
    %5497 = vdwg.mxu0
    %5498 = vmatprep.subr.mxu0 0.0
    %5499 = vmatpush1.msra.mxu0 0.0
    %5500 = vmatprep.subr.mxu0 0.0
    %5501 = vmatpush1.msra.mxu0 0.0
    %5502 = vmatprep.subr.mxu0 0.0
    %5503 = vmatpush1.msra.mxu0 0.0
    %5504 = vmatprep.subr.mxu0 0.0
    %5505 = vmatpush1.msra.mxu0 0.0
    %5506 = vmatprep.subr.mxu0 0.0
    %5507 = vmatpush1.msra.mxu0 0.0
    %5508 = vmatprep.subr.mxu0 0.0
    %5509 = vmatpush1.msra.mxu0 0.0
    %5510 = vmatprep.subr.mxu0 0.0
    %5511 = vmatpush1.msra.mxu0 0.0
    %5512 = vmatprep.subr.mxu0 0.0
    %5513 = vmatpush1.msra.mxu0 0.0
    %5514 = vmatprep.subr.mxu0 0.0
    %5515 = vmatpush1.msra.mxu0 0.0
    %5516 = vmatprep.subr.mxu0 0.0
    %5517 = vmatpush1.msra.mxu0 0.0
    %5518 = vmatprep.subr.mxu0 0.0
    %5519 = vmatpush1.msra.mxu0 0.0
    %5520 = vmatprep.subr.mxu0 0.0
    %5521 = vmatpush1.msra.mxu0 0.0
    %5522 = vmatprep.subr.mxu0 0.0
    %v5523 = vand.u32 %v28, 4294901760
    %5524 = vmatpush1.msra.mxu0 %v5523
    %5525 = vmatprep.subr.mxu0 0.0
    %v5526 = vand.u32 %v27, 4294901760
    %5527 = vmatpush1.msra.mxu0 %v5526
    %5528 = vmatprep.subr.mxu0 0.0
    %v5529 = vand.u32 %v26, 4294901760
    %5530 = vmatpush1.msra.mxu0 %v5529
    %5531 = vmatprep.subr.mxu0 0.0
    %v5532 = vand.u32 %v25, 4294901760
    %5533 = vmatpush1.msra.mxu0 %v5532
    %5534 = vmatprep.subr.mxu0 0.0
    %5535 = vmatpush2.msra.mxu0 0.0
    %5536 = vmatprep.subr.mxu0 0.0
    %5537 = vmatpush2.msra.mxu0 0.0
    %5538 = vmatprep.subr.mxu0 0.0
    %5539 = vmatpush2.msra.mxu0 0.0
    %5540 = vmatprep.subr.mxu0 0.0
    %5541 = vmatpush2.msra.mxu0 0.0
    %5542 = vmatprep.subr.mxu0 0.0
    %5543 = vmatpush2.msra.mxu0 0.0
    %5544 = vmatprep.subr.mxu0 0.0
    %5545 = vmatpush2.msra.mxu0 0.0
    %5546 = vmatprep.subr.mxu0 0.0
    %5547 = vmatpush2.msra.mxu0 0.0
    %5548 = vmatprep.subr.mxu0 0.0
    %5549 = vmatpush2.msra.mxu0 0.0
    %5550 = vmatprep.subr.mxu0 0.0
    %5551 = vmatpush2.msra.mxu0 0.0
    %5552 = vmatprep.subr.mxu0 0.0
    %5553 = vmatpush2.msra.mxu0 0.0
    %5554 = vmatprep.subr.mxu0 0.0
    %5555 = vmatpush2.msra.mxu0 0.0
    %5556 = vmatprep.subr.mxu0 0.0
    %5557 = vmatpush2.msra.mxu0 0.0
    %5558 = vmatprep.subr.mxu0 0.0
    %5559 = vmatpush2.msra.mxu0 0.0
    %5560 = vmatprep.subr.mxu0 0.0
    %5561 = vmatpush2.msra.mxu0 0.0
    %5562 = vmatprep.subr.mxu0 0.0
    %5563 = vmatpush2.msra.mxu0 0.0
    %5564 = vmatprep.subr.mxu0 0.0
    %5565 = vmatpush2.msra.mxu0 0.0
    %5566 = vmatprep.mubr.f32.mxu0 0.0
    %v5567 = vand.u32 %v5046, 4294901760
    %5568 = vmatmul.mubr.f32.gmra.mxu0 %v5567
    %v5569 = vpop.f32.mrf.mxu0
    %v5570 = vadd.f32 %v5489, %v5569
    %v5571 = vpop.f32.mrf.mxu0
    %5572 = vmatprep.mubr.f32.mxu0 0.0
    %v5573 = vand.u32 %v5049, 4294901760
    %5574 = vmatmul.mubr.f32.gmra.mxu0 %v5573
    %v5575 = vpop.f32.mrf.mxu0
    %v5576 = vadd.f32 %v5495, %v5575
    %v5577 = vpop.f32.mrf.mxu0
    %5578 = vdwg.mxu0
    %v5579 = vadd.f32 %v5033, %v5570
    %v5580 = vadd.f32 %v5034, %v5576
    %v5581 = vtanh.pop %v5579
    %v5582 = vtanh.pop %v5580
    %v5583 = vmul.f32 %v5029, %v4476
    %v5584 = vmul.f32 %v5031, %v4477
    %v5585 = vsub.f32 1.0, %v5029
    %v5586 = vsub.f32 1.0, %v5031
    %v5587 = vmul.f32 %v5585, %v5581
    %v5588 = vmul.f32 %v5586, %v5582
    %v5589 = vadd.f32 %v5583, %v5587
    %v5590 = vadd.f32 %v5584, %v5588
    %s5591 = scalar_lea.vmem [#allocation2], 64
    %5592 = vst.msk [vmem:[%s5591] sm:$0xff] %vm33, %v5589
    %5593 = vst.msk [vmem:[%s5591 + $0x8] sm:$0xff] %vm33, %v5590
    %s5594 = scalar_lea.vmem %s0, 80
    %v5595 = vld [vmem:[%s5594] sm:$0xff]
    %v5596 = vld [vmem:[%s5594 + $0x8] sm:$0xff]
    %v5598 = vsel %vm33, %v5589, 0
    %v5601 = vsel %vm33, %v5590, 0
    %5603 = vmatprep.subr.mxu0 0.0
    %5604 = vmatpush1.msra.mxu0 0.0
    %5605 = vmatprep.subr.mxu0 0.0
    %5606 = vmatpush1.msra.mxu0 0.0
    %5607 = vmatprep.subr.mxu0 0.0
    %5608 = vmatpush1.msra.mxu0 0.0
    %5609 = vmatprep.subr.mxu0 0.0
    %5610 = vmatpush1.msra.mxu0 0.0
    %5611 = vmatprep.subr.mxu0 0.0
    %5612 = vmatpush1.msra.mxu0 0.0
    %5613 = vmatprep.subr.mxu0 0.0
    %5614 = vmatpush1.msra.mxu0 0.0
    %5615 = vmatprep.subr.mxu0 0.0
    %5616 = vmatpush1.msra.mxu0 0.0
    %5617 = vmatprep.subr.mxu0 0.0
    %5618 = vmatpush1.msra.mxu0 0.0
    %5619 = vmatprep.subr.mxu0 0.0
    %5620 = vmatpush1.msra.mxu0 0.0
    %5621 = vmatprep.subr.mxu0 0.0
    %5622 = vmatpush1.msra.mxu0 0.0
    %5623 = vmatprep.subr.mxu0 0.0
    %5624 = vmatpush1.msra.mxu0 0.0
    %5625 = vmatprep.subr.mxu0 0.0
    %5626 = vmatpush1.msra.mxu0 0.0
    %5627 = vmatprep.subr.mxu0 0.0
    %v5628 = vand.u32 %v24, 4294901760
    %5629 = vmatpush1.msra.mxu0 %v5628
    %5630 = vmatprep.subr.mxu0 0.0
    %v5631 = vand.u32 %v23, 4294901760
    %5632 = vmatpush1.msra.mxu0 %v5631
    %5633 = vmatprep.subr.mxu0 0.0
    %v5634 = vand.u32 %v22, 4294901760
    %5635 = vmatpush1.msra.mxu0 %v5634
    %5636 = vmatprep.subr.mxu0 0.0
    %v5637 = vand.u32 %v21, 4294901760
    %5638 = vmatpush1.msra.mxu0 %v5637
    %5639 = vmatprep.subr.mxu0 0.0
    %5640 = vmatpush2.msra.mxu0 0.0
    %5641 = vmatprep.subr.mxu0 0.0
    %5642 = vmatpush2.msra.mxu0 0.0
    %5643 = vmatprep.subr.mxu0 0.0
    %5644 = vmatpush2.msra.mxu0 0.0
    %5645 = vmatprep.subr.mxu0 0.0
    %5646 = vmatpush2.msra.mxu0 0.0
    %5647 = vmatprep.subr.mxu0 0.0
    %5648 = vmatpush2.msra.mxu0 0.0
    %5649 = vmatprep.subr.mxu0 0.0
    %5650 = vmatpush2.msra.mxu0 0.0
    %5651 = vmatprep.subr.mxu0 0.0
    %5652 = vmatpush2.msra.mxu0 0.0
    %5653 = vmatprep.subr.mxu0 0.0
    %5654 = vmatpush2.msra.mxu0 0.0
    %5655 = vmatprep.subr.mxu0 0.0
    %5656 = vmatpush2.msra.mxu0 0.0
    %5657 = vmatprep.subr.mxu0 0.0
    %5658 = vmatpush2.msra.mxu0 0.0
    %5659 = vmatprep.subr.mxu0 0.0
    %5660 = vmatpush2.msra.mxu0 0.0
    %5661 = vmatprep.subr.mxu0 0.0
    %5662 = vmatpush2.msra.mxu0 0.0
    %5663 = vmatprep.subr.mxu0 0.0
    %5664 = vmatpush2.msra.mxu0 0.0
    %5665 = vmatprep.subr.mxu0 0.0
    %5666 = vmatpush2.msra.mxu0 0.0
    %5667 = vmatprep.subr.mxu0 0.0
    %5668 = vmatpush2.msra.mxu0 0.0
    %5669 = vmatprep.subr.mxu0 0.0
    %5670 = vmatpush2.msra.mxu0 0.0
    %5671 = vmatprep.mubr.f32.mxu0 0.0
    %v5672 = vand.u32 %v5598, 4294901760
    %v5673 = vsub.f32 %v5598, %v5672
    %v5674 = vand.u32 %v5673, 4294901760
    %v5675 = vsub.f32 %v5673, %v5674
    %v5676 = vand.u32 %v5675, 4294901760
    %5677 = vmatmul.mubr.f32.gmra.mxu0 %v5676
    %v5678 = vpop.f32.mrf.mxu0
    %v5679 = vadd.f32 0.0, %v5678
    %v5680 = vpop.f32.mrf.mxu0
    %5681 = vmatprep.mubr.f32.mxu0 0.0
    %v5682 = vand.u32 %v5601, 4294901760
    %v5683 = vsub.f32 %v5601, %v5682
    %v5684 = vand.u32 %v5683, 4294901760
    %v5685 = vsub.f32 %v5683, %v5684
    %v5686 = vand.u32 %v5685, 4294901760
    %5687 = vmatmul.mubr.f32.gmra.mxu0 %v5686
    %v5688 = vpop.f32.mrf.mxu0
    %v5689 = vadd.f32 0.0, %v5688
    %v5690 = vpop.f32.mrf.mxu0
    %5691 = vdwg.mxu0
    %5692 = vmatprep.subr.mxu0 0.0
    %5693 = vmatpush1.msra.mxu0 0.0
    %5694 = vmatprep.subr.mxu0 0.0
    %5695 = vmatpush1.msra.mxu0 0.0
    %5696 = vmatprep.subr.mxu0 0.0
    %5697 = vmatpush1.msra.mxu0 0.0
    %5698 = vmatprep.subr.mxu0 0.0
    %5699 = vmatpush1.msra.mxu0 0.0
    %5700 = vmatprep.subr.mxu0 0.0
    %5701 = vmatpush1.msra.mxu0 0.0
    %5702 = vmatprep.subr.mxu0 0.0
    %5703 = vmatpush1.msra.mxu0 0.0
    %5704 = vmatprep.subr.mxu0 0.0
    %5705 = vmatpush1.msra.mxu0 0.0
    %5706 = vmatprep.subr.mxu0 0.0
    %5707 = vmatpush1.msra.mxu0 0.0
    %5708 = vmatprep.subr.mxu0 0.0
    %5709 = vmatpush1.msra.mxu0 0.0
    %5710 = vmatprep.subr.mxu0 0.0
    %5711 = vmatpush1.msra.mxu0 0.0
    %5712 = vmatprep.subr.mxu0 0.0
    %5713 = vmatpush1.msra.mxu0 0.0
    %5714 = vmatprep.subr.mxu0 0.0
    %5715 = vmatpush1.msra.mxu0 0.0
    %5716 = vmatprep.subr.mxu0 0.0
    %v5717 = vand.u32 %v24, 4294901760
    %v5718 = vsub.f32 %v24, %v5717
    %v5719 = vand.u32 %v5718, 4294901760
    %v5720 = vsub.f32 %v5718, %v5719
    %v5721 = vand.u32 %v5720, 4294901760
    %5722 = vmatpush1.msra.mxu0 %v5721
    %5723 = vmatprep.subr.mxu0 0.0
    %v5724 = vand.u32 %v23, 4294901760
    %v5725 = vsub.f32 %v23, %v5724
    %v5726 = vand.u32 %v5725, 4294901760
    %v5727 = vsub.f32 %v5725, %v5726
    %v5728 = vand.u32 %v5727, 4294901760
    %5729 = vmatpush1.msra.mxu0 %v5728
    %5730 = vmatprep.subr.mxu0 0.0
    %v5731 = vand.u32 %v22, 4294901760
    %v5732 = vsub.f32 %v22, %v5731
    %v5733 = vand.u32 %v5732, 4294901760
    %v5734 = vsub.f32 %v5732, %v5733
    %v5735 = vand.u32 %v5734, 4294901760
    %5736 = vmatpush1.msra.mxu0 %v5735
    %5737 = vmatprep.subr.mxu0 0.0
    %v5738 = vand.u32 %v21, 4294901760
    %v5739 = vsub.f32 %v21, %v5738
    %v5740 = vand.u32 %v5739, 4294901760
    %v5741 = vsub.f32 %v5739, %v5740
    %v5742 = vand.u32 %v5741, 4294901760
    %5743 = vmatpush1.msra.mxu0 %v5742
    %5744 = vmatprep.subr.mxu0 0.0
    %5745 = vmatpush2.msra.mxu0 0.0
    %5746 = vmatprep.subr.mxu0 0.0
    %5747 = vmatpush2.msra.mxu0 0.0
    %5748 = vmatprep.subr.mxu0 0.0
    %5749 = vmatpush2.msra.mxu0 0.0
    %5750 = vmatprep.subr.mxu0 0.0
    %5751 = vmatpush2.msra.mxu0 0.0
    %5752 = vmatprep.subr.mxu0 0.0
    %5753 = vmatpush2.msra.mxu0 0.0
    %5754 = vmatprep.subr.mxu0 0.0
    %5755 = vmatpush2.msra.mxu0 0.0
    %5756 = vmatprep.subr.mxu0 0.0
    %5757 = vmatpush2.msra.mxu0 0.0
    %5758 = vmatprep.subr.mxu0 0.0
    %5759 = vmatpush2.msra.mxu0 0.0
    %5760 = vmatprep.subr.mxu0 0.0
    %5761 = vmatpush2.msra.mxu0 0.0
    %5762 = vmatprep.subr.mxu0 0.0
    %5763 = vmatpush2.msra.mxu0 0.0
    %5764 = vmatprep.subr.mxu0 0.0
    %5765 = vmatpush2.msra.mxu0 0.0
    %5766 = vmatprep.subr.mxu0 0.0
    %5767 = vmatpush2.msra.mxu0 0.0
    %5768 = vmatprep.subr.mxu0 0.0
    %5769 = vmatpush2.msra.mxu0 0.0
    %5770 = vmatprep.subr.mxu0 0.0
    %5771 = vmatpush2.msra.mxu0 0.0
    %5772 = vmatprep.subr.mxu0 0.0
    %5773 = vmatpush2.msra.mxu0 0.0
    %5774 = vmatprep.subr.mxu0 0.0
    %5775 = vmatpush2.msra.mxu0 0.0
    %5776 = vmatprep.mubr.f32.mxu0 0.0
    %v5777 = vand.u32 %v5598, 4294901760
    %5778 = vmatmul.mubr.f32.gmra.mxu0 %v5777
    %v5779 = vpop.f32.mrf.mxu0
    %v5780 = vadd.f32 %v5679, %v5779
    %v5781 = vpop.f32.mrf.mxu0
    %5782 = vmatprep.mubr.f32.mxu0 0.0
    %v5783 = vand.u32 %v5601, 4294901760
    %5784 = vmatmul.mubr.f32.gmra.mxu0 %v5783
    %v5785 = vpop.f32.mrf.mxu0
    %v5786 = vadd.f32 %v5689, %v5785
    %v5787 = vpop.f32.mrf.mxu0
    %5788 = vdwg.mxu0
    %5789 = vmatprep.subr.mxu0 0.0
    %5790 = vmatpush1.msra.mxu0 0.0
    %5791 = vmatprep.subr.mxu0 0.0
    %5792 = vmatpush1.msra.mxu0 0.0
    %5793 = vmatprep.subr.mxu0 0.0
    %5794 = vmatpush1.msra.mxu0 0.0
    %5795 = vmatprep.subr.mxu0 0.0
    %5796 = vmatpush1.msra.mxu0 0.0
    %5797 = vmatprep.subr.mxu0 0.0
    %5798 = vmatpush1.msra.mxu0 0.0
    %5799 = vmatprep.subr.mxu0 0.0
    %5800 = vmatpush1.msra.mxu0 0.0
    %5801 = vmatprep.subr.mxu0 0.0
    %5802 = vmatpush1.msra.mxu0 0.0
    %5803 = vmatprep.subr.mxu0 0.0
    %5804 = vmatpush1.msra.mxu0 0.0
    %5805 = vmatprep.subr.mxu0 0.0
    %5806 = vmatpush1.msra.mxu0 0.0
    %5807 = vmatprep.subr.mxu0 0.0
    %5808 = vmatpush1.msra.mxu0 0.0
    %5809 = vmatprep.subr.mxu0 0.0
    %5810 = vmatpush1.msra.mxu0 0.0
    %5811 = vmatprep.subr.mxu0 0.0
    %5812 = vmatpush1.msra.mxu0 0.0
    %5813 = vmatprep.subr.mxu0 0.0
    %v5814 = vand.u32 %v24, 4294901760
    %v5815 = vsub.f32 %v24, %v5814
    %5816 = vmatpush1.msra.mxu0 %v5815
    %5817 = vmatprep.subr.mxu0 0.0
    %v5818 = vand.u32 %v23, 4294901760
    %v5819 = vsub.f32 %v23, %v5818
    %5820 = vmatpush1.msra.mxu0 %v5819
    %5821 = vmatprep.subr.mxu0 0.0
    %v5822 = vand.u32 %v22, 4294901760
    %v5823 = vsub.f32 %v22, %v5822
    %5824 = vmatpush1.msra.mxu0 %v5823
    %5825 = vmatprep.subr.mxu0 0.0
    %v5826 = vand.u32 %v21, 4294901760
    %v5827 = vsub.f32 %v21, %v5826
    %5828 = vmatpush1.msra.mxu0 %v5827
    %5829 = vmatprep.subr.mxu0 0.0
    %5830 = vmatpush2.msra.mxu0 0.0
    %5831 = vmatprep.subr.mxu0 0.0
    %5832 = vmatpush2.msra.mxu0 0.0
    %5833 = vmatprep.subr.mxu0 0.0
    %5834 = vmatpush2.msra.mxu0 0.0
    %5835 = vmatprep.subr.mxu0 0.0
    %5836 = vmatpush2.msra.mxu0 0.0
    %5837 = vmatprep.subr.mxu0 0.0
    %5838 = vmatpush2.msra.mxu0 0.0
    %5839 = vmatprep.subr.mxu0 0.0
    %5840 = vmatpush2.msra.mxu0 0.0
    %5841 = vmatprep.subr.mxu0 0.0
    %5842 = vmatpush2.msra.mxu0 0.0
    %5843 = vmatprep.subr.mxu0 0.0
    %5844 = vmatpush2.msra.mxu0 0.0
    %5845 = vmatprep.subr.mxu0 0.0
    %5846 = vmatpush2.msra.mxu0 0.0
    %5847 = vmatprep.subr.mxu0 0.0
    %5848 = vmatpush2.msra.mxu0 0.0
    %5849 = vmatprep.subr.mxu0 0.0
    %5850 = vmatpush2.msra.mxu0 0.0
    %5851 = vmatprep.subr.mxu0 0.0
    %5852 = vmatpush2.msra.mxu0 0.0
    %5853 = vmatprep.subr.mxu0 0.0
    %5854 = vmatpush2.msra.mxu0 0.0
    %5855 = vmatprep.subr.mxu0 0.0
    %5856 = vmatpush2.msra.mxu0 0.0
    %5857 = vmatprep.subr.mxu0 0.0
    %5858 = vmatpush2.msra.mxu0 0.0
    %5859 = vmatprep.subr.mxu0 0.0
    %5860 = vmatpush2.msra.mxu0 0.0
    %5861 = vmatprep.mubr.f32.mxu0 0.0
    %v5862 = vand.u32 %v5598, 4294901760
    %v5863 = vsub.f32 %v5598, %v5862
    %5864 = vmatmul.mubr.f32.gmra.mxu0 %v5863
    %v5865 = vpop.f32.mrf.mxu0
    %v5866 = vadd.f32 %v5780, %v5865
    %v5867 = vpop.f32.mrf.mxu0
    %5868 = vmatprep.mubr.f32.mxu0 0.0
    %v5869 = vand.u32 %v5601, 4294901760
    %v5870 = vsub.f32 %v5601, %v5869
    %5871 = vmatmul.mubr.f32.gmra.mxu0 %v5870
    %v5872 = vpop.f32.mrf.mxu0
    %v5873 = vadd.f32 %v5786, %v5872
    %v5874 = vpop.f32.mrf.mxu0
    %5875 = vdwg.mxu0
    %5876 = vmatprep.subr.mxu0 0.0
    %5877 = vmatpush1.msra.mxu0 0.0
    %5878 = vmatprep.subr.mxu0 0.0
    %5879 = vmatpush1.msra.mxu0 0.0
    %5880 = vmatprep.subr.mxu0 0.0
    %5881 = vmatpush1.msra.mxu0 0.0
    %5882 = vmatprep.subr.mxu0 0.0
    %5883 = vmatpush1.msra.mxu0 0.0
    %5884 = vmatprep.subr.mxu0 0.0
    %5885 = vmatpush1.msra.mxu0 0.0
    %5886 = vmatprep.subr.mxu0 0.0
    %5887 = vmatpush1.msra.mxu0 0.0
    %5888 = vmatprep.subr.mxu0 0.0
    %5889 = vmatpush1.msra.mxu0 0.0
    %5890 = vmatprep.subr.mxu0 0.0
    %5891 = vmatpush1.msra.mxu0 0.0
    %5892 = vmatprep.subr.mxu0 0.0
    %5893 = vmatpush1.msra.mxu0 0.0
    %5894 = vmatprep.subr.mxu0 0.0
    %5895 = vmatpush1.msra.mxu0 0.0
    %5896 = vmatprep.subr.mxu0 0.0
    %5897 = vmatpush1.msra.mxu0 0.0
    %5898 = vmatprep.subr.mxu0 0.0
    %5899 = vmatpush1.msra.mxu0 0.0
    %5900 = vmatprep.subr.mxu0 0.0
    %v5901 = vand.u32 %v24, 4294901760
    %5902 = vmatpush1.msra.mxu0 %v5901
    %5903 = vmatprep.subr.mxu0 0.0
    %v5904 = vand.u32 %v23, 4294901760
    %5905 = vmatpush1.msra.mxu0 %v5904
    %5906 = vmatprep.subr.mxu0 0.0
    %v5907 = vand.u32 %v22, 4294901760
    %5908 = vmatpush1.msra.mxu0 %v5907
    %5909 = vmatprep.subr.mxu0 0.0
    %v5910 = vand.u32 %v21, 4294901760
    %5911 = vmatpush1.msra.mxu0 %v5910
    %5912 = vmatprep.subr.mxu0 0.0
    %5913 = vmatpush2.msra.mxu0 0.0
    %5914 = vmatprep.subr.mxu0 0.0
    %5915 = vmatpush2.msra.mxu0 0.0
    %5916 = vmatprep.subr.mxu0 0.0
    %5917 = vmatpush2.msra.mxu0 0.0
    %5918 = vmatprep.subr.mxu0 0.0
    %5919 = vmatpush2.msra.mxu0 0.0
    %5920 = vmatprep.subr.mxu0 0.0
    %5921 = vmatpush2.msra.mxu0 0.0
    %5922 = vmatprep.subr.mxu0 0.0
    %5923 = vmatpush2.msra.mxu0 0.0
    %5924 = vmatprep.subr.mxu0 0.0
    %5925 = vmatpush2.msra.mxu0 0.0
    %5926 = vmatprep.subr.mxu0 0.0
    %5927 = vmatpush2.msra.mxu0 0.0
    %5928 = vmatprep.subr.mxu0 0.0
    %5929 = vmatpush2.msra.mxu0 0.0
    %5930 = vmatprep.subr.mxu0 0.0
    %5931 = vmatpush2.msra.mxu0 0.0
    %5932 = vmatprep.subr.mxu0 0.0
    %5933 = vmatpush2.msra.mxu0 0.0
    %5934 = vmatprep.subr.mxu0 0.0
    %5935 = vmatpush2.msra.mxu0 0.0
    %5936 = vmatprep.subr.mxu0 0.0
    %5937 = vmatpush2.msra.mxu0 0.0
    %5938 = vmatprep.subr.mxu0 0.0
    %5939 = vmatpush2.msra.mxu0 0.0
    %5940 = vmatprep.subr.mxu0 0.0
    %5941 = vmatpush2.msra.mxu0 0.0
    %5942 = vmatprep.subr.mxu0 0.0
    %5943 = vmatpush2.msra.mxu0 0.0
    %5944 = vmatprep.mubr.f32.mxu0 0.0
    %v5945 = vand.u32 %v5598, 4294901760
    %v5946 = vsub.f32 %v5598, %v5945
    %v5947 = vand.u32 %v5946, 4294901760
    %5948 = vmatmul.mubr.f32.gmra.mxu0 %v5947
    %v5949 = vpop.f32.mrf.mxu0
    %v5950 = vadd.f32 %v5866, %v5949
    %v5951 = vpop.f32.mrf.mxu0
    %5952 = vmatprep.mubr.f32.mxu0 0.0
    %v5953 = vand.u32 %v5601, 4294901760
    %v5954 = vsub.f32 %v5601, %v5953
    %v5955 = vand.u32 %v5954, 4294901760
    %5956 = vmatmul.mubr.f32.gmra.mxu0 %v5955
    %v5957 = vpop.f32.mrf.mxu0
    %v5958 = vadd.f32 %v5873, %v5957
    %v5959 = vpop.f32.mrf.mxu0
    %5960 = vdwg.mxu0
    %5961 = vmatprep.subr.mxu0 0.0
    %5962 = vmatpush1.msra.mxu0 0.0
    %5963 = vmatprep.subr.mxu0 0.0
    %5964 = vmatpush1.msra.mxu0 0.0
    %5965 = vmatprep.subr.mxu0 0.0
    %5966 = vmatpush1.msra.mxu0 0.0
    %5967 = vmatprep.subr.mxu0 0.0
    %5968 = vmatpush1.msra.mxu0 0.0
    %5969 = vmatprep.subr.mxu0 0.0
    %5970 = vmatpush1.msra.mxu0 0.0
    %5971 = vmatprep.subr.mxu0 0.0
    %5972 = vmatpush1.msra.mxu0 0.0
    %5973 = vmatprep.subr.mxu0 0.0
    %5974 = vmatpush1.msra.mxu0 0.0
    %5975 = vmatprep.subr.mxu0 0.0
    %5976 = vmatpush1.msra.mxu0 0.0
    %5977 = vmatprep.subr.mxu0 0.0
    %5978 = vmatpush1.msra.mxu0 0.0
    %5979 = vmatprep.subr.mxu0 0.0
    %5980 = vmatpush1.msra.mxu0 0.0
    %5981 = vmatprep.subr.mxu0 0.0
    %5982 = vmatpush1.msra.mxu0 0.0
    %5983 = vmatprep.subr.mxu0 0.0
    %5984 = vmatpush1.msra.mxu0 0.0
    %5985 = vmatprep.subr.mxu0 0.0
    %v5986 = vand.u32 %v24, 4294901760
    %v5987 = vsub.f32 %v24, %v5986
    %v5988 = vand.u32 %v5987, 4294901760
    %5989 = vmatpush1.msra.mxu0 %v5988
    %5990 = vmatprep.subr.mxu0 0.0
    %v5991 = vand.u32 %v23, 4294901760
    %v5992 = vsub.f32 %v23, %v5991
    %v5993 = vand.u32 %v5992, 4294901760
    %5994 = vmatpush1.msra.mxu0 %v5993
    %5995 = vmatprep.subr.mxu0 0.0
    %v5996 = vand.u32 %v22, 4294901760
    %v5997 = vsub.f32 %v22, %v5996
    %v5998 = vand.u32 %v5997, 4294901760
    %5999 = vmatpush1.msra.mxu0 %v5998
    %6000 = vmatprep.subr.mxu0 0.0
    %v6001 = vand.u32 %v21, 4294901760
    %v6002 = vsub.f32 %v21, %v6001
    %v6003 = vand.u32 %v6002, 4294901760
    %6004 = vmatpush1.msra.mxu0 %v6003
    %6005 = vmatprep.subr.mxu0 0.0
    %6006 = vmatpush2.msra.mxu0 0.0
    %6007 = vmatprep.subr.mxu0 0.0
    %6008 = vmatpush2.msra.mxu0 0.0
    %6009 = vmatprep.subr.mxu0 0.0
    %6010 = vmatpush2.msra.mxu0 0.0
    %6011 = vmatprep.subr.mxu0 0.0
    %6012 = vmatpush2.msra.mxu0 0.0
    %6013 = vmatprep.subr.mxu0 0.0
    %6014 = vmatpush2.msra.mxu0 0.0
    %6015 = vmatprep.subr.mxu0 0.0
    %6016 = vmatpush2.msra.mxu0 0.0
    %6017 = vmatprep.subr.mxu0 0.0
    %6018 = vmatpush2.msra.mxu0 0.0
    %6019 = vmatprep.subr.mxu0 0.0
    %6020 = vmatpush2.msra.mxu0 0.0
    %6021 = vmatprep.subr.mxu0 0.0
    %6022 = vmatpush2.msra.mxu0 0.0
    %6023 = vmatprep.subr.mxu0 0.0
    %6024 = vmatpush2.msra.mxu0 0.0
    %6025 = vmatprep.subr.mxu0 0.0
    %6026 = vmatpush2.msra.mxu0 0.0
    %6027 = vmatprep.subr.mxu0 0.0
    %6028 = vmatpush2.msra.mxu0 0.0
    %6029 = vmatprep.subr.mxu0 0.0
    %6030 = vmatpush2.msra.mxu0 0.0
    %6031 = vmatprep.subr.mxu0 0.0
    %6032 = vmatpush2.msra.mxu0 0.0
    %6033 = vmatprep.subr.mxu0 0.0
    %6034 = vmatpush2.msra.mxu0 0.0
    %6035 = vmatprep.subr.mxu0 0.0
    %6036 = vmatpush2.msra.mxu0 0.0
    %6037 = vmatprep.mubr.f32.mxu0 0.0
    %v6038 = vand.u32 %v5598, 4294901760
    %6039 = vmatmul.mubr.f32.gmra.mxu0 %v6038
    %v6040 = vpop.f32.mrf.mxu0
    %v6041 = vadd.f32 %v5950, %v6040
    %v6042 = vpop.f32.mrf.mxu0
    %6043 = vmatprep.mubr.f32.mxu0 0.0
    %v6044 = vand.u32 %v5601, 4294901760
    %6045 = vmatmul.mubr.f32.gmra.mxu0 %v6044
    %v6046 = vpop.f32.mrf.mxu0
    %v6047 = vadd.f32 %v5958, %v6046
    %v6048 = vpop.f32.mrf.mxu0
    %6049 = vdwg.mxu0
    %6050 = vmatprep.subr.mxu0 0.0
    %6051 = vmatpush1.msra.mxu0 0.0
    %6052 = vmatprep.subr.mxu0 0.0
    %6053 = vmatpush1.msra.mxu0 0.0
    %6054 = vmatprep.subr.mxu0 0.0
    %6055 = vmatpush1.msra.mxu0 0.0
    %6056 = vmatprep.subr.mxu0 0.0
    %6057 = vmatpush1.msra.mxu0 0.0
    %6058 = vmatprep.subr.mxu0 0.0
    %6059 = vmatpush1.msra.mxu0 0.0
    %6060 = vmatprep.subr.mxu0 0.0
    %6061 = vmatpush1.msra.mxu0 0.0
    %6062 = vmatprep.subr.mxu0 0.0
    %6063 = vmatpush1.msra.mxu0 0.0
    %6064 = vmatprep.subr.mxu0 0.0
    %6065 = vmatpush1.msra.mxu0 0.0
    %6066 = vmatprep.subr.mxu0 0.0
    %6067 = vmatpush1.msra.mxu0 0.0
    %6068 = vmatprep.subr.mxu0 0.0
    %6069 = vmatpush1.msra.mxu0 0.0
    %6070 = vmatprep.subr.mxu0 0.0
    %6071 = vmatpush1.msra.mxu0 0.0
    %6072 = vmatprep.subr.mxu0 0.0
    %6073 = vmatpush1.msra.mxu0 0.0
    %6074 = vmatprep.subr.mxu0 0.0
    %v6075 = vand.u32 %v24, 4294901760
    %6076 = vmatpush1.msra.mxu0 %v6075
    %6077 = vmatprep.subr.mxu0 0.0
    %v6078 = vand.u32 %v23, 4294901760
    %6079 = vmatpush1.msra.mxu0 %v6078
    %6080 = vmatprep.subr.mxu0 0.0
    %v6081 = vand.u32 %v22, 4294901760
    %6082 = vmatpush1.msra.mxu0 %v6081
    %6083 = vmatprep.subr.mxu0 0.0
    %v6084 = vand.u32 %v21, 4294901760
    %6085 = vmatpush1.msra.mxu0 %v6084
    %6086 = vmatprep.subr.mxu0 0.0
    %6087 = vmatpush2.msra.mxu0 0.0
    %6088 = vmatprep.subr.mxu0 0.0
    %6089 = vmatpush2.msra.mxu0 0.0
    %6090 = vmatprep.subr.mxu0 0.0
    %6091 = vmatpush2.msra.mxu0 0.0
    %6092 = vmatprep.subr.mxu0 0.0
    %6093 = vmatpush2.msra.mxu0 0.0
    %6094 = vmatprep.subr.mxu0 0.0
    %6095 = vmatpush2.msra.mxu0 0.0
    %6096 = vmatprep.subr.mxu0 0.0
    %6097 = vmatpush2.msra.mxu0 0.0
    %6098 = vmatprep.subr.mxu0 0.0
    %6099 = vmatpush2.msra.mxu0 0.0
    %6100 = vmatprep.subr.mxu0 0.0
    %6101 = vmatpush2.msra.mxu0 0.0
    %6102 = vmatprep.subr.mxu0 0.0
    %6103 = vmatpush2.msra.mxu0 0.0
    %6104 = vmatprep.subr.mxu0 0.0
    %6105 = vmatpush2.msra.mxu0 0.0
    %6106 = vmatprep.subr.mxu0 0.0
    %6107 = vmatpush2.msra.mxu0 0.0
    %6108 = vmatprep.subr.mxu0 0.0
    %6109 = vmatpush2.msra.mxu0 0.0
    %6110 = vmatprep.subr.mxu0 0.0
    %6111 = vmatpush2.msra.mxu0 0.0
    %6112 = vmatprep.subr.mxu0 0.0
    %6113 = vmatpush2.msra.mxu0 0.0
    %6114 = vmatprep.subr.mxu0 0.0
    %6115 = vmatpush2.msra.mxu0 0.0
    %6116 = vmatprep.subr.mxu0 0.0
    %6117 = vmatpush2.msra.mxu0 0.0
    %6118 = vmatprep.mubr.f32.mxu0 0.0
    %v6119 = vand.u32 %v5598, 4294901760
    %6120 = vmatmul.mubr.f32.gmra.mxu0 %v6119
    %v6121 = vpop.f32.mrf.mxu0
    %v6122 = vadd.f32 %v6041, %v6121
    %v6123 = vpop.f32.mrf.mxu0
    %6124 = vmatprep.mubr.f32.mxu0 0.0
    %v6125 = vand.u32 %v5601, 4294901760
    %6126 = vmatmul.mubr.f32.gmra.mxu0 %v6125
    %v6127 = vpop.f32.mrf.mxu0
    %v6128 = vadd.f32 %v6047, %v6127
    %v6129 = vpop.f32.mrf.mxu0
    %6130 = vdwg.mxu0
    %v6131 = vadd.f32 %v5595, %v6122
    %v6132 = vadd.f32 %v5596, %v6128
    %v6133 = vxor.u32 %v6131, 2147483648
    %v6134 = vxor.u32 %v6132, 2147483648
    %v6135 = vmul.f32 %v6133, 1.442695
    %v6136 = vpow.pop %v6135
    %v6137 = vmul.f32 %v6134, 1.442695
    %v6138 = vpow.pop %v6137
    %v6139 = vadd.f32 %v6136, 1.0
    %v6140 = vadd.f32 %v6138, 1.0
    %v6141 = vrcp.pop %v6139
    %v6142 = vmul.f32 1.0, %v6141
    %v6143 = vrcp.pop %v6140
    %v6144 = vmul.f32 1.0, %v6143
    %s6145 = scalar_lea.vmem %s1, 80
    %v6146 = vld [vmem:[%s6145] sm:$0xff]
    %v6147 = vld [vmem:[%s6145 + $0x8] sm:$0xff]
    %6150 = vrot.lane.b32.xlu0 %v6142, 96
    %v6151 = vpop.permute.xlu0 %6150
    %6152 = vrot.lane.b32.xlu0 %v6144, 96
    %v6153 = vpop.permute.xlu0 %6152
    %v6156 = vmul.f32 %v5589, %v6151
    %v6157 = vmul.f32 %v5590, %v6153
    %v6159 = vsel %vm33, %v6156, 0
    %v6162 = vsel %vm33, %v6157, 0
    %6164 = vmatprep.subr.mxu0 0.0
    %6165 = vmatpush1.msra.mxu0 0.0
    %6166 = vmatprep.subr.mxu0 0.0
    %6167 = vmatpush1.msra.mxu0 0.0
    %6168 = vmatprep.subr.mxu0 0.0
    %6169 = vmatpush1.msra.mxu0 0.0
    %6170 = vmatprep.subr.mxu0 0.0
    %6171 = vmatpush1.msra.mxu0 0.0
    %6172 = vmatprep.subr.mxu0 0.0
    %6173 = vmatpush1.msra.mxu0 0.0
    %6174 = vmatprep.subr.mxu0 0.0
    %6175 = vmatpush1.msra.mxu0 0.0
    %6176 = vmatprep.subr.mxu0 0.0
    %6177 = vmatpush1.msra.mxu0 0.0
    %6178 = vmatprep.subr.mxu0 0.0
    %6179 = vmatpush1.msra.mxu0 0.0
    %6180 = vmatprep.subr.mxu0 0.0
    %6181 = vmatpush1.msra.mxu0 0.0
    %6182 = vmatprep.subr.mxu0 0.0
    %6183 = vmatpush1.msra.mxu0 0.0
    %6184 = vmatprep.subr.mxu0 0.0
    %6185 = vmatpush1.msra.mxu0 0.0
    %6186 = vmatprep.subr.mxu0 0.0
    %6187 = vmatpush1.msra.mxu0 0.0
    %6188 = vmatprep.subr.mxu0 0.0
    %v6189 = vand.u32 %v28, 4294901760
    %6190 = vmatpush1.msra.mxu0 %v6189
    %6191 = vmatprep.subr.mxu0 0.0
    %v6192 = vand.u32 %v27, 4294901760
    %6193 = vmatpush1.msra.mxu0 %v6192
    %6194 = vmatprep.subr.mxu0 0.0
    %v6195 = vand.u32 %v26, 4294901760
    %6196 = vmatpush1.msra.mxu0 %v6195
    %6197 = vmatprep.subr.mxu0 0.0
    %v6198 = vand.u32 %v25, 4294901760
    %6199 = vmatpush1.msra.mxu0 %v6198
    %6200 = vmatprep.subr.mxu0 0.0
    %6201 = vmatpush2.msra.mxu0 0.0
    %6202 = vmatprep.subr.mxu0 0.0
    %6203 = vmatpush2.msra.mxu0 0.0
    %6204 = vmatprep.subr.mxu0 0.0
    %6205 = vmatpush2.msra.mxu0 0.0
    %6206 = vmatprep.subr.mxu0 0.0
    %6207 = vmatpush2.msra.mxu0 0.0
    %6208 = vmatprep.subr.mxu0 0.0
    %6209 = vmatpush2.msra.mxu0 0.0
    %6210 = vmatprep.subr.mxu0 0.0
    %6211 = vmatpush2.msra.mxu0 0.0
    %6212 = vmatprep.subr.mxu0 0.0
    %6213 = vmatpush2.msra.mxu0 0.0
    %6214 = vmatprep.subr.mxu0 0.0
    %6215 = vmatpush2.msra.mxu0 0.0
    %6216 = vmatprep.subr.mxu0 0.0
    %6217 = vmatpush2.msra.mxu0 0.0
    %6218 = vmatprep.subr.mxu0 0.0
    %6219 = vmatpush2.msra.mxu0 0.0
    %6220 = vmatprep.subr.mxu0 0.0
    %6221 = vmatpush2.msra.mxu0 0.0
    %6222 = vmatprep.subr.mxu0 0.0
    %6223 = vmatpush2.msra.mxu0 0.0
    %6224 = vmatprep.subr.mxu0 0.0
    %6225 = vmatpush2.msra.mxu0 0.0
    %6226 = vmatprep.subr.mxu0 0.0
    %6227 = vmatpush2.msra.mxu0 0.0
    %6228 = vmatprep.subr.mxu0 0.0
    %6229 = vmatpush2.msra.mxu0 0.0
    %6230 = vmatprep.subr.mxu0 0.0
    %6231 = vmatpush2.msra.mxu0 0.0
    %6232 = vmatprep.mubr.f32.mxu0 0.0
    %v6233 = vand.u32 %v6159, 4294901760
    %v6234 = vsub.f32 %v6159, %v6233
    %v6235 = vand.u32 %v6234, 4294901760
    %v6236 = vsub.f32 %v6234, %v6235
    %v6237 = vand.u32 %v6236, 4294901760
    %6238 = vmatmul.mubr.f32.gmra.mxu0 %v6237
    %v6239 = vpop.f32.mrf.mxu0
    %v6240 = vadd.f32 0.0, %v6239
    %v6241 = vpop.f32.mrf.mxu0
    %6242 = vmatprep.mubr.f32.mxu0 0.0
    %v6243 = vand.u32 %v6162, 4294901760
    %v6244 = vsub.f32 %v6162, %v6243
    %v6245 = vand.u32 %v6244, 4294901760
    %v6246 = vsub.f32 %v6244, %v6245
    %v6247 = vand.u32 %v6246, 4294901760
    %6248 = vmatmul.mubr.f32.gmra.mxu0 %v6247
    %v6249 = vpop.f32.mrf.mxu0
    %v6250 = vadd.f32 0.0, %v6249
    %v6251 = vpop.f32.mrf.mxu0
    %6252 = vdwg.mxu0
    %6253 = vmatprep.subr.mxu0 0.0
    %6254 = vmatpush1.msra.mxu0 0.0
    %6255 = vmatprep.subr.mxu0 0.0
    %6256 = vmatpush1.msra.mxu0 0.0
    %6257 = vmatprep.subr.mxu0 0.0
    %6258 = vmatpush1.msra.mxu0 0.0
    %6259 = vmatprep.subr.mxu0 0.0
    %6260 = vmatpush1.msra.mxu0 0.0
    %6261 = vmatprep.subr.mxu0 0.0
    %6262 = vmatpush1.msra.mxu0 0.0
    %6263 = vmatprep.subr.mxu0 0.0
    %6264 = vmatpush1.msra.mxu0 0.0
    %6265 = vmatprep.subr.mxu0 0.0
    %6266 = vmatpush1.msra.mxu0 0.0
    %6267 = vmatprep.subr.mxu0 0.0
    %6268 = vmatpush1.msra.mxu0 0.0
    %6269 = vmatprep.subr.mxu0 0.0
    %6270 = vmatpush1.msra.mxu0 0.0
    %6271 = vmatprep.subr.mxu0 0.0
    %6272 = vmatpush1.msra.mxu0 0.0
    %6273 = vmatprep.subr.mxu0 0.0
    %6274 = vmatpush1.msra.mxu0 0.0
    %6275 = vmatprep.subr.mxu0 0.0
    %6276 = vmatpush1.msra.mxu0 0.0
    %6277 = vmatprep.subr.mxu0 0.0
    %v6278 = vand.u32 %v28, 4294901760
    %v6279 = vsub.f32 %v28, %v6278
    %v6280 = vand.u32 %v6279, 4294901760
    %v6281 = vsub.f32 %v6279, %v6280
    %v6282 = vand.u32 %v6281, 4294901760
    %6283 = vmatpush1.msra.mxu0 %v6282
    %6284 = vmatprep.subr.mxu0 0.0
    %v6285 = vand.u32 %v27, 4294901760
    %v6286 = vsub.f32 %v27, %v6285
    %v6287 = vand.u32 %v6286, 4294901760
    %v6288 = vsub.f32 %v6286, %v6287
    %v6289 = vand.u32 %v6288, 4294901760
    %6290 = vmatpush1.msra.mxu0 %v6289
    %6291 = vmatprep.subr.mxu0 0.0
    %v6292 = vand.u32 %v26, 4294901760
    %v6293 = vsub.f32 %v26, %v6292
    %v6294 = vand.u32 %v6293, 4294901760
    %v6295 = vsub.f32 %v6293, %v6294
    %v6296 = vand.u32 %v6295, 4294901760
    %6297 = vmatpush1.msra.mxu0 %v6296
    %6298 = vmatprep.subr.mxu0 0.0
    %v6299 = vand.u32 %v25, 4294901760
    %v6300 = vsub.f32 %v25, %v6299
    %v6301 = vand.u32 %v6300, 4294901760
    %v6302 = vsub.f32 %v6300, %v6301
    %v6303 = vand.u32 %v6302, 4294901760
    %6304 = vmatpush1.msra.mxu0 %v6303
    %6305 = vmatprep.subr.mxu0 0.0
    %6306 = vmatpush2.msra.mxu0 0.0
    %6307 = vmatprep.subr.mxu0 0.0
    %6308 = vmatpush2.msra.mxu0 0.0
    %6309 = vmatprep.subr.mxu0 0.0
    %6310 = vmatpush2.msra.mxu0 0.0
    %6311 = vmatprep.subr.mxu0 0.0
    %6312 = vmatpush2.msra.mxu0 0.0
    %6313 = vmatprep.subr.mxu0 0.0
    %6314 = vmatpush2.msra.mxu0 0.0
    %6315 = vmatprep.subr.mxu0 0.0
    %6316 = vmatpush2.msra.mxu0 0.0
    %6317 = vmatprep.subr.mxu0 0.0
    %6318 = vmatpush2.msra.mxu0 0.0
    %6319 = vmatprep.subr.mxu0 0.0
    %6320 = vmatpush2.msra.mxu0 0.0
    %6321 = vmatprep.subr.mxu0 0.0
    %6322 = vmatpush2.msra.mxu0 0.0
    %6323 = vmatprep.subr.mxu0 0.0
    %6324 = vmatpush2.msra.mxu0 0.0
    %6325 = vmatprep.subr.mxu0 0.0
    %6326 = vmatpush2.msra.mxu0 0.0
    %6327 = vmatprep.subr.mxu0 0.0
    %6328 = vmatpush2.msra.mxu0 0.0
    %6329 = vmatprep.subr.mxu0 0.0
    %6330 = vmatpush2.msra.mxu0 0.0
    %6331 = vmatprep.subr.mxu0 0.0
    %6332 = vmatpush2.msra.mxu0 0.0
    %6333 = vmatprep.subr.mxu0 0.0
    %6334 = vmatpush2.msra.mxu0 0.0
    %6335 = vmatprep.subr.mxu0 0.0
    %6336 = vmatpush2.msra.mxu0 0.0
    %6337 = vmatprep.mubr.f32.mxu0 0.0
    %v6338 = vand.u32 %v6159, 4294901760
    %6339 = vmatmul.mubr.f32.gmra.mxu0 %v6338
    %v6340 = vpop.f32.mrf.mxu0
    %v6341 = vadd.f32 %v6240, %v6340
    %v6342 = vpop.f32.mrf.mxu0
    %6343 = vmatprep.mubr.f32.mxu0 0.0
    %v6344 = vand.u32 %v6162, 4294901760
    %6345 = vmatmul.mubr.f32.gmra.mxu0 %v6344
    %v6346 = vpop.f32.mrf.mxu0
    %v6347 = vadd.f32 %v6250, %v6346
    %v6348 = vpop.f32.mrf.mxu0
    %6349 = vdwg.mxu0
    %6350 = vmatprep.subr.mxu0 0.0
    %6351 = vmatpush1.msra.mxu0 0.0
    %6352 = vmatprep.subr.mxu0 0.0
    %6353 = vmatpush1.msra.mxu0 0.0
    %6354 = vmatprep.subr.mxu0 0.0
    %6355 = vmatpush1.msra.mxu0 0.0
    %6356 = vmatprep.subr.mxu0 0.0
    %6357 = vmatpush1.msra.mxu0 0.0
    %6358 = vmatprep.subr.mxu0 0.0
    %6359 = vmatpush1.msra.mxu0 0.0
    %6360 = vmatprep.subr.mxu0 0.0
    %6361 = vmatpush1.msra.mxu0 0.0
    %6362 = vmatprep.subr.mxu0 0.0
    %6363 = vmatpush1.msra.mxu0 0.0
    %6364 = vmatprep.subr.mxu0 0.0
    %6365 = vmatpush1.msra.mxu0 0.0
    %6366 = vmatprep.subr.mxu0 0.0
    %6367 = vmatpush1.msra.mxu0 0.0
    %6368 = vmatprep.subr.mxu0 0.0
    %6369 = vmatpush1.msra.mxu0 0.0
    %6370 = vmatprep.subr.mxu0 0.0
    %6371 = vmatpush1.msra.mxu0 0.0
    %6372 = vmatprep.subr.mxu0 0.0
    %6373 = vmatpush1.msra.mxu0 0.0
    %6374 = vmatprep.subr.mxu0 0.0
    %v6375 = vand.u32 %v28, 4294901760
    %v6376 = vsub.f32 %v28, %v6375
    %6377 = vmatpush1.msra.mxu0 %v6376
    %6378 = vmatprep.subr.mxu0 0.0
    %v6379 = vand.u32 %v27, 4294901760
    %v6380 = vsub.f32 %v27, %v6379
    %6381 = vmatpush1.msra.mxu0 %v6380
    %6382 = vmatprep.subr.mxu0 0.0
    %v6383 = vand.u32 %v26, 4294901760
    %v6384 = vsub.f32 %v26, %v6383
    %6385 = vmatpush1.msra.mxu0 %v6384
    %6386 = vmatprep.subr.mxu0 0.0
    %v6387 = vand.u32 %v25, 4294901760
    %v6388 = vsub.f32 %v25, %v6387
    %6389 = vmatpush1.msra.mxu0 %v6388
    %6390 = vmatprep.subr.mxu0 0.0
    %6391 = vmatpush2.msra.mxu0 0.0
    %6392 = vmatprep.subr.mxu0 0.0
    %6393 = vmatpush2.msra.mxu0 0.0
    %6394 = vmatprep.subr.mxu0 0.0
    %6395 = vmatpush2.msra.mxu0 0.0
    %6396 = vmatprep.subr.mxu0 0.0
    %6397 = vmatpush2.msra.mxu0 0.0
    %6398 = vmatprep.subr.mxu0 0.0
    %6399 = vmatpush2.msra.mxu0 0.0
    %6400 = vmatprep.subr.mxu0 0.0
    %6401 = vmatpush2.msra.mxu0 0.0
    %6402 = vmatprep.subr.mxu0 0.0
    %6403 = vmatpush2.msra.mxu0 0.0
    %6404 = vmatprep.subr.mxu0 0.0
    %6405 = vmatpush2.msra.mxu0 0.0
    %6406 = vmatprep.subr.mxu0 0.0
    %6407 = vmatpush2.msra.mxu0 0.0
    %6408 = vmatprep.subr.mxu0 0.0
    %6409 = vmatpush2.msra.mxu0 0.0
    %6410 = vmatprep.subr.mxu0 0.0
    %6411 = vmatpush2.msra.mxu0 0.0
    %6412 = vmatprep.subr.mxu0 0.0
    %6413 = vmatpush2.msra.mxu0 0.0
    %6414 = vmatprep.subr.mxu0 0.0
    %6415 = vmatpush2.msra.mxu0 0.0
    %6416 = vmatprep.subr.mxu0 0.0
    %6417 = vmatpush2.msra.mxu0 0.0
    %6418 = vmatprep.subr.mxu0 0.0
    %6419 = vmatpush2.msra.mxu0 0.0
    %6420 = vmatprep.subr.mxu0 0.0
    %6421 = vmatpush2.msra.mxu0 0.0
    %6422 = vmatprep.mubr.f32.mxu0 0.0
    %v6423 = vand.u32 %v6159, 4294901760
    %v6424 = vsub.f32 %v6159, %v6423
    %6425 = vmatmul.mubr.f32.gmra.mxu0 %v6424
    %v6426 = vpop.f32.mrf.mxu0
    %v6427 = vadd.f32 %v6341, %v6426
    %v6428 = vpop.f32.mrf.mxu0
    %6429 = vmatprep.mubr.f32.mxu0 0.0
    %v6430 = vand.u32 %v6162, 4294901760
    %v6431 = vsub.f32 %v6162, %v6430
    %6432 = vmatmul.mubr.f32.gmra.mxu0 %v6431
    %v6433 = vpop.f32.mrf.mxu0
    %v6434 = vadd.f32 %v6347, %v6433
    %v6435 = vpop.f32.mrf.mxu0
    %6436 = vdwg.mxu0
    %6437 = vmatprep.subr.mxu0 0.0
    %6438 = vmatpush1.msra.mxu0 0.0
    %6439 = vmatprep.subr.mxu0 0.0
    %6440 = vmatpush1.msra.mxu0 0.0
    %6441 = vmatprep.subr.mxu0 0.0
    %6442 = vmatpush1.msra.mxu0 0.0
    %6443 = vmatprep.subr.mxu0 0.0
    %6444 = vmatpush1.msra.mxu0 0.0
    %6445 = vmatprep.subr.mxu0 0.0
    %6446 = vmatpush1.msra.mxu0 0.0
    %6447 = vmatprep.subr.mxu0 0.0
    %6448 = vmatpush1.msra.mxu0 0.0
    %6449 = vmatprep.subr.mxu0 0.0
    %6450 = vmatpush1.msra.mxu0 0.0
    %6451 = vmatprep.subr.mxu0 0.0
    %6452 = vmatpush1.msra.mxu0 0.0
    %6453 = vmatprep.subr.mxu0 0.0
    %6454 = vmatpush1.msra.mxu0 0.0
    %6455 = vmatprep.subr.mxu0 0.0
    %6456 = vmatpush1.msra.mxu0 0.0
    %6457 = vmatprep.subr.mxu0 0.0
    %6458 = vmatpush1.msra.mxu0 0.0
    %6459 = vmatprep.subr.mxu0 0.0
    %6460 = vmatpush1.msra.mxu0 0.0
    %6461 = vmatprep.subr.mxu0 0.0
    %v6462 = vand.u32 %v28, 4294901760
    %6463 = vmatpush1.msra.mxu0 %v6462
    %6464 = vmatprep.subr.mxu0 0.0
    %v6465 = vand.u32 %v27, 4294901760
    %6466 = vmatpush1.msra.mxu0 %v6465
    %6467 = vmatprep.subr.mxu0 0.0
    %v6468 = vand.u32 %v26, 4294901760
    %6469 = vmatpush1.msra.mxu0 %v6468
    %6470 = vmatprep.subr.mxu0 0.0
    %v6471 = vand.u32 %v25, 4294901760
    %6472 = vmatpush1.msra.mxu0 %v6471
    %6473 = vmatprep.subr.mxu0 0.0
    %6474 = vmatpush2.msra.mxu0 0.0
    %6475 = vmatprep.subr.mxu0 0.0
    %6476 = vmatpush2.msra.mxu0 0.0
    %6477 = vmatprep.subr.mxu0 0.0
    %6478 = vmatpush2.msra.mxu0 0.0
    %6479 = vmatprep.subr.mxu0 0.0
    %6480 = vmatpush2.msra.mxu0 0.0
    %6481 = vmatprep.subr.mxu0 0.0
    %6482 = vmatpush2.msra.mxu0 0.0
    %6483 = vmatprep.subr.mxu0 0.0
    %6484 = vmatpush2.msra.mxu0 0.0
    %6485 = vmatprep.subr.mxu0 0.0
    %6486 = vmatpush2.msra.mxu0 0.0
    %6487 = vmatprep.subr.mxu0 0.0
    %6488 = vmatpush2.msra.mxu0 0.0
    %6489 = vmatprep.subr.mxu0 0.0
    %6490 = vmatpush2.msra.mxu0 0.0
    %6491 = vmatprep.subr.mxu0 0.0
    %6492 = vmatpush2.msra.mxu0 0.0
    %6493 = vmatprep.subr.mxu0 0.0
    %6494 = vmatpush2.msra.mxu0 0.0
    %6495 = vmatprep.subr.mxu0 0.0
    %6496 = vmatpush2.msra.mxu0 0.0
    %6497 = vmatprep.subr.mxu0 0.0
    %6498 = vmatpush2.msra.mxu0 0.0
    %6499 = vmatprep.subr.mxu0 0.0
    %6500 = vmatpush2.msra.mxu0 0.0
    %6501 = vmatprep.subr.mxu0 0.0
    %6502 = vmatpush2.msra.mxu0 0.0
    %6503 = vmatprep.subr.mxu0 0.0
    %6504 = vmatpush2.msra.mxu0 0.0
    %6505 = vmatprep.mubr.f32.mxu0 0.0
    %v6506 = vand.u32 %v6159, 4294901760
    %v6507 = vsub.f32 %v6159, %v6506
    %v6508 = vand.u32 %v6507, 4294901760
    %6509 = vmatmul.mubr.f32.gmra.mxu0 %v6508
    %v6510 = vpop.f32.mrf.mxu0
    %v6511 = vadd.f32 %v6427, %v6510
    %v6512 = vpop.f32.mrf.mxu0
    %6513 = vmatprep.mubr.f32.mxu0 0.0
    %v6514 = vand.u32 %v6162, 4294901760
    %v6515 = vsub.f32 %v6162, %v6514
    %v6516 = vand.u32 %v6515, 4294901760
    %6517 = vmatmul.mubr.f32.gmra.mxu0 %v6516
    %v6518 = vpop.f32.mrf.mxu0
    %v6519 = vadd.f32 %v6434, %v6518
    %v6520 = vpop.f32.mrf.mxu0
    %6521 = vdwg.mxu0
    %6522 = vmatprep.subr.mxu0 0.0
    %6523 = vmatpush1.msra.mxu0 0.0
    %6524 = vmatprep.subr.mxu0 0.0
    %6525 = vmatpush1.msra.mxu0 0.0
    %6526 = vmatprep.subr.mxu0 0.0
    %6527 = vmatpush1.msra.mxu0 0.0
    %6528 = vmatprep.subr.mxu0 0.0
    %6529 = vmatpush1.msra.mxu0 0.0
    %6530 = vmatprep.subr.mxu0 0.0
    %6531 = vmatpush1.msra.mxu0 0.0
    %6532 = vmatprep.subr.mxu0 0.0
    %6533 = vmatpush1.msra.mxu0 0.0
    %6534 = vmatprep.subr.mxu0 0.0
    %6535 = vmatpush1.msra.mxu0 0.0
    %6536 = vmatprep.subr.mxu0 0.0
    %6537 = vmatpush1.msra.mxu0 0.0
    %6538 = vmatprep.subr.mxu0 0.0
    %6539 = vmatpush1.msra.mxu0 0.0
    %6540 = vmatprep.subr.mxu0 0.0
    %6541 = vmatpush1.msra.mxu0 0.0
    %6542 = vmatprep.subr.mxu0 0.0
    %6543 = vmatpush1.msra.mxu0 0.0
    %6544 = vmatprep.subr.mxu0 0.0
    %6545 = vmatpush1.msra.mxu0 0.0
    %6546 = vmatprep.subr.mxu0 0.0
    %v6547 = vand.u32 %v28, 4294901760
    %v6548 = vsub.f32 %v28, %v6547
    %v6549 = vand.u32 %v6548, 4294901760
    %6550 = vmatpush1.msra.mxu0 %v6549
    %6551 = vmatprep.subr.mxu0 0.0
    %v6552 = vand.u32 %v27, 4294901760
    %v6553 = vsub.f32 %v27, %v6552
    %v6554 = vand.u32 %v6553, 4294901760
    %6555 = vmatpush1.msra.mxu0 %v6554
    %6556 = vmatprep.subr.mxu0 0.0
    %v6557 = vand.u32 %v26, 4294901760
    %v6558 = vsub.f32 %v26, %v6557
    %v6559 = vand.u32 %v6558, 4294901760
    %6560 = vmatpush1.msra.mxu0 %v6559
    %6561 = vmatprep.subr.mxu0 0.0
    %v6562 = vand.u32 %v25, 4294901760
    %v6563 = vsub.f32 %v25, %v6562
    %v6564 = vand.u32 %v6563, 4294901760
    %6565 = vmatpush1.msra.mxu0 %v6564
    %6566 = vmatprep.subr.mxu0 0.0
    %6567 = vmatpush2.msra.mxu0 0.0
    %6568 = vmatprep.subr.mxu0 0.0
    %6569 = vmatpush2.msra.mxu0 0.0
    %6570 = vmatprep.subr.mxu0 0.0
    %6571 = vmatpush2.msra.mxu0 0.0
    %6572 = vmatprep.subr.mxu0 0.0
    %6573 = vmatpush2.msra.mxu0 0.0
    %6574 = vmatprep.subr.mxu0 0.0
    %6575 = vmatpush2.msra.mxu0 0.0
    %6576 = vmatprep.subr.mxu0 0.0
    %6577 = vmatpush2.msra.mxu0 0.0
    %6578 = vmatprep.subr.mxu0 0.0
    %6579 = vmatpush2.msra.mxu0 0.0
    %6580 = vmatprep.subr.mxu0 0.0
    %6581 = vmatpush2.msra.mxu0 0.0
    %6582 = vmatprep.subr.mxu0 0.0
    %6583 = vmatpush2.msra.mxu0 0.0
    %6584 = vmatprep.subr.mxu0 0.0
    %6585 = vmatpush2.msra.mxu0 0.0
    %6586 = vmatprep.subr.mxu0 0.0
    %6587 = vmatpush2.msra.mxu0 0.0
    %6588 = vmatprep.subr.mxu0 0.0
    %6589 = vmatpush2.msra.mxu0 0.0
    %6590 = vmatprep.subr.mxu0 0.0
    %6591 = vmatpush2.msra.mxu0 0.0
    %6592 = vmatprep.subr.mxu0 0.0
    %6593 = vmatpush2.msra.mxu0 0.0
    %6594 = vmatprep.subr.mxu0 0.0
    %6595 = vmatpush2.msra.mxu0 0.0
    %6596 = vmatprep.subr.mxu0 0.0
    %6597 = vmatpush2.msra.mxu0 0.0
    %6598 = vmatprep.mubr.f32.mxu0 0.0
    %v6599 = vand.u32 %v6159, 4294901760
    %6600 = vmatmul.mubr.f32.gmra.mxu0 %v6599
    %v6601 = vpop.f32.mrf.mxu0
    %v6602 = vadd.f32 %v6511, %v6601
    %v6603 = vpop.f32.mrf.mxu0
    %6604 = vmatprep.mubr.f32.mxu0 0.0
    %v6605 = vand.u32 %v6162, 4294901760
    %6606 = vmatmul.mubr.f32.gmra.mxu0 %v6605
    %v6607 = vpop.f32.mrf.mxu0
    %v6608 = vadd.f32 %v6519, %v6607
    %v6609 = vpop.f32.mrf.mxu0
    %6610 = vdwg.mxu0
    %6611 = vmatprep.subr.mxu0 0.0
    %6612 = vmatpush1.msra.mxu0 0.0
    %6613 = vmatprep.subr.mxu0 0.0
    %6614 = vmatpush1.msra.mxu0 0.0
    %6615 = vmatprep.subr.mxu0 0.0
    %6616 = vmatpush1.msra.mxu0 0.0
    %6617 = vmatprep.subr.mxu0 0.0
    %6618 = vmatpush1.msra.mxu0 0.0
    %6619 = vmatprep.subr.mxu0 0.0
    %6620 = vmatpush1.msra.mxu0 0.0
    %6621 = vmatprep.subr.mxu0 0.0
    %6622 = vmatpush1.msra.mxu0 0.0
    %6623 = vmatprep.subr.mxu0 0.0
    %6624 = vmatpush1.msra.mxu0 0.0
    %6625 = vmatprep.subr.mxu0 0.0
    %6626 = vmatpush1.msra.mxu0 0.0
    %6627 = vmatprep.subr.mxu0 0.0
    %6628 = vmatpush1.msra.mxu0 0.0
    %6629 = vmatprep.subr.mxu0 0.0
    %6630 = vmatpush1.msra.mxu0 0.0
    %6631 = vmatprep.subr.mxu0 0.0
    %6632 = vmatpush1.msra.mxu0 0.0
    %6633 = vmatprep.subr.mxu0 0.0
    %6634 = vmatpush1.msra.mxu0 0.0
    %6635 = vmatprep.subr.mxu0 0.0
    %v6636 = vand.u32 %v28, 4294901760
    %6637 = vmatpush1.msra.mxu0 %v6636
    %6638 = vmatprep.subr.mxu0 0.0
    %v6639 = vand.u32 %v27, 4294901760
    %6640 = vmatpush1.msra.mxu0 %v6639
    %6641 = vmatprep.subr.mxu0 0.0
    %v6642 = vand.u32 %v26, 4294901760
    %6643 = vmatpush1.msra.mxu0 %v6642
    %6644 = vmatprep.subr.mxu0 0.0
    %v6645 = vand.u32 %v25, 4294901760
    %6646 = vmatpush1.msra.mxu0 %v6645
    %6647 = vmatprep.subr.mxu0 0.0
    %6648 = vmatpush2.msra.mxu0 0.0
    %6649 = vmatprep.subr.mxu0 0.0
    %6650 = vmatpush2.msra.mxu0 0.0
    %6651 = vmatprep.subr.mxu0 0.0
    %6652 = vmatpush2.msra.mxu0 0.0
    %6653 = vmatprep.subr.mxu0 0.0
    %6654 = vmatpush2.msra.mxu0 0.0
    %6655 = vmatprep.subr.mxu0 0.0
    %6656 = vmatpush2.msra.mxu0 0.0
    %6657 = vmatprep.subr.mxu0 0.0
    %6658 = vmatpush2.msra.mxu0 0.0
    %6659 = vmatprep.subr.mxu0 0.0
    %6660 = vmatpush2.msra.mxu0 0.0
    %6661 = vmatprep.subr.mxu0 0.0
    %6662 = vmatpush2.msra.mxu0 0.0
    %6663 = vmatprep.subr.mxu0 0.0
    %6664 = vmatpush2.msra.mxu0 0.0
    %6665 = vmatprep.subr.mxu0 0.0
    %6666 = vmatpush2.msra.mxu0 0.0
    %6667 = vmatprep.subr.mxu0 0.0
    %6668 = vmatpush2.msra.mxu0 0.0
    %6669 = vmatprep.subr.mxu0 0.0
    %6670 = vmatpush2.msra.mxu0 0.0
    %6671 = vmatprep.subr.mxu0 0.0
    %6672 = vmatpush2.msra.mxu0 0.0
    %6673 = vmatprep.subr.mxu0 0.0
    %6674 = vmatpush2.msra.mxu0 0.0
    %6675 = vmatprep.subr.mxu0 0.0
    %6676 = vmatpush2.msra.mxu0 0.0
    %6677 = vmatprep.subr.mxu0 0.0
    %6678 = vmatpush2.msra.mxu0 0.0
    %6679 = vmatprep.mubr.f32.mxu0 0.0
    %v6680 = vand.u32 %v6159, 4294901760
    %6681 = vmatmul.mubr.f32.gmra.mxu0 %v6680
    %v6682 = vpop.f32.mrf.mxu0
    %v6683 = vadd.f32 %v6602, %v6682
    %v6684 = vpop.f32.mrf.mxu0
    %6685 = vmatprep.mubr.f32.mxu0 0.0
    %v6686 = vand.u32 %v6162, 4294901760
    %6687 = vmatmul.mubr.f32.gmra.mxu0 %v6686
    %v6688 = vpop.f32.mrf.mxu0
    %v6689 = vadd.f32 %v6608, %v6688
    %v6690 = vpop.f32.mrf.mxu0
    %6691 = vdwg.mxu0
    %v6692 = vadd.f32 %v6146, %v6683
    %v6693 = vadd.f32 %v6147, %v6689
    %v6694 = vtanh.pop %v6692
    %v6695 = vtanh.pop %v6693
    %v6696 = vmul.f32 %v6142, %v5589
    %v6697 = vmul.f32 %v6144, %v5590
    %v6698 = vsub.f32 1.0, %v6142
    %v6699 = vsub.f32 1.0, %v6144
    %v6700 = vmul.f32 %v6698, %v6694
    %v6701 = vmul.f32 %v6699, %v6695
    %v6702 = vadd.f32 %v6696, %v6700
    %v6703 = vadd.f32 %v6697, %v6701
    %s6704 = scalar_lea.vmem [#allocation2], 80
    %6705 = vst.msk [vmem:[%s6704] sm:$0xff] %vm33, %v6702
    %6706 = vst.msk [vmem:[%s6704 + $0x8] sm:$0xff] %vm33, %v6703
    %s6707 = scalar_lea.vmem %s0, 96
    %v6708 = vld [vmem:[%s6707] sm:$0xff]
    %v6709 = vld [vmem:[%s6707 + $0x8] sm:$0xff]
    %v6711 = vsel %vm33, %v6702, 0
    %v6714 = vsel %vm33, %v6703, 0
    %6716 = vmatprep.subr.mxu0 0.0
    %6717 = vmatpush1.msra.mxu0 0.0
    %6718 = vmatprep.subr.mxu0 0.0
    %6719 = vmatpush1.msra.mxu0 0.0
    %6720 = vmatprep.subr.mxu0 0.0
    %6721 = vmatpush1.msra.mxu0 0.0
    %6722 = vmatprep.subr.mxu0 0.0
    %6723 = vmatpush1.msra.mxu0 0.0
    %6724 = vmatprep.subr.mxu0 0.0
    %6725 = vmatpush1.msra.mxu0 0.0
    %6726 = vmatprep.subr.mxu0 0.0
    %6727 = vmatpush1.msra.mxu0 0.0
    %6728 = vmatprep.subr.mxu0 0.0
    %6729 = vmatpush1.msra.mxu0 0.0
    %6730 = vmatprep.subr.mxu0 0.0
    %6731 = vmatpush1.msra.mxu0 0.0
    %6732 = vmatprep.subr.mxu0 0.0
    %6733 = vmatpush1.msra.mxu0 0.0
    %6734 = vmatprep.subr.mxu0 0.0
    %6735 = vmatpush1.msra.mxu0 0.0
    %6736 = vmatprep.subr.mxu0 0.0
    %6737 = vmatpush1.msra.mxu0 0.0
    %6738 = vmatprep.subr.mxu0 0.0
    %6739 = vmatpush1.msra.mxu0 0.0
    %6740 = vmatprep.subr.mxu0 0.0
    %v6741 = vand.u32 %v24, 4294901760
    %6742 = vmatpush1.msra.mxu0 %v6741
    %6743 = vmatprep.subr.mxu0 0.0
    %v6744 = vand.u32 %v23, 4294901760
    %6745 = vmatpush1.msra.mxu0 %v6744
    %6746 = vmatprep.subr.mxu0 0.0
    %v6747 = vand.u32 %v22, 4294901760
    %6748 = vmatpush1.msra.mxu0 %v6747
    %6749 = vmatprep.subr.mxu0 0.0
    %v6750 = vand.u32 %v21, 4294901760
    %6751 = vmatpush1.msra.mxu0 %v6750
    %6752 = vmatprep.subr.mxu0 0.0
    %6753 = vmatpush2.msra.mxu0 0.0
    %6754 = vmatprep.subr.mxu0 0.0
    %6755 = vmatpush2.msra.mxu0 0.0
    %6756 = vmatprep.subr.mxu0 0.0
    %6757 = vmatpush2.msra.mxu0 0.0
    %6758 = vmatprep.subr.mxu0 0.0
    %6759 = vmatpush2.msra.mxu0 0.0
    %6760 = vmatprep.subr.mxu0 0.0
    %6761 = vmatpush2.msra.mxu0 0.0
    %6762 = vmatprep.subr.mxu0 0.0
    %6763 = vmatpush2.msra.mxu0 0.0
    %6764 = vmatprep.subr.mxu0 0.0
    %6765 = vmatpush2.msra.mxu0 0.0
    %6766 = vmatprep.subr.mxu0 0.0
    %6767 = vmatpush2.msra.mxu0 0.0
    %6768 = vmatprep.subr.mxu0 0.0
    %6769 = vmatpush2.msra.mxu0 0.0
    %6770 = vmatprep.subr.mxu0 0.0
    %6771 = vmatpush2.msra.mxu0 0.0
    %6772 = vmatprep.subr.mxu0 0.0
    %6773 = vmatpush2.msra.mxu0 0.0
    %6774 = vmatprep.subr.mxu0 0.0
    %6775 = vmatpush2.msra.mxu0 0.0
    %6776 = vmatprep.subr.mxu0 0.0
    %6777 = vmatpush2.msra.mxu0 0.0
    %6778 = vmatprep.subr.mxu0 0.0
    %6779 = vmatpush2.msra.mxu0 0.0
    %6780 = vmatprep.subr.mxu0 0.0
    %6781 = vmatpush2.msra.mxu0 0.0
    %6782 = vmatprep.subr.mxu0 0.0
    %6783 = vmatpush2.msra.mxu0 0.0
    %6784 = vmatprep.mubr.f32.mxu0 0.0
    %v6785 = vand.u32 %v6711, 4294901760
    %v6786 = vsub.f32 %v6711, %v6785
    %v6787 = vand.u32 %v6786, 4294901760
    %v6788 = vsub.f32 %v6786, %v6787
    %v6789 = vand.u32 %v6788, 4294901760
    %6790 = vmatmul.mubr.f32.gmra.mxu0 %v6789
    %v6791 = vpop.f32.mrf.mxu0
    %v6792 = vadd.f32 0.0, %v6791
    %v6793 = vpop.f32.mrf.mxu0
    %6794 = vmatprep.mubr.f32.mxu0 0.0
    %v6795 = vand.u32 %v6714, 4294901760
    %v6796 = vsub.f32 %v6714, %v6795
    %v6797 = vand.u32 %v6796, 4294901760
    %v6798 = vsub.f32 %v6796, %v6797
    %v6799 = vand.u32 %v6798, 4294901760
    %6800 = vmatmul.mubr.f32.gmra.mxu0 %v6799
    %v6801 = vpop.f32.mrf.mxu0
    %v6802 = vadd.f32 0.0, %v6801
    %v6803 = vpop.f32.mrf.mxu0
    %6804 = vdwg.mxu0
    %6805 = vmatprep.subr.mxu0 0.0
    %6806 = vmatpush1.msra.mxu0 0.0
    %6807 = vmatprep.subr.mxu0 0.0
    %6808 = vmatpush1.msra.mxu0 0.0
    %6809 = vmatprep.subr.mxu0 0.0
    %6810 = vmatpush1.msra.mxu0 0.0
    %6811 = vmatprep.subr.mxu0 0.0
    %6812 = vmatpush1.msra.mxu0 0.0
    %6813 = vmatprep.subr.mxu0 0.0
    %6814 = vmatpush1.msra.mxu0 0.0
    %6815 = vmatprep.subr.mxu0 0.0
    %6816 = vmatpush1.msra.mxu0 0.0
    %6817 = vmatprep.subr.mxu0 0.0
    %6818 = vmatpush1.msra.mxu0 0.0
    %6819 = vmatprep.subr.mxu0 0.0
    %6820 = vmatpush1.msra.mxu0 0.0
    %6821 = vmatprep.subr.mxu0 0.0
    %6822 = vmatpush1.msra.mxu0 0.0
    %6823 = vmatprep.subr.mxu0 0.0
    %6824 = vmatpush1.msra.mxu0 0.0
    %6825 = vmatprep.subr.mxu0 0.0
    %6826 = vmatpush1.msra.mxu0 0.0
    %6827 = vmatprep.subr.mxu0 0.0
    %6828 = vmatpush1.msra.mxu0 0.0
    %6829 = vmatprep.subr.mxu0 0.0
    %v6830 = vand.u32 %v24, 4294901760
    %v6831 = vsub.f32 %v24, %v6830
    %v6832 = vand.u32 %v6831, 4294901760
    %v6833 = vsub.f32 %v6831, %v6832
    %v6834 = vand.u32 %v6833, 4294901760
    %6835 = vmatpush1.msra.mxu0 %v6834
    %6836 = vmatprep.subr.mxu0 0.0
    %v6837 = vand.u32 %v23, 4294901760
    %v6838 = vsub.f32 %v23, %v6837
    %v6839 = vand.u32 %v6838, 4294901760
    %v6840 = vsub.f32 %v6838, %v6839
    %v6841 = vand.u32 %v6840, 4294901760
    %6842 = vmatpush1.msra.mxu0 %v6841
    %6843 = vmatprep.subr.mxu0 0.0
    %v6844 = vand.u32 %v22, 4294901760
    %v6845 = vsub.f32 %v22, %v6844
    %v6846 = vand.u32 %v6845, 4294901760
    %v6847 = vsub.f32 %v6845, %v6846
    %v6848 = vand.u32 %v6847, 4294901760
    %6849 = vmatpush1.msra.mxu0 %v6848
    %6850 = vmatprep.subr.mxu0 0.0
    %v6851 = vand.u32 %v21, 4294901760
    %v6852 = vsub.f32 %v21, %v6851
    %v6853 = vand.u32 %v6852, 4294901760
    %v6854 = vsub.f32 %v6852, %v6853
    %v6855 = vand.u32 %v6854, 4294901760
    %6856 = vmatpush1.msra.mxu0 %v6855
    %6857 = vmatprep.subr.mxu0 0.0
    %6858 = vmatpush2.msra.mxu0 0.0
    %6859 = vmatprep.subr.mxu0 0.0
    %6860 = vmatpush2.msra.mxu0 0.0
    %6861 = vmatprep.subr.mxu0 0.0
    %6862 = vmatpush2.msra.mxu0 0.0
    %6863 = vmatprep.subr.mxu0 0.0
    %6864 = vmatpush2.msra.mxu0 0.0
    %6865 = vmatprep.subr.mxu0 0.0
    %6866 = vmatpush2.msra.mxu0 0.0
    %6867 = vmatprep.subr.mxu0 0.0
    %6868 = vmatpush2.msra.mxu0 0.0
    %6869 = vmatprep.subr.mxu0 0.0
    %6870 = vmatpush2.msra.mxu0 0.0
    %6871 = vmatprep.subr.mxu0 0.0
    %6872 = vmatpush2.msra.mxu0 0.0
    %6873 = vmatprep.subr.mxu0 0.0
    %6874 = vmatpush2.msra.mxu0 0.0
    %6875 = vmatprep.subr.mxu0 0.0
    %6876 = vmatpush2.msra.mxu0 0.0
    %6877 = vmatprep.subr.mxu0 0.0
    %6878 = vmatpush2.msra.mxu0 0.0
    %6879 = vmatprep.subr.mxu0 0.0
    %6880 = vmatpush2.msra.mxu0 0.0
    %6881 = vmatprep.subr.mxu0 0.0
    %6882 = vmatpush2.msra.mxu0 0.0
    %6883 = vmatprep.subr.mxu0 0.0
    %6884 = vmatpush2.msra.mxu0 0.0
    %6885 = vmatprep.subr.mxu0 0.0
    %6886 = vmatpush2.msra.mxu0 0.0
    %6887 = vmatprep.subr.mxu0 0.0
    %6888 = vmatpush2.msra.mxu0 0.0
    %6889 = vmatprep.mubr.f32.mxu0 0.0
    %v6890 = vand.u32 %v6711, 4294901760
    %6891 = vmatmul.mubr.f32.gmra.mxu0 %v6890
    %v6892 = vpop.f32.mrf.mxu0
    %v6893 = vadd.f32 %v6792, %v6892
    %v6894 = vpop.f32.mrf.mxu0
    %6895 = vmatprep.mubr.f32.mxu0 0.0
    %v6896 = vand.u32 %v6714, 4294901760
    %6897 = vmatmul.mubr.f32.gmra.mxu0 %v6896
    %v6898 = vpop.f32.mrf.mxu0
    %v6899 = vadd.f32 %v6802, %v6898
    %v6900 = vpop.f32.mrf.mxu0
    %6901 = vdwg.mxu0
    %6902 = vmatprep.subr.mxu0 0.0
    %6903 = vmatpush1.msra.mxu0 0.0
    %6904 = vmatprep.subr.mxu0 0.0
    %6905 = vmatpush1.msra.mxu0 0.0
    %6906 = vmatprep.subr.mxu0 0.0
    %6907 = vmatpush1.msra.mxu0 0.0
    %6908 = vmatprep.subr.mxu0 0.0
    %6909 = vmatpush1.msra.mxu0 0.0
    %6910 = vmatprep.subr.mxu0 0.0
    %6911 = vmatpush1.msra.mxu0 0.0
    %6912 = vmatprep.subr.mxu0 0.0
    %6913 = vmatpush1.msra.mxu0 0.0
    %6914 = vmatprep.subr.mxu0 0.0
    %6915 = vmatpush1.msra.mxu0 0.0
    %6916 = vmatprep.subr.mxu0 0.0
    %6917 = vmatpush1.msra.mxu0 0.0
    %6918 = vmatprep.subr.mxu0 0.0
    %6919 = vmatpush1.msra.mxu0 0.0
    %6920 = vmatprep.subr.mxu0 0.0
    %6921 = vmatpush1.msra.mxu0 0.0
    %6922 = vmatprep.subr.mxu0 0.0
    %6923 = vmatpush1.msra.mxu0 0.0
    %6924 = vmatprep.subr.mxu0 0.0
    %6925 = vmatpush1.msra.mxu0 0.0
    %6926 = vmatprep.subr.mxu0 0.0
    %v6927 = vand.u32 %v24, 4294901760
    %v6928 = vsub.f32 %v24, %v6927
    %6929 = vmatpush1.msra.mxu0 %v6928
    %6930 = vmatprep.subr.mxu0 0.0
    %v6931 = vand.u32 %v23, 4294901760
    %v6932 = vsub.f32 %v23, %v6931
    %6933 = vmatpush1.msra.mxu0 %v6932
    %6934 = vmatprep.subr.mxu0 0.0
    %v6935 = vand.u32 %v22, 4294901760
    %v6936 = vsub.f32 %v22, %v6935
    %6937 = vmatpush1.msra.mxu0 %v6936
    %6938 = vmatprep.subr.mxu0 0.0
    %v6939 = vand.u32 %v21, 4294901760
    %v6940 = vsub.f32 %v21, %v6939
    %6941 = vmatpush1.msra.mxu0 %v6940
    %6942 = vmatprep.subr.mxu0 0.0
    %6943 = vmatpush2.msra.mxu0 0.0
    %6944 = vmatprep.subr.mxu0 0.0
    %6945 = vmatpush2.msra.mxu0 0.0
    %6946 = vmatprep.subr.mxu0 0.0
    %6947 = vmatpush2.msra.mxu0 0.0
    %6948 = vmatprep.subr.mxu0 0.0
    %6949 = vmatpush2.msra.mxu0 0.0
    %6950 = vmatprep.subr.mxu0 0.0
    %6951 = vmatpush2.msra.mxu0 0.0
    %6952 = vmatprep.subr.mxu0 0.0
    %6953 = vmatpush2.msra.mxu0 0.0
    %6954 = vmatprep.subr.mxu0 0.0
    %6955 = vmatpush2.msra.mxu0 0.0
    %6956 = vmatprep.subr.mxu0 0.0
    %6957 = vmatpush2.msra.mxu0 0.0
    %6958 = vmatprep.subr.mxu0 0.0
    %6959 = vmatpush2.msra.mxu0 0.0
    %6960 = vmatprep.subr.mxu0 0.0
    %6961 = vmatpush2.msra.mxu0 0.0
    %6962 = vmatprep.subr.mxu0 0.0
    %6963 = vmatpush2.msra.mxu0 0.0
    %6964 = vmatprep.subr.mxu0 0.0
    %6965 = vmatpush2.msra.mxu0 0.0
    %6966 = vmatprep.subr.mxu0 0.0
    %6967 = vmatpush2.msra.mxu0 0.0
    %6968 = vmatprep.subr.mxu0 0.0
    %6969 = vmatpush2.msra.mxu0 0.0
    %6970 = vmatprep.subr.mxu0 0.0
    %6971 = vmatpush2.msra.mxu0 0.0
    %6972 = vmatprep.subr.mxu0 0.0
    %6973 = vmatpush2.msra.mxu0 0.0
    %6974 = vmatprep.mubr.f32.mxu0 0.0
    %v6975 = vand.u32 %v6711, 4294901760
    %v6976 = vsub.f32 %v6711, %v6975
    %6977 = vmatmul.mubr.f32.gmra.mxu0 %v6976
    %v6978 = vpop.f32.mrf.mxu0
    %v6979 = vadd.f32 %v6893, %v6978
    %v6980 = vpop.f32.mrf.mxu0
    %6981 = vmatprep.mubr.f32.mxu0 0.0
    %v6982 = vand.u32 %v6714, 4294901760
    %v6983 = vsub.f32 %v6714, %v6982
    %6984 = vmatmul.mubr.f32.gmra.mxu0 %v6983
    %v6985 = vpop.f32.mrf.mxu0
    %v6986 = vadd.f32 %v6899, %v6985
    %v6987 = vpop.f32.mrf.mxu0
    %6988 = vdwg.mxu0
    %6989 = vmatprep.subr.mxu0 0.0
    %6990 = vmatpush1.msra.mxu0 0.0
    %6991 = vmatprep.subr.mxu0 0.0
    %6992 = vmatpush1.msra.mxu0 0.0
    %6993 = vmatprep.subr.mxu0 0.0
    %6994 = vmatpush1.msra.mxu0 0.0
    %6995 = vmatprep.subr.mxu0 0.0
    %6996 = vmatpush1.msra.mxu0 0.0
    %6997 = vmatprep.subr.mxu0 0.0
    %6998 = vmatpush1.msra.mxu0 0.0
    %6999 = vmatprep.subr.mxu0 0.0
    %7000 = vmatpush1.msra.mxu0 0.0
    %7001 = vmatprep.subr.mxu0 0.0
    %7002 = vmatpush1.msra.mxu0 0.0
    %7003 = vmatprep.subr.mxu0 0.0
    %7004 = vmatpush1.msra.mxu0 0.0
    %7005 = vmatprep.subr.mxu0 0.0
    %7006 = vmatpush1.msra.mxu0 0.0
    %7007 = vmatprep.subr.mxu0 0.0
    %7008 = vmatpush1.msra.mxu0 0.0
    %7009 = vmatprep.subr.mxu0 0.0
    %7010 = vmatpush1.msra.mxu0 0.0
    %7011 = vmatprep.subr.mxu0 0.0
    %7012 = vmatpush1.msra.mxu0 0.0
    %7013 = vmatprep.subr.mxu0 0.0
    %v7014 = vand.u32 %v24, 4294901760
    %7015 = vmatpush1.msra.mxu0 %v7014
    %7016 = vmatprep.subr.mxu0 0.0
    %v7017 = vand.u32 %v23, 4294901760
    %7018 = vmatpush1.msra.mxu0 %v7017
    %7019 = vmatprep.subr.mxu0 0.0
    %v7020 = vand.u32 %v22, 4294901760
    %7021 = vmatpush1.msra.mxu0 %v7020
    %7022 = vmatprep.subr.mxu0 0.0
    %v7023 = vand.u32 %v21, 4294901760
    %7024 = vmatpush1.msra.mxu0 %v7023
    %7025 = vmatprep.subr.mxu0 0.0
    %7026 = vmatpush2.msra.mxu0 0.0
    %7027 = vmatprep.subr.mxu0 0.0
    %7028 = vmatpush2.msra.mxu0 0.0
    %7029 = vmatprep.subr.mxu0 0.0
    %7030 = vmatpush2.msra.mxu0 0.0
    %7031 = vmatprep.subr.mxu0 0.0
    %7032 = vmatpush2.msra.mxu0 0.0
    %7033 = vmatprep.subr.mxu0 0.0
    %7034 = vmatpush2.msra.mxu0 0.0
    %7035 = vmatprep.subr.mxu0 0.0
    %7036 = vmatpush2.msra.mxu0 0.0
    %7037 = vmatprep.subr.mxu0 0.0
    %7038 = vmatpush2.msra.mxu0 0.0
    %7039 = vmatprep.subr.mxu0 0.0
    %7040 = vmatpush2.msra.mxu0 0.0
    %7041 = vmatprep.subr.mxu0 0.0
    %7042 = vmatpush2.msra.mxu0 0.0
    %7043 = vmatprep.subr.mxu0 0.0
    %7044 = vmatpush2.msra.mxu0 0.0
    %7045 = vmatprep.subr.mxu0 0.0
    %7046 = vmatpush2.msra.mxu0 0.0
    %7047 = vmatprep.subr.mxu0 0.0
    %7048 = vmatpush2.msra.mxu0 0.0
    %7049 = vmatprep.subr.mxu0 0.0
    %7050 = vmatpush2.msra.mxu0 0.0
    %7051 = vmatprep.subr.mxu0 0.0
    %7052 = vmatpush2.msra.mxu0 0.0
    %7053 = vmatprep.subr.mxu0 0.0
    %7054 = vmatpush2.msra.mxu0 0.0
    %7055 = vmatprep.subr.mxu0 0.0
    %7056 = vmatpush2.msra.mxu0 0.0
    %7057 = vmatprep.mubr.f32.mxu0 0.0
    %v7058 = vand.u32 %v6711, 4294901760
    %v7059 = vsub.f32 %v6711, %v7058
    %v7060 = vand.u32 %v7059, 4294901760
    %7061 = vmatmul.mubr.f32.gmra.mxu0 %v7060
    %v7062 = vpop.f32.mrf.mxu0
    %v7063 = vadd.f32 %v6979, %v7062
    %v7064 = vpop.f32.mrf.mxu0
    %7065 = vmatprep.mubr.f32.mxu0 0.0
    %v7066 = vand.u32 %v6714, 4294901760
    %v7067 = vsub.f32 %v6714, %v7066
    %v7068 = vand.u32 %v7067, 4294901760
    %7069 = vmatmul.mubr.f32.gmra.mxu0 %v7068
    %v7070 = vpop.f32.mrf.mxu0
    %v7071 = vadd.f32 %v6986, %v7070
    %v7072 = vpop.f32.mrf.mxu0
    %7073 = vdwg.mxu0
    %7074 = vmatprep.subr.mxu0 0.0
    %7075 = vmatpush1.msra.mxu0 0.0
    %7076 = vmatprep.subr.mxu0 0.0
    %7077 = vmatpush1.msra.mxu0 0.0
    %7078 = vmatprep.subr.mxu0 0.0
    %7079 = vmatpush1.msra.mxu0 0.0
    %7080 = vmatprep.subr.mxu0 0.0
    %7081 = vmatpush1.msra.mxu0 0.0
    %7082 = vmatprep.subr.mxu0 0.0
    %7083 = vmatpush1.msra.mxu0 0.0
    %7084 = vmatprep.subr.mxu0 0.0
    %7085 = vmatpush1.msra.mxu0 0.0
    %7086 = vmatprep.subr.mxu0 0.0
    %7087 = vmatpush1.msra.mxu0 0.0
    %7088 = vmatprep.subr.mxu0 0.0
    %7089 = vmatpush1.msra.mxu0 0.0
    %7090 = vmatprep.subr.mxu0 0.0
    %7091 = vmatpush1.msra.mxu0 0.0
    %7092 = vmatprep.subr.mxu0 0.0
    %7093 = vmatpush1.msra.mxu0 0.0
    %7094 = vmatprep.subr.mxu0 0.0
    %7095 = vmatpush1.msra.mxu0 0.0
    %7096 = vmatprep.subr.mxu0 0.0
    %7097 = vmatpush1.msra.mxu0 0.0
    %7098 = vmatprep.subr.mxu0 0.0
    %v7099 = vand.u32 %v24, 4294901760
    %v7100 = vsub.f32 %v24, %v7099
    %v7101 = vand.u32 %v7100, 4294901760
    %7102 = vmatpush1.msra.mxu0 %v7101
    %7103 = vmatprep.subr.mxu0 0.0
    %v7104 = vand.u32 %v23, 4294901760
    %v7105 = vsub.f32 %v23, %v7104
    %v7106 = vand.u32 %v7105, 4294901760
    %7107 = vmatpush1.msra.mxu0 %v7106
    %7108 = vmatprep.subr.mxu0 0.0
    %v7109 = vand.u32 %v22, 4294901760
    %v7110 = vsub.f32 %v22, %v7109
    %v7111 = vand.u32 %v7110, 4294901760
    %7112 = vmatpush1.msra.mxu0 %v7111
    %7113 = vmatprep.subr.mxu0 0.0
    %v7114 = vand.u32 %v21, 4294901760
    %v7115 = vsub.f32 %v21, %v7114
    %v7116 = vand.u32 %v7115, 4294901760
    %7117 = vmatpush1.msra.mxu0 %v7116
    %7118 = vmatprep.subr.mxu0 0.0
    %7119 = vmatpush2.msra.mxu0 0.0
    %7120 = vmatprep.subr.mxu0 0.0
    %7121 = vmatpush2.msra.mxu0 0.0
    %7122 = vmatprep.subr.mxu0 0.0
    %7123 = vmatpush2.msra.mxu0 0.0
    %7124 = vmatprep.subr.mxu0 0.0
    %7125 = vmatpush2.msra.mxu0 0.0
    %7126 = vmatprep.subr.mxu0 0.0
    %7127 = vmatpush2.msra.mxu0 0.0
    %7128 = vmatprep.subr.mxu0 0.0
    %7129 = vmatpush2.msra.mxu0 0.0
    %7130 = vmatprep.subr.mxu0 0.0
    %7131 = vmatpush2.msra.mxu0 0.0
    %7132 = vmatprep.subr.mxu0 0.0
    %7133 = vmatpush2.msra.mxu0 0.0
    %7134 = vmatprep.subr.mxu0 0.0
    %7135 = vmatpush2.msra.mxu0 0.0
    %7136 = vmatprep.subr.mxu0 0.0
    %7137 = vmatpush2.msra.mxu0 0.0
    %7138 = vmatprep.subr.mxu0 0.0
    %7139 = vmatpush2.msra.mxu0 0.0
    %7140 = vmatprep.subr.mxu0 0.0
    %7141 = vmatpush2.msra.mxu0 0.0
    %7142 = vmatprep.subr.mxu0 0.0
    %7143 = vmatpush2.msra.mxu0 0.0
    %7144 = vmatprep.subr.mxu0 0.0
    %7145 = vmatpush2.msra.mxu0 0.0
    %7146 = vmatprep.subr.mxu0 0.0
    %7147 = vmatpush2.msra.mxu0 0.0
    %7148 = vmatprep.subr.mxu0 0.0
    %7149 = vmatpush2.msra.mxu0 0.0
    %7150 = vmatprep.mubr.f32.mxu0 0.0
    %v7151 = vand.u32 %v6711, 4294901760
    %7152 = vmatmul.mubr.f32.gmra.mxu0 %v7151
    %v7153 = vpop.f32.mrf.mxu0
    %v7154 = vadd.f32 %v7063, %v7153
    %v7155 = vpop.f32.mrf.mxu0
    %7156 = vmatprep.mubr.f32.mxu0 0.0
    %v7157 = vand.u32 %v6714, 4294901760
    %7158 = vmatmul.mubr.f32.gmra.mxu0 %v7157
    %v7159 = vpop.f32.mrf.mxu0
    %v7160 = vadd.f32 %v7071, %v7159
    %v7161 = vpop.f32.mrf.mxu0
    %7162 = vdwg.mxu0
    %7163 = vmatprep.subr.mxu0 0.0
    %7164 = vmatpush1.msra.mxu0 0.0
    %7165 = vmatprep.subr.mxu0 0.0
    %7166 = vmatpush1.msra.mxu0 0.0
    %7167 = vmatprep.subr.mxu0 0.0
    %7168 = vmatpush1.msra.mxu0 0.0
    %7169 = vmatprep.subr.mxu0 0.0
    %7170 = vmatpush1.msra.mxu0 0.0
    %7171 = vmatprep.subr.mxu0 0.0
    %7172 = vmatpush1.msra.mxu0 0.0
    %7173 = vmatprep.subr.mxu0 0.0
    %7174 = vmatpush1.msra.mxu0 0.0
    %7175 = vmatprep.subr.mxu0 0.0
    %7176 = vmatpush1.msra.mxu0 0.0
    %7177 = vmatprep.subr.mxu0 0.0
    %7178 = vmatpush1.msra.mxu0 0.0
    %7179 = vmatprep.subr.mxu0 0.0
    %7180 = vmatpush1.msra.mxu0 0.0
    %7181 = vmatprep.subr.mxu0 0.0
    %7182 = vmatpush1.msra.mxu0 0.0
    %7183 = vmatprep.subr.mxu0 0.0
    %7184 = vmatpush1.msra.mxu0 0.0
    %7185 = vmatprep.subr.mxu0 0.0
    %7186 = vmatpush1.msra.mxu0 0.0
    %7187 = vmatprep.subr.mxu0 0.0
    %v7188 = vand.u32 %v24, 4294901760
    %7189 = vmatpush1.msra.mxu0 %v7188
    %7190 = vmatprep.subr.mxu0 0.0
    %v7191 = vand.u32 %v23, 4294901760
    %7192 = vmatpush1.msra.mxu0 %v7191
    %7193 = vmatprep.subr.mxu0 0.0
    %v7194 = vand.u32 %v22, 4294901760
    %7195 = vmatpush1.msra.mxu0 %v7194
    %7196 = vmatprep.subr.mxu0 0.0
    %v7197 = vand.u32 %v21, 4294901760
    %7198 = vmatpush1.msra.mxu0 %v7197
    %7199 = vmatprep.subr.mxu0 0.0
    %7200 = vmatpush2.msra.mxu0 0.0
    %7201 = vmatprep.subr.mxu0 0.0
    %7202 = vmatpush2.msra.mxu0 0.0
    %7203 = vmatprep.subr.mxu0 0.0
    %7204 = vmatpush2.msra.mxu0 0.0
    %7205 = vmatprep.subr.mxu0 0.0
    %7206 = vmatpush2.msra.mxu0 0.0
    %7207 = vmatprep.subr.mxu0 0.0
    %7208 = vmatpush2.msra.mxu0 0.0
    %7209 = vmatprep.subr.mxu0 0.0
    %7210 = vmatpush2.msra.mxu0 0.0
    %7211 = vmatprep.subr.mxu0 0.0
    %7212 = vmatpush2.msra.mxu0 0.0
    %7213 = vmatprep.subr.mxu0 0.0
    %7214 = vmatpush2.msra.mxu0 0.0
    %7215 = vmatprep.subr.mxu0 0.0
    %7216 = vmatpush2.msra.mxu0 0.0
    %7217 = vmatprep.subr.mxu0 0.0
    %7218 = vmatpush2.msra.mxu0 0.0
    %7219 = vmatprep.subr.mxu0 0.0
    %7220 = vmatpush2.msra.mxu0 0.0
    %7221 = vmatprep.subr.mxu0 0.0
    %7222 = vmatpush2.msra.mxu0 0.0
    %7223 = vmatprep.subr.mxu0 0.0
    %7224 = vmatpush2.msra.mxu0 0.0
    %7225 = vmatprep.subr.mxu0 0.0
    %7226 = vmatpush2.msra.mxu0 0.0
    %7227 = vmatprep.subr.mxu0 0.0
    %7228 = vmatpush2.msra.mxu0 0.0
    %7229 = vmatprep.subr.mxu0 0.0
    %7230 = vmatpush2.msra.mxu0 0.0
    %7231 = vmatprep.mubr.f32.mxu0 0.0
    %v7232 = vand.u32 %v6711, 4294901760
    %7233 = vmatmul.mubr.f32.gmra.mxu0 %v7232
    %v7234 = vpop.f32.mrf.mxu0
    %v7235 = vadd.f32 %v7154, %v7234
    %v7236 = vpop.f32.mrf.mxu0
    %7237 = vmatprep.mubr.f32.mxu0 0.0
    %v7238 = vand.u32 %v6714, 4294901760
    %7239 = vmatmul.mubr.f32.gmra.mxu0 %v7238
    %v7240 = vpop.f32.mrf.mxu0
    %v7241 = vadd.f32 %v7160, %v7240
    %v7242 = vpop.f32.mrf.mxu0
    %7243 = vdwg.mxu0
    %v7244 = vadd.f32 %v6708, %v7235
    %v7245 = vadd.f32 %v6709, %v7241
    %v7246 = vxor.u32 %v7244, 2147483648
    %v7247 = vxor.u32 %v7245, 2147483648
    %v7248 = vmul.f32 %v7246, 1.442695
    %v7249 = vpow.pop %v7248
    %v7250 = vmul.f32 %v7247, 1.442695
    %v7251 = vpow.pop %v7250
    %v7252 = vadd.f32 %v7249, 1.0
    %v7253 = vadd.f32 %v7251, 1.0
    %v7254 = vrcp.pop %v7252
    %v7255 = vmul.f32 1.0, %v7254
    %v7256 = vrcp.pop %v7253
    %v7257 = vmul.f32 1.0, %v7256
    %s7258 = scalar_lea.vmem %s1, 96
    %v7259 = vld [vmem:[%s7258] sm:$0xff]
    %v7260 = vld [vmem:[%s7258 + $0x8] sm:$0xff]
    %7263 = vrot.lane.b32.xlu0 %v7255, 96
    %v7264 = vpop.permute.xlu0 %7263
    %7265 = vrot.lane.b32.xlu0 %v7257, 96
    %v7266 = vpop.permute.xlu0 %7265
    %v7269 = vmul.f32 %v6702, %v7264
    %v7270 = vmul.f32 %v6703, %v7266
    %v7272 = vsel %vm33, %v7269, 0
    %v7275 = vsel %vm33, %v7270, 0
    %7277 = vmatprep.subr.mxu0 0.0
    %7278 = vmatpush1.msra.mxu0 0.0
    %7279 = vmatprep.subr.mxu0 0.0
    %7280 = vmatpush1.msra.mxu0 0.0
    %7281 = vmatprep.subr.mxu0 0.0
    %7282 = vmatpush1.msra.mxu0 0.0
    %7283 = vmatprep.subr.mxu0 0.0
    %7284 = vmatpush1.msra.mxu0 0.0
    %7285 = vmatprep.subr.mxu0 0.0
    %7286 = vmatpush1.msra.mxu0 0.0
    %7287 = vmatprep.subr.mxu0 0.0
    %7288 = vmatpush1.msra.mxu0 0.0
    %7289 = vmatprep.subr.mxu0 0.0
    %7290 = vmatpush1.msra.mxu0 0.0
    %7291 = vmatprep.subr.mxu0 0.0
    %7292 = vmatpush1.msra.mxu0 0.0
    %7293 = vmatprep.subr.mxu0 0.0
    %7294 = vmatpush1.msra.mxu0 0.0
    %7295 = vmatprep.subr.mxu0 0.0
    %7296 = vmatpush1.msra.mxu0 0.0
    %7297 = vmatprep.subr.mxu0 0.0
    %7298 = vmatpush1.msra.mxu0 0.0
    %7299 = vmatprep.subr.mxu0 0.0
    %7300 = vmatpush1.msra.mxu0 0.0
    %7301 = vmatprep.subr.mxu0 0.0
    %v7302 = vand.u32 %v28, 4294901760
    %7303 = vmatpush1.msra.mxu0 %v7302
    %7304 = vmatprep.subr.mxu0 0.0
    %v7305 = vand.u32 %v27, 4294901760
    %7306 = vmatpush1.msra.mxu0 %v7305
    %7307 = vmatprep.subr.mxu0 0.0
    %v7308 = vand.u32 %v26, 4294901760
    %7309 = vmatpush1.msra.mxu0 %v7308
    %7310 = vmatprep.subr.mxu0 0.0
    %v7311 = vand.u32 %v25, 4294901760
    %7312 = vmatpush1.msra.mxu0 %v7311
    %7313 = vmatprep.subr.mxu0 0.0
    %7314 = vmatpush2.msra.mxu0 0.0
    %7315 = vmatprep.subr.mxu0 0.0
    %7316 = vmatpush2.msra.mxu0 0.0
    %7317 = vmatprep.subr.mxu0 0.0
    %7318 = vmatpush2.msra.mxu0 0.0
    %7319 = vmatprep.subr.mxu0 0.0
    %7320 = vmatpush2.msra.mxu0 0.0
    %7321 = vmatprep.subr.mxu0 0.0
    %7322 = vmatpush2.msra.mxu0 0.0
    %7323 = vmatprep.subr.mxu0 0.0
    %7324 = vmatpush2.msra.mxu0 0.0
    %7325 = vmatprep.subr.mxu0 0.0
    %7326 = vmatpush2.msra.mxu0 0.0
    %7327 = vmatprep.subr.mxu0 0.0
    %7328 = vmatpush2.msra.mxu0 0.0
    %7329 = vmatprep.subr.mxu0 0.0
    %7330 = vmatpush2.msra.mxu0 0.0
    %7331 = vmatprep.subr.mxu0 0.0
    %7332 = vmatpush2.msra.mxu0 0.0
    %7333 = vmatprep.subr.mxu0 0.0
    %7334 = vmatpush2.msra.mxu0 0.0
    %7335 = vmatprep.subr.mxu0 0.0
    %7336 = vmatpush2.msra.mxu0 0.0
    %7337 = vmatprep.subr.mxu0 0.0
    %7338 = vmatpush2.msra.mxu0 0.0
    %7339 = vmatprep.subr.mxu0 0.0
    %7340 = vmatpush2.msra.mxu0 0.0
    %7341 = vmatprep.subr.mxu0 0.0
    %7342 = vmatpush2.msra.mxu0 0.0
    %7343 = vmatprep.subr.mxu0 0.0
    %7344 = vmatpush2.msra.mxu0 0.0
    %7345 = vmatprep.mubr.f32.mxu0 0.0
    %v7346 = vand.u32 %v7272, 4294901760
    %v7347 = vsub.f32 %v7272, %v7346
    %v7348 = vand.u32 %v7347, 4294901760
    %v7349 = vsub.f32 %v7347, %v7348
    %v7350 = vand.u32 %v7349, 4294901760
    %7351 = vmatmul.mubr.f32.gmra.mxu0 %v7350
    %v7352 = vpop.f32.mrf.mxu0
    %v7353 = vadd.f32 0.0, %v7352
    %v7354 = vpop.f32.mrf.mxu0
    %7355 = vmatprep.mubr.f32.mxu0 0.0
    %v7356 = vand.u32 %v7275, 4294901760
    %v7357 = vsub.f32 %v7275, %v7356
    %v7358 = vand.u32 %v7357, 4294901760
    %v7359 = vsub.f32 %v7357, %v7358
    %v7360 = vand.u32 %v7359, 4294901760
    %7361 = vmatmul.mubr.f32.gmra.mxu0 %v7360
    %v7362 = vpop.f32.mrf.mxu0
    %v7363 = vadd.f32 0.0, %v7362
    %v7364 = vpop.f32.mrf.mxu0
    %7365 = vdwg.mxu0
    %7366 = vmatprep.subr.mxu0 0.0
    %7367 = vmatpush1.msra.mxu0 0.0
    %7368 = vmatprep.subr.mxu0 0.0
    %7369 = vmatpush1.msra.mxu0 0.0
    %7370 = vmatprep.subr.mxu0 0.0
    %7371 = vmatpush1.msra.mxu0 0.0
    %7372 = vmatprep.subr.mxu0 0.0
    %7373 = vmatpush1.msra.mxu0 0.0
    %7374 = vmatprep.subr.mxu0 0.0
    %7375 = vmatpush1.msra.mxu0 0.0
    %7376 = vmatprep.subr.mxu0 0.0
    %7377 = vmatpush1.msra.mxu0 0.0
    %7378 = vmatprep.subr.mxu0 0.0
    %7379 = vmatpush1.msra.mxu0 0.0
    %7380 = vmatprep.subr.mxu0 0.0
    %7381 = vmatpush1.msra.mxu0 0.0
    %7382 = vmatprep.subr.mxu0 0.0
    %7383 = vmatpush1.msra.mxu0 0.0
    %7384 = vmatprep.subr.mxu0 0.0
    %7385 = vmatpush1.msra.mxu0 0.0
    %7386 = vmatprep.subr.mxu0 0.0
    %7387 = vmatpush1.msra.mxu0 0.0
    %7388 = vmatprep.subr.mxu0 0.0
    %7389 = vmatpush1.msra.mxu0 0.0
    %7390 = vmatprep.subr.mxu0 0.0
    %v7391 = vand.u32 %v28, 4294901760
    %v7392 = vsub.f32 %v28, %v7391
    %v7393 = vand.u32 %v7392, 4294901760
    %v7394 = vsub.f32 %v7392, %v7393
    %v7395 = vand.u32 %v7394, 4294901760
    %7396 = vmatpush1.msra.mxu0 %v7395
    %7397 = vmatprep.subr.mxu0 0.0
    %v7398 = vand.u32 %v27, 4294901760
    %v7399 = vsub.f32 %v27, %v7398
    %v7400 = vand.u32 %v7399, 4294901760
    %v7401 = vsub.f32 %v7399, %v7400
    %v7402 = vand.u32 %v7401, 4294901760
    %7403 = vmatpush1.msra.mxu0 %v7402
    %7404 = vmatprep.subr.mxu0 0.0
    %v7405 = vand.u32 %v26, 4294901760
    %v7406 = vsub.f32 %v26, %v7405
    %v7407 = vand.u32 %v7406, 4294901760
    %v7408 = vsub.f32 %v7406, %v7407
    %v7409 = vand.u32 %v7408, 4294901760
    %7410 = vmatpush1.msra.mxu0 %v7409
    %7411 = vmatprep.subr.mxu0 0.0
    %v7412 = vand.u32 %v25, 4294901760
    %v7413 = vsub.f32 %v25, %v7412
    %v7414 = vand.u32 %v7413, 4294901760
    %v7415 = vsub.f32 %v7413, %v7414
    %v7416 = vand.u32 %v7415, 4294901760
    %7417 = vmatpush1.msra.mxu0 %v7416
    %7418 = vmatprep.subr.mxu0 0.0
    %7419 = vmatpush2.msra.mxu0 0.0
    %7420 = vmatprep.subr.mxu0 0.0
    %7421 = vmatpush2.msra.mxu0 0.0
    %7422 = vmatprep.subr.mxu0 0.0
    %7423 = vmatpush2.msra.mxu0 0.0
    %7424 = vmatprep.subr.mxu0 0.0
    %7425 = vmatpush2.msra.mxu0 0.0
    %7426 = vmatprep.subr.mxu0 0.0
    %7427 = vmatpush2.msra.mxu0 0.0
    %7428 = vmatprep.subr.mxu0 0.0
    %7429 = vmatpush2.msra.mxu0 0.0
    %7430 = vmatprep.subr.mxu0 0.0
    %7431 = vmatpush2.msra.mxu0 0.0
    %7432 = vmatprep.subr.mxu0 0.0
    %7433 = vmatpush2.msra.mxu0 0.0
    %7434 = vmatprep.subr.mxu0 0.0
    %7435 = vmatpush2.msra.mxu0 0.0
    %7436 = vmatprep.subr.mxu0 0.0
    %7437 = vmatpush2.msra.mxu0 0.0
    %7438 = vmatprep.subr.mxu0 0.0
    %7439 = vmatpush2.msra.mxu0 0.0
    %7440 = vmatprep.subr.mxu0 0.0
    %7441 = vmatpush2.msra.mxu0 0.0
    %7442 = vmatprep.subr.mxu0 0.0
    %7443 = vmatpush2.msra.mxu0 0.0
    %7444 = vmatprep.subr.mxu0 0.0
    %7445 = vmatpush2.msra.mxu0 0.0
    %7446 = vmatprep.subr.mxu0 0.0
    %7447 = vmatpush2.msra.mxu0 0.0
    %7448 = vmatprep.subr.mxu0 0.0
    %7449 = vmatpush2.msra.mxu0 0.0
    %7450 = vmatprep.mubr.f32.mxu0 0.0
    %v7451 = vand.u32 %v7272, 4294901760
    %7452 = vmatmul.mubr.f32.gmra.mxu0 %v7451
    %v7453 = vpop.f32.mrf.mxu0
    %v7454 = vadd.f32 %v7353, %v7453
    %v7455 = vpop.f32.mrf.mxu0
    %7456 = vmatprep.mubr.f32.mxu0 0.0
    %v7457 = vand.u32 %v7275, 4294901760
    %7458 = vmatmul.mubr.f32.gmra.mxu0 %v7457
    %v7459 = vpop.f32.mrf.mxu0
    %v7460 = vadd.f32 %v7363, %v7459
    %v7461 = vpop.f32.mrf.mxu0
    %7462 = vdwg.mxu0
    %7463 = vmatprep.subr.mxu0 0.0
    %7464 = vmatpush1.msra.mxu0 0.0
    %7465 = vmatprep.subr.mxu0 0.0
    %7466 = vmatpush1.msra.mxu0 0.0
    %7467 = vmatprep.subr.mxu0 0.0
    %7468 = vmatpush1.msra.mxu0 0.0
    %7469 = vmatprep.subr.mxu0 0.0
    %7470 = vmatpush1.msra.mxu0 0.0
    %7471 = vmatprep.subr.mxu0 0.0
    %7472 = vmatpush1.msra.mxu0 0.0
    %7473 = vmatprep.subr.mxu0 0.0
    %7474 = vmatpush1.msra.mxu0 0.0
    %7475 = vmatprep.subr.mxu0 0.0
    %7476 = vmatpush1.msra.mxu0 0.0
    %7477 = vmatprep.subr.mxu0 0.0
    %7478 = vmatpush1.msra.mxu0 0.0
    %7479 = vmatprep.subr.mxu0 0.0
    %7480 = vmatpush1.msra.mxu0 0.0
    %7481 = vmatprep.subr.mxu0 0.0
    %7482 = vmatpush1.msra.mxu0 0.0
    %7483 = vmatprep.subr.mxu0 0.0
    %7484 = vmatpush1.msra.mxu0 0.0
    %7485 = vmatprep.subr.mxu0 0.0
    %7486 = vmatpush1.msra.mxu0 0.0
    %7487 = vmatprep.subr.mxu0 0.0
    %v7488 = vand.u32 %v28, 4294901760
    %v7489 = vsub.f32 %v28, %v7488
    %7490 = vmatpush1.msra.mxu0 %v7489
    %7491 = vmatprep.subr.mxu0 0.0
    %v7492 = vand.u32 %v27, 4294901760
    %v7493 = vsub.f32 %v27, %v7492
    %7494 = vmatpush1.msra.mxu0 %v7493
    %7495 = vmatprep.subr.mxu0 0.0
    %v7496 = vand.u32 %v26, 4294901760
    %v7497 = vsub.f32 %v26, %v7496
    %7498 = vmatpush1.msra.mxu0 %v7497
    %7499 = vmatprep.subr.mxu0 0.0
    %v7500 = vand.u32 %v25, 4294901760
    %v7501 = vsub.f32 %v25, %v7500
    %7502 = vmatpush1.msra.mxu0 %v7501
    %7503 = vmatprep.subr.mxu0 0.0
    %7504 = vmatpush2.msra.mxu0 0.0
    %7505 = vmatprep.subr.mxu0 0.0
    %7506 = vmatpush2.msra.mxu0 0.0
    %7507 = vmatprep.subr.mxu0 0.0
    %7508 = vmatpush2.msra.mxu0 0.0
    %7509 = vmatprep.subr.mxu0 0.0
    %7510 = vmatpush2.msra.mxu0 0.0
    %7511 = vmatprep.subr.mxu0 0.0
    %7512 = vmatpush2.msra.mxu0 0.0
    %7513 = vmatprep.subr.mxu0 0.0
    %7514 = vmatpush2.msra.mxu0 0.0
    %7515 = vmatprep.subr.mxu0 0.0
    %7516 = vmatpush2.msra.mxu0 0.0
    %7517 = vmatprep.subr.mxu0 0.0
    %7518 = vmatpush2.msra.mxu0 0.0
    %7519 = vmatprep.subr.mxu0 0.0
    %7520 = vmatpush2.msra.mxu0 0.0
    %7521 = vmatprep.subr.mxu0 0.0
    %7522 = vmatpush2.msra.mxu0 0.0
    %7523 = vmatprep.subr.mxu0 0.0
    %7524 = vmatpush2.msra.mxu0 0.0
    %7525 = vmatprep.subr.mxu0 0.0
    %7526 = vmatpush2.msra.mxu0 0.0
    %7527 = vmatprep.subr.mxu0 0.0
    %7528 = vmatpush2.msra.mxu0 0.0
    %7529 = vmatprep.subr.mxu0 0.0
    %7530 = vmatpush2.msra.mxu0 0.0
    %7531 = vmatprep.subr.mxu0 0.0
    %7532 = vmatpush2.msra.mxu0 0.0
    %7533 = vmatprep.subr.mxu0 0.0
    %7534 = vmatpush2.msra.mxu0 0.0
    %7535 = vmatprep.mubr.f32.mxu0 0.0
    %v7536 = vand.u32 %v7272, 4294901760
    %v7537 = vsub.f32 %v7272, %v7536
    %7538 = vmatmul.mubr.f32.gmra.mxu0 %v7537
    %v7539 = vpop.f32.mrf.mxu0
    %v7540 = vadd.f32 %v7454, %v7539
    %v7541 = vpop.f32.mrf.mxu0
    %7542 = vmatprep.mubr.f32.mxu0 0.0
    %v7543 = vand.u32 %v7275, 4294901760
    %v7544 = vsub.f32 %v7275, %v7543
    %7545 = vmatmul.mubr.f32.gmra.mxu0 %v7544
    %v7546 = vpop.f32.mrf.mxu0
    %v7547 = vadd.f32 %v7460, %v7546
    %v7548 = vpop.f32.mrf.mxu0
    %7549 = vdwg.mxu0
    %7550 = vmatprep.subr.mxu0 0.0
    %7551 = vmatpush1.msra.mxu0 0.0
    %7552 = vmatprep.subr.mxu0 0.0
    %7553 = vmatpush1.msra.mxu0 0.0
    %7554 = vmatprep.subr.mxu0 0.0
    %7555 = vmatpush1.msra.mxu0 0.0
    %7556 = vmatprep.subr.mxu0 0.0
    %7557 = vmatpush1.msra.mxu0 0.0
    %7558 = vmatprep.subr.mxu0 0.0
    %7559 = vmatpush1.msra.mxu0 0.0
    %7560 = vmatprep.subr.mxu0 0.0
    %7561 = vmatpush1.msra.mxu0 0.0
    %7562 = vmatprep.subr.mxu0 0.0
    %7563 = vmatpush1.msra.mxu0 0.0
    %7564 = vmatprep.subr.mxu0 0.0
    %7565 = vmatpush1.msra.mxu0 0.0
    %7566 = vmatprep.subr.mxu0 0.0
    %7567 = vmatpush1.msra.mxu0 0.0
    %7568 = vmatprep.subr.mxu0 0.0
    %7569 = vmatpush1.msra.mxu0 0.0
    %7570 = vmatprep.subr.mxu0 0.0
    %7571 = vmatpush1.msra.mxu0 0.0
    %7572 = vmatprep.subr.mxu0 0.0
    %7573 = vmatpush1.msra.mxu0 0.0
    %7574 = vmatprep.subr.mxu0 0.0
    %v7575 = vand.u32 %v28, 4294901760
    %7576 = vmatpush1.msra.mxu0 %v7575
    %7577 = vmatprep.subr.mxu0 0.0
    %v7578 = vand.u32 %v27, 4294901760
    %7579 = vmatpush1.msra.mxu0 %v7578
    %7580 = vmatprep.subr.mxu0 0.0
    %v7581 = vand.u32 %v26, 4294901760
    %7582 = vmatpush1.msra.mxu0 %v7581
    %7583 = vmatprep.subr.mxu0 0.0
    %v7584 = vand.u32 %v25, 4294901760
    %7585 = vmatpush1.msra.mxu0 %v7584
    %7586 = vmatprep.subr.mxu0 0.0
    %7587 = vmatpush2.msra.mxu0 0.0
    %7588 = vmatprep.subr.mxu0 0.0
    %7589 = vmatpush2.msra.mxu0 0.0
    %7590 = vmatprep.subr.mxu0 0.0
    %7591 = vmatpush2.msra.mxu0 0.0
    %7592 = vmatprep.subr.mxu0 0.0
    %7593 = vmatpush2.msra.mxu0 0.0
    %7594 = vmatprep.subr.mxu0 0.0
    %7595 = vmatpush2.msra.mxu0 0.0
    %7596 = vmatprep.subr.mxu0 0.0
    %7597 = vmatpush2.msra.mxu0 0.0
    %7598 = vmatprep.subr.mxu0 0.0
    %7599 = vmatpush2.msra.mxu0 0.0
    %7600 = vmatprep.subr.mxu0 0.0
    %7601 = vmatpush2.msra.mxu0 0.0
    %7602 = vmatprep.subr.mxu0 0.0
    %7603 = vmatpush2.msra.mxu0 0.0
    %7604 = vmatprep.subr.mxu0 0.0
    %7605 = vmatpush2.msra.mxu0 0.0
    %7606 = vmatprep.subr.mxu0 0.0
    %7607 = vmatpush2.msra.mxu0 0.0
    %7608 = vmatprep.subr.mxu0 0.0
    %7609 = vmatpush2.msra.mxu0 0.0
    %7610 = vmatprep.subr.mxu0 0.0
    %7611 = vmatpush2.msra.mxu0 0.0
    %7612 = vmatprep.subr.mxu0 0.0
    %7613 = vmatpush2.msra.mxu0 0.0
    %7614 = vmatprep.subr.mxu0 0.0
    %7615 = vmatpush2.msra.mxu0 0.0
    %7616 = vmatprep.subr.mxu0 0.0
    %7617 = vmatpush2.msra.mxu0 0.0
    %7618 = vmatprep.mubr.f32.mxu0 0.0
    %v7619 = vand.u32 %v7272, 4294901760
    %v7620 = vsub.f32 %v7272, %v7619
    %v7621 = vand.u32 %v7620, 4294901760
    %7622 = vmatmul.mubr.f32.gmra.mxu0 %v7621
    %v7623 = vpop.f32.mrf.mxu0
    %v7624 = vadd.f32 %v7540, %v7623
    %v7625 = vpop.f32.mrf.mxu0
    %7626 = vmatprep.mubr.f32.mxu0 0.0
    %v7627 = vand.u32 %v7275, 4294901760
    %v7628 = vsub.f32 %v7275, %v7627
    %v7629 = vand.u32 %v7628, 4294901760
    %7630 = vmatmul.mubr.f32.gmra.mxu0 %v7629
    %v7631 = vpop.f32.mrf.mxu0
    %v7632 = vadd.f32 %v7547, %v7631
    %v7633 = vpop.f32.mrf.mxu0
    %7634 = vdwg.mxu0
    %7635 = vmatprep.subr.mxu0 0.0
    %7636 = vmatpush1.msra.mxu0 0.0
    %7637 = vmatprep.subr.mxu0 0.0
    %7638 = vmatpush1.msra.mxu0 0.0
    %7639 = vmatprep.subr.mxu0 0.0
    %7640 = vmatpush1.msra.mxu0 0.0
    %7641 = vmatprep.subr.mxu0 0.0
    %7642 = vmatpush1.msra.mxu0 0.0
    %7643 = vmatprep.subr.mxu0 0.0
    %7644 = vmatpush1.msra.mxu0 0.0
    %7645 = vmatprep.subr.mxu0 0.0
    %7646 = vmatpush1.msra.mxu0 0.0
    %7647 = vmatprep.subr.mxu0 0.0
    %7648 = vmatpush1.msra.mxu0 0.0
    %7649 = vmatprep.subr.mxu0 0.0
    %7650 = vmatpush1.msra.mxu0 0.0
    %7651 = vmatprep.subr.mxu0 0.0
    %7652 = vmatpush1.msra.mxu0 0.0
    %7653 = vmatprep.subr.mxu0 0.0
    %7654 = vmatpush1.msra.mxu0 0.0
    %7655 = vmatprep.subr.mxu0 0.0
    %7656 = vmatpush1.msra.mxu0 0.0
    %7657 = vmatprep.subr.mxu0 0.0
    %7658 = vmatpush1.msra.mxu0 0.0
    %7659 = vmatprep.subr.mxu0 0.0
    %v7660 = vand.u32 %v28, 4294901760
    %v7661 = vsub.f32 %v28, %v7660
    %v7662 = vand.u32 %v7661, 4294901760
    %7663 = vmatpush1.msra.mxu0 %v7662
    %7664 = vmatprep.subr.mxu0 0.0
    %v7665 = vand.u32 %v27, 4294901760
    %v7666 = vsub.f32 %v27, %v7665
    %v7667 = vand.u32 %v7666, 4294901760
    %7668 = vmatpush1.msra.mxu0 %v7667
    %7669 = vmatprep.subr.mxu0 0.0
    %v7670 = vand.u32 %v26, 4294901760
    %v7671 = vsub.f32 %v26, %v7670
    %v7672 = vand.u32 %v7671, 4294901760
    %7673 = vmatpush1.msra.mxu0 %v7672
    %7674 = vmatprep.subr.mxu0 0.0
    %v7675 = vand.u32 %v25, 4294901760
    %v7676 = vsub.f32 %v25, %v7675
    %v7677 = vand.u32 %v7676, 4294901760
    %7678 = vmatpush1.msra.mxu0 %v7677
    %7679 = vmatprep.subr.mxu0 0.0
    %7680 = vmatpush2.msra.mxu0 0.0
    %7681 = vmatprep.subr.mxu0 0.0
    %7682 = vmatpush2.msra.mxu0 0.0
    %7683 = vmatprep.subr.mxu0 0.0
    %7684 = vmatpush2.msra.mxu0 0.0
    %7685 = vmatprep.subr.mxu0 0.0
    %7686 = vmatpush2.msra.mxu0 0.0
    %7687 = vmatprep.subr.mxu0 0.0
    %7688 = vmatpush2.msra.mxu0 0.0
    %7689 = vmatprep.subr.mxu0 0.0
    %7690 = vmatpush2.msra.mxu0 0.0
    %7691 = vmatprep.subr.mxu0 0.0
    %7692 = vmatpush2.msra.mxu0 0.0
    %7693 = vmatprep.subr.mxu0 0.0
    %7694 = vmatpush2.msra.mxu0 0.0
    %7695 = vmatprep.subr.mxu0 0.0
    %7696 = vmatpush2.msra.mxu0 0.0
    %7697 = vmatprep.subr.mxu0 0.0
    %7698 = vmatpush2.msra.mxu0 0.0
    %7699 = vmatprep.subr.mxu0 0.0
    %7700 = vmatpush2.msra.mxu0 0.0
    %7701 = vmatprep.subr.mxu0 0.0
    %7702 = vmatpush2.msra.mxu0 0.0
    %7703 = vmatprep.subr.mxu0 0.0
    %7704 = vmatpush2.msra.mxu0 0.0
    %7705 = vmatprep.subr.mxu0 0.0
    %7706 = vmatpush2.msra.mxu0 0.0
    %7707 = vmatprep.subr.mxu0 0.0
    %7708 = vmatpush2.msra.mxu0 0.0
    %7709 = vmatprep.subr.mxu0 0.0
    %7710 = vmatpush2.msra.mxu0 0.0
    %7711 = vmatprep.mubr.f32.mxu0 0.0
    %v7712 = vand.u32 %v7272, 4294901760
    %7713 = vmatmul.mubr.f32.gmra.mxu0 %v7712
    %v7714 = vpop.f32.mrf.mxu0
    %v7715 = vadd.f32 %v7624, %v7714
    %v7716 = vpop.f32.mrf.mxu0
    %7717 = vmatprep.mubr.f32.mxu0 0.0
    %v7718 = vand.u32 %v7275, 4294901760
    %7719 = vmatmul.mubr.f32.gmra.mxu0 %v7718
    %v7720 = vpop.f32.mrf.mxu0
    %v7721 = vadd.f32 %v7632, %v7720
    %v7722 = vpop.f32.mrf.mxu0
    %7723 = vdwg.mxu0
    %7724 = vmatprep.subr.mxu0 0.0
    %7725 = vmatpush1.msra.mxu0 0.0
    %7726 = vmatprep.subr.mxu0 0.0
    %7727 = vmatpush1.msra.mxu0 0.0
    %7728 = vmatprep.subr.mxu0 0.0
    %7729 = vmatpush1.msra.mxu0 0.0
    %7730 = vmatprep.subr.mxu0 0.0
    %7731 = vmatpush1.msra.mxu0 0.0
    %7732 = vmatprep.subr.mxu0 0.0
    %7733 = vmatpush1.msra.mxu0 0.0
    %7734 = vmatprep.subr.mxu0 0.0
    %7735 = vmatpush1.msra.mxu0 0.0
    %7736 = vmatprep.subr.mxu0 0.0
    %7737 = vmatpush1.msra.mxu0 0.0
    %7738 = vmatprep.subr.mxu0 0.0
    %7739 = vmatpush1.msra.mxu0 0.0
    %7740 = vmatprep.subr.mxu0 0.0
    %7741 = vmatpush1.msra.mxu0 0.0
    %7742 = vmatprep.subr.mxu0 0.0
    %7743 = vmatpush1.msra.mxu0 0.0
    %7744 = vmatprep.subr.mxu0 0.0
    %7745 = vmatpush1.msra.mxu0 0.0
    %7746 = vmatprep.subr.mxu0 0.0
    %7747 = vmatpush1.msra.mxu0 0.0
    %7748 = vmatprep.subr.mxu0 0.0
    %v7749 = vand.u32 %v28, 4294901760
    %7750 = vmatpush1.msra.mxu0 %v7749
    %7751 = vmatprep.subr.mxu0 0.0
    %v7752 = vand.u32 %v27, 4294901760
    %7753 = vmatpush1.msra.mxu0 %v7752
    %7754 = vmatprep.subr.mxu0 0.0
    %v7755 = vand.u32 %v26, 4294901760
    %7756 = vmatpush1.msra.mxu0 %v7755
    %7757 = vmatprep.subr.mxu0 0.0
    %v7758 = vand.u32 %v25, 4294901760
    %7759 = vmatpush1.msra.mxu0 %v7758
    %7760 = vmatprep.subr.mxu0 0.0
    %7761 = vmatpush2.msra.mxu0 0.0
    %7762 = vmatprep.subr.mxu0 0.0
    %7763 = vmatpush2.msra.mxu0 0.0
    %7764 = vmatprep.subr.mxu0 0.0
    %7765 = vmatpush2.msra.mxu0 0.0
    %7766 = vmatprep.subr.mxu0 0.0
    %7767 = vmatpush2.msra.mxu0 0.0
    %7768 = vmatprep.subr.mxu0 0.0
    %7769 = vmatpush2.msra.mxu0 0.0
    %7770 = vmatprep.subr.mxu0 0.0
    %7771 = vmatpush2.msra.mxu0 0.0
    %7772 = vmatprep.subr.mxu0 0.0
    %7773 = vmatpush2.msra.mxu0 0.0
    %7774 = vmatprep.subr.mxu0 0.0
    %7775 = vmatpush2.msra.mxu0 0.0
    %7776 = vmatprep.subr.mxu0 0.0
    %7777 = vmatpush2.msra.mxu0 0.0
    %7778 = vmatprep.subr.mxu0 0.0
    %7779 = vmatpush2.msra.mxu0 0.0
    %7780 = vmatprep.subr.mxu0 0.0
    %7781 = vmatpush2.msra.mxu0 0.0
    %7782 = vmatprep.subr.mxu0 0.0
    %7783 = vmatpush2.msra.mxu0 0.0
    %7784 = vmatprep.subr.mxu0 0.0
    %7785 = vmatpush2.msra.mxu0 0.0
    %7786 = vmatprep.subr.mxu0 0.0
    %7787 = vmatpush2.msra.mxu0 0.0
    %7788 = vmatprep.subr.mxu0 0.0
    %7789 = vmatpush2.msra.mxu0 0.0
    %7790 = vmatprep.subr.mxu0 0.0
    %7791 = vmatpush2.msra.mxu0 0.0
    %7792 = vmatprep.mubr.f32.mxu0 0.0
    %v7793 = vand.u32 %v7272, 4294901760
    %7794 = vmatmul.mubr.f32.gmra.mxu0 %v7793
    %v7795 = vpop.f32.mrf.mxu0
    %v7796 = vadd.f32 %v7715, %v7795
    %v7797 = vpop.f32.mrf.mxu0
    %7798 = vmatprep.mubr.f32.mxu0 0.0
    %v7799 = vand.u32 %v7275, 4294901760
    %7800 = vmatmul.mubr.f32.gmra.mxu0 %v7799
    %v7801 = vpop.f32.mrf.mxu0
    %v7802 = vadd.f32 %v7721, %v7801
    %v7803 = vpop.f32.mrf.mxu0
    %7804 = vdwg.mxu0
    %v7805 = vadd.f32 %v7259, %v7796
    %v7806 = vadd.f32 %v7260, %v7802
    %v7807 = vtanh.pop %v7805
    %v7808 = vtanh.pop %v7806
    %v7809 = vmul.f32 %v7255, %v6702
    %v7810 = vmul.f32 %v7257, %v6703
    %v7811 = vsub.f32 1.0, %v7255
    %v7812 = vsub.f32 1.0, %v7257
    %v7813 = vmul.f32 %v7811, %v7807
    %v7814 = vmul.f32 %v7812, %v7808
    %v7815 = vadd.f32 %v7809, %v7813
    %v7816 = vadd.f32 %v7810, %v7814
    %s7817 = scalar_lea.vmem [#allocation2], 96
    %7818 = vst.msk [vmem:[%s7817] sm:$0xff] %vm33, %v7815
    %7819 = vst.msk [vmem:[%s7817 + $0x8] sm:$0xff] %vm33, %v7816
    %s7820 = scalar_lea.vmem %s0, 112
    %v7821 = vld [vmem:[%s7820] sm:$0xff]
    %v7822 = vld [vmem:[%s7820 + $0x8] sm:$0xff]
    %v7824 = vsel %vm33, %v7815, 0
    %v7827 = vsel %vm33, %v7816, 0
    %7829 = vmatprep.subr.mxu0 0.0
    %7830 = vmatpush1.msra.mxu0 0.0
    %7831 = vmatprep.subr.mxu0 0.0
    %7832 = vmatpush1.msra.mxu0 0.0
    %7833 = vmatprep.subr.mxu0 0.0
    %7834 = vmatpush1.msra.mxu0 0.0
    %7835 = vmatprep.subr.mxu0 0.0
    %7836 = vmatpush1.msra.mxu0 0.0
    %7837 = vmatprep.subr.mxu0 0.0
    %7838 = vmatpush1.msra.mxu0 0.0
    %7839 = vmatprep.subr.mxu0 0.0
    %7840 = vmatpush1.msra.mxu0 0.0
    %7841 = vmatprep.subr.mxu0 0.0
    %7842 = vmatpush1.msra.mxu0 0.0
    %7843 = vmatprep.subr.mxu0 0.0
    %7844 = vmatpush1.msra.mxu0 0.0
    %7845 = vmatprep.subr.mxu0 0.0
    %7846 = vmatpush1.msra.mxu0 0.0
    %7847 = vmatprep.subr.mxu0 0.0
    %7848 = vmatpush1.msra.mxu0 0.0
    %7849 = vmatprep.subr.mxu0 0.0
    %7850 = vmatpush1.msra.mxu0 0.0
    %7851 = vmatprep.subr.mxu0 0.0
    %7852 = vmatpush1.msra.mxu0 0.0
    %7853 = vmatprep.subr.mxu0 0.0
    %v7854 = vand.u32 %v24, 4294901760
    %7855 = vmatpush1.msra.mxu0 %v7854
    %7856 = vmatprep.subr.mxu0 0.0
    %v7857 = vand.u32 %v23, 4294901760
    %7858 = vmatpush1.msra.mxu0 %v7857
    %7859 = vmatprep.subr.mxu0 0.0
    %v7860 = vand.u32 %v22, 4294901760
    %7861 = vmatpush1.msra.mxu0 %v7860
    %7862 = vmatprep.subr.mxu0 0.0
    %v7863 = vand.u32 %v21, 4294901760
    %7864 = vmatpush1.msra.mxu0 %v7863
    %7865 = vmatprep.subr.mxu0 0.0
    %7866 = vmatpush2.msra.mxu0 0.0
    %7867 = vmatprep.subr.mxu0 0.0
    %7868 = vmatpush2.msra.mxu0 0.0
    %7869 = vmatprep.subr.mxu0 0.0
    %7870 = vmatpush2.msra.mxu0 0.0
    %7871 = vmatprep.subr.mxu0 0.0
    %7872 = vmatpush2.msra.mxu0 0.0
    %7873 = vmatprep.subr.mxu0 0.0
    %7874 = vmatpush2.msra.mxu0 0.0
    %7875 = vmatprep.subr.mxu0 0.0
    %7876 = vmatpush2.msra.mxu0 0.0
    %7877 = vmatprep.subr.mxu0 0.0
    %7878 = vmatpush2.msra.mxu0 0.0
    %7879 = vmatprep.subr.mxu0 0.0
    %7880 = vmatpush2.msra.mxu0 0.0
    %7881 = vmatprep.subr.mxu0 0.0
    %7882 = vmatpush2.msra.mxu0 0.0
    %7883 = vmatprep.subr.mxu0 0.0
    %7884 = vmatpush2.msra.mxu0 0.0
    %7885 = vmatprep.subr.mxu0 0.0
    %7886 = vmatpush2.msra.mxu0 0.0
    %7887 = vmatprep.subr.mxu0 0.0
    %7888 = vmatpush2.msra.mxu0 0.0
    %7889 = vmatprep.subr.mxu0 0.0
    %7890 = vmatpush2.msra.mxu0 0.0
    %7891 = vmatprep.subr.mxu0 0.0
    %7892 = vmatpush2.msra.mxu0 0.0
    %7893 = vmatprep.subr.mxu0 0.0
    %7894 = vmatpush2.msra.mxu0 0.0
    %7895 = vmatprep.subr.mxu0 0.0
    %7896 = vmatpush2.msra.mxu0 0.0
    %7897 = vmatprep.mubr.f32.mxu0 0.0
    %v7898 = vand.u32 %v7824, 4294901760
    %v7899 = vsub.f32 %v7824, %v7898
    %v7900 = vand.u32 %v7899, 4294901760
    %v7901 = vsub.f32 %v7899, %v7900
    %v7902 = vand.u32 %v7901, 4294901760
    %7903 = vmatmul.mubr.f32.gmra.mxu0 %v7902
    %v7904 = vpop.f32.mrf.mxu0
    %v7905 = vadd.f32 0.0, %v7904
    %v7906 = vpop.f32.mrf.mxu0
    %7907 = vmatprep.mubr.f32.mxu0 0.0
    %v7908 = vand.u32 %v7827, 4294901760
    %v7909 = vsub.f32 %v7827, %v7908
    %v7910 = vand.u32 %v7909, 4294901760
    %v7911 = vsub.f32 %v7909, %v7910
    %v7912 = vand.u32 %v7911, 4294901760
    %7913 = vmatmul.mubr.f32.gmra.mxu0 %v7912
    %v7914 = vpop.f32.mrf.mxu0
    %v7915 = vadd.f32 0.0, %v7914
    %v7916 = vpop.f32.mrf.mxu0
    %7917 = vdwg.mxu0
    %7918 = vmatprep.subr.mxu0 0.0
    %7919 = vmatpush1.msra.mxu0 0.0
    %7920 = vmatprep.subr.mxu0 0.0
    %7921 = vmatpush1.msra.mxu0 0.0
    %7922 = vmatprep.subr.mxu0 0.0
    %7923 = vmatpush1.msra.mxu0 0.0
    %7924 = vmatprep.subr.mxu0 0.0
    %7925 = vmatpush1.msra.mxu0 0.0
    %7926 = vmatprep.subr.mxu0 0.0
    %7927 = vmatpush1.msra.mxu0 0.0
    %7928 = vmatprep.subr.mxu0 0.0
    %7929 = vmatpush1.msra.mxu0 0.0
    %7930 = vmatprep.subr.mxu0 0.0
    %7931 = vmatpush1.msra.mxu0 0.0
    %7932 = vmatprep.subr.mxu0 0.0
    %7933 = vmatpush1.msra.mxu0 0.0
    %7934 = vmatprep.subr.mxu0 0.0
    %7935 = vmatpush1.msra.mxu0 0.0
    %7936 = vmatprep.subr.mxu0 0.0
    %7937 = vmatpush1.msra.mxu0 0.0
    %7938 = vmatprep.subr.mxu0 0.0
    %7939 = vmatpush1.msra.mxu0 0.0
    %7940 = vmatprep.subr.mxu0 0.0
    %7941 = vmatpush1.msra.mxu0 0.0
    %7942 = vmatprep.subr.mxu0 0.0
    %v7943 = vand.u32 %v24, 4294901760
    %v7944 = vsub.f32 %v24, %v7943
    %v7945 = vand.u32 %v7944, 4294901760
    %v7946 = vsub.f32 %v7944, %v7945
    %v7947 = vand.u32 %v7946, 4294901760
    %7948 = vmatpush1.msra.mxu0 %v7947
    %7949 = vmatprep.subr.mxu0 0.0
    %v7950 = vand.u32 %v23, 4294901760
    %v7951 = vsub.f32 %v23, %v7950
    %v7952 = vand.u32 %v7951, 4294901760
    %v7953 = vsub.f32 %v7951, %v7952
    %v7954 = vand.u32 %v7953, 4294901760
    %7955 = vmatpush1.msra.mxu0 %v7954
    %7956 = vmatprep.subr.mxu0 0.0
    %v7957 = vand.u32 %v22, 4294901760
    %v7958 = vsub.f32 %v22, %v7957
    %v7959 = vand.u32 %v7958, 4294901760
    %v7960 = vsub.f32 %v7958, %v7959
    %v7961 = vand.u32 %v7960, 4294901760
    %7962 = vmatpush1.msra.mxu0 %v7961
    %7963 = vmatprep.subr.mxu0 0.0
    %v7964 = vand.u32 %v21, 4294901760
    %v7965 = vsub.f32 %v21, %v7964
    %v7966 = vand.u32 %v7965, 4294901760
    %v7967 = vsub.f32 %v7965, %v7966
    %v7968 = vand.u32 %v7967, 4294901760
    %7969 = vmatpush1.msra.mxu0 %v7968
    %7970 = vmatprep.subr.mxu0 0.0
    %7971 = vmatpush2.msra.mxu0 0.0
    %7972 = vmatprep.subr.mxu0 0.0
    %7973 = vmatpush2.msra.mxu0 0.0
    %7974 = vmatprep.subr.mxu0 0.0
    %7975 = vmatpush2.msra.mxu0 0.0
    %7976 = vmatprep.subr.mxu0 0.0
    %7977 = vmatpush2.msra.mxu0 0.0
    %7978 = vmatprep.subr.mxu0 0.0
    %7979 = vmatpush2.msra.mxu0 0.0
    %7980 = vmatprep.subr.mxu0 0.0
    %7981 = vmatpush2.msra.mxu0 0.0
    %7982 = vmatprep.subr.mxu0 0.0
    %7983 = vmatpush2.msra.mxu0 0.0
    %7984 = vmatprep.subr.mxu0 0.0
    %7985 = vmatpush2.msra.mxu0 0.0
    %7986 = vmatprep.subr.mxu0 0.0
    %7987 = vmatpush2.msra.mxu0 0.0
    %7988 = vmatprep.subr.mxu0 0.0
    %7989 = vmatpush2.msra.mxu0 0.0
    %7990 = vmatprep.subr.mxu0 0.0
    %7991 = vmatpush2.msra.mxu0 0.0
    %7992 = vmatprep.subr.mxu0 0.0
    %7993 = vmatpush2.msra.mxu0 0.0
    %7994 = vmatprep.subr.mxu0 0.0
    %7995 = vmatpush2.msra.mxu0 0.0
    %7996 = vmatprep.subr.mxu0 0.0
    %7997 = vmatpush2.msra.mxu0 0.0
    %7998 = vmatprep.subr.mxu0 0.0
    %7999 = vmatpush2.msra.mxu0 0.0
    %8000 = vmatprep.subr.mxu0 0.0
    %8001 = vmatpush2.msra.mxu0 0.0
    %8002 = vmatprep.mubr.f32.mxu0 0.0
    %v8003 = vand.u32 %v7824, 4294901760
    %8004 = vmatmul.mubr.f32.gmra.mxu0 %v8003
    %v8005 = vpop.f32.mrf.mxu0
    %v8006 = vadd.f32 %v7905, %v8005
    %v8007 = vpop.f32.mrf.mxu0
    %8008 = vmatprep.mubr.f32.mxu0 0.0
    %v8009 = vand.u32 %v7827, 4294901760
    %8010 = vmatmul.mubr.f32.gmra.mxu0 %v8009
    %v8011 = vpop.f32.mrf.mxu0
    %v8012 = vadd.f32 %v7915, %v8011
    %v8013 = vpop.f32.mrf.mxu0
    %8014 = vdwg.mxu0
    %8015 = vmatprep.subr.mxu0 0.0
    %8016 = vmatpush1.msra.mxu0 0.0
    %8017 = vmatprep.subr.mxu0 0.0
    %8018 = vmatpush1.msra.mxu0 0.0
    %8019 = vmatprep.subr.mxu0 0.0
    %8020 = vmatpush1.msra.mxu0 0.0
    %8021 = vmatprep.subr.mxu0 0.0
    %8022 = vmatpush1.msra.mxu0 0.0
    %8023 = vmatprep.subr.mxu0 0.0
    %8024 = vmatpush1.msra.mxu0 0.0
    %8025 = vmatprep.subr.mxu0 0.0
    %8026 = vmatpush1.msra.mxu0 0.0
    %8027 = vmatprep.subr.mxu0 0.0
    %8028 = vmatpush1.msra.mxu0 0.0
    %8029 = vmatprep.subr.mxu0 0.0
    %8030 = vmatpush1.msra.mxu0 0.0
    %8031 = vmatprep.subr.mxu0 0.0
    %8032 = vmatpush1.msra.mxu0 0.0
    %8033 = vmatprep.subr.mxu0 0.0
    %8034 = vmatpush1.msra.mxu0 0.0
    %8035 = vmatprep.subr.mxu0 0.0
    %8036 = vmatpush1.msra.mxu0 0.0
    %8037 = vmatprep.subr.mxu0 0.0
    %8038 = vmatpush1.msra.mxu0 0.0
    %8039 = vmatprep.subr.mxu0 0.0
    %v8040 = vand.u32 %v24, 4294901760
    %v8041 = vsub.f32 %v24, %v8040
    %8042 = vmatpush1.msra.mxu0 %v8041
    %8043 = vmatprep.subr.mxu0 0.0
    %v8044 = vand.u32 %v23, 4294901760
    %v8045 = vsub.f32 %v23, %v8044
    %8046 = vmatpush1.msra.mxu0 %v8045
    %8047 = vmatprep.subr.mxu0 0.0
    %v8048 = vand.u32 %v22, 4294901760
    %v8049 = vsub.f32 %v22, %v8048
    %8050 = vmatpush1.msra.mxu0 %v8049
    %8051 = vmatprep.subr.mxu0 0.0
    %v8052 = vand.u32 %v21, 4294901760
    %v8053 = vsub.f32 %v21, %v8052
    %8054 = vmatpush1.msra.mxu0 %v8053
    %8055 = vmatprep.subr.mxu0 0.0
    %8056 = vmatpush2.msra.mxu0 0.0
    %8057 = vmatprep.subr.mxu0 0.0
    %8058 = vmatpush2.msra.mxu0 0.0
    %8059 = vmatprep.subr.mxu0 0.0
    %8060 = vmatpush2.msra.mxu0 0.0
    %8061 = vmatprep.subr.mxu0 0.0
    %8062 = vmatpush2.msra.mxu0 0.0
    %8063 = vmatprep.subr.mxu0 0.0
    %8064 = vmatpush2.msra.mxu0 0.0
    %8065 = vmatprep.subr.mxu0 0.0
    %8066 = vmatpush2.msra.mxu0 0.0
    %8067 = vmatprep.subr.mxu0 0.0
    %8068 = vmatpush2.msra.mxu0 0.0
    %8069 = vmatprep.subr.mxu0 0.0
    %8070 = vmatpush2.msra.mxu0 0.0
    %8071 = vmatprep.subr.mxu0 0.0
    %8072 = vmatpush2.msra.mxu0 0.0
    %8073 = vmatprep.subr.mxu0 0.0
    %8074 = vmatpush2.msra.mxu0 0.0
    %8075 = vmatprep.subr.mxu0 0.0
    %8076 = vmatpush2.msra.mxu0 0.0
    %8077 = vmatprep.subr.mxu0 0.0
    %8078 = vmatpush2.msra.mxu0 0.0
    %8079 = vmatprep.subr.mxu0 0.0
    %8080 = vmatpush2.msra.mxu0 0.0
    %8081 = vmatprep.subr.mxu0 0.0
    %8082 = vmatpush2.msra.mxu0 0.0
    %8083 = vmatprep.subr.mxu0 0.0
    %8084 = vmatpush2.msra.mxu0 0.0
    %8085 = vmatprep.subr.mxu0 0.0
    %8086 = vmatpush2.msra.mxu0 0.0
    %8087 = vmatprep.mubr.f32.mxu0 0.0
    %v8088 = vand.u32 %v7824, 4294901760
    %v8089 = vsub.f32 %v7824, %v8088
    %8090 = vmatmul.mubr.f32.gmra.mxu0 %v8089
    %v8091 = vpop.f32.mrf.mxu0
    %v8092 = vadd.f32 %v8006, %v8091
    %v8093 = vpop.f32.mrf.mxu0
    %8094 = vmatprep.mubr.f32.mxu0 0.0
    %v8095 = vand.u32 %v7827, 4294901760
    %v8096 = vsub.f32 %v7827, %v8095
    %8097 = vmatmul.mubr.f32.gmra.mxu0 %v8096
    %v8098 = vpop.f32.mrf.mxu0
    %v8099 = vadd.f32 %v8012, %v8098
    %v8100 = vpop.f32.mrf.mxu0
    %8101 = vdwg.mxu0
    %8102 = vmatprep.subr.mxu0 0.0
    %8103 = vmatpush1.msra.mxu0 0.0
    %8104 = vmatprep.subr.mxu0 0.0
    %8105 = vmatpush1.msra.mxu0 0.0
    %8106 = vmatprep.subr.mxu0 0.0
    %8107 = vmatpush1.msra.mxu0 0.0
    %8108 = vmatprep.subr.mxu0 0.0
    %8109 = vmatpush1.msra.mxu0 0.0
    %8110 = vmatprep.subr.mxu0 0.0
    %8111 = vmatpush1.msra.mxu0 0.0
    %8112 = vmatprep.subr.mxu0 0.0
    %8113 = vmatpush1.msra.mxu0 0.0
    %8114 = vmatprep.subr.mxu0 0.0
    %8115 = vmatpush1.msra.mxu0 0.0
    %8116 = vmatprep.subr.mxu0 0.0
    %8117 = vmatpush1.msra.mxu0 0.0
    %8118 = vmatprep.subr.mxu0 0.0
    %8119 = vmatpush1.msra.mxu0 0.0
    %8120 = vmatprep.subr.mxu0 0.0
    %8121 = vmatpush1.msra.mxu0 0.0
    %8122 = vmatprep.subr.mxu0 0.0
    %8123 = vmatpush1.msra.mxu0 0.0
    %8124 = vmatprep.subr.mxu0 0.0
    %8125 = vmatpush1.msra.mxu0 0.0
    %8126 = vmatprep.subr.mxu0 0.0
    %v8127 = vand.u32 %v24, 4294901760
    %8128 = vmatpush1.msra.mxu0 %v8127
    %8129 = vmatprep.subr.mxu0 0.0
    %v8130 = vand.u32 %v23, 4294901760
    %8131 = vmatpush1.msra.mxu0 %v8130
    %8132 = vmatprep.subr.mxu0 0.0
    %v8133 = vand.u32 %v22, 4294901760
    %8134 = vmatpush1.msra.mxu0 %v8133
    %8135 = vmatprep.subr.mxu0 0.0
    %v8136 = vand.u32 %v21, 4294901760
    %8137 = vmatpush1.msra.mxu0 %v8136
    %8138 = vmatprep.subr.mxu0 0.0
    %8139 = vmatpush2.msra.mxu0 0.0
    %8140 = vmatprep.subr.mxu0 0.0
    %8141 = vmatpush2.msra.mxu0 0.0
    %8142 = vmatprep.subr.mxu0 0.0
    %8143 = vmatpush2.msra.mxu0 0.0
    %8144 = vmatprep.subr.mxu0 0.0
    %8145 = vmatpush2.msra.mxu0 0.0
    %8146 = vmatprep.subr.mxu0 0.0
    %8147 = vmatpush2.msra.mxu0 0.0
    %8148 = vmatprep.subr.mxu0 0.0
    %8149 = vmatpush2.msra.mxu0 0.0
    %8150 = vmatprep.subr.mxu0 0.0
    %8151 = vmatpush2.msra.mxu0 0.0
    %8152 = vmatprep.subr.mxu0 0.0
    %8153 = vmatpush2.msra.mxu0 0.0
    %8154 = vmatprep.subr.mxu0 0.0
    %8155 = vmatpush2.msra.mxu0 0.0
    %8156 = vmatprep.subr.mxu0 0.0
    %8157 = vmatpush2.msra.mxu0 0.0
    %8158 = vmatprep.subr.mxu0 0.0
    %8159 = vmatpush2.msra.mxu0 0.0
    %8160 = vmatprep.subr.mxu0 0.0
    %8161 = vmatpush2.msra.mxu0 0.0
    %8162 = vmatprep.subr.mxu0 0.0
    %8163 = vmatpush2.msra.mxu0 0.0
    %8164 = vmatprep.subr.mxu0 0.0
    %8165 = vmatpush2.msra.mxu0 0.0
    %8166 = vmatprep.subr.mxu0 0.0
    %8167 = vmatpush2.msra.mxu0 0.0
    %8168 = vmatprep.subr.mxu0 0.0
    %8169 = vmatpush2.msra.mxu0 0.0
    %8170 = vmatprep.mubr.f32.mxu0 0.0
    %v8171 = vand.u32 %v7824, 4294901760
    %v8172 = vsub.f32 %v7824, %v8171
    %v8173 = vand.u32 %v8172, 4294901760
    %8174 = vmatmul.mubr.f32.gmra.mxu0 %v8173
    %v8175 = vpop.f32.mrf.mxu0
    %v8176 = vadd.f32 %v8092, %v8175
    %v8177 = vpop.f32.mrf.mxu0
    %8178 = vmatprep.mubr.f32.mxu0 0.0
    %v8179 = vand.u32 %v7827, 4294901760
    %v8180 = vsub.f32 %v7827, %v8179
    %v8181 = vand.u32 %v8180, 4294901760
    %8182 = vmatmul.mubr.f32.gmra.mxu0 %v8181
    %v8183 = vpop.f32.mrf.mxu0
    %v8184 = vadd.f32 %v8099, %v8183
    %v8185 = vpop.f32.mrf.mxu0
    %8186 = vdwg.mxu0
    %8187 = vmatprep.subr.mxu0 0.0
    %8188 = vmatpush1.msra.mxu0 0.0
    %8189 = vmatprep.subr.mxu0 0.0
    %8190 = vmatpush1.msra.mxu0 0.0
    %8191 = vmatprep.subr.mxu0 0.0
    %8192 = vmatpush1.msra.mxu0 0.0
    %8193 = vmatprep.subr.mxu0 0.0
    %8194 = vmatpush1.msra.mxu0 0.0
    %8195 = vmatprep.subr.mxu0 0.0
    %8196 = vmatpush1.msra.mxu0 0.0
    %8197 = vmatprep.subr.mxu0 0.0
    %8198 = vmatpush1.msra.mxu0 0.0
    %8199 = vmatprep.subr.mxu0 0.0
    %8200 = vmatpush1.msra.mxu0 0.0
    %8201 = vmatprep.subr.mxu0 0.0
    %8202 = vmatpush1.msra.mxu0 0.0
    %8203 = vmatprep.subr.mxu0 0.0
    %8204 = vmatpush1.msra.mxu0 0.0
    %8205 = vmatprep.subr.mxu0 0.0
    %8206 = vmatpush1.msra.mxu0 0.0
    %8207 = vmatprep.subr.mxu0 0.0
    %8208 = vmatpush1.msra.mxu0 0.0
    %8209 = vmatprep.subr.mxu0 0.0
    %8210 = vmatpush1.msra.mxu0 0.0
    %8211 = vmatprep.subr.mxu0 0.0
    %v8212 = vand.u32 %v24, 4294901760
    %v8213 = vsub.f32 %v24, %v8212
    %v8214 = vand.u32 %v8213, 4294901760
    %8215 = vmatpush1.msra.mxu0 %v8214
    %8216 = vmatprep.subr.mxu0 0.0
    %v8217 = vand.u32 %v23, 4294901760
    %v8218 = vsub.f32 %v23, %v8217
    %v8219 = vand.u32 %v8218, 4294901760
    %8220 = vmatpush1.msra.mxu0 %v8219
    %8221 = vmatprep.subr.mxu0 0.0
    %v8222 = vand.u32 %v22, 4294901760
    %v8223 = vsub.f32 %v22, %v8222
    %v8224 = vand.u32 %v8223, 4294901760
    %8225 = vmatpush1.msra.mxu0 %v8224
    %8226 = vmatprep.subr.mxu0 0.0
    %v8227 = vand.u32 %v21, 4294901760
    %v8228 = vsub.f32 %v21, %v8227
    %v8229 = vand.u32 %v8228, 4294901760
    %8230 = vmatpush1.msra.mxu0 %v8229
    %8231 = vmatprep.subr.mxu0 0.0
    %8232 = vmatpush2.msra.mxu0 0.0
    %8233 = vmatprep.subr.mxu0 0.0
    %8234 = vmatpush2.msra.mxu0 0.0
    %8235 = vmatprep.subr.mxu0 0.0
    %8236 = vmatpush2.msra.mxu0 0.0
    %8237 = vmatprep.subr.mxu0 0.0
    %8238 = vmatpush2.msra.mxu0 0.0
    %8239 = vmatprep.subr.mxu0 0.0
    %8240 = vmatpush2.msra.mxu0 0.0
    %8241 = vmatprep.subr.mxu0 0.0
    %8242 = vmatpush2.msra.mxu0 0.0
    %8243 = vmatprep.subr.mxu0 0.0
    %8244 = vmatpush2.msra.mxu0 0.0
    %8245 = vmatprep.subr.mxu0 0.0
    %8246 = vmatpush2.msra.mxu0 0.0
    %8247 = vmatprep.subr.mxu0 0.0
    %8248 = vmatpush2.msra.mxu0 0.0
    %8249 = vmatprep.subr.mxu0 0.0
    %8250 = vmatpush2.msra.mxu0 0.0
    %8251 = vmatprep.subr.mxu0 0.0
    %8252 = vmatpush2.msra.mxu0 0.0
    %8253 = vmatprep.subr.mxu0 0.0
    %8254 = vmatpush2.msra.mxu0 0.0
    %8255 = vmatprep.subr.mxu0 0.0
    %8256 = vmatpush2.msra.mxu0 0.0
    %8257 = vmatprep.subr.mxu0 0.0
    %8258 = vmatpush2.msra.mxu0 0.0
    %8259 = vmatprep.subr.mxu0 0.0
    %8260 = vmatpush2.msra.mxu0 0.0
    %8261 = vmatprep.subr.mxu0 0.0
    %8262 = vmatpush2.msra.mxu0 0.0
    %8263 = vmatprep.mubr.f32.mxu0 0.0
    %v8264 = vand.u32 %v7824, 4294901760
    %8265 = vmatmul.mubr.f32.gmra.mxu0 %v8264
    %v8266 = vpop.f32.mrf.mxu0
    %v8267 = vadd.f32 %v8176, %v8266
    %v8268 = vpop.f32.mrf.mxu0
    %8269 = vmatprep.mubr.f32.mxu0 0.0
    %v8270 = vand.u32 %v7827, 4294901760
    %8271 = vmatmul.mubr.f32.gmra.mxu0 %v8270
    %v8272 = vpop.f32.mrf.mxu0
    %v8273 = vadd.f32 %v8184, %v8272
    %v8274 = vpop.f32.mrf.mxu0
    %8275 = vdwg.mxu0
    %8276 = vmatprep.subr.mxu0 0.0
    %8277 = vmatpush1.msra.mxu0 0.0
    %8278 = vmatprep.subr.mxu0 0.0
    %8279 = vmatpush1.msra.mxu0 0.0
    %8280 = vmatprep.subr.mxu0 0.0
    %8281 = vmatpush1.msra.mxu0 0.0
    %8282 = vmatprep.subr.mxu0 0.0
    %8283 = vmatpush1.msra.mxu0 0.0
    %8284 = vmatprep.subr.mxu0 0.0
    %8285 = vmatpush1.msra.mxu0 0.0
    %8286 = vmatprep.subr.mxu0 0.0
    %8287 = vmatpush1.msra.mxu0 0.0
    %8288 = vmatprep.subr.mxu0 0.0
    %8289 = vmatpush1.msra.mxu0 0.0
    %8290 = vmatprep.subr.mxu0 0.0
    %8291 = vmatpush1.msra.mxu0 0.0
    %8292 = vmatprep.subr.mxu0 0.0
    %8293 = vmatpush1.msra.mxu0 0.0
    %8294 = vmatprep.subr.mxu0 0.0
    %8295 = vmatpush1.msra.mxu0 0.0
    %8296 = vmatprep.subr.mxu0 0.0
    %8297 = vmatpush1.msra.mxu0 0.0
    %8298 = vmatprep.subr.mxu0 0.0
    %8299 = vmatpush1.msra.mxu0 0.0
    %8300 = vmatprep.subr.mxu0 0.0
    %v8301 = vand.u32 %v24, 4294901760
    %8302 = vmatpush1.msra.mxu0 %v8301
    %8303 = vmatprep.subr.mxu0 0.0
    %v8304 = vand.u32 %v23, 4294901760
    %8305 = vmatpush1.msra.mxu0 %v8304
    %8306 = vmatprep.subr.mxu0 0.0
    %v8307 = vand.u32 %v22, 4294901760
    %8308 = vmatpush1.msra.mxu0 %v8307
    %8309 = vmatprep.subr.mxu0 0.0
    %v8310 = vand.u32 %v21, 4294901760
    %8311 = vmatpush1.msra.mxu0 %v8310
    %8312 = vmatprep.subr.mxu0 0.0
    %8313 = vmatpush2.msra.mxu0 0.0
    %8314 = vmatprep.subr.mxu0 0.0
    %8315 = vmatpush2.msra.mxu0 0.0
    %8316 = vmatprep.subr.mxu0 0.0
    %8317 = vmatpush2.msra.mxu0 0.0
    %8318 = vmatprep.subr.mxu0 0.0
    %8319 = vmatpush2.msra.mxu0 0.0
    %8320 = vmatprep.subr.mxu0 0.0
    %8321 = vmatpush2.msra.mxu0 0.0
    %8322 = vmatprep.subr.mxu0 0.0
    %8323 = vmatpush2.msra.mxu0 0.0
    %8324 = vmatprep.subr.mxu0 0.0
    %8325 = vmatpush2.msra.mxu0 0.0
    %8326 = vmatprep.subr.mxu0 0.0
    %8327 = vmatpush2.msra.mxu0 0.0
    %8328 = vmatprep.subr.mxu0 0.0
    %8329 = vmatpush2.msra.mxu0 0.0
    %8330 = vmatprep.subr.mxu0 0.0
    %8331 = vmatpush2.msra.mxu0 0.0
    %8332 = vmatprep.subr.mxu0 0.0
    %8333 = vmatpush2.msra.mxu0 0.0
    %8334 = vmatprep.subr.mxu0 0.0
    %8335 = vmatpush2.msra.mxu0 0.0
    %8336 = vmatprep.subr.mxu0 0.0
    %8337 = vmatpush2.msra.mxu0 0.0
    %8338 = vmatprep.subr.mxu0 0.0
    %8339 = vmatpush2.msra.mxu0 0.0
    %8340 = vmatprep.subr.mxu0 0.0
    %8341 = vmatpush2.msra.mxu0 0.0
    %8342 = vmatprep.subr.mxu0 0.0
    %8343 = vmatpush2.msra.mxu0 0.0
    %8344 = vmatprep.mubr.f32.mxu0 0.0
    %v8345 = vand.u32 %v7824, 4294901760
    %8346 = vmatmul.mubr.f32.gmra.mxu0 %v8345
    %v8347 = vpop.f32.mrf.mxu0
    %v8348 = vadd.f32 %v8267, %v8347
    %v8349 = vpop.f32.mrf.mxu0
    %8350 = vmatprep.mubr.f32.mxu0 0.0
    %v8351 = vand.u32 %v7827, 4294901760
    %8352 = vmatmul.mubr.f32.gmra.mxu0 %v8351
    %v8353 = vpop.f32.mrf.mxu0
    %v8354 = vadd.f32 %v8273, %v8353
    %v8355 = vpop.f32.mrf.mxu0
    %8356 = vdwg.mxu0
    %v8357 = vadd.f32 %v7821, %v8348
    %v8358 = vadd.f32 %v7822, %v8354
    %v8359 = vxor.u32 %v8357, 2147483648
    %v8360 = vxor.u32 %v8358, 2147483648
    %v8361 = vmul.f32 %v8359, 1.442695
    %v8362 = vpow.pop %v8361
    %v8363 = vmul.f32 %v8360, 1.442695
    %v8364 = vpow.pop %v8363
    %v8365 = vadd.f32 %v8362, 1.0
    %v8366 = vadd.f32 %v8364, 1.0
    %v8367 = vrcp.pop %v8365
    %v8368 = vmul.f32 1.0, %v8367
    %v8369 = vrcp.pop %v8366
    %v8370 = vmul.f32 1.0, %v8369
    %s8371 = scalar_lea.vmem %s1, 112
    %v8372 = vld [vmem:[%s8371] sm:$0xff]
    %v8373 = vld [vmem:[%s8371 + $0x8] sm:$0xff]
    %8376 = vrot.lane.b32.xlu0 %v8368, 96
    %v8377 = vpop.permute.xlu0 %8376
    %8378 = vrot.lane.b32.xlu0 %v8370, 96
    %v8379 = vpop.permute.xlu0 %8378
    %v8382 = vmul.f32 %v7815, %v8377
    %v8383 = vmul.f32 %v7816, %v8379
    %v8385 = vsel %vm33, %v8382, 0
    %v8388 = vsel %vm33, %v8383, 0
    %8390 = vmatprep.subr.mxu0 0.0
    %8391 = vmatpush1.msra.mxu0 0.0
    %8392 = vmatprep.subr.mxu0 0.0
    %8393 = vmatpush1.msra.mxu0 0.0
    %8394 = vmatprep.subr.mxu0 0.0
    %8395 = vmatpush1.msra.mxu0 0.0
    %8396 = vmatprep.subr.mxu0 0.0
    %8397 = vmatpush1.msra.mxu0 0.0
    %8398 = vmatprep.subr.mxu0 0.0
    %8399 = vmatpush1.msra.mxu0 0.0
    %8400 = vmatprep.subr.mxu0 0.0
    %8401 = vmatpush1.msra.mxu0 0.0
    %8402 = vmatprep.subr.mxu0 0.0
    %8403 = vmatpush1.msra.mxu0 0.0
    %8404 = vmatprep.subr.mxu0 0.0
    %8405 = vmatpush1.msra.mxu0 0.0
    %8406 = vmatprep.subr.mxu0 0.0
    %8407 = vmatpush1.msra.mxu0 0.0
    %8408 = vmatprep.subr.mxu0 0.0
    %8409 = vmatpush1.msra.mxu0 0.0
    %8410 = vmatprep.subr.mxu0 0.0
    %8411 = vmatpush1.msra.mxu0 0.0
    %8412 = vmatprep.subr.mxu0 0.0
    %8413 = vmatpush1.msra.mxu0 0.0
    %8414 = vmatprep.subr.mxu0 0.0
    %v8415 = vand.u32 %v28, 4294901760
    %8416 = vmatpush1.msra.mxu0 %v8415
    %8417 = vmatprep.subr.mxu0 0.0
    %v8418 = vand.u32 %v27, 4294901760
    %8419 = vmatpush1.msra.mxu0 %v8418
    %8420 = vmatprep.subr.mxu0 0.0
    %v8421 = vand.u32 %v26, 4294901760
    %8422 = vmatpush1.msra.mxu0 %v8421
    %8423 = vmatprep.subr.mxu0 0.0
    %v8424 = vand.u32 %v25, 4294901760
    %8425 = vmatpush1.msra.mxu0 %v8424
    %8426 = vmatprep.subr.mxu0 0.0
    %8427 = vmatpush2.msra.mxu0 0.0
    %8428 = vmatprep.subr.mxu0 0.0
    %8429 = vmatpush2.msra.mxu0 0.0
    %8430 = vmatprep.subr.mxu0 0.0
    %8431 = vmatpush2.msra.mxu0 0.0
    %8432 = vmatprep.subr.mxu0 0.0
    %8433 = vmatpush2.msra.mxu0 0.0
    %8434 = vmatprep.subr.mxu0 0.0
    %8435 = vmatpush2.msra.mxu0 0.0
    %8436 = vmatprep.subr.mxu0 0.0
    %8437 = vmatpush2.msra.mxu0 0.0
    %8438 = vmatprep.subr.mxu0 0.0
    %8439 = vmatpush2.msra.mxu0 0.0
    %8440 = vmatprep.subr.mxu0 0.0
    %8441 = vmatpush2.msra.mxu0 0.0
    %8442 = vmatprep.subr.mxu0 0.0
    %8443 = vmatpush2.msra.mxu0 0.0
    %8444 = vmatprep.subr.mxu0 0.0
    %8445 = vmatpush2.msra.mxu0 0.0
    %8446 = vmatprep.subr.mxu0 0.0
    %8447 = vmatpush2.msra.mxu0 0.0
    %8448 = vmatprep.subr.mxu0 0.0
    %8449 = vmatpush2.msra.mxu0 0.0
    %8450 = vmatprep.subr.mxu0 0.0
    %8451 = vmatpush2.msra.mxu0 0.0
    %8452 = vmatprep.subr.mxu0 0.0
    %8453 = vmatpush2.msra.mxu0 0.0
    %8454 = vmatprep.subr.mxu0 0.0
    %8455 = vmatpush2.msra.mxu0 0.0
    %8456 = vmatprep.subr.mxu0 0.0
    %8457 = vmatpush2.msra.mxu0 0.0
    %8458 = vmatprep.mubr.f32.mxu0 0.0
    %v8459 = vand.u32 %v8385, 4294901760
    %v8460 = vsub.f32 %v8385, %v8459
    %v8461 = vand.u32 %v8460, 4294901760
    %v8462 = vsub.f32 %v8460, %v8461
    %v8463 = vand.u32 %v8462, 4294901760
    %8464 = vmatmul.mubr.f32.gmra.mxu0 %v8463
    %v8465 = vpop.f32.mrf.mxu0
    %v8466 = vadd.f32 0.0, %v8465
    %v8467 = vpop.f32.mrf.mxu0
    %8468 = vmatprep.mubr.f32.mxu0 0.0
    %v8469 = vand.u32 %v8388, 4294901760
    %v8470 = vsub.f32 %v8388, %v8469
    %v8471 = vand.u32 %v8470, 4294901760
    %v8472 = vsub.f32 %v8470, %v8471
    %v8473 = vand.u32 %v8472, 4294901760
    %8474 = vmatmul.mubr.f32.gmra.mxu0 %v8473
    %v8475 = vpop.f32.mrf.mxu0
    %v8476 = vadd.f32 0.0, %v8475
    %v8477 = vpop.f32.mrf.mxu0
    %8478 = vdwg.mxu0
    %8479 = vmatprep.subr.mxu0 0.0
    %8480 = vmatpush1.msra.mxu0 0.0
    %8481 = vmatprep.subr.mxu0 0.0
    %8482 = vmatpush1.msra.mxu0 0.0
    %8483 = vmatprep.subr.mxu0 0.0
    %8484 = vmatpush1.msra.mxu0 0.0
    %8485 = vmatprep.subr.mxu0 0.0
    %8486 = vmatpush1.msra.mxu0 0.0
    %8487 = vmatprep.subr.mxu0 0.0
    %8488 = vmatpush1.msra.mxu0 0.0
    %8489 = vmatprep.subr.mxu0 0.0
    %8490 = vmatpush1.msra.mxu0 0.0
    %8491 = vmatprep.subr.mxu0 0.0
    %8492 = vmatpush1.msra.mxu0 0.0
    %8493 = vmatprep.subr.mxu0 0.0
    %8494 = vmatpush1.msra.mxu0 0.0
    %8495 = vmatprep.subr.mxu0 0.0
    %8496 = vmatpush1.msra.mxu0 0.0
    %8497 = vmatprep.subr.mxu0 0.0
    %8498 = vmatpush1.msra.mxu0 0.0
    %8499 = vmatprep.subr.mxu0 0.0
    %8500 = vmatpush1.msra.mxu0 0.0
    %8501 = vmatprep.subr.mxu0 0.0
    %8502 = vmatpush1.msra.mxu0 0.0
    %8503 = vmatprep.subr.mxu0 0.0
    %v8504 = vand.u32 %v28, 4294901760
    %v8505 = vsub.f32 %v28, %v8504
    %v8506 = vand.u32 %v8505, 4294901760
    %v8507 = vsub.f32 %v8505, %v8506
    %v8508 = vand.u32 %v8507, 4294901760
    %8509 = vmatpush1.msra.mxu0 %v8508
    %8510 = vmatprep.subr.mxu0 0.0
    %v8511 = vand.u32 %v27, 4294901760
    %v8512 = vsub.f32 %v27, %v8511
    %v8513 = vand.u32 %v8512, 4294901760
    %v8514 = vsub.f32 %v8512, %v8513
    %v8515 = vand.u32 %v8514, 4294901760
    %8516 = vmatpush1.msra.mxu0 %v8515
    %8517 = vmatprep.subr.mxu0 0.0
    %v8518 = vand.u32 %v26, 4294901760
    %v8519 = vsub.f32 %v26, %v8518
    %v8520 = vand.u32 %v8519, 4294901760
    %v8521 = vsub.f32 %v8519, %v8520
    %v8522 = vand.u32 %v8521, 4294901760
    %8523 = vmatpush1.msra.mxu0 %v8522
    %8524 = vmatprep.subr.mxu0 0.0
    %v8525 = vand.u32 %v25, 4294901760
    %v8526 = vsub.f32 %v25, %v8525
    %v8527 = vand.u32 %v8526, 4294901760
    %v8528 = vsub.f32 %v8526, %v8527
    %v8529 = vand.u32 %v8528, 4294901760
    %8530 = vmatpush1.msra.mxu0 %v8529
    %8531 = vmatprep.subr.mxu0 0.0
    %8532 = vmatpush2.msra.mxu0 0.0
    %8533 = vmatprep.subr.mxu0 0.0
    %8534 = vmatpush2.msra.mxu0 0.0
    %8535 = vmatprep.subr.mxu0 0.0
    %8536 = vmatpush2.msra.mxu0 0.0
    %8537 = vmatprep.subr.mxu0 0.0
    %8538 = vmatpush2.msra.mxu0 0.0
    %8539 = vmatprep.subr.mxu0 0.0
    %8540 = vmatpush2.msra.mxu0 0.0
    %8541 = vmatprep.subr.mxu0 0.0
    %8542 = vmatpush2.msra.mxu0 0.0
    %8543 = vmatprep.subr.mxu0 0.0
    %8544 = vmatpush2.msra.mxu0 0.0
    %8545 = vmatprep.subr.mxu0 0.0
    %8546 = vmatpush2.msra.mxu0 0.0
    %8547 = vmatprep.subr.mxu0 0.0
    %8548 = vmatpush2.msra.mxu0 0.0
    %8549 = vmatprep.subr.mxu0 0.0
    %8550 = vmatpush2.msra.mxu0 0.0
    %8551 = vmatprep.subr.mxu0 0.0
    %8552 = vmatpush2.msra.mxu0 0.0
    %8553 = vmatprep.subr.mxu0 0.0
    %8554 = vmatpush2.msra.mxu0 0.0
    %8555 = vmatprep.subr.mxu0 0.0
    %8556 = vmatpush2.msra.mxu0 0.0
    %8557 = vmatprep.subr.mxu0 0.0
    %8558 = vmatpush2.msra.mxu0 0.0
    %8559 = vmatprep.subr.mxu0 0.0
    %8560 = vmatpush2.msra.mxu0 0.0
    %8561 = vmatprep.subr.mxu0 0.0
    %8562 = vmatpush2.msra.mxu0 0.0
    %8563 = vmatprep.mubr.f32.mxu0 0.0
    %v8564 = vand.u32 %v8385, 4294901760
    %8565 = vmatmul.mubr.f32.gmra.mxu0 %v8564
    %v8566 = vpop.f32.mrf.mxu0
    %v8567 = vadd.f32 %v8466, %v8566
    %v8568 = vpop.f32.mrf.mxu0
    %8569 = vmatprep.mubr.f32.mxu0 0.0
    %v8570 = vand.u32 %v8388, 4294901760
    %8571 = vmatmul.mubr.f32.gmra.mxu0 %v8570
    %v8572 = vpop.f32.mrf.mxu0
    %v8573 = vadd.f32 %v8476, %v8572
    %v8574 = vpop.f32.mrf.mxu0
    %8575 = vdwg.mxu0
    %8576 = vmatprep.subr.mxu0 0.0
    %8577 = vmatpush1.msra.mxu0 0.0
    %8578 = vmatprep.subr.mxu0 0.0
    %8579 = vmatpush1.msra.mxu0 0.0
    %8580 = vmatprep.subr.mxu0 0.0
    %8581 = vmatpush1.msra.mxu0 0.0
    %8582 = vmatprep.subr.mxu0 0.0
    %8583 = vmatpush1.msra.mxu0 0.0
    %8584 = vmatprep.subr.mxu0 0.0
    %8585 = vmatpush1.msra.mxu0 0.0
    %8586 = vmatprep.subr.mxu0 0.0
    %8587 = vmatpush1.msra.mxu0 0.0
    %8588 = vmatprep.subr.mxu0 0.0
    %8589 = vmatpush1.msra.mxu0 0.0
    %8590 = vmatprep.subr.mxu0 0.0
    %8591 = vmatpush1.msra.mxu0 0.0
    %8592 = vmatprep.subr.mxu0 0.0
    %8593 = vmatpush1.msra.mxu0 0.0
    %8594 = vmatprep.subr.mxu0 0.0
    %8595 = vmatpush1.msra.mxu0 0.0
    %8596 = vmatprep.subr.mxu0 0.0
    %8597 = vmatpush1.msra.mxu0 0.0
    %8598 = vmatprep.subr.mxu0 0.0
    %8599 = vmatpush1.msra.mxu0 0.0
    %8600 = vmatprep.subr.mxu0 0.0
    %v8601 = vand.u32 %v28, 4294901760
    %v8602 = vsub.f32 %v28, %v8601
    %8603 = vmatpush1.msra.mxu0 %v8602
    %8604 = vmatprep.subr.mxu0 0.0
    %v8605 = vand.u32 %v27, 4294901760
    %v8606 = vsub.f32 %v27, %v8605
    %8607 = vmatpush1.msra.mxu0 %v8606
    %8608 = vmatprep.subr.mxu0 0.0
    %v8609 = vand.u32 %v26, 4294901760
    %v8610 = vsub.f32 %v26, %v8609
    %8611 = vmatpush1.msra.mxu0 %v8610
    %8612 = vmatprep.subr.mxu0 0.0
    %v8613 = vand.u32 %v25, 4294901760
    %v8614 = vsub.f32 %v25, %v8613
    %8615 = vmatpush1.msra.mxu0 %v8614
    %8616 = vmatprep.subr.mxu0 0.0
    %8617 = vmatpush2.msra.mxu0 0.0
    %8618 = vmatprep.subr.mxu0 0.0
    %8619 = vmatpush2.msra.mxu0 0.0
    %8620 = vmatprep.subr.mxu0 0.0
    %8621 = vmatpush2.msra.mxu0 0.0
    %8622 = vmatprep.subr.mxu0 0.0
    %8623 = vmatpush2.msra.mxu0 0.0
    %8624 = vmatprep.subr.mxu0 0.0
    %8625 = vmatpush2.msra.mxu0 0.0
    %8626 = vmatprep.subr.mxu0 0.0
    %8627 = vmatpush2.msra.mxu0 0.0
    %8628 = vmatprep.subr.mxu0 0.0
    %8629 = vmatpush2.msra.mxu0 0.0
    %8630 = vmatprep.subr.mxu0 0.0
    %8631 = vmatpush2.msra.mxu0 0.0
    %8632 = vmatprep.subr.mxu0 0.0
    %8633 = vmatpush2.msra.mxu0 0.0
    %8634 = vmatprep.subr.mxu0 0.0
    %8635 = vmatpush2.msra.mxu0 0.0
    %8636 = vmatprep.subr.mxu0 0.0
    %8637 = vmatpush2.msra.mxu0 0.0
    %8638 = vmatprep.subr.mxu0 0.0
    %8639 = vmatpush2.msra.mxu0 0.0
    %8640 = vmatprep.subr.mxu0 0.0
    %8641 = vmatpush2.msra.mxu0 0.0
    %8642 = vmatprep.subr.mxu0 0.0
    %8643 = vmatpush2.msra.mxu0 0.0
    %8644 = vmatprep.subr.mxu0 0.0
    %8645 = vmatpush2.msra.mxu0 0.0
    %8646 = vmatprep.subr.mxu0 0.0
    %8647 = vmatpush2.msra.mxu0 0.0
    %8648 = vmatprep.mubr.f32.mxu0 0.0
    %v8649 = vand.u32 %v8385, 4294901760
    %v8650 = vsub.f32 %v8385, %v8649
    %8651 = vmatmul.mubr.f32.gmra.mxu0 %v8650
    %v8652 = vpop.f32.mrf.mxu0
    %v8653 = vadd.f32 %v8567, %v8652
    %v8654 = vpop.f32.mrf.mxu0
    %8655 = vmatprep.mubr.f32.mxu0 0.0
    %v8656 = vand.u32 %v8388, 4294901760
    %v8657 = vsub.f32 %v8388, %v8656
    %8658 = vmatmul.mubr.f32.gmra.mxu0 %v8657
    %v8659 = vpop.f32.mrf.mxu0
    %v8660 = vadd.f32 %v8573, %v8659
    %v8661 = vpop.f32.mrf.mxu0
    %8662 = vdwg.mxu0
    %8663 = vmatprep.subr.mxu0 0.0
    %8664 = vmatpush1.msra.mxu0 0.0
    %8665 = vmatprep.subr.mxu0 0.0
    %8666 = vmatpush1.msra.mxu0 0.0
    %8667 = vmatprep.subr.mxu0 0.0
    %8668 = vmatpush1.msra.mxu0 0.0
    %8669 = vmatprep.subr.mxu0 0.0
    %8670 = vmatpush1.msra.mxu0 0.0
    %8671 = vmatprep.subr.mxu0 0.0
    %8672 = vmatpush1.msra.mxu0 0.0
    %8673 = vmatprep.subr.mxu0 0.0
    %8674 = vmatpush1.msra.mxu0 0.0
    %8675 = vmatprep.subr.mxu0 0.0
    %8676 = vmatpush1.msra.mxu0 0.0
    %8677 = vmatprep.subr.mxu0 0.0
    %8678 = vmatpush1.msra.mxu0 0.0
    %8679 = vmatprep.subr.mxu0 0.0
    %8680 = vmatpush1.msra.mxu0 0.0
    %8681 = vmatprep.subr.mxu0 0.0
    %8682 = vmatpush1.msra.mxu0 0.0
    %8683 = vmatprep.subr.mxu0 0.0
    %8684 = vmatpush1.msra.mxu0 0.0
    %8685 = vmatprep.subr.mxu0 0.0
    %8686 = vmatpush1.msra.mxu0 0.0
    %8687 = vmatprep.subr.mxu0 0.0
    %v8688 = vand.u32 %v28, 4294901760
    %8689 = vmatpush1.msra.mxu0 %v8688
    %8690 = vmatprep.subr.mxu0 0.0
    %v8691 = vand.u32 %v27, 4294901760
    %8692 = vmatpush1.msra.mxu0 %v8691
    %8693 = vmatprep.subr.mxu0 0.0
    %v8694 = vand.u32 %v26, 4294901760
    %8695 = vmatpush1.msra.mxu0 %v8694
    %8696 = vmatprep.subr.mxu0 0.0
    %v8697 = vand.u32 %v25, 4294901760
    %8698 = vmatpush1.msra.mxu0 %v8697
    %8699 = vmatprep.subr.mxu0 0.0
    %8700 = vmatpush2.msra.mxu0 0.0
    %8701 = vmatprep.subr.mxu0 0.0
    %8702 = vmatpush2.msra.mxu0 0.0
    %8703 = vmatprep.subr.mxu0 0.0
    %8704 = vmatpush2.msra.mxu0 0.0
    %8705 = vmatprep.subr.mxu0 0.0
    %8706 = vmatpush2.msra.mxu0 0.0
    %8707 = vmatprep.subr.mxu0 0.0
    %8708 = vmatpush2.msra.mxu0 0.0
    %8709 = vmatprep.subr.mxu0 0.0
    %8710 = vmatpush2.msra.mxu0 0.0
    %8711 = vmatprep.subr.mxu0 0.0
    %8712 = vmatpush2.msra.mxu0 0.0
    %8713 = vmatprep.subr.mxu0 0.0
    %8714 = vmatpush2.msra.mxu0 0.0
    %8715 = vmatprep.subr.mxu0 0.0
    %8716 = vmatpush2.msra.mxu0 0.0
    %8717 = vmatprep.subr.mxu0 0.0
    %8718 = vmatpush2.msra.mxu0 0.0
    %8719 = vmatprep.subr.mxu0 0.0
    %8720 = vmatpush2.msra.mxu0 0.0
    %8721 = vmatprep.subr.mxu0 0.0
    %8722 = vmatpush2.msra.mxu0 0.0
    %8723 = vmatprep.subr.mxu0 0.0
    %8724 = vmatpush2.msra.mxu0 0.0
    %8725 = vmatprep.subr.mxu0 0.0
    %8726 = vmatpush2.msra.mxu0 0.0
    %8727 = vmatprep.subr.mxu0 0.0
    %8728 = vmatpush2.msra.mxu0 0.0
    %8729 = vmatprep.subr.mxu0 0.0
    %8730 = vmatpush2.msra.mxu0 0.0
    %8731 = vmatprep.mubr.f32.mxu0 0.0
    %v8732 = vand.u32 %v8385, 4294901760
    %v8733 = vsub.f32 %v8385, %v8732
    %v8734 = vand.u32 %v8733, 4294901760
    %8735 = vmatmul.mubr.f32.gmra.mxu0 %v8734
    %v8736 = vpop.f32.mrf.mxu0
    %v8737 = vadd.f32 %v8653, %v8736
    %v8738 = vpop.f32.mrf.mxu0
    %8739 = vmatprep.mubr.f32.mxu0 0.0
    %v8740 = vand.u32 %v8388, 4294901760
    %v8741 = vsub.f32 %v8388, %v8740
    %v8742 = vand.u32 %v8741, 4294901760
    %8743 = vmatmul.mubr.f32.gmra.mxu0 %v8742
    %v8744 = vpop.f32.mrf.mxu0
    %v8745 = vadd.f32 %v8660, %v8744
    %v8746 = vpop.f32.mrf.mxu0
    %8747 = vdwg.mxu0
    %8748 = vmatprep.subr.mxu0 0.0
    %8749 = vmatpush1.msra.mxu0 0.0
    %8750 = vmatprep.subr.mxu0 0.0
    %8751 = vmatpush1.msra.mxu0 0.0
    %8752 = vmatprep.subr.mxu0 0.0
    %8753 = vmatpush1.msra.mxu0 0.0
    %8754 = vmatprep.subr.mxu0 0.0
    %8755 = vmatpush1.msra.mxu0 0.0
    %8756 = vmatprep.subr.mxu0 0.0
    %8757 = vmatpush1.msra.mxu0 0.0
    %8758 = vmatprep.subr.mxu0 0.0
    %8759 = vmatpush1.msra.mxu0 0.0
    %8760 = vmatprep.subr.mxu0 0.0
    %8761 = vmatpush1.msra.mxu0 0.0
    %8762 = vmatprep.subr.mxu0 0.0
    %8763 = vmatpush1.msra.mxu0 0.0
    %8764 = vmatprep.subr.mxu0 0.0
    %8765 = vmatpush1.msra.mxu0 0.0
    %8766 = vmatprep.subr.mxu0 0.0
    %8767 = vmatpush1.msra.mxu0 0.0
    %8768 = vmatprep.subr.mxu0 0.0
    %8769 = vmatpush1.msra.mxu0 0.0
    %8770 = vmatprep.subr.mxu0 0.0
    %8771 = vmatpush1.msra.mxu0 0.0
    %8772 = vmatprep.subr.mxu0 0.0
    %v8773 = vand.u32 %v28, 4294901760
    %v8774 = vsub.f32 %v28, %v8773
    %v8775 = vand.u32 %v8774, 4294901760
    %8776 = vmatpush1.msra.mxu0 %v8775
    %8777 = vmatprep.subr.mxu0 0.0
    %v8778 = vand.u32 %v27, 4294901760
    %v8779 = vsub.f32 %v27, %v8778
    %v8780 = vand.u32 %v8779, 4294901760
    %8781 = vmatpush1.msra.mxu0 %v8780
    %8782 = vmatprep.subr.mxu0 0.0
    %v8783 = vand.u32 %v26, 4294901760
    %v8784 = vsub.f32 %v26, %v8783
    %v8785 = vand.u32 %v8784, 4294901760
    %8786 = vmatpush1.msra.mxu0 %v8785
    %8787 = vmatprep.subr.mxu0 0.0
    %v8788 = vand.u32 %v25, 4294901760
    %v8789 = vsub.f32 %v25, %v8788
    %v8790 = vand.u32 %v8789, 4294901760
    %8791 = vmatpush1.msra.mxu0 %v8790
    %8792 = vmatprep.subr.mxu0 0.0
    %8793 = vmatpush2.msra.mxu0 0.0
    %8794 = vmatprep.subr.mxu0 0.0
    %8795 = vmatpush2.msra.mxu0 0.0
    %8796 = vmatprep.subr.mxu0 0.0
    %8797 = vmatpush2.msra.mxu0 0.0
    %8798 = vmatprep.subr.mxu0 0.0
    %8799 = vmatpush2.msra.mxu0 0.0
    %8800 = vmatprep.subr.mxu0 0.0
    %8801 = vmatpush2.msra.mxu0 0.0
    %8802 = vmatprep.subr.mxu0 0.0
    %8803 = vmatpush2.msra.mxu0 0.0
    %8804 = vmatprep.subr.mxu0 0.0
    %8805 = vmatpush2.msra.mxu0 0.0
    %8806 = vmatprep.subr.mxu0 0.0
    %8807 = vmatpush2.msra.mxu0 0.0
    %8808 = vmatprep.subr.mxu0 0.0
    %8809 = vmatpush2.msra.mxu0 0.0
    %8810 = vmatprep.subr.mxu0 0.0
    %8811 = vmatpush2.msra.mxu0 0.0
    %8812 = vmatprep.subr.mxu0 0.0
    %8813 = vmatpush2.msra.mxu0 0.0
    %8814 = vmatprep.subr.mxu0 0.0
    %8815 = vmatpush2.msra.mxu0 0.0
    %8816 = vmatprep.subr.mxu0 0.0
    %8817 = vmatpush2.msra.mxu0 0.0
    %8818 = vmatprep.subr.mxu0 0.0
    %8819 = vmatpush2.msra.mxu0 0.0
    %8820 = vmatprep.subr.mxu0 0.0
    %8821 = vmatpush2.msra.mxu0 0.0
    %8822 = vmatprep.subr.mxu0 0.0
    %8823 = vmatpush2.msra.mxu0 0.0
    %8824 = vmatprep.mubr.f32.mxu0 0.0
    %v8825 = vand.u32 %v8385, 4294901760
    %8826 = vmatmul.mubr.f32.gmra.mxu0 %v8825
    %v8827 = vpop.f32.mrf.mxu0
    %v8828 = vadd.f32 %v8737, %v8827
    %v8829 = vpop.f32.mrf.mxu0
    %8830 = vmatprep.mubr.f32.mxu0 0.0
    %v8831 = vand.u32 %v8388, 4294901760
    %8832 = vmatmul.mubr.f32.gmra.mxu0 %v8831
    %v8833 = vpop.f32.mrf.mxu0
    %v8834 = vadd.f32 %v8745, %v8833
    %v8835 = vpop.f32.mrf.mxu0
    %8836 = vdwg.mxu0
    %8837 = vmatprep.subr.mxu0 0.0
    %8838 = vmatpush1.msra.mxu0 0.0
    %8839 = vmatprep.subr.mxu0 0.0
    %8840 = vmatpush1.msra.mxu0 0.0
    %8841 = vmatprep.subr.mxu0 0.0
    %8842 = vmatpush1.msra.mxu0 0.0
    %8843 = vmatprep.subr.mxu0 0.0
    %8844 = vmatpush1.msra.mxu0 0.0
    %8845 = vmatprep.subr.mxu0 0.0
    %8846 = vmatpush1.msra.mxu0 0.0
    %8847 = vmatprep.subr.mxu0 0.0
    %8848 = vmatpush1.msra.mxu0 0.0
    %8849 = vmatprep.subr.mxu0 0.0
    %8850 = vmatpush1.msra.mxu0 0.0
    %8851 = vmatprep.subr.mxu0 0.0
    %8852 = vmatpush1.msra.mxu0 0.0
    %8853 = vmatprep.subr.mxu0 0.0
    %8854 = vmatpush1.msra.mxu0 0.0
    %8855 = vmatprep.subr.mxu0 0.0
    %8856 = vmatpush1.msra.mxu0 0.0
    %8857 = vmatprep.subr.mxu0 0.0
    %8858 = vmatpush1.msra.mxu0 0.0
    %8859 = vmatprep.subr.mxu0 0.0
    %8860 = vmatpush1.msra.mxu0 0.0
    %8861 = vmatprep.subr.mxu0 0.0
    %v8862 = vand.u32 %v28, 4294901760
    %8863 = vmatpush1.msra.mxu0 %v8862
    %8864 = vmatprep.subr.mxu0 0.0
    %v8865 = vand.u32 %v27, 4294901760
    %8866 = vmatpush1.msra.mxu0 %v8865
    %8867 = vmatprep.subr.mxu0 0.0
    %v8868 = vand.u32 %v26, 4294901760
    %8869 = vmatpush1.msra.mxu0 %v8868
    %8870 = vmatprep.subr.mxu0 0.0
    %v8871 = vand.u32 %v25, 4294901760
    %8872 = vmatpush1.msra.mxu0 %v8871
    %8873 = vmatprep.subr.mxu0 0.0
    %8874 = vmatpush2.msra.mxu0 0.0
    %8875 = vmatprep.subr.mxu0 0.0
    %8876 = vmatpush2.msra.mxu0 0.0
    %8877 = vmatprep.subr.mxu0 0.0
    %8878 = vmatpush2.msra.mxu0 0.0
    %8879 = vmatprep.subr.mxu0 0.0
    %8880 = vmatpush2.msra.mxu0 0.0
    %8881 = vmatprep.subr.mxu0 0.0
    %8882 = vmatpush2.msra.mxu0 0.0
    %8883 = vmatprep.subr.mxu0 0.0
    %8884 = vmatpush2.msra.mxu0 0.0
    %8885 = vmatprep.subr.mxu0 0.0
    %8886 = vmatpush2.msra.mxu0 0.0
    %8887 = vmatprep.subr.mxu0 0.0
    %8888 = vmatpush2.msra.mxu0 0.0
    %8889 = vmatprep.subr.mxu0 0.0
    %8890 = vmatpush2.msra.mxu0 0.0
    %8891 = vmatprep.subr.mxu0 0.0
    %8892 = vmatpush2.msra.mxu0 0.0
    %8893 = vmatprep.subr.mxu0 0.0
    %8894 = vmatpush2.msra.mxu0 0.0
    %8895 = vmatprep.subr.mxu0 0.0
    %8896 = vmatpush2.msra.mxu0 0.0
    %8897 = vmatprep.subr.mxu0 0.0
    %8898 = vmatpush2.msra.mxu0 0.0
    %8899 = vmatprep.subr.mxu0 0.0
    %8900 = vmatpush2.msra.mxu0 0.0
    %8901 = vmatprep.subr.mxu0 0.0
    %8902 = vmatpush2.msra.mxu0 0.0
    %8903 = vmatprep.subr.mxu0 0.0
    %8904 = vmatpush2.msra.mxu0 0.0
    %8905 = vmatprep.mubr.f32.mxu0 0.0
    %v8906 = vand.u32 %v8385, 4294901760
    %8907 = vmatmul.mubr.f32.gmra.mxu0 %v8906
    %v8908 = vpop.f32.mrf.mxu0
    %v8909 = vadd.f32 %v8828, %v8908
    %v8910 = vpop.f32.mrf.mxu0
    %8911 = vmatprep.mubr.f32.mxu0 0.0
    %v8912 = vand.u32 %v8388, 4294901760
    %8913 = vmatmul.mubr.f32.gmra.mxu0 %v8912
    %v8914 = vpop.f32.mrf.mxu0
    %v8915 = vadd.f32 %v8834, %v8914
    %v8916 = vpop.f32.mrf.mxu0
    %8917 = vdwg.mxu0
    %v8918 = vadd.f32 %v8372, %v8909
    %v8919 = vadd.f32 %v8373, %v8915
    %v8920 = vtanh.pop %v8918
    %v8921 = vtanh.pop %v8919
    %v8922 = vmul.f32 %v8368, %v7815
    %v8923 = vmul.f32 %v8370, %v7816
    %v8924 = vsub.f32 1.0, %v8368
    %v8925 = vsub.f32 1.0, %v8370
    %v8926 = vmul.f32 %v8924, %v8920
    %v8927 = vmul.f32 %v8925, %v8921
    %v8928 = vadd.f32 %v8922, %v8926
    %v8929 = vadd.f32 %v8923, %v8927
    %s8930 = scalar_lea.vmem [#allocation2], 112
    %8931 = vst.msk [vmem:[%s8930] sm:$0xff] %vm33, %v8928
    %8932 = vst.msk [vmem:[%s8930 + $0x8] sm:$0xff] %vm33, %v8929
    // Predicated region
    $region22: #{tgcn_forward.1} parent=1 // pred_check
      _
    $region23: #{tgcn_forward.1} parent=1 // pred_check_branch
      %8934 = sbr.rel (0) target = $region25
    $region24: #{tgcn_forward.1} parent=1 // pred_region
      %s8936 = ssub.s32 2048, 2048
      %8937 = vsyncadd [#allocation3], %s8936
      %s8938 = sshll.u32 [#allocation2], 4
      %s8939 = int_to_ptr.vmem [resolvable:$true] %s8938
      %8944 = dma.vmem_to_hbm [thread:$0]  %s8939, 2048, %s5, [#allocation3], 128, 128, 8
    $region25: #{tgcn_forward.1} parent=1 // pred_fallthru
      _
    // Predicated region
    $region26: #{tgcn_forward.1} parent=1 // pred_check
      _
    $region27: #{tgcn_forward.1} parent=1 // pred_check_branch
      %8946 = sbr.rel (0) target = $region29
    $region28: #{tgcn_forward.1} parent=1 // pred_region
      %8947 = dma.done [#allocation3], 2048
    $region29: #{tgcn_forward.1} parent=1 // pred_fallthru
      _
    %8948 = vsyncpa [#allocation3], 1

</llo_original>
